<compile_context>
chip_gen: v7x
topology: tpu7x:2x2x1
jax: 0.10.0
libtpu: 0.0.40
codegen_flags: <defaults>
</compile_context>

<pallas_src>
import functools

import jax
import jax.numpy as jnp
from jax.experimental import pallas as pl
from jax.experimental.pallas import tpu as pltpu


_ROW_TILE = 256       # tm for the similarity kernel
_COL_TILE = 512       # tn for the similarity kernel
_PAD_MULT = 512       # lcm(tm, tn) -> n is padded to this multiple


def _pad_rows(x, n_pad):
    n = x.shape[0]
    if n_pad == n:
        return x
    return jnp.pad(x, ((0, n_pad - n), (0, 0)))


# ----------------------------------------------------------------------------
# Kernel 1: tiled similarity matmul (+10 on diagonal) + streaming per-row top-k
# ----------------------------------------------------------------------------
def _sim_topk_kernel(student_ref, teacher_ref, iknn_ref, vals_ref, idxs_ref,
                     *, tn, top_k, n_valid, n_total, resident):
    i = pl.program_id(0)            # row block ("parallel")
    j = pl.program_id(1)            # column block ("arbitrary" streaming axis)
    nj = pl.num_programs(1)
    tm = student_ref.shape[0]

    # Reset the running top-k at the start of every row block's column sweep.
    @pl.when(j == 0)
    def _():
        vals_ref[...] = jnp.full((tm, top_k), -jnp.inf, dtype=jnp.float32)
        # Distinct negative sentinels: never collide with a real (>=0) column.
        idxs_ref[...] = -(jax.lax.broadcasted_iota(jnp.int32, (tm, top_k), 1) + 1)

    if resident:
        # Whole teacher resident in VMEM (DMA'd once); slice the column tile.
        start = pl.multiple_of(j * tn, tn)
        t_tile = teacher_ref[pl.ds(start, tn), :]
    else:
        t_tile = teacher_ref[...]

    # (tm, tn) tile of student @ teacher.T on the MXU, f32 accumulation.
    s = jax.lax.dot_general(
        student_ref[...], t_tile,
        dimension_numbers=(((1,), (1,)), ((), ())),
        preferred_element_type=jnp.float32)

    col_l = jax.lax.broadcasted_iota(jnp.int32, (tm, tn), 1)   # local col ids
    base = j * tn                                              # global col base

    # +10 on the global diagonal, only on tiles that actually cross it.
    def _add_diag(sv):
        row_g = jax.lax.broadcasted_iota(jnp.int32, (tm, tn), 0) + i * tm
        return jnp.where(row_g == col_l + base, sv + jnp.float32(10.0), sv)

    on_diag = jnp.logical_and(i * tm < base + tn, base < (i + 1) * tm)
    s = jax.lax.cond(on_diag, _add_diag, lambda sv: sv, s)

    # Mask padded columns (emitted only when padding exists; static check).
    if n_total != n_valid:
        s = jnp.where(col_l + base < n_valid, s, -jnp.inf)

    # --- per-tile top-k extraction directly on the (tm, tn) tile -------------
    tile_v, tile_i = [], []
    for p in range(top_k):
        m = jnp.max(s, axis=1, keepdims=True)                      # (tm, 1)
        # first-occurrence (lowest local column) of the max
        sel = jnp.min(jnp.where(s >= m, col_l, jnp.int32(tn)),
                      axis=1, keepdims=True)
        tile_v.append(m)
        tile_i.append(sel + base)                                   # global col
        if p + 1 < top_k:
            s = jnp.where(col_l == sel, -jnp.inf, s)   # mask exactly one entry
    tile_v = jnp.concatenate(tile_v, axis=1)                        # (tm, top_k)
    tile_i = jnp.concatenate(tile_i, axis=1)

    # --- tiny (tm, 2*top_k) merge with the running scratch -------------------
    cand_v = jnp.concatenate([vals_ref[...], tile_v], axis=1)
    cand_i = jnp.concatenate([idxs_ref[...], tile_i], axis=1)
    new_v, new_i = [], []
    for p in range(top_k):
        m = jnp.max(cand_v, axis=1, keepdims=True)
        sel = jnp.min(jnp.where(cand_v >= m, cand_i, jnp.int32(2 ** 30)),
                      axis=1, keepdims=True)
        new_v.append(m)
        new_i.append(sel)
        if p + 1 < top_k:
            # candidate indices are distinct -> masks exactly one live entry
            cand_v = jnp.where(cand_i == sel, -jnp.inf, cand_v)
    vals_ref[...] = jnp.concatenate(new_v, axis=1)
    idxs_ref[...] = jnp.concatenate(new_i, axis=1)

    # Single (tm, top_k) writeback per row block.
    @pl.when(j == nj - 1)
    def _():
        iknn_ref[...] = idxs_ref[...]


def similarity_topk(student, teacher, top_k):
    """Indices of the top_k largest entries per row of student @ teacher.T + 10*I.

    NOTE: inputs are fed to the MXU as bf16 (f32 accumulation); near-tied
    neighbors can differ from a strict float32 reference.
    """
    n, d = student.shape
    n_pad = ((n + _PAD_MULT - 1) // _PAD_MULT) * _PAD_MULT
    tm, tn = _ROW_TILE, _COL_TILE

    s_bf = _pad_rows(student, n_pad).astype(jnp.bfloat16)
    t_bf = _pad_rows(teacher, n_pad).astype(jnp.bfloat16)

    teacher_bytes = n_pad * d * 2
    resident = teacher_bytes <= (8 << 20)   # conservative (v7x has 64 MiB VMEM)

    if resident:
        teacher_spec = pl.BlockSpec((n_pad, d), lambda i, j: (0, 0))
        teacher_vmem = 2 * teacher_bytes
    else:
        teacher_spec = pl.BlockSpec((tn, d), lambda i, j: (j, 0))
        teacher_vmem = 4 * tn * d

    vmem_need = (4 * tm * d                 # student tile bf16, double-buffered
                 + teacher_vmem
                 + 8 * tm * tn * 4          # f32 score tile + elementwise temps
                 + 4 * tm * 128 * 4)        # out + scratch, lane-padded
    vmem_limit = int(min(max(vmem_need + (2 << 20), 24 << 20), 40 << 20))

    kern = functools.partial(_sim_topk_kernel, tn=tn, top_k=top_k,
                             n_valid=n, n_total=n_pad, resident=resident)

    out = pl.pallas_call(
        kern,
        out_shape=jax.ShapeDtypeStruct((n_pad, top_k), jnp.int32),
        grid_spec=pltpu.PrefetchScalarGridSpec(
            num_scalar_prefetch=0,
            grid=(n_pad // tm, n_pad // tn),
            in_specs=[pl.BlockSpec((tm, d), lambda i, j: (i, 0)),
                      teacher_spec],
            out_specs=pl.BlockSpec((tm, top_k), lambda i, j: (i, 0)),
            scratch_shapes=[pltpu.VMEM((tm, top_k), jnp.float32),
                            pltpu.VMEM((tm, top_k), jnp.int32)]),
        compiler_params=pltpu.CompilerParams(
            dimension_semantics=("parallel", "arbitrary"),
            vmem_limit_bytes=vmem_limit),
    )(s_bf, t_bf)
    return out[:n]


# ----------------------------------------------------------------------------
# Kernel 2: batched (num_kmeans runs) fused k-means assignment + update stats.
# ----------------------------------------------------------------------------
def _kmeans_step_kernel(x_ref, c_ref, csq_ref, lbl_ref, stat_ref,
                        *, ncent, nruns, n_valid, n_total):
    i = pl.program_id(0)
    t = x_ref.shape[0]

    x = x_ref[...]                                           # (t, d+1), last col == 1
    # argmin_j (||c_j||^2 - 2 x_i . c_j)   (||x_i||^2 is constant per row)
    dots = jax.lax.dot_general(
        x, c_ref[...],
        dimension_numbers=(((1,), (1,)), ((), ())),
        preferred_element_type=jnp.float32)                  # (t, nruns*ncent)
    dist = csq_ref[...] - 2.0 * dots

    cid = jax.lax.broadcasted_iota(jnp.int32, (t, ncent), 1)
    lbls, hots = [], []
    for r in range(nruns):                                   # segmented argmin per run
        seg = dist[:, r * ncent:(r + 1) * ncent]
        mn = jnp.min(seg, axis=1, keepdims=True)
        lbl = jnp.min(jnp.where(seg <= mn, cid, jnp.int32(ncent)),
                      axis=1, keepdims=True)
        lbls.append(lbl)
        hots.append((cid == lbl).astype(jnp.float32))
    onehot = jnp.concatenate(hots, axis=1)                   # (t, nruns*ncent)

    if n_total != n_valid:   # keep padded rows out of the centroid statistics
        row_g = jax.lax.broadcasted_iota(jnp.int32, (t, 1), 0) + i * t
        onehot = onehot * (row_g < n_valid).astype(jnp.float32)

    lbl_ref[...] = jnp.concatenate(lbls, axis=1)             # (t, nruns) int32
    # one MXU matmul gives both per-centroid sums (cols :d) and counts (col d)
    stat_ref[0] = jax.lax.dot_general(
        onehot, x,
        dimension_numbers=(((0,), (0,)), ((), ())),
        preferred_element_type=jnp.float32)                  # (nruns*ncent, d+1)


# TODO(synk): faiss.Kmeans is replaced by Lloyd's k-means with random-row init;
# faiss's exact initialization / empty-cluster handling is not reproduced.
def _kmeans_consensus_labels(teacher_pad, n, ncent, nruns, niter):
    n_pad, d = teacher_pad.shape
    rc = nruns * ncent
    t_rows = 1024 if n_pad % 1024 == 0 else 512
    n_blocks = n_pad // t_rows

    # [x | 1] so that one matmul yields sums and counts; pair with [c | 0].
    data_ext = jnp.concatenate(
        [teacher_pad, jnp.ones((n_pad, 1), teacher_pad.dtype)], axis=1)

    kern = functools.partial(_kmeans_step_kernel, ncent=ncent, nruns=nruns,
                             n_valid=n, n_total=n_pad)
    step = pl.pallas_call(
        kern,
        out_shape=(jax.ShapeDtypeStruct((n_pad, nruns), jnp.int32),
                   jax.ShapeDtypeStruct((n_blocks, rc, d + 1), jnp.float32)),
        grid_spec=pltpu.PrefetchScalarGridSpec(
            num_scalar_prefetch=0,
            grid=(n_blocks,),
            in_specs=[pl.BlockSpec((t_rows, d + 1), lambda i: (i, 0)),
                      pl.BlockSpec((rc, d + 1), lambda i: (0, 0)),
                      pl.BlockSpec((1, rc), lambda i: (0, 0))],
            out_specs=(pl.BlockSpec((t_rows, nruns), lambda i: (i, 0)),
                       pl.BlockSpec((1, rc, d + 1), lambda i: (i, 0, 0)))),
        compiler_params=pltpu.CompilerParams(
            dimension_semantics=("parallel",)),
    )

    # Per-run init: random rows of the (unpadded) data, seeds 1234 .. 1234+R-1.
    cents = []
    for r in range(nruns):
        key = jax.random.PRNGKey(1234 + r)
        idx = jax.random.permutation(key, n)[:ncent]
        cents.append(teacher_pad[idx])
    cent = jnp.concatenate(cents, axis=0)                    # (rc, d)

    def body(_, c):
        c_ext = jnp.concatenate([c, jnp.zeros((rc, 1), c.dtype)], axis=1)
        csq = jnp.sum(c * c, axis=1)[None, :]
        _, stats = step(data_ext, c_ext, csq)
        stats = jnp.sum(stats, axis=0)                       # (rc, d+1)
        sums, cnts = stats[:, :d], stats[:, d]
        newc = sums / jnp.maximum(cnts, 1.0)[:, None]
        return jnp.where(cnts[:, None] > 0.0, newc, c)       # empty cluster: keep old

    cent = jax.lax.fori_loop(0, niter, body, cent)

    c_ext = jnp.concatenate([cent, jnp.zeros((rc, 1), cent.dtype)], axis=1)
    csq = jnp.sum(cent * cent, axis=1)[None, :]
    labels_pad, _ = step(data_ext, c_ext, csq)
    return labels_pad[:n]                                    # (n, nruns) int32


# ----------------------------------------------------------------------------
# Jitted forward: all Pallas calls + glue fuse into one XLA executable.
# ----------------------------------------------------------------------------
@functools.partial(jax.jit, static_argnums=(3, 4, 5, 6))
def _neighbor_forward(adj, student, teacher, top_k, num_centroids, num_kmeans,
                      clus_num_iters):
    n = student.shape[0]
    n_pad = ((n + _PAD_MULT - 1) // _PAD_MULT) * _PAD_MULT

    # 1) similarity + 10*I, per-row top-k  (tiled streaming Pallas kernel)
    I_knn = similarity_topk(student, teacher, top_k)          # (n, top_k) int32

    # 2) adj values at the knn coordinates: an O(n*top_k) XLA gather, no dense
    #    n x n intermediates are built.
    locality_vals = jnp.take_along_axis(adj, I_knn, axis=1)

    # 3) batched k-means consensus over num_kmeans seeded runs
    teacher_pad = _pad_rows(teacher, n_pad)
    labels = _kmeans_consensus_labels(teacher_pad, n, num_centroids,
                                      num_kmeans, clus_num_iters)   # (n, R)
    all_close = jnp.any(labels[:, None, :] == labels[I_knn], axis=-1)
    pos_vals = locality_vals + all_close.astype(jnp.float32)

    # torch: pos_.coalesce()._indices().  Because `locality = knn_neighbor * adj`
    # keeps explicit zeros at every knn coordinate, the coalesced support is
    # exactly the knn coordinate set sorted row-major -> static (2, n*top_k)
    # shape (keeps the whole forward jittable).  pos values are permuted with
    # the same per-row sort so they line up with `indices` columns.
    order = jnp.argsort(I_knn, axis=1)
    cols = jnp.take_along_axis(I_knn, order, axis=1).reshape(-1)
    vals = jnp.take_along_axis(pos_vals, order, axis=1).reshape(-1)
    rows = jnp.repeat(jnp.arange(n, dtype=jnp.int32), top_k)
    indices = jnp.stack([rows, cols.astype(jnp.int32)], axis=0)
    return indices, vals


class Neighbor:
    """JAX/Pallas version of models/scAFGCC.py::Neighbor (forward only)."""

    def __init__(self, num_centroids, num_kmeans, clus_num_iters):
        self.num_centroids = num_centroids
        self.num_kmeans = num_kmeans
        self.clus_num_iters = clus_num_iters

    def __call__(self, adj, student, teacher, top_k, epoch):
        del epoch  # unused, as in the reference module
        indices, _pos_vals = _neighbor_forward(
            adj, student, teacher, top_k,
            self.num_centroids, self.num_kmeans, self.clus_num_iters)
        return indices, top_k


def _reference_topk_check(student, teacher, top_k, I_knn):
    """Tie-robust check of the streaming top-k against plain JAX (bf16 ref)."""
    n = student.shape[0]
    sim = jnp.dot(student.astype(jnp.bfloat16).astype(jnp.float32),
                  teacher.astype(jnp.bfloat16).astype(jnp.float32).T)
    sim = sim + 10.0 * jnp.eye(n, dtype=jnp.float32)
    ref_vals = jax.lax.top_k(sim, top_k)[0]
    got_vals = jnp.take_along_axis(sim, I_knn, axis=1)
    got_vals = -jnp.sort(-got_vals, axis=1)
    assert bool(jnp.allclose(got_vals, ref_vals, rtol=1e-4, atol=1e-2))
    srt = jnp.sort(I_knn, axis=1)
    assert bool(jnp.all(srt[:, 1:] != srt[:, :-1]))           # distinct per row
    assert bool(jnp.all((I_knn >= 0) & (I_knn < n)))


if __name__ == "__main__":
    top_k = 4
    d = 32
    model = Neighbor(num_centroids=4, num_kmeans=2, clus_num_iters=5)

    # n=512 is the aligned path; n=300 exercises the padded (n % 512 != 0) path
    # that used to be a single-block VMEM cliff.
    for n_data in (512, 300):
        key = jax.random.PRNGKey(0)
        k_s, k_t, k_a = jax.random.split(key, 3)
        student = jax.random.normal(k_s, (n_data, d), dtype=jnp.float32)
        teacher = jax.random.normal(k_t, (n_data, d), dtype=jnp.float32)

        # symmetric 0/1 adjacency with self-loops
        a = (jax.random.uniform(k_a, (n_data, n_data)) < 0.2).astype(jnp.float32)
        adj = jnp.maximum(a, a.T)
        adj = adj.at[jnp.arange(n_data), jnp.arange(n_data)].set(1.0)

        # --- sanity-check the tiled streaming top-k kernel ---
        I_knn = similarity_topk(student, teacher, top_k)
        jax.block_until_ready(I_knn)
        assert I_knn.shape == (n_data, top_k)
        _reference_topk_check(student, teacher, top_k, I_knn)

        # --- full forward ---
        indices, k_out = model(adj, student, teacher, top_k, epoch=0)
        jax.block_until_ready(indices)
        assert indices.shape == (2, n_data * top_k)
        assert k_out == top_k
        assert bool(jnp.all(indices[1] >= 0)) and bool(jnp.all(indices[1] < n_data))

    print("KERNEL_OK")
</pallas_src>

<mosaic_0001>
module attributes {stable_mosaic.version = 11 : i64} {
  func.func @_sim_topk_kernel(%arg0: i32, %arg1: i32, %arg2: memref<256x32xbf16, #tpu.memory_space<vmem>>, %arg3: memref<512x32xbf16, #tpu.memory_space<vmem>>, %arg4: memref<256x4xi32, #tpu.memory_space<vmem>>, %arg5: memref<256x4xf32, #tpu.memory_space<vmem>>, %arg6: memref<256x4xi32, #tpu.memory_space<vmem>>) attributes {dimension_semantics = [#tpu.dimension_semantics<parallel>, #tpu.dimension_semantics<arbitrary>], iteration_bounds = array<i64: 2, 1>, scalar_prefetch = 0 : i64, scratch_operands = 2 : i64, tpu.core_type = #tpu.core_type<tc>, window_params = [{transform_indices = @transform_0, window_bounds = array<i64: 256, 32>}, {pipeline_mode = #tpu.pipeline_mode<synchronous>, transform_indices = @transform_1, window_bounds = array<i64: 512, 32>}, {transform_indices = @transform_2, window_bounds = array<i64: 256, 4>}]} {
    %c0_i32 = arith.constant 0 : i32
    %0 = arith.cmpi eq, %arg1, %c0_i32 : i32
    %1 = arith.extui %0 : i1 to i32
    %c0_i32_0 = arith.constant 0 : i32
    %2 = arith.cmpi ne, %1, %c0_i32_0 : i32
    scf.if %2 {
      %cst_46 = arith.constant 0xFF800000 : f32
      %130 = vector.broadcast %cst_46 : f32 to vector<256x4xf32>
      %c0_47 = arith.constant 0 : index
      %c0_48 = arith.constant 0 : index
      %131 = vector.load %arg5[%c0_47, %c0_48] : memref<256x4xf32, #tpu.memory_space<vmem>>, vector<256x4xf32>
      tpu.vector_store %arg5[%c0_47, %c0_48], %130 {strides = array<i32>} : memref<256x4xf32, #tpu.memory_space<vmem>>, vector<256x4xf32>,
      %132 = tpu.iota {dimensions = array<i32: 1>} : vector<256x4xi32>
      %c1_i32_49 = arith.constant 1 : i32
      %133 = vector.broadcast %c1_i32_49 : i32 to vector<256x4xi32>
      %134 = arith.addi %132, %133 : vector<256x4xi32>
      %c0_i32_50 = arith.constant 0 : i32
      %135 = vector.broadcast %c0_i32_50 : i32 to vector<256x4xi32>
      %136 = arith.subi %135, %134 : vector<256x4xi32>
      %c0_51 = arith.constant 0 : index
      %c0_52 = arith.constant 0 : index
      %137 = vector.load %arg6[%c0_51, %c0_52] : memref<256x4xi32, #tpu.memory_space<vmem>>, vector<256x4xi32>
      tpu.vector_store %arg6[%c0_51, %c0_52], %136 {strides = array<i32>} : memref<256x4xi32, #tpu.memory_space<vmem>>, vector<256x4xi32>,
    } else {
    }
    %c512_i32 = arith.constant 512 : i32
    %3 = arith.muli %arg1, %c512_i32 : i32
    %4 = tpu.assume_multiple %3, 512 : i32
    %5 = arith.index_cast %4 : i32 to index
    %c0 = arith.constant 0 : index
    %6 = vector.load %arg3[%5, %c0] : memref<512x32xbf16, #tpu.memory_space<vmem>>, vector<512x32xbf16>
    %c0_1 = arith.constant 0 : index
    %c0_2 = arith.constant 0 : index
    %7 = vector.load %arg2[%c0_1, %c0_2] : memref<256x32xbf16, #tpu.memory_space<vmem>>, vector<256x32xbf16>
    %cst = arith.constant dense<0.000000e+00> : vector<256x512xf32>
    %8 = tpu.matmul %7, %6, %cst {dimension_numbers = #tpu.dot_dimension_numbers<[1], [1], [0], [0], [0, 0, 1, 0], [], []>} : vector<256x32xbf16>, vector<512x32xbf16>, vector<256x512xf32> -> vector<256x512xf32>
    %9 = tpu.iota {dimensions = array<i32: 1>} : vector<256x512xi32>
    %c512_i32_3 = arith.constant 512 : i32
    %10 = arith.muli %arg1, %c512_i32_3 : i32
    %c256_i32 = arith.constant 256 : i32
    %11 = arith.muli %arg0, %c256_i32 : i32
    %c512_i32_4 = arith.constant 512 : i32
    %12 = arith.addi %10, %c512_i32_4 : i32
    %13 = arith.cmpi slt, %11, %12 : i32
    %c1_i32 = arith.constant 1 : i32
    %14 = arith.addi %arg0, %c1_i32 : i32
    %c256_i32_5 = arith.constant 256 : i32
    %15 = arith.muli %14, %c256_i32_5 : i32
    %16 = arith.cmpi slt, %10, %15 : i32
    %17 = arith.andi %13, %16 : i1
    %18 = arith.extui %17 : i1 to i32
    %c0_i32_6 = arith.constant 0 : i32
    %19 = arith.cmpi ne, %18, %c0_i32_6 : i32
    %20 = scf.if %19 -> (vector<256x512xf32>) {
      %130 = tpu.iota {dimensions = array<i32: 0>} : vector<256x512xi32>
      %c256_i32_46 = arith.constant 256 : i32
      %131 = arith.muli %arg0, %c256_i32_46 : i32
      %132 = vector.broadcast %131 : i32 to vector<256x512xi32>
      %133 = arith.addi %130, %132 : vector<256x512xi32>
      %134 = vector.broadcast %10 : i32 to vector<256x512xi32>
      %135 = arith.addi %9, %134 : vector<256x512xi32>
      %136 = arith.cmpi eq, %133, %135 : vector<256x512xi32>
      %cst_47 = arith.constant 1.000000e+01 : f32
      %137 = vector.broadcast %cst_47 : f32 to vector<256x512xf32>
      %138 = arith.addf %8, %137 : vector<256x512xf32>
      %139 = arith.select %136, %138, %8 : vector<256x512xi1>, vector<256x512xf32>
      scf.yield %139 : vector<256x512xf32>
    } else {
      scf.yield %8 : vector<256x512xf32>
    }
    %cst_7 = arith.constant dense<0xFF800000> : vector<256xf32>
    %21 = vector.multi_reduction <maximumf>, %20, %cst_7 [1] : vector<256x512xf32> to vector<256xf32>
    %22 = vector.shape_cast %21 : vector<256xf32> to vector<256x1xf32>
    %23 = vector.broadcast %22 : vector<256x1xf32> to vector<256x512xf32>
    %24 = arith.cmpf oge, %20, %23 : vector<256x512xf32>
    %c512_i32_8 = arith.constant 512 : i32
    %25 = vector.broadcast %c512_i32_8 : i32 to vector<256x512xi32>
    %26 = arith.select %24, %9, %25 : vector<256x512xi1>, vector<256x512xi32>
    %cst_9 = arith.constant dense<2147483647> : vector<256xi32>
    %27 = vector.multi_reduction <minsi>, %26, %cst_9 [1] : vector<256x512xi32> to vector<256xi32>
    %28 = vector.shape_cast %27 : vector<256xi32> to vector<256x1xi32>
    %29 = vector.broadcast %10 : i32 to vector<256x1xi32>
    %30 = arith.addi %28, %29 : vector<256x1xi32>
    %31 = vector.broadcast %28 : vector<256x1xi32> to vector<256x512xi32>
    %32 = arith.cmpi eq, %9, %31 : vector<256x512xi32>
    %cst_10 = arith.constant 0xFF800000 : f32
    %33 = vector.broadcast %cst_10 : f32 to vector<256x512xf32>
    %34 = arith.select %32, %33, %20 : vector<256x512xi1>, vector<256x512xf32>
    %cst_11 = arith.constant dense<0xFF800000> : vector<256xf32>
    %35 = vector.multi_reduction <maximumf>, %34, %cst_11 [1] : vector<256x512xf32> to vector<256xf32>
    %36 = vector.shape_cast %35 : vector<256xf32> to vector<256x1xf32>
    %37 = vector.broadcast %36 : vector<256x1xf32> to vector<256x512xf32>
    %38 = arith.cmpf oge, %34, %37 : vector<256x512xf32>
    %c512_i32_12 = arith.constant 512 : i32
    %39 = vector.broadcast %c512_i32_12 : i32 to vector<256x512xi32>
    %40 = arith.select %38, %9, %39 : vector<256x512xi1>, vector<256x512xi32>
    %cst_13 = arith.constant dense<2147483647> : vector<256xi32>
    %41 = vector.multi_reduction <minsi>, %40, %cst_13 [1] : vector<256x512xi32> to vector<256xi32>
    %42 = vector.shape_cast %41 : vector<256xi32> to vector<256x1xi32>
    %43 = vector.broadcast %10 : i32 to vector<256x1xi32>
    %44 = arith.addi %42, %43 : vector<256x1xi32>
    %45 = vector.broadcast %42 : vector<256x1xi32> to vector<256x512xi32>
    %46 = arith.cmpi eq, %9, %45 : vector<256x512xi32>
    %cst_14 = arith.constant 0xFF800000 : f32
    %47 = vector.broadcast %cst_14 : f32 to vector<256x512xf32>
    %48 = arith.select %46, %47, %34 : vector<256x512xi1>, vector<256x512xf32>
    %cst_15 = arith.constant dense<0xFF800000> : vector<256xf32>
    %49 = vector.multi_reduction <maximumf>, %48, %cst_15 [1] : vector<256x512xf32> to vector<256xf32>
    %50 = vector.shape_cast %49 : vector<256xf32> to vector<256x1xf32>
    %51 = vector.broadcast %50 : vector<256x1xf32> to vector<256x512xf32>
    %52 = arith.cmpf oge, %48, %51 : vector<256x512xf32>
    %c512_i32_16 = arith.constant 512 : i32
    %53 = vector.broadcast %c512_i32_16 : i32 to vector<256x512xi32>
    %54 = arith.select %52, %9, %53 : vector<256x512xi1>, vector<256x512xi32>
    %cst_17 = arith.constant dense<2147483647> : vector<256xi32>
    %55 = vector.multi_reduction <minsi>, %54, %cst_17 [1] : vector<256x512xi32> to vector<256xi32>
    %56 = vector.shape_cast %55 : vector<256xi32> to vector<256x1xi32>
    %57 = vector.broadcast %10 : i32 to vector<256x1xi32>
    %58 = arith.addi %56, %57 : vector<256x1xi32>
    %59 = vector.broadcast %56 : vector<256x1xi32> to vector<256x512xi32>
    %60 = arith.cmpi eq, %9, %59 : vector<256x512xi32>
    %cst_18 = arith.constant 0xFF800000 : f32
    %61 = vector.broadcast %cst_18 : f32 to vector<256x512xf32>
    %62 = arith.select %60, %61, %48 : vector<256x512xi1>, vector<256x512xf32>
    %cst_19 = arith.constant dense<0xFF800000> : vector<256xf32>
    %63 = vector.multi_reduction <maximumf>, %62, %cst_19 [1] : vector<256x512xf32> to vector<256xf32>
    %64 = vector.shape_cast %63 : vector<256xf32> to vector<256x1xf32>
    %65 = vector.broadcast %64 : vector<256x1xf32> to vector<256x512xf32>
    %66 = arith.cmpf oge, %62, %65 : vector<256x512xf32>
    %c512_i32_20 = arith.constant 512 : i32
    %67 = vector.broadcast %c512_i32_20 : i32 to vector<256x512xi32>
    %68 = arith.select %66, %9, %67 : vector<256x512xi1>, vector<256x512xi32>
    %cst_21 = arith.constant dense<2147483647> : vector<256xi32>
    %69 = vector.multi_reduction <minsi>, %68, %cst_21 [1] : vector<256x512xi32> to vector<256xi32>
    %70 = vector.shape_cast %69 : vector<256xi32> to vector<256x1xi32>
    %71 = vector.broadcast %10 : i32 to vector<256x1xi32>
    %72 = arith.addi %70, %71 : vector<256x1xi32>
    %73 = tpu.concatenate %22, %36, %50, %64 in 1 : vector<256x1xf32>, vector<256x1xf32>, vector<256x1xf32>, vector<256x1xf32> -> vector<256x4xf32>
    %74 = tpu.concatenate %30, %44, %58, %72 in 1 : vector<256x1xi32>, vector<256x1xi32>, vector<256x1xi32>, vector<256x1xi32> -> vector<256x4xi32>
    %c0_22 = arith.constant 0 : index
    %c0_23 = arith.constant 0 : index
    %75 = vector.load %arg5[%c0_22, %c0_23] : memref<256x4xf32, #tpu.memory_space<vmem>>, vector<256x4xf32>
    %76 = tpu.concatenate %75, %73 in 1 : vector<256x4xf32>, vector<256x4xf32> -> vector<256x8xf32>
    %c0_24 = arith.constant 0 : index
    %c0_25 = arith.constant 0 : index
    %77 = vector.load %arg6[%c0_24, %c0_25] : memref<256x4xi32, #tpu.memory_space<vmem>>, vector<256x4xi32>
    %78 = tpu.concatenate %77, %74 in 1 : vector<256x4xi32>, vector<256x4xi32> -> vector<256x8xi32>
    %cst_26 = arith.constant dense<0xFF800000> : vector<256xf32>
    %79 = vector.multi_reduction <maximumf>, %76, %cst_26 [1] : vector<256x8xf32> to vector<256xf32>
    %80 = vector.shape_cast %79 : vector<256xf32> to vector<256x1xf32>
    %81 = vector.broadcast %80 : vector<256x1xf32> to vector<256x8xf32>
    %82 = arith.cmpf oge, %76, %81 : vector<256x8xf32>
    %c1073741824_i32 = arith.constant 1073741824 : i32
    %83 = vector.broadcast %c1073741824_i32 : i32 to vector<256x8xi32>
    %84 = arith.select %82, %78, %83 : vector<256x8xi1>, vector<256x8xi32>
    %cst_27 = arith.constant dense<2147483647> : vector<256xi32>
    %85 = vector.multi_reduction <minsi>, %84, %cst_27 [1] : vector<256x8xi32> to vector<256xi32>
    %86 = vector.shape_cast %85 : vector<256xi32> to vector<256x1xi32>
    %87 = vector.broadcast %86 : vector<256x1xi32> to vector<256x8xi32>
    %88 = arith.cmpi eq, %78, %87 : vector<256x8xi32>
    %cst_28 = arith.constant 0xFF800000 : f32
    %89 = vector.broadcast %cst_28 : f32 to vector<256x8xf32>
    %90 = arith.select %88, %89, %76 : vector<256x8xi1>, vector<256x8xf32>
    %cst_29 = arith.constant dense<0xFF800000> : vector<256xf32>
    %91 = vector.multi_reduction <maximumf>, %90, %cst_29 [1] : vector<256x8xf32> to vector<256xf32>
    %92 = vector.shape_cast %91 : vector<256xf32> to vector<256x1xf32>
    %93 = vector.broadcast %92 : vector<256x1xf32> to vector<256x8xf32>
    %94 = arith.cmpf oge, %90, %93 : vector<256x8xf32>
    %c1073741824_i32_30 = arith.constant 1073741824 : i32
    %95 = vector.broadcast %c1073741824_i32_30 : i32 to vector<256x8xi32>
    %96 = arith.select %94, %78, %95 : vector<256x8xi1>, vector<256x8xi32>
    %cst_31 = arith.constant dense<2147483647> : vector<256xi32>
    %97 = vector.multi_reduction <minsi>, %96, %cst_31 [1] : vector<256x8xi32> to vector<256xi32>
    %98 = vector.shape_cast %97 : vector<256xi32> to vector<256x1xi32>
    %99 = vector.broadcast %98 : vector<256x1xi32> to vector<256x8xi32>
    %100 = arith.cmpi eq, %78, %99 : vector<256x8xi32>
    %cst_32 = arith.constant 0xFF800000 : f32
    %101 = vector.broadcast %cst_32 : f32 to vector<256x8xf32>
    %102 = arith.select %100, %101, %90 : vector<256x8xi1>, vector<256x8xf32>
    %cst_33 = arith.constant dense<0xFF800000> : vector<256xf32>
    %103 = vector.multi_reduction <maximumf>, %102, %cst_33 [1] : vector<256x8xf32> to vector<256xf32>
    %104 = vector.shape_cast %103 : vector<256xf32> to vector<256x1xf32>
    %105 = vector.broadcast %104 : vector<256x1xf32> to vector<256x8xf32>
    %106 = arith.cmpf oge, %102, %105 : vector<256x8xf32>
    %c1073741824_i32_34 = arith.constant 1073741824 : i32
    %107 = vector.broadcast %c1073741824_i32_34 : i32 to vector<256x8xi32>
    %108 = arith.select %106, %78, %107 : vector<256x8xi1>, vector<256x8xi32>
    %cst_35 = arith.constant dense<2147483647> : vector<256xi32>
    %109 = vector.multi_reduction <minsi>, %108, %cst_35 [1] : vector<256x8xi32> to vector<256xi32>
    %110 = vector.shape_cast %109 : vector<256xi32> to vector<256x1xi32>
    %111 = vector.broadcast %110 : vector<256x1xi32> to vector<256x8xi32>
    %112 = arith.cmpi eq, %78, %111 : vector<256x8xi32>
    %cst_36 = arith.constant 0xFF800000 : f32
    %113 = vector.broadcast %cst_36 : f32 to vector<256x8xf32>
    %114 = arith.select %112, %113, %102 : vector<256x8xi1>, vector<256x8xf32>
    %cst_37 = arith.constant dense<0xFF800000> : vector<256xf32>
    %115 = vector.multi_reduction <maximumf>, %114, %cst_37 [1] : vector<256x8xf32> to vector<256xf32>
    %116 = vector.shape_cast %115 : vector<256xf32> to vector<256x1xf32>
    %117 = vector.broadcast %116 : vector<256x1xf32> to vector<256x8xf32>
    %118 = arith.cmpf oge, %114, %117 : vector<256x8xf32>
    %c1073741824_i32_38 = arith.constant 1073741824 : i32
    %119 = vector.broadcast %c1073741824_i32_38 : i32 to vector<256x8xi32>
    %120 = arith.select %118, %78, %119 : vector<256x8xi1>, vector<256x8xi32>
    %cst_39 = arith.constant dense<2147483647> : vector<256xi32>
    %121 = vector.multi_reduction <minsi>, %120, %cst_39 [1] : vector<256x8xi32> to vector<256xi32>
    %122 = vector.shape_cast %121 : vector<256xi32> to vector<256x1xi32>
    %123 = tpu.concatenate %80, %92, %104, %116 in 1 : vector<256x1xf32>, vector<256x1xf32>, vector<256x1xf32>, vector<256x1xf32> -> vector<256x4xf32>
    %c0_40 = arith.constant 0 : index
    %c0_41 = arith.constant 0 : index
    %124 = vector.load %arg5[%c0_40, %c0_41] : memref<256x4xf32, #tpu.memory_space<vmem>>, vector<256x4xf32>
    tpu.vector_store %arg5[%c0_40, %c0_41], %123 {strides = array<i32>} : memref<256x4xf32, #tpu.memory_space<vmem>>, vector<256x4xf32>,
    %125 = tpu.concatenate %86, %98, %110, %122 in 1 : vector<256x1xi32>, vector<256x1xi32>, vector<256x1xi32>, vector<256x1xi32> -> vector<256x4xi32>
    %c0_42 = arith.constant 0 : index
    %c0_43 = arith.constant 0 : index
    %126 = vector.load %arg6[%c0_42, %c0_43] : memref<256x4xi32, #tpu.memory_space<vmem>>, vector<256x4xi32>
    tpu.vector_store %arg6[%c0_42, %c0_43], %125 {strides = array<i32>} : memref<256x4xi32, #tpu.memory_space<vmem>>, vector<256x4xi32>,
    %c0_i32_44 = arith.constant 0 : i32
    %127 = arith.cmpi eq, %arg1, %c0_i32_44 : i32
    %128 = arith.extui %127 : i1 to i32
    %c0_i32_45 = arith.constant 0 : i32
    %129 = arith.cmpi ne, %128, %c0_i32_45 : i32
    scf.if %129 {
      %c0_46 = arith.constant 0 : index
      %c0_47 = arith.constant 0 : index
      %130 = vector.load %arg6[%c0_46, %c0_47] : memref<256x4xi32, #tpu.memory_space<vmem>>, vector<256x4xi32>
      %c0_48 = arith.constant 0 : index
      %c0_49 = arith.constant 0 : index
      %131 = vector.load %arg4[%c0_48, %c0_49] : memref<256x4xi32, #tpu.memory_space<vmem>>, vector<256x4xi32>
      tpu.vector_store %arg4[%c0_48, %c0_49], %130 {strides = array<i32>} : memref<256x4xi32, #tpu.memory_space<vmem>>, vector<256x4xi32>,
    } else {
    }
    return
  }
  func.func @transform_0(%arg0: i32, %arg1: i32) -> (i32, i32) {
    %c0_i32 = arith.constant 0 : i32
    %c0_i32_0 = arith.constant 0 : i32
    return %arg0, %c0_i32 : i32, i32
  }
  func.func @transform_1(%arg0: i32, %arg1: i32) -> (i32, i32) {
    %c0_i32 = arith.constant 0 : i32
    %c0_i32_0 = arith.constant 0 : i32
    %c0_i32_1 = arith.constant 0 : i32
    return %c0_i32, %c0_i32_0 : i32, i32
  }
  func.func @transform_2(%arg0: i32, %arg1: i32) -> (i32, i32) {
    %c0_i32 = arith.constant 0 : i32
    %c0_i32_0 = arith.constant 0 : i32
    return %arg0, %c0_i32 : i32, i32
  }
}

</mosaic_0001>

<llo_original>
// kernel: tpu_custom_call.1
$region0: #{tpu_custom_call.1}
  #allocation0 [shape = 'u32[]', space=smem, size = 0x4, offset = 0x4, fixed_abs, tag = 'smem constant byte address 0x4 - core index']
  #allocation1 [shape = 'u32[144,128]{1,0:T(1,128)}', space=vmem, size = 0x12000, scoped, tag = 'internal scratch']
  #allocation2 [shape = 'f32[256,4]{1,0:T(8,128)}', space=vmem, size = 0x20000, scoped, tag = 'scratch operand']
  #allocation3 [shape = 's32[256,4]{1,0:T(8,128)}', space=vmem, size = 0x20000, scoped, tag = 'scratch operand']
  %s0 = inlined_call_operand.vmem [shape: bf16[512,32], index: 0, kind: input, shape index: {}]
  %s1 = inlined_call_operand.vmem [shape: bf16[512,32], index: 1, kind: input, shape index: {}]
  %s2 = inlined_call_operand.vmem [shape: s32[512,4], index: 2, kind: output, shape index: {}]
  %s3 = sld [smem:[#allocation0]]
  $region57: #{tpu_custom_call.1} parent=0
    _
  %s5 = ssub.s32 1, %s3
  %s6 = scalar_select 0, %s5, %s3
  loop: start=0, step=1, limit=4
  $region2: #{tpu_custom_call.1} parent=0 // loop_pre_header
    _
  $region3: #{tpu_custom_call.1} parent=0 // loop_header
    %s8 = sphi 0, %s12
    %p9 = scmp.ge.s32.totalorder %s8, 4
    %s15 = sphi 0, %s27
    %s16 = sphi 0, %s23
    %s17 = sphi 0, %s15
    %s18 = sphi 0, %s16
    %s19 = sphi 0, %s17
    %s20 = sphi 0, %s18
    %s30 = sphi 0, %s32
    %s33 = sphi 0, %s30
    %s34 = sphi 0, %s33
    %s50 = sphi 0, %s34
    %s54 = sphi 0, %s54
    %s56 = sphi 0, %s54
    %s57 = sphi 0, %s56
    %s71 = sphi 0, %s57
    %s77 = sphi 0, %s79
    %s80 = sphi 0, %s77
    %s81 = sphi 0, %s80
    %s97 = sphi 0, %s81
  $region4: #{tpu_custom_call.1} parent=0 // loop_header_branch
    %11 = sbr.rel (%p9) target = $region8
  $region5: #{tpu_custom_call.1} parent=0 // loop_body
    %s13 = ssub.s32 %s8, 1
    %s14 = ssub.s32 %s8, 2
    %s21 = sadd.s32 1, %s16
    %p22 = scmp.ge.s32.totalorder %s21, 1
    %s23 = scalar_select %p22, 0, %s21
    %s24 = sadd.s32 1, %s15
    %s25 = scalar_select %p22, %s24, %s15
    %p26 = scmp.ge.s32.totalorder %s25, 2
    %s27 = scalar_select %p26, 0, %s25
    %s28 = ssub.s32 %s15, %s27
    %p29 = scmp.eq.s32.totalorder %s28, 0
    %s31 = sadd.s32 %s30, 1
    %s32 = scalar_select %p29, %s30, %s31
    %p35 = pneg %p29
    %p36 = scmp.eq.s32.totalorder %s8, 1
    %p37 = por %p35, %p36
    %p38 = scmp.ne.s32.totalorder %s30, %s33
    %p39 = scmp.eq.s32.totalorder %s8, 0
    %p40 = por %p38, %p39
    %p41 = scmp.ne.s32.totalorder %s30, %s33
    %p42 = scmp.eq.s32.totalorder %s13, 1
    %p43 = por %p41, %p42
    %p44 = scmp.ne.s32.totalorder %s33, %s34
    %p45 = scmp.eq.s32.totalorder %s13, 0
    %p46 = por %p44, %p45
    %p47 = scmp.ne.s32.totalorder %s33, %s34
    %p48 = scmp.eq.s32.totalorder %s14, 1
    %p49 = por %p47, %p48
    %p51 = scmp.ne.s32.totalorder %s34, %s50
    %p52 = scmp.eq.s32.totalorder %s14, 0
    %p53 = por %p51, %p52
    %s55 = sadd.s32 %s54, 1
    %p58 = scmp.eq.s32.totalorder %s8, 1
    %p59 = scmp.ne.s32.totalorder %s54, %s56
    %p60 = scmp.eq.s32.totalorder %s8, 0
    %p61 = por %p59, %p60
    %p62 = scmp.ne.s32.totalorder %s54, %s56
    %p63 = scmp.eq.s32.totalorder %s13, 1
    %p64 = por %p62, %p63
    %p65 = scmp.ne.s32.totalorder %s56, %s57
    %p66 = scmp.eq.s32.totalorder %s13, 0
    %p67 = por %p65, %p66
    %p68 = scmp.ne.s32.totalorder %s56, %s57
    %p69 = scmp.eq.s32.totalorder %s14, 1
    %p70 = por %p68, %p69
    %p72 = scmp.ne.s32.totalorder %s57, %s71
    %p73 = scmp.eq.s32.totalorder %s14, 0
    %p74 = por %p72, %p73
    %s75 = ssub.s32 %s15, %s27
    %p76 = scmp.eq.s32.totalorder %s75, 0
    %s78 = sadd.s32 %s77, 1
    %s79 = scalar_select %p76, %s77, %s78
    %p82 = pneg %p76
    %p83 = scmp.eq.s32.totalorder %s8, 1
    %p84 = por %p82, %p83
    %p85 = scmp.ne.s32.totalorder %s77, %s80
    %p86 = scmp.eq.s32.totalorder %s8, 0
    %p87 = por %p85, %p86
    %p88 = scmp.ne.s32.totalorder %s77, %s80
    %p89 = scmp.eq.s32.totalorder %s13, 1
    %p90 = por %p88, %p89
    %p91 = scmp.ne.s32.totalorder %s80, %s81
    %p92 = scmp.eq.s32.totalorder %s13, 0
    %p93 = por %p91, %p92
    %p94 = scmp.ne.s32.totalorder %s80, %s81
    %p95 = scmp.eq.s32.totalorder %s14, 1
    %p96 = por %p94, %p95
    %p98 = scmp.ne.s32.totalorder %s81, %s97
    %p99 = scmp.eq.s32.totalorder %s14, 0
    %p100 = por %p98, %p99
    %p101 = scmp.le.s32.totalorder 1, %s8
    %p102 = scmp.lt.s32.totalorder %s8, 3
    %p103 = pnand %p101, %p102
    %p104 = pneg %p103
    // Predicated region
    $region9: #{tpu_custom_call.1} parent=5 // pred_check
      _
    $region10: #{tpu_custom_call.1} parent=5 // pred_check_branch
      %106 = sbr.rel (%p103) target = $region12
    $region11: #{tpu_custom_call.1} parent=5 // pred_region
      %s107 = ssub.s32 %s8, 1
      // Predicated region
      $region13: #{tpu_custom_call.1} parent=11 // pred_check
        %p108 = pneg %p67
      $region14: #{tpu_custom_call.1} parent=11 // pred_check_branch
        %110 = sbr.rel (%p108) target = $region16
      $region15: #{tpu_custom_call.1} parent=11 // pred_region
        _
      $region16: #{tpu_custom_call.1} parent=11 // pred_fallthru
        _
    $region12: #{tpu_custom_call.1} parent=5 // pred_fallthru
      _
    %p111 = scmp.lt.s32.totalorder %s8, 2
    // Predicated region
    $region17: #{tpu_custom_call.1} parent=5 // pred_check
      %p112 = pneg %p111
    $region18: #{tpu_custom_call.1} parent=5 // pred_check_branch
      %114 = sbr.rel (%p112) target = $region20
    $region19: #{tpu_custom_call.1} parent=5 // pred_region
      // Predicated region
      $region21: #{tpu_custom_call.1} parent=19 // pred_check
        %p115 = pneg %p40
      $region22: #{tpu_custom_call.1} parent=19 // pred_check_branch
        %117 = sbr.rel (%p115) target = $region24
      $region23: #{tpu_custom_call.1} parent=19 // pred_region
        %s118 = smul.u32 32, %s15
        %p119 = scmp.lt.s32.totalorder %s118, 63
        %s120 = scalar_select %p119, %s118, 63
        %s121 = smul.addr %s120, 4
        %s122 = scalar_lea.vmem %s0, %s121
        %s123 = smul.u32 32, %s15
      $region24: #{tpu_custom_call.1} parent=19 // pred_fallthru
        _
    $region20: #{tpu_custom_call.1} parent=5 // pred_fallthru
      _
    %p124 = scmp.le.s32.totalorder 1, %s8
    %p125 = scmp.lt.s32.totalorder %s8, 3
    %p126 = pnand %p124, %p125
    %p127 = pneg %p126
    // Predicated region
    $region25: #{tpu_custom_call.1} parent=5 // pred_check
      _
    $region26: #{tpu_custom_call.1} parent=5 // pred_check_branch
      %129 = sbr.rel (%p126) target = $region28
    $region27: #{tpu_custom_call.1} parent=5 // pred_region
      %s130 = ssub.s32 %s8, 1
      %s131 = smul.u32 32, %s17
      %p132 = scmp.lt.s32.totalorder %s131, 63
      %s133 = scalar_select %p132, %s131, 63
      %s134 = smul.addr %s133, 4
      %s135 = scalar_lea.vmem %s0, %s134
      %p136 = pneg %p46
      %p137 = pneg %p43
      %p138 = pneg %p67
      %p139 = pneg %p64
      %p140 = pneg %p93
      %p141 = pneg %p90
      %s142 = smul.u32 32, %s17
      %p143 = scmp.lt.s32.totalorder %s142, 63
      %s144 = scalar_select %p143, %s142, 63
      %s145 = smul.addr %s144, 8
      %s146 = scalar_lea.vmem %s2, %s145
      %s147 = smul.u32 32, %s17
      %p148 = scmp.lt.s32.totalorder %s147, 63
      %s149 = scalar_select %p148, %s147, 63
      %s150 = smul.addr %s149, 4
      %s151 = scalar_lea.vmem %s0, %s150
      %s152 = smul.u32 32, %s17
      %s153 = smul.u32 32, %s17
      %p154 = scmp.lt.s32.totalorder %s153, 63
      %s155 = scalar_select %p154, %s153, 63
      %s156 = smul.addr %s155, 8
      %s157 = scalar_lea.vmem %s2, %s156
      %s158 = smul.u32 32, %s17
      %p160 = scmp.eq.s32.totalorder %s18, 0
      // Predicated region
      $region29: #{tpu_custom_call.1} parent=27 // pred_check
        %p161 = pneg %p160
      $region30: #{tpu_custom_call.1} parent=27 // pred_check_branch
        %163 = sbr.rel (%p161) target = $region32
      $region31: #{tpu_custom_call.1} parent=27 // pred_region
        %vm164 = vcmask 31744
        %165 = vst.msk [vmem:[#allocation2] sm:$0xff] %vm164, -inf
        %166 = vst.msk [vmem:[#allocation2 + $0x8] sm:$0xff] %vm164, -inf
        %167 = vst.msk [vmem:[#allocation2 + $0x10] sm:$0xff] %vm164, -inf
        %168 = vst.msk [vmem:[#allocation2 + $0x18] sm:$0xff] %vm164, -inf
        %169 = vst.msk [vmem:[#allocation2 + $0x20] sm:$0xff] %vm164, -inf
        %170 = vst.msk [vmem:[#allocation2 + $0x28] sm:$0xff] %vm164, -inf
        %171 = vst.msk [vmem:[#allocation2 + $0x30] sm:$0xff] %vm164, -inf
        %172 = vst.msk [vmem:[#allocation2 + $0x38] sm:$0xff] %vm164, -inf
        %173 = vst.msk [vmem:[#allocation2 + $0x40] sm:$0xff] %vm164, -inf
        %174 = vst.msk [vmem:[#allocation2 + $0x48] sm:$0xff] %vm164, -inf
        %175 = vst.msk [vmem:[#allocation2 + $0x50] sm:$0xff] %vm164, -inf
        %176 = vst.msk [vmem:[#allocation2 + $0x58] sm:$0xff] %vm164, -inf
        %177 = vst.msk [vmem:[#allocation2 + $0x60] sm:$0xff] %vm164, -inf
        %178 = vst.msk [vmem:[#allocation2 + $0x68] sm:$0xff] %vm164, -inf
        %179 = vst.msk [vmem:[#allocation2 + $0x70] sm:$0xff] %vm164, -inf
        %180 = vst.msk [vmem:[#allocation2 + $0x78] sm:$0xff] %vm164, -inf
        %181 = vst.msk [vmem:[#allocation2 + $0x80] sm:$0xff] %vm164, -inf
        %182 = vst.msk [vmem:[#allocation2 + $0x88] sm:$0xff] %vm164, -inf
        %183 = vst.msk [vmem:[#allocation2 + $0x90] sm:$0xff] %vm164, -inf
        %184 = vst.msk [vmem:[#allocation2 + $0x98] sm:$0xff] %vm164, -inf
        %185 = vst.msk [vmem:[#allocation2 + $0xa0] sm:$0xff] %vm164, -inf
        %186 = vst.msk [vmem:[#allocation2 + $0xa8] sm:$0xff] %vm164, -inf
        %187 = vst.msk [vmem:[#allocation2 + $0xb0] sm:$0xff] %vm164, -inf
        %188 = vst.msk [vmem:[#allocation2 + $0xb8] sm:$0xff] %vm164, -inf
        %189 = vst.msk [vmem:[#allocation2 + $0xc0] sm:$0xff] %vm164, -inf
        %190 = vst.msk [vmem:[#allocation2 + $0xc8] sm:$0xff] %vm164, -inf
        %191 = vst.msk [vmem:[#allocation2 + $0xd0] sm:$0xff] %vm164, -inf
        %192 = vst.msk [vmem:[#allocation2 + $0xd8] sm:$0xff] %vm164, -inf
        %193 = vst.msk [vmem:[#allocation2 + $0xe0] sm:$0xff] %vm164, -inf
        %194 = vst.msk [vmem:[#allocation2 + $0xe8] sm:$0xff] %vm164, -inf
        %195 = vst.msk [vmem:[#allocation2 + $0xf0] sm:$0xff] %vm164, -inf
        %196 = vst.msk [vmem:[#allocation2 + $0xf8] sm:$0xff] %vm164, -inf
        %v197 = vlaneseq
        %v198 = vand.u32 %v197, 127
        %v199 = vadd.s32 %v198, 1
        %v200 = vsub.s32 0, %v199
        %201 = vst.msk [vmem:[#allocation3] sm:$0xff] %vm164, %v200
        %202 = vst.msk [vmem:[#allocation3 + $0x8] sm:$0xff] %vm164, %v200
        %203 = vst.msk [vmem:[#allocation3 + $0x10] sm:$0xff] %vm164, %v200
        %204 = vst.msk [vmem:[#allocation3 + $0x18] sm:$0xff] %vm164, %v200
        %205 = vst.msk [vmem:[#allocation3 + $0x20] sm:$0xff] %vm164, %v200
        %206 = vst.msk [vmem:[#allocation3 + $0x28] sm:$0xff] %vm164, %v200
        %207 = vst.msk [vmem:[#allocation3 + $0x30] sm:$0xff] %vm164, %v200
        %208 = vst.msk [vmem:[#allocation3 + $0x38] sm:$0xff] %vm164, %v200
        %209 = vst.msk [vmem:[#allocation3 + $0x40] sm:$0xff] %vm164, %v200
        %210 = vst.msk [vmem:[#allocation3 + $0x48] sm:$0xff] %vm164, %v200
        %211 = vst.msk [vmem:[#allocation3 + $0x50] sm:$0xff] %vm164, %v200
        %212 = vst.msk [vmem:[#allocation3 + $0x58] sm:$0xff] %vm164, %v200
        %213 = vst.msk [vmem:[#allocation3 + $0x60] sm:$0xff] %vm164, %v200
        %214 = vst.msk [vmem:[#allocation3 + $0x68] sm:$0xff] %vm164, %v200
        %215 = vst.msk [vmem:[#allocation3 + $0x70] sm:$0xff] %vm164, %v200
        %216 = vst.msk [vmem:[#allocation3 + $0x78] sm:$0xff] %vm164, %v200
        %217 = vst.msk [vmem:[#allocation3 + $0x80] sm:$0xff] %vm164, %v200
        %218 = vst.msk [vmem:[#allocation3 + $0x88] sm:$0xff] %vm164, %v200
        %219 = vst.msk [vmem:[#allocation3 + $0x90] sm:$0xff] %vm164, %v200
        %220 = vst.msk [vmem:[#allocation3 + $0x98] sm:$0xff] %vm164, %v200
        %221 = vst.msk [vmem:[#allocation3 + $0xa0] sm:$0xff] %vm164, %v200
        %222 = vst.msk [vmem:[#allocation3 + $0xa8] sm:$0xff] %vm164, %v200
        %223 = vst.msk [vmem:[#allocation3 + $0xb0] sm:$0xff] %vm164, %v200
        %224 = vst.msk [vmem:[#allocation3 + $0xb8] sm:$0xff] %vm164, %v200
        %225 = vst.msk [vmem:[#allocation3 + $0xc0] sm:$0xff] %vm164, %v200
        %226 = vst.msk [vmem:[#allocation3 + $0xc8] sm:$0xff] %vm164, %v200
        %227 = vst.msk [vmem:[#allocation3 + $0xd0] sm:$0xff] %vm164, %v200
        %228 = vst.msk [vmem:[#allocation3 + $0xd8] sm:$0xff] %vm164, %v200
        %229 = vst.msk [vmem:[#allocation3 + $0xe0] sm:$0xff] %vm164, %v200
        %230 = vst.msk [vmem:[#allocation3 + $0xe8] sm:$0xff] %vm164, %v200
        %231 = vst.msk [vmem:[#allocation3 + $0xf0] sm:$0xff] %vm164, %v200
        %232 = vst.msk [vmem:[#allocation3 + $0xf8] sm:$0xff] %vm164, %v200
      $region32: #{tpu_custom_call.1} parent=27 // pred_fallthru
        _
      %s233 = smul.u32 %s18, 512
      %s234 = sshra.s32 %s233, 3
      %s235 = sand.u32 %s233, 7
      %s236 = smul.addr %s234, 4
      %s237 = scalar_lea.vmem %s1, %s236
      %v238 = vld [vmem:[%s237] sm:$0xf]
      %v239 = vld [vmem:[%s237 + $0x4] sm:$0xf]
      %v240 = vld [vmem:[%s237 + $0x8] sm:$0xf]
      %v241 = vld [vmem:[%s237 + $0xc] sm:$0xf]
      %v242 = vld [vmem:[%s237 + $0x10] sm:$0xf]
      %v243 = vld [vmem:[%s237 + $0x14] sm:$0xf]
      %v244 = vld [vmem:[%s237 + $0x18] sm:$0xf]
      %v245 = vld [vmem:[%s237 + $0x1c] sm:$0xf]
      %v246 = vld [vmem:[%s237 + $0x20] sm:$0xf]
      %v247 = vld [vmem:[%s237 + $0x24] sm:$0xf]
      %v248 = vld [vmem:[%s237 + $0x28] sm:$0xf]
      %v249 = vld [vmem:[%s237 + $0x2c] sm:$0xf]
      %v250 = vld [vmem:[%s237 + $0x30] sm:$0xf]
      %v251 = vld [vmem:[%s237 + $0x34] sm:$0xf]
      %v252 = vld [vmem:[%s237 + $0x38] sm:$0xf]
      %v253 = vld [vmem:[%s237 + $0x3c] sm:$0xf]
      %v254 = vld [vmem:[%s237 + $0x40] sm:$0xf]
      %v255 = vld [vmem:[%s237 + $0x44] sm:$0xf]
      %v256 = vld [vmem:[%s237 + $0x48] sm:$0xf]
      %v257 = vld [vmem:[%s237 + $0x4c] sm:$0xf]
      %v258 = vld [vmem:[%s237 + $0x50] sm:$0xf]
      %v259 = vld [vmem:[%s237 + $0x54] sm:$0xf]
      %v260 = vld [vmem:[%s237 + $0x58] sm:$0xf]
      %v261 = vld [vmem:[%s237 + $0x5c] sm:$0xf]
      %v262 = vld [vmem:[%s237 + $0x60] sm:$0xf]
      %v263 = vld [vmem:[%s237 + $0x64] sm:$0xf]
      %v264 = vld [vmem:[%s237 + $0x68] sm:$0xf]
      %v265 = vld [vmem:[%s237 + $0x6c] sm:$0xf]
      %v266 = vld [vmem:[%s237 + $0x70] sm:$0xf]
      %v267 = vld [vmem:[%s237 + $0x74] sm:$0xf]
      %v268 = vld [vmem:[%s237 + $0x78] sm:$0xf]
      %v269 = vld [vmem:[%s237 + $0x7c] sm:$0xf]
      %v270 = vld [vmem:[%s237 + $0x80] sm:$0xf]
      %v271 = vld [vmem:[%s237 + $0x84] sm:$0xf]
      %v272 = vld [vmem:[%s237 + $0x88] sm:$0xf]
      %v273 = vld [vmem:[%s237 + $0x8c] sm:$0xf]
      %v274 = vld [vmem:[%s237 + $0x90] sm:$0xf]
      %v275 = vld [vmem:[%s237 + $0x94] sm:$0xf]
      %v276 = vld [vmem:[%s237 + $0x98] sm:$0xf]
      %v277 = vld [vmem:[%s237 + $0x9c] sm:$0xf]
      %v278 = vld [vmem:[%s237 + $0xa0] sm:$0xf]
      %v279 = vld [vmem:[%s237 + $0xa4] sm:$0xf]
      %v280 = vld [vmem:[%s237 + $0xa8] sm:$0xf]
      %v281 = vld [vmem:[%s237 + $0xac] sm:$0xf]
      %v282 = vld [vmem:[%s237 + $0xb0] sm:$0xf]
      %v283 = vld [vmem:[%s237 + $0xb4] sm:$0xf]
      %v284 = vld [vmem:[%s237 + $0xb8] sm:$0xf]
      %v285 = vld [vmem:[%s237 + $0xbc] sm:$0xf]
      %v286 = vld [vmem:[%s237 + $0xc0] sm:$0xf]
      %v287 = vld [vmem:[%s237 + $0xc4] sm:$0xf]
      %v288 = vld [vmem:[%s237 + $0xc8] sm:$0xf]
      %v289 = vld [vmem:[%s237 + $0xcc] sm:$0xf]
      %v290 = vld [vmem:[%s237 + $0xd0] sm:$0xf]
      %v291 = vld [vmem:[%s237 + $0xd4] sm:$0xf]
      %v292 = vld [vmem:[%s237 + $0xd8] sm:$0xf]
      %v293 = vld [vmem:[%s237 + $0xdc] sm:$0xf]
      %v294 = vld [vmem:[%s237 + $0xe0] sm:$0xf]
      %v295 = vld [vmem:[%s237 + $0xe4] sm:$0xf]
      %v296 = vld [vmem:[%s237 + $0xe8] sm:$0xf]
      %v297 = vld [vmem:[%s237 + $0xec] sm:$0xf]
      %v298 = vld [vmem:[%s237 + $0xf0] sm:$0xf]
      %v299 = vld [vmem:[%s237 + $0xf4] sm:$0xf]
      %v300 = vld [vmem:[%s237 + $0xf8] sm:$0xf]
      %v301 = vld [vmem:[%s237 + $0xfc] sm:$0xf]
      %v302 = vld [vmem:[%s151] sm:$0xf]
      %v303 = vld [vmem:[%s151 + $0x4] sm:$0xf]
      %v304 = vld [vmem:[%s151 + $0x8] sm:$0xf]
      %v305 = vld [vmem:[%s151 + $0xc] sm:$0xf]
      %v306 = vld [vmem:[%s151 + $0x10] sm:$0xf]
      %v307 = vld [vmem:[%s151 + $0x14] sm:$0xf]
      %v308 = vld [vmem:[%s151 + $0x18] sm:$0xf]
      %v309 = vld [vmem:[%s151 + $0x1c] sm:$0xf]
      %v310 = vld [vmem:[%s151 + $0x20] sm:$0xf]
      %v311 = vld [vmem:[%s151 + $0x24] sm:$0xf]
      %v312 = vld [vmem:[%s151 + $0x28] sm:$0xf]
      %v313 = vld [vmem:[%s151 + $0x2c] sm:$0xf]
      %v314 = vld [vmem:[%s151 + $0x30] sm:$0xf]
      %v315 = vld [vmem:[%s151 + $0x34] sm:$0xf]
      %v316 = vld [vmem:[%s151 + $0x38] sm:$0xf]
      %v317 = vld [vmem:[%s151 + $0x3c] sm:$0xf]
      %v318 = vld [vmem:[%s151 + $0x40] sm:$0xf]
      %v319 = vld [vmem:[%s151 + $0x44] sm:$0xf]
      %v320 = vld [vmem:[%s151 + $0x48] sm:$0xf]
      %v321 = vld [vmem:[%s151 + $0x4c] sm:$0xf]
      %v322 = vld [vmem:[%s151 + $0x50] sm:$0xf]
      %v323 = vld [vmem:[%s151 + $0x54] sm:$0xf]
      %v324 = vld [vmem:[%s151 + $0x58] sm:$0xf]
      %v325 = vld [vmem:[%s151 + $0x5c] sm:$0xf]
      %v326 = vld [vmem:[%s151 + $0x60] sm:$0xf]
      %v327 = vld [vmem:[%s151 + $0x64] sm:$0xf]
      %v328 = vld [vmem:[%s151 + $0x68] sm:$0xf]
      %v329 = vld [vmem:[%s151 + $0x6c] sm:$0xf]
      %v330 = vld [vmem:[%s151 + $0x70] sm:$0xf]
      %v331 = vld [vmem:[%s151 + $0x74] sm:$0xf]
      %v332 = vld [vmem:[%s151 + $0x78] sm:$0xf]
      %v333 = vld [vmem:[%s151 + $0x7c] sm:$0xf]
      %v366 = vunpack.c.l.b16 %v302
      %v367 = vunpack.c.l.b16 %v303
      %v368 = vunpack.c.l.b16 %v304
      %v369 = vunpack.c.l.b16 %v305
      %v370 = vunpack.c.l.b16 %v306
      %v371 = vunpack.c.l.b16 %v307
      %v372 = vunpack.c.l.b16 %v308
      %v373 = vunpack.c.l.b16 %v309
      %v374 = vunpack.c.l.b16 %v310
      %v375 = vunpack.c.l.b16 %v311
      %v376 = vunpack.c.l.b16 %v312
      %v377 = vunpack.c.l.b16 %v313
      %v378 = vunpack.c.l.b16 %v314
      %v379 = vunpack.c.l.b16 %v315
      %v380 = vunpack.c.l.b16 %v316
      %v381 = vunpack.c.l.b16 %v317
      %v382 = vunpack.c.l.b16 %v318
      %v383 = vunpack.c.l.b16 %v319
      %v384 = vunpack.c.l.b16 %v320
      %v385 = vunpack.c.l.b16 %v321
      %v386 = vunpack.c.l.b16 %v322
      %v387 = vunpack.c.l.b16 %v323
      %v388 = vunpack.c.l.b16 %v324
      %v389 = vunpack.c.l.b16 %v325
      %v390 = vunpack.c.l.b16 %v326
      %v391 = vunpack.c.l.b16 %v327
      %v392 = vunpack.c.l.b16 %v328
      %v393 = vunpack.c.l.b16 %v329
      %v394 = vunpack.c.l.b16 %v330
      %v395 = vunpack.c.l.b16 %v331
      %v396 = vunpack.c.l.b16 %v332
      %v397 = vunpack.c.l.b16 %v333
      %v398 = vpack.c.b16 %v367, %v366
      %v399 = vpack.c.b16 %v369, %v368
      %v400 = vpack.c.b16 %v371, %v370
      %v401 = vpack.c.b16 %v373, %v372
      %v402 = vpack.c.b16 %v375, %v374
      %v403 = vpack.c.b16 %v377, %v376
      %v404 = vpack.c.b16 %v379, %v378
      %v405 = vpack.c.b16 %v381, %v380
      %v406 = vpack.c.b16 %v383, %v382
      %v407 = vpack.c.b16 %v385, %v384
      %v408 = vpack.c.b16 %v387, %v386
      %v409 = vpack.c.b16 %v389, %v388
      %v410 = vpack.c.b16 %v391, %v390
      %v411 = vpack.c.b16 %v393, %v392
      %v412 = vpack.c.b16 %v395, %v394
      %v413 = vpack.c.b16 %v397, %v396
      %v478 = vunpack.c.l.b16 %v238
      %v479 = vunpack.c.l.b16 %v239
      %v480 = vunpack.c.l.b16 %v240
      %v481 = vunpack.c.l.b16 %v241
      %v482 = vunpack.c.l.b16 %v242
      %v483 = vunpack.c.l.b16 %v243
      %v484 = vunpack.c.l.b16 %v244
      %v485 = vunpack.c.l.b16 %v245
      %v486 = vunpack.c.l.b16 %v246
      %v487 = vunpack.c.l.b16 %v247
      %v488 = vunpack.c.l.b16 %v248
      %v489 = vunpack.c.l.b16 %v249
      %v490 = vunpack.c.l.b16 %v250
      %v491 = vunpack.c.l.b16 %v251
      %v492 = vunpack.c.l.b16 %v252
      %v493 = vunpack.c.l.b16 %v253
      %v494 = vunpack.c.l.b16 %v254
      %v495 = vunpack.c.l.b16 %v255
      %v496 = vunpack.c.l.b16 %v256
      %v497 = vunpack.c.l.b16 %v257
      %v498 = vunpack.c.l.b16 %v258
      %v499 = vunpack.c.l.b16 %v259
      %v500 = vunpack.c.l.b16 %v260
      %v501 = vunpack.c.l.b16 %v261
      %v502 = vunpack.c.l.b16 %v262
      %v503 = vunpack.c.l.b16 %v263
      %v504 = vunpack.c.l.b16 %v264
      %v505 = vunpack.c.l.b16 %v265
      %v506 = vunpack.c.l.b16 %v266
      %v507 = vunpack.c.l.b16 %v267
      %v508 = vunpack.c.l.b16 %v268
      %v509 = vunpack.c.l.b16 %v269
      %v510 = vunpack.c.l.b16 %v270
      %v511 = vunpack.c.l.b16 %v271
      %v512 = vunpack.c.l.b16 %v272
      %v513 = vunpack.c.l.b16 %v273
      %v514 = vunpack.c.l.b16 %v274
      %v515 = vunpack.c.l.b16 %v275
      %v516 = vunpack.c.l.b16 %v276
      %v517 = vunpack.c.l.b16 %v277
      %v518 = vunpack.c.l.b16 %v278
      %v519 = vunpack.c.l.b16 %v279
      %v520 = vunpack.c.l.b16 %v280
      %v521 = vunpack.c.l.b16 %v281
      %v522 = vunpack.c.l.b16 %v282
      %v523 = vunpack.c.l.b16 %v283
      %v524 = vunpack.c.l.b16 %v284
      %v525 = vunpack.c.l.b16 %v285
      %v526 = vunpack.c.l.b16 %v286
      %v527 = vunpack.c.l.b16 %v287
      %v528 = vunpack.c.l.b16 %v288
      %v529 = vunpack.c.l.b16 %v289
      %v530 = vunpack.c.l.b16 %v290
      %v531 = vunpack.c.l.b16 %v291
      %v532 = vunpack.c.l.b16 %v292
      %v533 = vunpack.c.l.b16 %v293
      %v534 = vunpack.c.l.b16 %v294
      %v535 = vunpack.c.l.b16 %v295
      %v536 = vunpack.c.l.b16 %v296
      %v537 = vunpack.c.l.b16 %v297
      %v538 = vunpack.c.l.b16 %v298
      %v539 = vunpack.c.l.b16 %v299
      %v540 = vunpack.c.l.b16 %v300
      %v541 = vunpack.c.l.b16 %v301
      %v542 = vpack.c.b16 %v479, %v478
      %v543 = vpack.c.b16 %v481, %v480
      %v544 = vpack.c.b16 %v483, %v482
      %v545 = vpack.c.b16 %v485, %v484
      %v546 = vpack.c.b16 %v487, %v486
      %v547 = vpack.c.b16 %v489, %v488
      %v548 = vpack.c.b16 %v491, %v490
      %v549 = vpack.c.b16 %v493, %v492
      %v550 = vpack.c.b16 %v495, %v494
      %v551 = vpack.c.b16 %v497, %v496
      %v552 = vpack.c.b16 %v499, %v498
      %v553 = vpack.c.b16 %v501, %v500
      %v554 = vpack.c.b16 %v503, %v502
      %v555 = vpack.c.b16 %v505, %v504
      %v556 = vpack.c.b16 %v507, %v506
      %v557 = vpack.c.b16 %v509, %v508
      %v558 = vpack.c.b16 %v511, %v510
      %v559 = vpack.c.b16 %v513, %v512
      %v560 = vpack.c.b16 %v515, %v514
      %v561 = vpack.c.b16 %v517, %v516
      %v562 = vpack.c.b16 %v519, %v518
      %v563 = vpack.c.b16 %v521, %v520
      %v564 = vpack.c.b16 %v523, %v522
      %v565 = vpack.c.b16 %v525, %v524
      %v566 = vpack.c.b16 %v527, %v526
      %v567 = vpack.c.b16 %v529, %v528
      %v568 = vpack.c.b16 %v531, %v530
      %v569 = vpack.c.b16 %v533, %v532
      %v570 = vpack.c.b16 %v535, %v534
      %v571 = vpack.c.b16 %v537, %v536
      %v572 = vpack.c.b16 %v539, %v538
      %v573 = vpack.c.b16 %v541, %v540
      %vm574 = vcmask 261120
      %v576 = vsel %vm574, %v398, 0
      %v579 = vsel %vm574, %v399, 0
      %v582 = vsel %vm574, %v400, 0
      %v585 = vsel %vm574, %v401, 0
      %v588 = vsel %vm574, %v402, 0
      %v591 = vsel %vm574, %v403, 0
      %v594 = vsel %vm574, %v404, 0
      %v597 = vsel %vm574, %v405, 0
      %v600 = vsel %vm574, %v406, 0
      %v603 = vsel %vm574, %v407, 0
      %v606 = vsel %vm574, %v408, 0
      %v609 = vsel %vm574, %v409, 0
      %v612 = vsel %vm574, %v410, 0
      %v615 = vsel %vm574, %v411, 0
      %v618 = vsel %vm574, %v412, 0
      %v621 = vsel %vm574, %v413, 0
      %v624 = vsel %vm574, %v542, 0
      %v627 = vsel %vm574, %v543, 0
      %v630 = vsel %vm574, %v544, 0
      %v633 = vsel %vm574, %v545, 0
      %v636 = vsel %vm574, %v546, 0
      %v639 = vsel %vm574, %v547, 0
      %v642 = vsel %vm574, %v548, 0
      %v645 = vsel %vm574, %v549, 0
      %v648 = vsel %vm574, %v550, 0
      %v651 = vsel %vm574, %v551, 0
      %v654 = vsel %vm574, %v552, 0
      %v657 = vsel %vm574, %v553, 0
      %v660 = vsel %vm574, %v554, 0
      %v663 = vsel %vm574, %v555, 0
      %v666 = vsel %vm574, %v556, 0
      %v669 = vsel %vm574, %v557, 0
      %v672 = vsel %vm574, %v558, 0
      %v675 = vsel %vm574, %v559, 0
      %v678 = vsel %vm574, %v560, 0
      %v681 = vsel %vm574, %v561, 0
      %v684 = vsel %vm574, %v562, 0
      %v687 = vsel %vm574, %v563, 0
      %v690 = vsel %vm574, %v564, 0
      %v693 = vsel %vm574, %v565, 0
      %v696 = vsel %vm574, %v566, 0
      %v699 = vsel %vm574, %v567, 0
      %v702 = vsel %vm574, %v568, 0
      %v705 = vsel %vm574, %v569, 0
      %v708 = vsel %vm574, %v570, 0
      %v711 = vsel %vm574, %v571, 0
      %v714 = vsel %vm574, %v572, 0
      %v717 = vsel %vm574, %v573, 0
      %719 = vmatprep.subr.bf16.mxu0 0
      %720 = vmatpush1.bf16.xpose.msra.mxu0 %v624
      %721 = vmatprep.subr.bf16.mxu0 0
      %722 = vmatpush1.bf16.xpose.msra.mxu0 %v627
      %723 = vmatprep.subr.bf16.mxu0 0
      %724 = vmatpush1.bf16.xpose.msra.mxu0 %v630
      %725 = vmatprep.subr.bf16.mxu0 0
      %726 = vmatpush1.bf16.xpose.msra.mxu0 %v633
      %727 = vmatprep.subr.bf16.mxu0 0
      %728 = vmatpush1.bf16.xpose.msra.mxu0 %v636
      %729 = vmatprep.subr.bf16.mxu0 0
      %730 = vmatpush1.bf16.xpose.msra.mxu0 %v639
      %731 = vmatprep.subr.bf16.mxu0 0
      %732 = vmatpush1.bf16.xpose.msra.mxu0 %v642
      %733 = vmatprep.subr.bf16.mxu0 0
      %734 = vmatpush1.bf16.xpose.msra.mxu0 %v645
      %735 = vmatprep.subr.bf16.mxu0 0
      %736 = vmatpush1.bf16.xpose.msra.mxu0 %v648
      %737 = vmatprep.subr.bf16.mxu0 0
      %738 = vmatpush1.bf16.xpose.msra.mxu0 %v651
      %739 = vmatprep.subr.bf16.mxu0 0
      %740 = vmatpush1.bf16.xpose.msra.mxu0 %v654
      %741 = vmatprep.subr.bf16.mxu0 0
      %742 = vmatpush1.bf16.xpose.msra.mxu0 %v657
      %743 = vmatprep.subr.bf16.mxu0 0
      %744 = vmatpush1.bf16.xpose.msra.mxu0 %v660
      %745 = vmatprep.subr.bf16.mxu0 0
      %746 = vmatpush1.bf16.xpose.msra.mxu0 %v663
      %747 = vmatprep.subr.bf16.mxu0 0
      %748 = vmatpush1.bf16.xpose.msra.mxu0 %v666
      %749 = vmatprep.subr.bf16.mxu0 0
      %750 = vmatpush1.bf16.xpose.msra.mxu0 %v669
      %751 = vmatprep.mubr.bf16.mxu0 0
      %752 = vmatmul.mubr.bf16.gmra.mrb[0].mxu0 %v576
      %v753 = vpop.f32.mrb[0].mxu0
      %v754 = vadd.f32 0.0, %v753
      %v755 = vpop.f32.mrb[0].mxu0
      %v756 = vadd.f32 0.0, %v755
      %v757 = vpop.f32.mrb[0].mxu0
      %v758 = vadd.f32 0.0, %v757
      %v759 = vpop.f32.mrb[0].mxu0
      %v760 = vadd.f32 0.0, %v759
      %761 = vmatprep.mubr.bf16.mxu0 0
      %762 = vmatmul.mubr.bf16.gmra.mrb[0].mxu0 %v579
      %v763 = vpop.f32.mrb[0].mxu0
      %v764 = vadd.f32 0.0, %v763
      %v765 = vpop.f32.mrb[0].mxu0
      %v766 = vadd.f32 0.0, %v765
      %v767 = vpop.f32.mrb[0].mxu0
      %v768 = vadd.f32 0.0, %v767
      %v769 = vpop.f32.mrb[0].mxu0
      %v770 = vadd.f32 0.0, %v769
      %771 = vmatprep.mubr.bf16.mxu0 0
      %772 = vmatmul.mubr.bf16.gmra.mrb[0].mxu0 %v582
      %v773 = vpop.f32.mrb[0].mxu0
      %v774 = vadd.f32 0.0, %v773
      %v775 = vpop.f32.mrb[0].mxu0
      %v776 = vadd.f32 0.0, %v775
      %v777 = vpop.f32.mrb[0].mxu0
      %v778 = vadd.f32 0.0, %v777
      %v779 = vpop.f32.mrb[0].mxu0
      %v780 = vadd.f32 0.0, %v779
      %781 = vmatprep.mubr.bf16.mxu0 0
      %782 = vmatmul.mubr.bf16.gmra.mrb[0].mxu0 %v585
      %v783 = vpop.f32.mrb[0].mxu0
      %v784 = vadd.f32 0.0, %v783
      %v785 = vpop.f32.mrb[0].mxu0
      %v786 = vadd.f32 0.0, %v785
      %v787 = vpop.f32.mrb[0].mxu0
      %v788 = vadd.f32 0.0, %v787
      %v789 = vpop.f32.mrb[0].mxu0
      %v790 = vadd.f32 0.0, %v789
      %791 = vmatprep.mubr.bf16.mxu0 0
      %792 = vmatmul.mubr.bf16.gmra.mrb[0].mxu0 %v588
      %v793 = vpop.f32.mrb[0].mxu0
      %v794 = vadd.f32 0.0, %v793
      %v795 = vpop.f32.mrb[0].mxu0
      %v796 = vadd.f32 0.0, %v795
      %v797 = vpop.f32.mrb[0].mxu0
      %v798 = vadd.f32 0.0, %v797
      %v799 = vpop.f32.mrb[0].mxu0
      %v800 = vadd.f32 0.0, %v799
      %801 = vmatprep.mubr.bf16.mxu0 0
      %802 = vmatmul.mubr.bf16.gmra.mrb[0].mxu0 %v591
      %v803 = vpop.f32.mrb[0].mxu0
      %v804 = vadd.f32 0.0, %v803
      %v805 = vpop.f32.mrb[0].mxu0
      %v806 = vadd.f32 0.0, %v805
      %v807 = vpop.f32.mrb[0].mxu0
      %v808 = vadd.f32 0.0, %v807
      %v809 = vpop.f32.mrb[0].mxu0
      %v810 = vadd.f32 0.0, %v809
      %811 = vmatprep.mubr.bf16.mxu0 0
      %812 = vmatmul.mubr.bf16.gmra.mrb[0].mxu0 %v594
      %v813 = vpop.f32.mrb[0].mxu0
      %v814 = vadd.f32 0.0, %v813
      %v815 = vpop.f32.mrb[0].mxu0
      %v816 = vadd.f32 0.0, %v815
      %v817 = vpop.f32.mrb[0].mxu0
      %v818 = vadd.f32 0.0, %v817
      %v819 = vpop.f32.mrb[0].mxu0
      %v820 = vadd.f32 0.0, %v819
      %821 = vmatprep.mubr.bf16.mxu0 0
      %822 = vmatmul.mubr.bf16.gmra.mrb[0].mxu0 %v597
      %v823 = vpop.f32.mrb[0].mxu0
      %v824 = vadd.f32 0.0, %v823
      %v825 = vpop.f32.mrb[0].mxu0
      %v826 = vadd.f32 0.0, %v825
      %v827 = vpop.f32.mrb[0].mxu0
      %v828 = vadd.f32 0.0, %v827
      %v829 = vpop.f32.mrb[0].mxu0
      %v830 = vadd.f32 0.0, %v829
      %831 = vmatprep.mubr.bf16.mxu0 0
      %832 = vmatmul.mubr.bf16.gmra.mrb[0].mxu0 %v600
      %v833 = vpop.f32.mrb[0].mxu0
      %v834 = vadd.f32 0.0, %v833
      %v835 = vpop.f32.mrb[0].mxu0
      %v836 = vadd.f32 0.0, %v835
      %v837 = vpop.f32.mrb[0].mxu0
      %v838 = vadd.f32 0.0, %v837
      %v839 = vpop.f32.mrb[0].mxu0
      %v840 = vadd.f32 0.0, %v839
      %841 = vmatprep.mubr.bf16.mxu0 0
      %842 = vmatmul.mubr.bf16.gmra.mrb[0].mxu0 %v603
      %v843 = vpop.f32.mrb[0].mxu0
      %v844 = vadd.f32 0.0, %v843
      %v845 = vpop.f32.mrb[0].mxu0
      %v846 = vadd.f32 0.0, %v845
      %v847 = vpop.f32.mrb[0].mxu0
      %v848 = vadd.f32 0.0, %v847
      %v849 = vpop.f32.mrb[0].mxu0
      %v850 = vadd.f32 0.0, %v849
      %851 = vmatprep.mubr.bf16.mxu0 0
      %852 = vmatmul.mubr.bf16.gmra.mrb[0].mxu0 %v606
      %v853 = vpop.f32.mrb[0].mxu0
      %v854 = vadd.f32 0.0, %v853
      %v855 = vpop.f32.mrb[0].mxu0
      %v856 = vadd.f32 0.0, %v855
      %v857 = vpop.f32.mrb[0].mxu0
      %v858 = vadd.f32 0.0, %v857
      %v859 = vpop.f32.mrb[0].mxu0
      %v860 = vadd.f32 0.0, %v859
      %861 = vmatprep.mubr.bf16.mxu0 0
      %862 = vmatmul.mubr.bf16.gmra.mrb[0].mxu0 %v609
      %v863 = vpop.f32.mrb[0].mxu0
      %v864 = vadd.f32 0.0, %v863
      %v865 = vpop.f32.mrb[0].mxu0
      %v866 = vadd.f32 0.0, %v865
      %v867 = vpop.f32.mrb[0].mxu0
      %v868 = vadd.f32 0.0, %v867
      %v869 = vpop.f32.mrb[0].mxu0
      %v870 = vadd.f32 0.0, %v869
      %871 = vmatprep.mubr.bf16.mxu0 0
      %872 = vmatmul.mubr.bf16.gmra.mrb[0].mxu0 %v612
      %v873 = vpop.f32.mrb[0].mxu0
      %v874 = vadd.f32 0.0, %v873
      %v875 = vpop.f32.mrb[0].mxu0
      %v876 = vadd.f32 0.0, %v875
      %v877 = vpop.f32.mrb[0].mxu0
      %v878 = vadd.f32 0.0, %v877
      %v879 = vpop.f32.mrb[0].mxu0
      %v880 = vadd.f32 0.0, %v879
      %881 = vmatprep.mubr.bf16.mxu0 0
      %882 = vmatmul.mubr.bf16.gmra.mrb[0].mxu0 %v615
      %v883 = vpop.f32.mrb[0].mxu0
      %v884 = vadd.f32 0.0, %v883
      %v885 = vpop.f32.mrb[0].mxu0
      %v886 = vadd.f32 0.0, %v885
      %v887 = vpop.f32.mrb[0].mxu0
      %v888 = vadd.f32 0.0, %v887
      %v889 = vpop.f32.mrb[0].mxu0
      %v890 = vadd.f32 0.0, %v889
      %891 = vmatprep.mubr.bf16.mxu0 0
      %892 = vmatmul.mubr.bf16.gmra.mrb[0].mxu0 %v618
      %v893 = vpop.f32.mrb[0].mxu0
      %v894 = vadd.f32 0.0, %v893
      %v895 = vpop.f32.mrb[0].mxu0
      %v896 = vadd.f32 0.0, %v895
      %v897 = vpop.f32.mrb[0].mxu0
      %v898 = vadd.f32 0.0, %v897
      %v899 = vpop.f32.mrb[0].mxu0
      %v900 = vadd.f32 0.0, %v899
      %901 = vmatprep.mubr.bf16.mxu0 0
      %902 = vmatmul.mubr.bf16.gmra.mrb[0].mxu0 %v621
      %v903 = vpop.f32.mrb[0].mxu0
      %v904 = vadd.f32 0.0, %v903
      %v905 = vpop.f32.mrb[0].mxu0
      %v906 = vadd.f32 0.0, %v905
      %v907 = vpop.f32.mrb[0].mxu0
      %v908 = vadd.f32 0.0, %v907
      %v909 = vpop.f32.mrb[0].mxu0
      %v910 = vadd.f32 0.0, %v909
      %911 = vdwg.mxu0
      %912 = vmatprep.subr.bf16.mxu0 0
      %913 = vmatpush1.bf16.xpose.msra.mxu0 %v672
      %914 = vmatprep.subr.bf16.mxu0 0
      %915 = vmatpush1.bf16.xpose.msra.mxu0 %v675
      %916 = vmatprep.subr.bf16.mxu0 0
      %917 = vmatpush1.bf16.xpose.msra.mxu0 %v678
      %918 = vmatprep.subr.bf16.mxu0 0
      %919 = vmatpush1.bf16.xpose.msra.mxu0 %v681
      %920 = vmatprep.subr.bf16.mxu0 0
      %921 = vmatpush1.bf16.xpose.msra.mxu0 %v684
      %922 = vmatprep.subr.bf16.mxu0 0
      %923 = vmatpush1.bf16.xpose.msra.mxu0 %v687
      %924 = vmatprep.subr.bf16.mxu0 0
      %925 = vmatpush1.bf16.xpose.msra.mxu0 %v690
      %926 = vmatprep.subr.bf16.mxu0 0
      %927 = vmatpush1.bf16.xpose.msra.mxu0 %v693
      %928 = vmatprep.subr.bf16.mxu0 0
      %929 = vmatpush1.bf16.xpose.msra.mxu0 %v696
      %930 = vmatprep.subr.bf16.mxu0 0
      %931 = vmatpush1.bf16.xpose.msra.mxu0 %v699
      %932 = vmatprep.subr.bf16.mxu0 0
      %933 = vmatpush1.bf16.xpose.msra.mxu0 %v702
      %934 = vmatprep.subr.bf16.mxu0 0
      %935 = vmatpush1.bf16.xpose.msra.mxu0 %v705
      %936 = vmatprep.subr.bf16.mxu0 0
      %937 = vmatpush1.bf16.xpose.msra.mxu0 %v708
      %938 = vmatprep.subr.bf16.mxu0 0
      %939 = vmatpush1.bf16.xpose.msra.mxu0 %v711
      %940 = vmatprep.subr.bf16.mxu0 0
      %941 = vmatpush1.bf16.xpose.msra.mxu0 %v714
      %942 = vmatprep.subr.bf16.mxu0 0
      %943 = vmatpush1.bf16.xpose.msra.mxu0 %v717
      %944 = vmatprep.mubr.bf16.mxu0 0
      %945 = vmatmul.mubr.bf16.gmra.mrb[0].mxu0 %v576
      %v946 = vpop.f32.mrb[0].mxu0
      %v947 = vadd.f32 0.0, %v946
      %v948 = vpop.f32.mrb[0].mxu0
      %v949 = vadd.f32 0.0, %v948
      %v950 = vpop.f32.mrb[0].mxu0
      %v951 = vadd.f32 0.0, %v950
      %v952 = vpop.f32.mrb[0].mxu0
      %v953 = vadd.f32 0.0, %v952
      %954 = vmatprep.mubr.bf16.mxu0 0
      %955 = vmatmul.mubr.bf16.gmra.mrb[0].mxu0 %v579
      %v956 = vpop.f32.mrb[0].mxu0
      %v957 = vadd.f32 0.0, %v956
      %v958 = vpop.f32.mrb[0].mxu0
      %v959 = vadd.f32 0.0, %v958
      %v960 = vpop.f32.mrb[0].mxu0
      %v961 = vadd.f32 0.0, %v960
      %v962 = vpop.f32.mrb[0].mxu0
      %v963 = vadd.f32 0.0, %v962
      %964 = vmatprep.mubr.bf16.mxu0 0
      %965 = vmatmul.mubr.bf16.gmra.mrb[0].mxu0 %v582
      %v966 = vpop.f32.mrb[0].mxu0
      %v967 = vadd.f32 0.0, %v966
      %v968 = vpop.f32.mrb[0].mxu0
      %v969 = vadd.f32 0.0, %v968
      %v970 = vpop.f32.mrb[0].mxu0
      %v971 = vadd.f32 0.0, %v970
      %v972 = vpop.f32.mrb[0].mxu0
      %v973 = vadd.f32 0.0, %v972
      %974 = vmatprep.mubr.bf16.mxu0 0
      %975 = vmatmul.mubr.bf16.gmra.mrb[0].mxu0 %v585
      %v976 = vpop.f32.mrb[0].mxu0
      %v977 = vadd.f32 0.0, %v976
      %v978 = vpop.f32.mrb[0].mxu0
      %v979 = vadd.f32 0.0, %v978
      %v980 = vpop.f32.mrb[0].mxu0
      %v981 = vadd.f32 0.0, %v980
      %v982 = vpop.f32.mrb[0].mxu0
      %v983 = vadd.f32 0.0, %v982
      %984 = vmatprep.mubr.bf16.mxu0 0
      %985 = vmatmul.mubr.bf16.gmra.mrb[0].mxu0 %v588
      %v986 = vpop.f32.mrb[0].mxu0
      %v987 = vadd.f32 0.0, %v986
      %v988 = vpop.f32.mrb[0].mxu0
      %v989 = vadd.f32 0.0, %v988
      %v990 = vpop.f32.mrb[0].mxu0
      %v991 = vadd.f32 0.0, %v990
      %v992 = vpop.f32.mrb[0].mxu0
      %v993 = vadd.f32 0.0, %v992
      %994 = vmatprep.mubr.bf16.mxu0 0
      %995 = vmatmul.mubr.bf16.gmra.mrb[0].mxu0 %v591
      %v996 = vpop.f32.mrb[0].mxu0
      %v997 = vadd.f32 0.0, %v996
      %v998 = vpop.f32.mrb[0].mxu0
      %v999 = vadd.f32 0.0, %v998
      %v1000 = vpop.f32.mrb[0].mxu0
      %v1001 = vadd.f32 0.0, %v1000
      %v1002 = vpop.f32.mrb[0].mxu0
      %v1003 = vadd.f32 0.0, %v1002
      %1004 = vmatprep.mubr.bf16.mxu0 0
      %1005 = vmatmul.mubr.bf16.gmra.mrb[0].mxu0 %v594
      %v1006 = vpop.f32.mrb[0].mxu0
      %v1007 = vadd.f32 0.0, %v1006
      %v1008 = vpop.f32.mrb[0].mxu0
      %v1009 = vadd.f32 0.0, %v1008
      %v1010 = vpop.f32.mrb[0].mxu0
      %v1011 = vadd.f32 0.0, %v1010
      %v1012 = vpop.f32.mrb[0].mxu0
      %v1013 = vadd.f32 0.0, %v1012
      %1014 = vmatprep.mubr.bf16.mxu0 0
      %1015 = vmatmul.mubr.bf16.gmra.mrb[0].mxu0 %v597
      %v1016 = vpop.f32.mrb[0].mxu0
      %v1017 = vadd.f32 0.0, %v1016
      %v1018 = vpop.f32.mrb[0].mxu0
      %v1019 = vadd.f32 0.0, %v1018
      %v1020 = vpop.f32.mrb[0].mxu0
      %v1021 = vadd.f32 0.0, %v1020
      %v1022 = vpop.f32.mrb[0].mxu0
      %v1023 = vadd.f32 0.0, %v1022
      %1024 = vmatprep.mubr.bf16.mxu0 0
      %1025 = vmatmul.mubr.bf16.gmra.mrb[0].mxu0 %v600
      %v1026 = vpop.f32.mrb[0].mxu0
      %v1027 = vadd.f32 0.0, %v1026
      %v1028 = vpop.f32.mrb[0].mxu0
      %v1029 = vadd.f32 0.0, %v1028
      %v1030 = vpop.f32.mrb[0].mxu0
      %v1031 = vadd.f32 0.0, %v1030
      %v1032 = vpop.f32.mrb[0].mxu0
      %v1033 = vadd.f32 0.0, %v1032
      %1034 = vmatprep.mubr.bf16.mxu0 0
      %1035 = vmatmul.mubr.bf16.gmra.mrb[0].mxu0 %v603
      %v1036 = vpop.f32.mrb[0].mxu0
      %v1037 = vadd.f32 0.0, %v1036
      %v1038 = vpop.f32.mrb[0].mxu0
      %v1039 = vadd.f32 0.0, %v1038
      %v1040 = vpop.f32.mrb[0].mxu0
      %v1041 = vadd.f32 0.0, %v1040
      %v1042 = vpop.f32.mrb[0].mxu0
      %v1043 = vadd.f32 0.0, %v1042
      %1044 = vmatprep.mubr.bf16.mxu0 0
      %1045 = vmatmul.mubr.bf16.gmra.mrb[0].mxu0 %v606
      %v1046 = vpop.f32.mrb[0].mxu0
      %v1047 = vadd.f32 0.0, %v1046
      %v1048 = vpop.f32.mrb[0].mxu0
      %v1049 = vadd.f32 0.0, %v1048
      %v1050 = vpop.f32.mrb[0].mxu0
      %v1051 = vadd.f32 0.0, %v1050
      %v1052 = vpop.f32.mrb[0].mxu0
      %v1053 = vadd.f32 0.0, %v1052
      %1054 = vmatprep.mubr.bf16.mxu0 0
      %1055 = vmatmul.mubr.bf16.gmra.mrb[0].mxu0 %v609
      %v1056 = vpop.f32.mrb[0].mxu0
      %v1057 = vadd.f32 0.0, %v1056
      %v1058 = vpop.f32.mrb[0].mxu0
      %v1059 = vadd.f32 0.0, %v1058
      %v1060 = vpop.f32.mrb[0].mxu0
      %v1061 = vadd.f32 0.0, %v1060
      %v1062 = vpop.f32.mrb[0].mxu0
      %v1063 = vadd.f32 0.0, %v1062
      %1064 = vmatprep.mubr.bf16.mxu0 0
      %1065 = vmatmul.mubr.bf16.gmra.mrb[0].mxu0 %v612
      %v1066 = vpop.f32.mrb[0].mxu0
      %v1067 = vadd.f32 0.0, %v1066
      %v1068 = vpop.f32.mrb[0].mxu0
      %v1069 = vadd.f32 0.0, %v1068
      %v1070 = vpop.f32.mrb[0].mxu0
      %v1071 = vadd.f32 0.0, %v1070
      %v1072 = vpop.f32.mrb[0].mxu0
      %v1073 = vadd.f32 0.0, %v1072
      %1074 = vmatprep.mubr.bf16.mxu0 0
      %1075 = vmatmul.mubr.bf16.gmra.mrb[0].mxu0 %v615
      %v1076 = vpop.f32.mrb[0].mxu0
      %v1077 = vadd.f32 0.0, %v1076
      %v1078 = vpop.f32.mrb[0].mxu0
      %v1079 = vadd.f32 0.0, %v1078
      %v1080 = vpop.f32.mrb[0].mxu0
      %v1081 = vadd.f32 0.0, %v1080
      %v1082 = vpop.f32.mrb[0].mxu0
      %v1083 = vadd.f32 0.0, %v1082
      %1084 = vmatprep.mubr.bf16.mxu0 0
      %1085 = vmatmul.mubr.bf16.gmra.mrb[0].mxu0 %v618
      %v1086 = vpop.f32.mrb[0].mxu0
      %v1087 = vadd.f32 0.0, %v1086
      %v1088 = vpop.f32.mrb[0].mxu0
      %v1089 = vadd.f32 0.0, %v1088
      %v1090 = vpop.f32.mrb[0].mxu0
      %v1091 = vadd.f32 0.0, %v1090
      %v1092 = vpop.f32.mrb[0].mxu0
      %v1093 = vadd.f32 0.0, %v1092
      %1094 = vmatprep.mubr.bf16.mxu0 0
      %1095 = vmatmul.mubr.bf16.gmra.mrb[0].mxu0 %v621
      %v1096 = vpop.f32.mrb[0].mxu0
      %v1097 = vadd.f32 0.0, %v1096
      %v1098 = vpop.f32.mrb[0].mxu0
      %v1099 = vadd.f32 0.0, %v1098
      %v1100 = vpop.f32.mrb[0].mxu0
      %v1101 = vadd.f32 0.0, %v1100
      %v1102 = vpop.f32.mrb[0].mxu0
      %v1103 = vadd.f32 0.0, %v1102
      %1104 = vdwg.mxu0
      %v1105 = vlaneseq
      %v1106 = vand.u32 %v1105, 127
      %v1107 = vadd.s32 %v1106, 128
      %v1108 = vadd.s32 %v1106, 256
      %v1109 = vadd.s32 %v1106, 384
      %s1110 = smul.u32 %s17, 256
      %s1111 = sadd.s32 %s233, 512
      %p1112 = scmp.lt.s32.totalorder %s1110, %s1111
      %s1113 = sadd.s32 %s17, 1
      %s1114 = smul.u32 %s1113, 256
      %p1115 = scmp.lt.s32.totalorder %s233, %s1114
      %p1116 = pnand %p1112, %p1115
      %p1117 = pneg %p1116
      // Predicated region
      $region33: #{tpu_custom_call.1} parent=27 // pred_check
        _
      $region34: #{tpu_custom_call.1} parent=27 // pred_check_branch
        %1119 = sbr.rel (%p1116) target = $region36
      $region35: #{tpu_custom_call.1} parent=27 // pred_region
        %v1120 = vlaneseq
        %v1121 = vshrl.u32 %v1120, 7
        %v1122 = vadd.s32 %v1121, 8
        %v1123 = vadd.s32 %v1121, 16
        %v1124 = vadd.s32 %v1121, 24
        %v1125 = vadd.s32 %v1121, 32
        %v1126 = vadd.s32 %v1121, 40
        %v1127 = vadd.s32 %v1121, 48
        %v1128 = vadd.s32 %v1121, 56
        %v1129 = vadd.s32 %v1121, 64
        %v1130 = vadd.s32 %v1121, 72
        %v1131 = vadd.s32 %v1121, 80
        %v1132 = vadd.s32 %v1121, 88
        %v1133 = vadd.s32 %v1121, 96
        %v1134 = vadd.s32 %v1121, 104
        %v1135 = vadd.s32 %v1121, 112
        %v1136 = vadd.s32 %v1121, 120
        %v1137 = vadd.s32 %v1121, 128
        %v1138 = vadd.s32 %v1121, 136
        %v1139 = vadd.s32 %v1121, 144
        %v1140 = vadd.s32 %v1121, 152
        %v1141 = vadd.s32 %v1121, 160
        %v1142 = vadd.s32 %v1121, 168
        %v1143 = vadd.s32 %v1121, 176
        %v1144 = vadd.s32 %v1121, 184
        %v1145 = vadd.s32 %v1121, 192
        %v1146 = vadd.s32 %v1121, 200
        %v1147 = vadd.s32 %v1121, 208
        %v1148 = vadd.s32 %v1121, 216
        %v1149 = vadd.s32 %v1121, 224
        %v1150 = vadd.s32 %v1121, 232
        %v1151 = vadd.s32 %v1121, 240
        %v1152 = vadd.s32 %v1121, 248
        %v1153 = vstv %s1110
        %v1154 = vadd.s32 %v1121, %v1153
        %v1155 = vadd.s32 %v1122, %v1153
        %v1156 = vadd.s32 %v1123, %v1153
        %v1157 = vadd.s32 %v1124, %v1153
        %v1158 = vadd.s32 %v1125, %v1153
        %v1159 = vadd.s32 %v1126, %v1153
        %v1160 = vadd.s32 %v1127, %v1153
        %v1161 = vadd.s32 %v1128, %v1153
        %v1162 = vadd.s32 %v1129, %v1153
        %v1163 = vadd.s32 %v1130, %v1153
        %v1164 = vadd.s32 %v1131, %v1153
        %v1165 = vadd.s32 %v1132, %v1153
        %v1166 = vadd.s32 %v1133, %v1153
        %v1167 = vadd.s32 %v1134, %v1153
        %v1168 = vadd.s32 %v1135, %v1153
        %v1169 = vadd.s32 %v1136, %v1153
        %v1170 = vadd.s32 %v1137, %v1153
        %v1171 = vadd.s32 %v1138, %v1153
        %v1172 = vadd.s32 %v1139, %v1153
        %v1173 = vadd.s32 %v1140, %v1153
        %v1174 = vadd.s32 %v1141, %v1153
        %v1175 = vadd.s32 %v1142, %v1153
        %v1176 = vadd.s32 %v1143, %v1153
        %v1177 = vadd.s32 %v1144, %v1153
        %v1178 = vadd.s32 %v1145, %v1153
        %v1179 = vadd.s32 %v1146, %v1153
        %v1180 = vadd.s32 %v1147, %v1153
        %v1181 = vadd.s32 %v1148, %v1153
        %v1182 = vadd.s32 %v1149, %v1153
        %v1183 = vadd.s32 %v1150, %v1153
        %v1184 = vadd.s32 %v1151, %v1153
        %v1185 = vadd.s32 %v1152, %v1153
        %v1186 = vstv %s233
        %v1187 = vadd.s32 %v1106, %v1186
        %v1188 = vadd.s32 %v1107, %v1186
        %v1189 = vadd.s32 %v1108, %v1186
        %v1190 = vadd.s32 %v1109, %v1186
        %vm1191 = vcmp.eq.s32.totalorder %v1154, %v1187
        %vm1192 = vcmp.eq.s32.totalorder %v1154, %v1188
        %vm1193 = vcmp.eq.s32.totalorder %v1154, %v1189
        %vm1194 = vcmp.eq.s32.totalorder %v1154, %v1190
        %vm1195 = vcmp.eq.s32.totalorder %v1155, %v1187
        %vm1196 = vcmp.eq.s32.totalorder %v1155, %v1188
        %vm1197 = vcmp.eq.s32.totalorder %v1155, %v1189
        %vm1198 = vcmp.eq.s32.totalorder %v1155, %v1190
        %vm1199 = vcmp.eq.s32.totalorder %v1156, %v1187
        %vm1200 = vcmp.eq.s32.totalorder %v1156, %v1188
        %vm1201 = vcmp.eq.s32.totalorder %v1156, %v1189
        %vm1202 = vcmp.eq.s32.totalorder %v1156, %v1190
        %vm1203 = vcmp.eq.s32.totalorder %v1157, %v1187
        %vm1204 = vcmp.eq.s32.totalorder %v1157, %v1188
        %vm1205 = vcmp.eq.s32.totalorder %v1157, %v1189
        %vm1206 = vcmp.eq.s32.totalorder %v1157, %v1190
        %vm1207 = vcmp.eq.s32.totalorder %v1158, %v1187
        %vm1208 = vcmp.eq.s32.totalorder %v1158, %v1188
        %vm1209 = vcmp.eq.s32.totalorder %v1158, %v1189
        %vm1210 = vcmp.eq.s32.totalorder %v1158, %v1190
        %vm1211 = vcmp.eq.s32.totalorder %v1159, %v1187
        %vm1212 = vcmp.eq.s32.totalorder %v1159, %v1188
        %vm1213 = vcmp.eq.s32.totalorder %v1159, %v1189
        %vm1214 = vcmp.eq.s32.totalorder %v1159, %v1190
        %vm1215 = vcmp.eq.s32.totalorder %v1160, %v1187
        %vm1216 = vcmp.eq.s32.totalorder %v1160, %v1188
        %vm1217 = vcmp.eq.s32.totalorder %v1160, %v1189
        %vm1218 = vcmp.eq.s32.totalorder %v1160, %v1190
        %vm1219 = vcmp.eq.s32.totalorder %v1161, %v1187
        %vm1220 = vcmp.eq.s32.totalorder %v1161, %v1188
        %vm1221 = vcmp.eq.s32.totalorder %v1161, %v1189
        %vm1222 = vcmp.eq.s32.totalorder %v1161, %v1190
        %vm1223 = vcmp.eq.s32.totalorder %v1162, %v1187
        %vm1224 = vcmp.eq.s32.totalorder %v1162, %v1188
        %vm1225 = vcmp.eq.s32.totalorder %v1162, %v1189
        %vm1226 = vcmp.eq.s32.totalorder %v1162, %v1190
        %vm1227 = vcmp.eq.s32.totalorder %v1163, %v1187
        %vm1228 = vcmp.eq.s32.totalorder %v1163, %v1188
        %vm1229 = vcmp.eq.s32.totalorder %v1163, %v1189
        %vm1230 = vcmp.eq.s32.totalorder %v1163, %v1190
        %vm1231 = vcmp.eq.s32.totalorder %v1164, %v1187
        %vm1232 = vcmp.eq.s32.totalorder %v1164, %v1188
        %vm1233 = vcmp.eq.s32.totalorder %v1164, %v1189
        %vm1234 = vcmp.eq.s32.totalorder %v1164, %v1190
        %vm1235 = vcmp.eq.s32.totalorder %v1165, %v1187
        %vm1236 = vcmp.eq.s32.totalorder %v1165, %v1188
        %vm1237 = vcmp.eq.s32.totalorder %v1165, %v1189
        %vm1238 = vcmp.eq.s32.totalorder %v1165, %v1190
        %vm1239 = vcmp.eq.s32.totalorder %v1166, %v1187
        %vm1240 = vcmp.eq.s32.totalorder %v1166, %v1188
        %vm1241 = vcmp.eq.s32.totalorder %v1166, %v1189
        %vm1242 = vcmp.eq.s32.totalorder %v1166, %v1190
        %vm1243 = vcmp.eq.s32.totalorder %v1167, %v1187
        %vm1244 = vcmp.eq.s32.totalorder %v1167, %v1188
        %vm1245 = vcmp.eq.s32.totalorder %v1167, %v1189
        %vm1246 = vcmp.eq.s32.totalorder %v1167, %v1190
        %vm1247 = vcmp.eq.s32.totalorder %v1168, %v1187
        %vm1248 = vcmp.eq.s32.totalorder %v1168, %v1188
        %vm1249 = vcmp.eq.s32.totalorder %v1168, %v1189
        %vm1250 = vcmp.eq.s32.totalorder %v1168, %v1190
        %vm1251 = vcmp.eq.s32.totalorder %v1169, %v1187
        %vm1252 = vcmp.eq.s32.totalorder %v1169, %v1188
        %vm1253 = vcmp.eq.s32.totalorder %v1169, %v1189
        %vm1254 = vcmp.eq.s32.totalorder %v1169, %v1190
        %vm1255 = vcmp.eq.s32.totalorder %v1170, %v1187
        %vm1256 = vcmp.eq.s32.totalorder %v1170, %v1188
        %vm1257 = vcmp.eq.s32.totalorder %v1170, %v1189
        %vm1258 = vcmp.eq.s32.totalorder %v1170, %v1190
        %vm1259 = vcmp.eq.s32.totalorder %v1171, %v1187
        %vm1260 = vcmp.eq.s32.totalorder %v1171, %v1188
        %vm1261 = vcmp.eq.s32.totalorder %v1171, %v1189
        %vm1262 = vcmp.eq.s32.totalorder %v1171, %v1190
        %vm1263 = vcmp.eq.s32.totalorder %v1172, %v1187
        %vm1264 = vcmp.eq.s32.totalorder %v1172, %v1188
        %vm1265 = vcmp.eq.s32.totalorder %v1172, %v1189
        %vm1266 = vcmp.eq.s32.totalorder %v1172, %v1190
        %vm1267 = vcmp.eq.s32.totalorder %v1173, %v1187
        %vm1268 = vcmp.eq.s32.totalorder %v1173, %v1188
        %vm1269 = vcmp.eq.s32.totalorder %v1173, %v1189
        %vm1270 = vcmp.eq.s32.totalorder %v1173, %v1190
        %vm1271 = vcmp.eq.s32.totalorder %v1174, %v1187
        %vm1272 = vcmp.eq.s32.totalorder %v1174, %v1188
        %vm1273 = vcmp.eq.s32.totalorder %v1174, %v1189
        %vm1274 = vcmp.eq.s32.totalorder %v1174, %v1190
        %vm1275 = vcmp.eq.s32.totalorder %v1175, %v1187
        %vm1276 = vcmp.eq.s32.totalorder %v1175, %v1188
        %vm1277 = vcmp.eq.s32.totalorder %v1175, %v1189
        %vm1278 = vcmp.eq.s32.totalorder %v1175, %v1190
        %vm1279 = vcmp.eq.s32.totalorder %v1176, %v1187
        %vm1280 = vcmp.eq.s32.totalorder %v1176, %v1188
        %vm1281 = vcmp.eq.s32.totalorder %v1176, %v1189
        %vm1282 = vcmp.eq.s32.totalorder %v1176, %v1190
        %vm1283 = vcmp.eq.s32.totalorder %v1177, %v1187
        %vm1284 = vcmp.eq.s32.totalorder %v1177, %v1188
        %vm1285 = vcmp.eq.s32.totalorder %v1177, %v1189
        %vm1286 = vcmp.eq.s32.totalorder %v1177, %v1190
        %vm1287 = vcmp.eq.s32.totalorder %v1178, %v1187
        %vm1288 = vcmp.eq.s32.totalorder %v1178, %v1188
        %vm1289 = vcmp.eq.s32.totalorder %v1178, %v1189
        %vm1290 = vcmp.eq.s32.totalorder %v1178, %v1190
        %vm1291 = vcmp.eq.s32.totalorder %v1179, %v1187
        %vm1292 = vcmp.eq.s32.totalorder %v1179, %v1188
        %vm1293 = vcmp.eq.s32.totalorder %v1179, %v1189
        %vm1294 = vcmp.eq.s32.totalorder %v1179, %v1190
        %vm1295 = vcmp.eq.s32.totalorder %v1180, %v1187
        %vm1296 = vcmp.eq.s32.totalorder %v1180, %v1188
        %vm1297 = vcmp.eq.s32.totalorder %v1180, %v1189
        %vm1298 = vcmp.eq.s32.totalorder %v1180, %v1190
        %vm1299 = vcmp.eq.s32.totalorder %v1181, %v1187
        %vm1300 = vcmp.eq.s32.totalorder %v1181, %v1188
        %vm1301 = vcmp.eq.s32.totalorder %v1181, %v1189
        %vm1302 = vcmp.eq.s32.totalorder %v1181, %v1190
        %vm1303 = vcmp.eq.s32.totalorder %v1182, %v1187
        %vm1304 = vcmp.eq.s32.totalorder %v1182, %v1188
        %vm1305 = vcmp.eq.s32.totalorder %v1182, %v1189
        %vm1306 = vcmp.eq.s32.totalorder %v1182, %v1190
        %vm1307 = vcmp.eq.s32.totalorder %v1183, %v1187
        %vm1308 = vcmp.eq.s32.totalorder %v1183, %v1188
        %vm1309 = vcmp.eq.s32.totalorder %v1183, %v1189
        %vm1310 = vcmp.eq.s32.totalorder %v1183, %v1190
        %vm1311 = vcmp.eq.s32.totalorder %v1184, %v1187
        %vm1312 = vcmp.eq.s32.totalorder %v1184, %v1188
        %vm1313 = vcmp.eq.s32.totalorder %v1184, %v1189
        %vm1314 = vcmp.eq.s32.totalorder %v1184, %v1190
        %vm1315 = vcmp.eq.s32.totalorder %v1185, %v1187
        %vm1316 = vcmp.eq.s32.totalorder %v1185, %v1188
        %vm1317 = vcmp.eq.s32.totalorder %v1185, %v1189
        %vm1318 = vcmp.eq.s32.totalorder %v1185, %v1190
        %v1319 = vadd.f32 %v754, 10.0
        %v1320 = vadd.f32 %v756, 10.0
        %v1321 = vadd.f32 %v947, 10.0
        %v1322 = vadd.f32 %v949, 10.0
        %v1323 = vadd.f32 %v758, 10.0
        %v1324 = vadd.f32 %v760, 10.0
        %v1325 = vadd.f32 %v951, 10.0
        %v1326 = vadd.f32 %v953, 10.0
        %v1327 = vadd.f32 %v764, 10.0
        %v1328 = vadd.f32 %v766, 10.0
        %v1329 = vadd.f32 %v957, 10.0
        %v1330 = vadd.f32 %v959, 10.0
        %v1331 = vadd.f32 %v768, 10.0
        %v1332 = vadd.f32 %v770, 10.0
        %v1333 = vadd.f32 %v961, 10.0
        %v1334 = vadd.f32 %v963, 10.0
        %v1335 = vadd.f32 %v774, 10.0
        %v1336 = vadd.f32 %v776, 10.0
        %v1337 = vadd.f32 %v967, 10.0
        %v1338 = vadd.f32 %v969, 10.0
        %v1339 = vadd.f32 %v778, 10.0
        %v1340 = vadd.f32 %v780, 10.0
        %v1341 = vadd.f32 %v971, 10.0
        %v1342 = vadd.f32 %v973, 10.0
        %v1343 = vadd.f32 %v784, 10.0
        %v1344 = vadd.f32 %v786, 10.0
        %v1345 = vadd.f32 %v977, 10.0
        %v1346 = vadd.f32 %v979, 10.0
        %v1347 = vadd.f32 %v788, 10.0
        %v1348 = vadd.f32 %v790, 10.0
        %v1349 = vadd.f32 %v981, 10.0
        %v1350 = vadd.f32 %v983, 10.0
        %v1351 = vadd.f32 %v794, 10.0
        %v1352 = vadd.f32 %v796, 10.0
        %v1353 = vadd.f32 %v987, 10.0
        %v1354 = vadd.f32 %v989, 10.0
        %v1355 = vadd.f32 %v798, 10.0
        %v1356 = vadd.f32 %v800, 10.0
        %v1357 = vadd.f32 %v991, 10.0
        %v1358 = vadd.f32 %v993, 10.0
        %v1359 = vadd.f32 %v804, 10.0
        %v1360 = vadd.f32 %v806, 10.0
        %v1361 = vadd.f32 %v997, 10.0
        %v1362 = vadd.f32 %v999, 10.0
        %v1363 = vadd.f32 %v808, 10.0
        %v1364 = vadd.f32 %v810, 10.0
        %v1365 = vadd.f32 %v1001, 10.0
        %v1366 = vadd.f32 %v1003, 10.0
        %v1367 = vadd.f32 %v814, 10.0
        %v1368 = vadd.f32 %v816, 10.0
        %v1369 = vadd.f32 %v1007, 10.0
        %v1370 = vadd.f32 %v1009, 10.0
        %v1371 = vadd.f32 %v818, 10.0
        %v1372 = vadd.f32 %v820, 10.0
        %v1373 = vadd.f32 %v1011, 10.0
        %v1374 = vadd.f32 %v1013, 10.0
        %v1375 = vadd.f32 %v824, 10.0
        %v1376 = vadd.f32 %v826, 10.0
        %v1377 = vadd.f32 %v1017, 10.0
        %v1378 = vadd.f32 %v1019, 10.0
        %v1379 = vadd.f32 %v828, 10.0
        %v1380 = vadd.f32 %v830, 10.0
        %v1381 = vadd.f32 %v1021, 10.0
        %v1382 = vadd.f32 %v1023, 10.0
        %v1383 = vadd.f32 %v834, 10.0
        %v1384 = vadd.f32 %v836, 10.0
        %v1385 = vadd.f32 %v1027, 10.0
        %v1386 = vadd.f32 %v1029, 10.0
        %v1387 = vadd.f32 %v838, 10.0
        %v1388 = vadd.f32 %v840, 10.0
        %v1389 = vadd.f32 %v1031, 10.0
        %v1390 = vadd.f32 %v1033, 10.0
        %v1391 = vadd.f32 %v844, 10.0
        %v1392 = vadd.f32 %v846, 10.0
        %v1393 = vadd.f32 %v1037, 10.0
        %v1394 = vadd.f32 %v1039, 10.0
        %v1395 = vadd.f32 %v848, 10.0
        %v1396 = vadd.f32 %v850, 10.0
        %v1397 = vadd.f32 %v1041, 10.0
        %v1398 = vadd.f32 %v1043, 10.0
        %v1399 = vadd.f32 %v854, 10.0
        %v1400 = vadd.f32 %v856, 10.0
        %v1401 = vadd.f32 %v1047, 10.0
        %v1402 = vadd.f32 %v1049, 10.0
        %v1403 = vadd.f32 %v858, 10.0
        %v1404 = vadd.f32 %v860, 10.0
        %v1405 = vadd.f32 %v1051, 10.0
        %v1406 = vadd.f32 %v1053, 10.0
        %v1407 = vadd.f32 %v864, 10.0
        %v1408 = vadd.f32 %v866, 10.0
        %v1409 = vadd.f32 %v1057, 10.0
        %v1410 = vadd.f32 %v1059, 10.0
        %v1411 = vadd.f32 %v868, 10.0
        %v1412 = vadd.f32 %v870, 10.0
        %v1413 = vadd.f32 %v1061, 10.0
        %v1414 = vadd.f32 %v1063, 10.0
        %v1415 = vadd.f32 %v874, 10.0
        %v1416 = vadd.f32 %v876, 10.0
        %v1417 = vadd.f32 %v1067, 10.0
        %v1418 = vadd.f32 %v1069, 10.0
        %v1419 = vadd.f32 %v878, 10.0
        %v1420 = vadd.f32 %v880, 10.0
        %v1421 = vadd.f32 %v1071, 10.0
        %v1422 = vadd.f32 %v1073, 10.0
        %v1423 = vadd.f32 %v884, 10.0
        %v1424 = vadd.f32 %v886, 10.0
        %v1425 = vadd.f32 %v1077, 10.0
        %v1426 = vadd.f32 %v1079, 10.0
        %v1427 = vadd.f32 %v888, 10.0
        %v1428 = vadd.f32 %v890, 10.0
        %v1429 = vadd.f32 %v1081, 10.0
        %v1430 = vadd.f32 %v1083, 10.0
        %v1431 = vadd.f32 %v894, 10.0
        %v1432 = vadd.f32 %v896, 10.0
        %v1433 = vadd.f32 %v1087, 10.0
        %v1434 = vadd.f32 %v1089, 10.0
        %v1435 = vadd.f32 %v898, 10.0
        %v1436 = vadd.f32 %v900, 10.0
        %v1437 = vadd.f32 %v1091, 10.0
        %v1438 = vadd.f32 %v1093, 10.0
        %v1439 = vadd.f32 %v904, 10.0
        %v1440 = vadd.f32 %v906, 10.0
        %v1441 = vadd.f32 %v1097, 10.0
        %v1442 = vadd.f32 %v1099, 10.0
        %v1443 = vadd.f32 %v908, 10.0
        %v1444 = vadd.f32 %v910, 10.0
        %v1445 = vadd.f32 %v1101, 10.0
        %v1446 = vadd.f32 %v1103, 10.0
        %v1447 = vsel %vm1191, %v1319, %v754
        %v1448 = vsel %vm1192, %v1320, %v756
        %v1449 = vsel %vm1193, %v1321, %v947
        %v1450 = vsel %vm1194, %v1322, %v949
        %v1451 = vsel %vm1195, %v1323, %v758
        %v1452 = vsel %vm1196, %v1324, %v760
        %v1453 = vsel %vm1197, %v1325, %v951
        %v1454 = vsel %vm1198, %v1326, %v953
        %v1455 = vsel %vm1199, %v1327, %v764
        %v1456 = vsel %vm1200, %v1328, %v766
        %v1457 = vsel %vm1201, %v1329, %v957
        %v1458 = vsel %vm1202, %v1330, %v959
        %v1459 = vsel %vm1203, %v1331, %v768
        %v1460 = vsel %vm1204, %v1332, %v770
        %v1461 = vsel %vm1205, %v1333, %v961
        %v1462 = vsel %vm1206, %v1334, %v963
        %v1463 = vsel %vm1207, %v1335, %v774
        %v1464 = vsel %vm1208, %v1336, %v776
        %v1465 = vsel %vm1209, %v1337, %v967
        %v1466 = vsel %vm1210, %v1338, %v969
        %v1467 = vsel %vm1211, %v1339, %v778
        %v1468 = vsel %vm1212, %v1340, %v780
        %v1469 = vsel %vm1213, %v1341, %v971
        %v1470 = vsel %vm1214, %v1342, %v973
        %v1471 = vsel %vm1215, %v1343, %v784
        %v1472 = vsel %vm1216, %v1344, %v786
        %v1473 = vsel %vm1217, %v1345, %v977
        %v1474 = vsel %vm1218, %v1346, %v979
        %v1475 = vsel %vm1219, %v1347, %v788
        %v1476 = vsel %vm1220, %v1348, %v790
        %v1477 = vsel %vm1221, %v1349, %v981
        %v1478 = vsel %vm1222, %v1350, %v983
        %v1479 = vsel %vm1223, %v1351, %v794
        %v1480 = vsel %vm1224, %v1352, %v796
        %v1481 = vsel %vm1225, %v1353, %v987
        %v1482 = vsel %vm1226, %v1354, %v989
        %v1483 = vsel %vm1227, %v1355, %v798
        %v1484 = vsel %vm1228, %v1356, %v800
        %v1485 = vsel %vm1229, %v1357, %v991
        %v1486 = vsel %vm1230, %v1358, %v993
        %v1487 = vsel %vm1231, %v1359, %v804
        %v1488 = vsel %vm1232, %v1360, %v806
        %v1489 = vsel %vm1233, %v1361, %v997
        %v1490 = vsel %vm1234, %v1362, %v999
        %v1491 = vsel %vm1235, %v1363, %v808
        %v1492 = vsel %vm1236, %v1364, %v810
        %v1493 = vsel %vm1237, %v1365, %v1001
        %v1494 = vsel %vm1238, %v1366, %v1003
        %v1495 = vsel %vm1239, %v1367, %v814
        %v1496 = vsel %vm1240, %v1368, %v816
        %v1497 = vsel %vm1241, %v1369, %v1007
        %v1498 = vsel %vm1242, %v1370, %v1009
        %v1499 = vsel %vm1243, %v1371, %v818
        %v1500 = vsel %vm1244, %v1372, %v820
        %v1501 = vsel %vm1245, %v1373, %v1011
        %v1502 = vsel %vm1246, %v1374, %v1013
        %v1503 = vsel %vm1247, %v1375, %v824
        %v1504 = vsel %vm1248, %v1376, %v826
        %v1505 = vsel %vm1249, %v1377, %v1017
        %v1506 = vsel %vm1250, %v1378, %v1019
        %v1507 = vsel %vm1251, %v1379, %v828
        %v1508 = vsel %vm1252, %v1380, %v830
        %v1509 = vsel %vm1253, %v1381, %v1021
        %v1510 = vsel %vm1254, %v1382, %v1023
        %v1511 = vsel %vm1255, %v1383, %v834
        %v1512 = vsel %vm1256, %v1384, %v836
        %v1513 = vsel %vm1257, %v1385, %v1027
        %v1514 = vsel %vm1258, %v1386, %v1029
        %v1515 = vsel %vm1259, %v1387, %v838
        %v1516 = vsel %vm1260, %v1388, %v840
        %v1517 = vsel %vm1261, %v1389, %v1031
        %v1518 = vsel %vm1262, %v1390, %v1033
        %v1519 = vsel %vm1263, %v1391, %v844
        %v1520 = vsel %vm1264, %v1392, %v846
        %v1521 = vsel %vm1265, %v1393, %v1037
        %v1522 = vsel %vm1266, %v1394, %v1039
        %v1523 = vsel %vm1267, %v1395, %v848
        %v1524 = vsel %vm1268, %v1396, %v850
        %v1525 = vsel %vm1269, %v1397, %v1041
        %v1526 = vsel %vm1270, %v1398, %v1043
        %v1527 = vsel %vm1271, %v1399, %v854
        %v1528 = vsel %vm1272, %v1400, %v856
        %v1529 = vsel %vm1273, %v1401, %v1047
        %v1530 = vsel %vm1274, %v1402, %v1049
        %v1531 = vsel %vm1275, %v1403, %v858
        %v1532 = vsel %vm1276, %v1404, %v860
        %v1533 = vsel %vm1277, %v1405, %v1051
        %v1534 = vsel %vm1278, %v1406, %v1053
        %v1535 = vsel %vm1279, %v1407, %v864
        %v1536 = vsel %vm1280, %v1408, %v866
        %v1537 = vsel %vm1281, %v1409, %v1057
        %v1538 = vsel %vm1282, %v1410, %v1059
        %v1539 = vsel %vm1283, %v1411, %v868
        %v1540 = vsel %vm1284, %v1412, %v870
        %v1541 = vsel %vm1285, %v1413, %v1061
        %v1542 = vsel %vm1286, %v1414, %v1063
        %v1543 = vsel %vm1287, %v1415, %v874
        %v1544 = vsel %vm1288, %v1416, %v876
        %v1545 = vsel %vm1289, %v1417, %v1067
        %v1546 = vsel %vm1290, %v1418, %v1069
        %v1547 = vsel %vm1291, %v1419, %v878
        %v1548 = vsel %vm1292, %v1420, %v880
        %v1549 = vsel %vm1293, %v1421, %v1071
        %v1550 = vsel %vm1294, %v1422, %v1073
        %v1551 = vsel %vm1295, %v1423, %v884
        %v1552 = vsel %vm1296, %v1424, %v886
        %v1553 = vsel %vm1297, %v1425, %v1077
        %v1554 = vsel %vm1298, %v1426, %v1079
        %v1555 = vsel %vm1299, %v1427, %v888
        %v1556 = vsel %vm1300, %v1428, %v890
        %v1557 = vsel %vm1301, %v1429, %v1081
        %v1558 = vsel %vm1302, %v1430, %v1083
        %v1559 = vsel %vm1303, %v1431, %v894
        %v1560 = vsel %vm1304, %v1432, %v896
        %v1561 = vsel %vm1305, %v1433, %v1087
        %v1562 = vsel %vm1306, %v1434, %v1089
        %v1563 = vsel %vm1307, %v1435, %v898
        %v1564 = vsel %vm1308, %v1436, %v900
        %v1565 = vsel %vm1309, %v1437, %v1091
        %v1566 = vsel %vm1310, %v1438, %v1093
        %v1567 = vsel %vm1311, %v1439, %v904
        %v1568 = vsel %vm1312, %v1440, %v906
        %v1569 = vsel %vm1313, %v1441, %v1097
        %v1570 = vsel %vm1314, %v1442, %v1099
        %v1571 = vsel %vm1315, %v1443, %v908
        %v1572 = vsel %vm1316, %v1444, %v910
        %v1573 = vsel %vm1317, %v1445, %v1101
        %v1574 = vsel %vm1318, %v1446, %v1103
      $region36: #{tpu_custom_call.1} parent=27 // pred_fallthru
        %v1575 = vphi 0, %v1447
        %v1576 = vphi 0, %v1448
        %v1577 = vphi 0, %v1449
        %v1578 = vphi 0, %v1450
        %v1579 = vphi 0, %v1451
        %v1580 = vphi 0, %v1452
        %v1581 = vphi 0, %v1453
        %v1582 = vphi 0, %v1454
        %v1583 = vphi 0, %v1455
        %v1584 = vphi 0, %v1456
        %v1585 = vphi 0, %v1457
        %v1586 = vphi 0, %v1458
        %v1587 = vphi 0, %v1459
        %v1588 = vphi 0, %v1460
        %v1589 = vphi 0, %v1461
        %v1590 = vphi 0, %v1462
        %v1591 = vphi 0, %v1463
        %v1592 = vphi 0, %v1464
        %v1593 = vphi 0, %v1465
        %v1594 = vphi 0, %v1466
        %v1595 = vphi 0, %v1467
        %v1596 = vphi 0, %v1468
        %v1597 = vphi 0, %v1469
        %v1598 = vphi 0, %v1470
        %v1599 = vphi 0, %v1471
        %v1600 = vphi 0, %v1472
        %v1601 = vphi 0, %v1473
        %v1602 = vphi 0, %v1474
        %v1603 = vphi 0, %v1475
        %v1604 = vphi 0, %v1476
        %v1605 = vphi 0, %v1477
        %v1606 = vphi 0, %v1478
        %v1607 = vphi 0, %v1479
        %v1608 = vphi 0, %v1480
        %v1609 = vphi 0, %v1481
        %v1610 = vphi 0, %v1482
        %v1611 = vphi 0, %v1483
        %v1612 = vphi 0, %v1484
        %v1613 = vphi 0, %v1485
        %v1614 = vphi 0, %v1486
        %v1615 = vphi 0, %v1487
        %v1616 = vphi 0, %v1488
        %v1617 = vphi 0, %v1489
        %v1618 = vphi 0, %v1490
        %v1619 = vphi 0, %v1491
        %v1620 = vphi 0, %v1492
        %v1621 = vphi 0, %v1493
        %v1622 = vphi 0, %v1494
        %v1623 = vphi 0, %v1495
        %v1624 = vphi 0, %v1496
        %v1625 = vphi 0, %v1497
        %v1626 = vphi 0, %v1498
        %v1627 = vphi 0, %v1499
        %v1628 = vphi 0, %v1500
        %v1629 = vphi 0, %v1501
        %v1630 = vphi 0, %v1502
        %v1631 = vphi 0, %v1503
        %v1632 = vphi 0, %v1504
        %v1633 = vphi 0, %v1505
        %v1634 = vphi 0, %v1506
        %v1635 = vphi 0, %v1507
        %v1636 = vphi 0, %v1508
        %v1637 = vphi 0, %v1509
        %v1638 = vphi 0, %v1510
        %v1639 = vphi 0, %v1511
        %v1640 = vphi 0, %v1512
        %v1641 = vphi 0, %v1513
        %v1642 = vphi 0, %v1514
        %v1643 = vphi 0, %v1515
        %v1644 = vphi 0, %v1516
        %v1645 = vphi 0, %v1517
        %v1646 = vphi 0, %v1518
        %v1647 = vphi 0, %v1519
        %v1648 = vphi 0, %v1520
        %v1649 = vphi 0, %v1521
        %v1650 = vphi 0, %v1522
        %v1651 = vphi 0, %v1523
        %v1652 = vphi 0, %v1524
        %v1653 = vphi 0, %v1525
        %v1654 = vphi 0, %v1526
        %v1655 = vphi 0, %v1527
        %v1656 = vphi 0, %v1528
        %v1657 = vphi 0, %v1529
        %v1658 = vphi 0, %v1530
        %v1659 = vphi 0, %v1531
        %v1660 = vphi 0, %v1532
        %v1661 = vphi 0, %v1533
        %v1662 = vphi 0, %v1534
        %v1663 = vphi 0, %v1535
        %v1664 = vphi 0, %v1536
        %v1665 = vphi 0, %v1537
        %v1666 = vphi 0, %v1538
        %v1667 = vphi 0, %v1539
        %v1668 = vphi 0, %v1540
        %v1669 = vphi 0, %v1541
        %v1670 = vphi 0, %v1542
        %v1671 = vphi 0, %v1543
        %v1672 = vphi 0, %v1544
        %v1673 = vphi 0, %v1545
        %v1674 = vphi 0, %v1546
        %v1675 = vphi 0, %v1547
        %v1676 = vphi 0, %v1548
        %v1677 = vphi 0, %v1549
        %v1678 = vphi 0, %v1550
        %v1679 = vphi 0, %v1551
        %v1680 = vphi 0, %v1552
        %v1681 = vphi 0, %v1553
        %v1682 = vphi 0, %v1554
        %v1683 = vphi 0, %v1555
        %v1684 = vphi 0, %v1556
        %v1685 = vphi 0, %v1557
        %v1686 = vphi 0, %v1558
        %v1687 = vphi 0, %v1559
        %v1688 = vphi 0, %v1560
        %v1689 = vphi 0, %v1561
        %v1690 = vphi 0, %v1562
        %v1691 = vphi 0, %v1563
        %v1692 = vphi 0, %v1564
        %v1693 = vphi 0, %v1565
        %v1694 = vphi 0, %v1566
        %v1695 = vphi 0, %v1567
        %v1696 = vphi 0, %v1568
        %v1697 = vphi 0, %v1569
        %v1698 = vphi 0, %v1570
        %v1699 = vphi 0, %v1571
        %v1700 = vphi 0, %v1572
        %v1701 = vphi 0, %v1573
        %v1702 = vphi 0, %v1574
      // Predicated region
      $region37: #{tpu_custom_call.1} parent=27 // pred_check
        %p1703 = pneg %p1116
      $region38: #{tpu_custom_call.1} parent=27 // pred_check_branch
        %1705 = sbr.rel (%p1703) target = $region40
      $region39: #{tpu_custom_call.1} parent=27 // pred_region
        _
      $region40: #{tpu_custom_call.1} parent=27 // pred_fallthru
        %v1706 = vphi %v1575, %v754
        %v1707 = vphi %v1576, %v756
        %v1708 = vphi %v1577, %v947
        %v1709 = vphi %v1578, %v949
        %v1710 = vphi %v1579, %v758
        %v1711 = vphi %v1580, %v760
        %v1712 = vphi %v1581, %v951
        %v1713 = vphi %v1582, %v953
        %v1714 = vphi %v1583, %v764
        %v1715 = vphi %v1584, %v766
        %v1716 = vphi %v1585, %v957
        %v1717 = vphi %v1586, %v959
        %v1718 = vphi %v1587, %v768
        %v1719 = vphi %v1588, %v770
        %v1720 = vphi %v1589, %v961
        %v1721 = vphi %v1590, %v963
        %v1722 = vphi %v1591, %v774
        %v1723 = vphi %v1592, %v776
        %v1724 = vphi %v1593, %v967
        %v1725 = vphi %v1594, %v969
        %v1726 = vphi %v1595, %v778
        %v1727 = vphi %v1596, %v780
        %v1728 = vphi %v1597, %v971
        %v1729 = vphi %v1598, %v973
        %v1730 = vphi %v1599, %v784
        %v1731 = vphi %v1600, %v786
        %v1732 = vphi %v1601, %v977
        %v1733 = vphi %v1602, %v979
        %v1734 = vphi %v1603, %v788
        %v1735 = vphi %v1604, %v790
        %v1736 = vphi %v1605, %v981
        %v1737 = vphi %v1606, %v983
        %v1738 = vphi %v1607, %v794
        %v1739 = vphi %v1608, %v796
        %v1740 = vphi %v1609, %v987
        %v1741 = vphi %v1610, %v989
        %v1742 = vphi %v1611, %v798
        %v1743 = vphi %v1612, %v800
        %v1744 = vphi %v1613, %v991
        %v1745 = vphi %v1614, %v993
        %v1746 = vphi %v1615, %v804
        %v1747 = vphi %v1616, %v806
        %v1748 = vphi %v1617, %v997
        %v1749 = vphi %v1618, %v999
        %v1750 = vphi %v1619, %v808
        %v1751 = vphi %v1620, %v810
        %v1752 = vphi %v1621, %v1001
        %v1753 = vphi %v1622, %v1003
        %v1754 = vphi %v1623, %v814
        %v1755 = vphi %v1624, %v816
        %v1756 = vphi %v1625, %v1007
        %v1757 = vphi %v1626, %v1009
        %v1758 = vphi %v1627, %v818
        %v1759 = vphi %v1628, %v820
        %v1760 = vphi %v1629, %v1011
        %v1761 = vphi %v1630, %v1013
        %v1762 = vphi %v1631, %v824
        %v1763 = vphi %v1632, %v826
        %v1764 = vphi %v1633, %v1017
        %v1765 = vphi %v1634, %v1019
        %v1766 = vphi %v1635, %v828
        %v1767 = vphi %v1636, %v830
        %v1768 = vphi %v1637, %v1021
        %v1769 = vphi %v1638, %v1023
        %v1770 = vphi %v1639, %v834
        %v1771 = vphi %v1640, %v836
        %v1772 = vphi %v1641, %v1027
        %v1773 = vphi %v1642, %v1029
        %v1774 = vphi %v1643, %v838
        %v1775 = vphi %v1644, %v840
        %v1776 = vphi %v1645, %v1031
        %v1777 = vphi %v1646, %v1033
        %v1778 = vphi %v1647, %v844
        %v1779 = vphi %v1648, %v846
        %v1780 = vphi %v1649, %v1037
        %v1781 = vphi %v1650, %v1039
        %v1782 = vphi %v1651, %v848
        %v1783 = vphi %v1652, %v850
        %v1784 = vphi %v1653, %v1041
        %v1785 = vphi %v1654, %v1043
        %v1786 = vphi %v1655, %v854
        %v1787 = vphi %v1656, %v856
        %v1788 = vphi %v1657, %v1047
        %v1789 = vphi %v1658, %v1049
        %v1790 = vphi %v1659, %v858
        %v1791 = vphi %v1660, %v860
        %v1792 = vphi %v1661, %v1051
        %v1793 = vphi %v1662, %v1053
        %v1794 = vphi %v1663, %v864
        %v1795 = vphi %v1664, %v866
        %v1796 = vphi %v1665, %v1057
        %v1797 = vphi %v1666, %v1059
        %v1798 = vphi %v1667, %v868
        %v1799 = vphi %v1668, %v870
        %v1800 = vphi %v1669, %v1061
        %v1801 = vphi %v1670, %v1063
        %v1802 = vphi %v1671, %v874
        %v1803 = vphi %v1672, %v876
        %v1804 = vphi %v1673, %v1067
        %v1805 = vphi %v1674, %v1069
        %v1806 = vphi %v1675, %v878
        %v1807 = vphi %v1676, %v880
        %v1808 = vphi %v1677, %v1071
        %v1809 = vphi %v1678, %v1073
        %v1810 = vphi %v1679, %v884
        %v1811 = vphi %v1680, %v886
        %v1812 = vphi %v1681, %v1077
        %v1813 = vphi %v1682, %v1079
        %v1814 = vphi %v1683, %v888
        %v1815 = vphi %v1684, %v890
        %v1816 = vphi %v1685, %v1081
        %v1817 = vphi %v1686, %v1083
        %v1818 = vphi %v1687, %v894
        %v1819 = vphi %v1688, %v896
        %v1820 = vphi %v1689, %v1087
        %v1821 = vphi %v1690, %v1089
        %v1822 = vphi %v1691, %v898
        %v1823 = vphi %v1692, %v900
        %v1824 = vphi %v1693, %v1091
        %v1825 = vphi %v1694, %v1093
        %v1826 = vphi %v1695, %v904
        %v1827 = vphi %v1696, %v906
        %v1828 = vphi %v1697, %v1097
        %v1829 = vphi %v1698, %v1099
        %v1830 = vphi %v1699, %v908
        %v1831 = vphi %v1700, %v910
        %v1832 = vphi %v1701, %v1101
        %v1833 = vphi %v1702, %v1103
      %v1834 = vmax.f32 %v1706, %v1707
      %v1835 = vmax.f32 %v1834, %v1708
      %v1836 = vmax.f32 %v1835, %v1709
      %1837 = vmax.xlane.f32.xlu0 %v1836
      %v1838 = vpop.xlane.xlu0 %1837
      %v1839 = vmax.f32 %v1710, %v1711
      %v1840 = vmax.f32 %v1839, %v1712
      %v1841 = vmax.f32 %v1840, %v1713
      %1842 = vmax.xlane.f32.xlu0 %v1841
      %v1843 = vpop.xlane.xlu0 %1842
      %v1844 = vmax.f32 %v1714, %v1715
      %v1845 = vmax.f32 %v1844, %v1716
      %v1846 = vmax.f32 %v1845, %v1717
      %1847 = vmax.xlane.f32.xlu0 %v1846
      %v1848 = vpop.xlane.xlu0 %1847
      %v1849 = vmax.f32 %v1718, %v1719
      %v1850 = vmax.f32 %v1849, %v1720
      %v1851 = vmax.f32 %v1850, %v1721
      %1852 = vmax.xlane.f32.xlu0 %v1851
      %v1853 = vpop.xlane.xlu0 %1852
      %v1854 = vmax.f32 %v1722, %v1723
      %v1855 = vmax.f32 %v1854, %v1724
      %v1856 = vmax.f32 %v1855, %v1725
      %1857 = vmax.xlane.f32.xlu0 %v1856
      %v1858 = vpop.xlane.xlu0 %1857
      %v1859 = vmax.f32 %v1726, %v1727
      %v1860 = vmax.f32 %v1859, %v1728
      %v1861 = vmax.f32 %v1860, %v1729
      %1862 = vmax.xlane.f32.xlu0 %v1861
      %v1863 = vpop.xlane.xlu0 %1862
      %v1864 = vmax.f32 %v1730, %v1731
      %v1865 = vmax.f32 %v1864, %v1732
      %v1866 = vmax.f32 %v1865, %v1733
      %1867 = vmax.xlane.f32.xlu0 %v1866
      %v1868 = vpop.xlane.xlu0 %1867
      %v1869 = vmax.f32 %v1734, %v1735
      %v1870 = vmax.f32 %v1869, %v1736
      %v1871 = vmax.f32 %v1870, %v1737
      %1872 = vmax.xlane.f32.xlu0 %v1871
      %v1873 = vpop.xlane.xlu0 %1872
      %v1874 = vmax.f32 %v1738, %v1739
      %v1875 = vmax.f32 %v1874, %v1740
      %v1876 = vmax.f32 %v1875, %v1741
      %1877 = vmax.xlane.f32.xlu0 %v1876
      %v1878 = vpop.xlane.xlu0 %1877
      %v1879 = vmax.f32 %v1742, %v1743
      %v1880 = vmax.f32 %v1879, %v1744
      %v1881 = vmax.f32 %v1880, %v1745
      %1882 = vmax.xlane.f32.xlu0 %v1881
      %v1883 = vpop.xlane.xlu0 %1882
      %v1884 = vmax.f32 %v1746, %v1747
      %v1885 = vmax.f32 %v1884, %v1748
      %v1886 = vmax.f32 %v1885, %v1749
      %1887 = vmax.xlane.f32.xlu0 %v1886
      %v1888 = vpop.xlane.xlu0 %1887
      %v1889 = vmax.f32 %v1750, %v1751
      %v1890 = vmax.f32 %v1889, %v1752
      %v1891 = vmax.f32 %v1890, %v1753
      %1892 = vmax.xlane.f32.xlu0 %v1891
      %v1893 = vpop.xlane.xlu0 %1892
      %v1894 = vmax.f32 %v1754, %v1755
      %v1895 = vmax.f32 %v1894, %v1756
      %v1896 = vmax.f32 %v1895, %v1757
      %1897 = vmax.xlane.f32.xlu0 %v1896
      %v1898 = vpop.xlane.xlu0 %1897
      %v1899 = vmax.f32 %v1758, %v1759
      %v1900 = vmax.f32 %v1899, %v1760
      %v1901 = vmax.f32 %v1900, %v1761
      %1902 = vmax.xlane.f32.xlu0 %v1901
      %v1903 = vpop.xlane.xlu0 %1902
      %v1904 = vmax.f32 %v1762, %v1763
      %v1905 = vmax.f32 %v1904, %v1764
      %v1906 = vmax.f32 %v1905, %v1765
      %1907 = vmax.xlane.f32.xlu0 %v1906
      %v1908 = vpop.xlane.xlu0 %1907
      %v1909 = vmax.f32 %v1766, %v1767
      %v1910 = vmax.f32 %v1909, %v1768
      %v1911 = vmax.f32 %v1910, %v1769
      %1912 = vmax.xlane.f32.xlu0 %v1911
      %v1913 = vpop.xlane.xlu0 %1912
      %v1914 = vmax.f32 %v1770, %v1771
      %v1915 = vmax.f32 %v1914, %v1772
      %v1916 = vmax.f32 %v1915, %v1773
      %1917 = vmax.xlane.f32.xlu0 %v1916
      %v1918 = vpop.xlane.xlu0 %1917
      %v1919 = vmax.f32 %v1774, %v1775
      %v1920 = vmax.f32 %v1919, %v1776
      %v1921 = vmax.f32 %v1920, %v1777
      %1922 = vmax.xlane.f32.xlu0 %v1921
      %v1923 = vpop.xlane.xlu0 %1922
      %v1924 = vmax.f32 %v1778, %v1779
      %v1925 = vmax.f32 %v1924, %v1780
      %v1926 = vmax.f32 %v1925, %v1781
      %1927 = vmax.xlane.f32.xlu0 %v1926
      %v1928 = vpop.xlane.xlu0 %1927
      %v1929 = vmax.f32 %v1782, %v1783
      %v1930 = vmax.f32 %v1929, %v1784
      %v1931 = vmax.f32 %v1930, %v1785
      %1932 = vmax.xlane.f32.xlu0 %v1931
      %v1933 = vpop.xlane.xlu0 %1932
      %v1934 = vmax.f32 %v1786, %v1787
      %v1935 = vmax.f32 %v1934, %v1788
      %v1936 = vmax.f32 %v1935, %v1789
      %1937 = vmax.xlane.f32.xlu0 %v1936
      %v1938 = vpop.xlane.xlu0 %1937
      %v1939 = vmax.f32 %v1790, %v1791
      %v1940 = vmax.f32 %v1939, %v1792
      %v1941 = vmax.f32 %v1940, %v1793
      %1942 = vmax.xlane.f32.xlu0 %v1941
      %v1943 = vpop.xlane.xlu0 %1942
      %v1944 = vmax.f32 %v1794, %v1795
      %v1945 = vmax.f32 %v1944, %v1796
      %v1946 = vmax.f32 %v1945, %v1797
      %1947 = vmax.xlane.f32.xlu0 %v1946
      %v1948 = vpop.xlane.xlu0 %1947
      %v1949 = vmax.f32 %v1798, %v1799
      %v1950 = vmax.f32 %v1949, %v1800
      %v1951 = vmax.f32 %v1950, %v1801
      %1952 = vmax.xlane.f32.xlu0 %v1951
      %v1953 = vpop.xlane.xlu0 %1952
      %v1954 = vmax.f32 %v1802, %v1803
      %v1955 = vmax.f32 %v1954, %v1804
      %v1956 = vmax.f32 %v1955, %v1805
      %1957 = vmax.xlane.f32.xlu0 %v1956
      %v1958 = vpop.xlane.xlu0 %1957
      %v1959 = vmax.f32 %v1806, %v1807
      %v1960 = vmax.f32 %v1959, %v1808
      %v1961 = vmax.f32 %v1960, %v1809
      %1962 = vmax.xlane.f32.xlu0 %v1961
      %v1963 = vpop.xlane.xlu0 %1962
      %v1964 = vmax.f32 %v1810, %v1811
      %v1965 = vmax.f32 %v1964, %v1812
      %v1966 = vmax.f32 %v1965, %v1813
      %1967 = vmax.xlane.f32.xlu0 %v1966
      %v1968 = vpop.xlane.xlu0 %1967
      %v1969 = vmax.f32 %v1814, %v1815
      %v1970 = vmax.f32 %v1969, %v1816
      %v1971 = vmax.f32 %v1970, %v1817
      %1972 = vmax.xlane.f32.xlu0 %v1971
      %v1973 = vpop.xlane.xlu0 %1972
      %v1974 = vmax.f32 %v1818, %v1819
      %v1975 = vmax.f32 %v1974, %v1820
      %v1976 = vmax.f32 %v1975, %v1821
      %1977 = vmax.xlane.f32.xlu0 %v1976
      %v1978 = vpop.xlane.xlu0 %1977
      %v1979 = vmax.f32 %v1822, %v1823
      %v1980 = vmax.f32 %v1979, %v1824
      %v1981 = vmax.f32 %v1980, %v1825
      %1982 = vmax.xlane.f32.xlu0 %v1981
      %v1983 = vpop.xlane.xlu0 %1982
      %v1984 = vmax.f32 %v1826, %v1827
      %v1985 = vmax.f32 %v1984, %v1828
      %v1986 = vmax.f32 %v1985, %v1829
      %1987 = vmax.xlane.f32.xlu0 %v1986
      %v1988 = vpop.xlane.xlu0 %1987
      %v1989 = vmax.f32 %v1830, %v1831
      %v1990 = vmax.f32 %v1989, %v1832
      %v1991 = vmax.f32 %v1990, %v1833
      %1992 = vmax.xlane.f32.xlu0 %v1991
      %v1993 = vpop.xlane.xlu0 %1992
      %vm1994 = vcmp.ge.f32.partialorder %v1706, %v1838
      %vm1995 = vcmp.ge.f32.partialorder %v1707, %v1838
      %vm1996 = vcmp.ge.f32.partialorder %v1708, %v1838
      %vm1997 = vcmp.ge.f32.partialorder %v1709, %v1838
      %vm1998 = vcmp.ge.f32.partialorder %v1710, %v1843
      %vm1999 = vcmp.ge.f32.partialorder %v1711, %v1843
      %vm2000 = vcmp.ge.f32.partialorder %v1712, %v1843
      %vm2001 = vcmp.ge.f32.partialorder %v1713, %v1843
      %vm2002 = vcmp.ge.f32.partialorder %v1714, %v1848
      %vm2003 = vcmp.ge.f32.partialorder %v1715, %v1848
      %vm2004 = vcmp.ge.f32.partialorder %v1716, %v1848
      %vm2005 = vcmp.ge.f32.partialorder %v1717, %v1848
      %vm2006 = vcmp.ge.f32.partialorder %v1718, %v1853
      %vm2007 = vcmp.ge.f32.partialorder %v1719, %v1853
      %vm2008 = vcmp.ge.f32.partialorder %v1720, %v1853
      %vm2009 = vcmp.ge.f32.partialorder %v1721, %v1853
      %vm2010 = vcmp.ge.f32.partialorder %v1722, %v1858
      %vm2011 = vcmp.ge.f32.partialorder %v1723, %v1858
      %vm2012 = vcmp.ge.f32.partialorder %v1724, %v1858
      %vm2013 = vcmp.ge.f32.partialorder %v1725, %v1858
      %vm2014 = vcmp.ge.f32.partialorder %v1726, %v1863
      %vm2015 = vcmp.ge.f32.partialorder %v1727, %v1863
      %vm2016 = vcmp.ge.f32.partialorder %v1728, %v1863
      %vm2017 = vcmp.ge.f32.partialorder %v1729, %v1863
      %vm2018 = vcmp.ge.f32.partialorder %v1730, %v1868
      %vm2019 = vcmp.ge.f32.partialorder %v1731, %v1868
      %vm2020 = vcmp.ge.f32.partialorder %v1732, %v1868
      %vm2021 = vcmp.ge.f32.partialorder %v1733, %v1868
      %vm2022 = vcmp.ge.f32.partialorder %v1734, %v1873
      %vm2023 = vcmp.ge.f32.partialorder %v1735, %v1873
      %vm2024 = vcmp.ge.f32.partialorder %v1736, %v1873
      %vm2025 = vcmp.ge.f32.partialorder %v1737, %v1873
      %vm2026 = vcmp.ge.f32.partialorder %v1738, %v1878
      %vm2027 = vcmp.ge.f32.partialorder %v1739, %v1878
      %vm2028 = vcmp.ge.f32.partialorder %v1740, %v1878
      %vm2029 = vcmp.ge.f32.partialorder %v1741, %v1878
      %vm2030 = vcmp.ge.f32.partialorder %v1742, %v1883
      %vm2031 = vcmp.ge.f32.partialorder %v1743, %v1883
      %vm2032 = vcmp.ge.f32.partialorder %v1744, %v1883
      %vm2033 = vcmp.ge.f32.partialorder %v1745, %v1883
      %vm2034 = vcmp.ge.f32.partialorder %v1746, %v1888
      %vm2035 = vcmp.ge.f32.partialorder %v1747, %v1888
      %vm2036 = vcmp.ge.f32.partialorder %v1748, %v1888
      %vm2037 = vcmp.ge.f32.partialorder %v1749, %v1888
      %vm2038 = vcmp.ge.f32.partialorder %v1750, %v1893
      %vm2039 = vcmp.ge.f32.partialorder %v1751, %v1893
      %vm2040 = vcmp.ge.f32.partialorder %v1752, %v1893
      %vm2041 = vcmp.ge.f32.partialorder %v1753, %v1893
      %vm2042 = vcmp.ge.f32.partialorder %v1754, %v1898
      %vm2043 = vcmp.ge.f32.partialorder %v1755, %v1898
      %vm2044 = vcmp.ge.f32.partialorder %v1756, %v1898
      %vm2045 = vcmp.ge.f32.partialorder %v1757, %v1898
      %vm2046 = vcmp.ge.f32.partialorder %v1758, %v1903
      %vm2047 = vcmp.ge.f32.partialorder %v1759, %v1903
      %vm2048 = vcmp.ge.f32.partialorder %v1760, %v1903
      %vm2049 = vcmp.ge.f32.partialorder %v1761, %v1903
      %vm2050 = vcmp.ge.f32.partialorder %v1762, %v1908
      %vm2051 = vcmp.ge.f32.partialorder %v1763, %v1908
      %vm2052 = vcmp.ge.f32.partialorder %v1764, %v1908
      %vm2053 = vcmp.ge.f32.partialorder %v1765, %v1908
      %vm2054 = vcmp.ge.f32.partialorder %v1766, %v1913
      %vm2055 = vcmp.ge.f32.partialorder %v1767, %v1913
      %vm2056 = vcmp.ge.f32.partialorder %v1768, %v1913
      %vm2057 = vcmp.ge.f32.partialorder %v1769, %v1913
      %vm2058 = vcmp.ge.f32.partialorder %v1770, %v1918
      %vm2059 = vcmp.ge.f32.partialorder %v1771, %v1918
      %vm2060 = vcmp.ge.f32.partialorder %v1772, %v1918
      %vm2061 = vcmp.ge.f32.partialorder %v1773, %v1918
      %vm2062 = vcmp.ge.f32.partialorder %v1774, %v1923
      %vm2063 = vcmp.ge.f32.partialorder %v1775, %v1923
      %vm2064 = vcmp.ge.f32.partialorder %v1776, %v1923
      %vm2065 = vcmp.ge.f32.partialorder %v1777, %v1923
      %vm2066 = vcmp.ge.f32.partialorder %v1778, %v1928
      %vm2067 = vcmp.ge.f32.partialorder %v1779, %v1928
      %vm2068 = vcmp.ge.f32.partialorder %v1780, %v1928
      %vm2069 = vcmp.ge.f32.partialorder %v1781, %v1928
      %vm2070 = vcmp.ge.f32.partialorder %v1782, %v1933
      %vm2071 = vcmp.ge.f32.partialorder %v1783, %v1933
      %vm2072 = vcmp.ge.f32.partialorder %v1784, %v1933
      %vm2073 = vcmp.ge.f32.partialorder %v1785, %v1933
      %vm2074 = vcmp.ge.f32.partialorder %v1786, %v1938
      %vm2075 = vcmp.ge.f32.partialorder %v1787, %v1938
      %vm2076 = vcmp.ge.f32.partialorder %v1788, %v1938
      %vm2077 = vcmp.ge.f32.partialorder %v1789, %v1938
      %vm2078 = vcmp.ge.f32.partialorder %v1790, %v1943
      %vm2079 = vcmp.ge.f32.partialorder %v1791, %v1943
      %vm2080 = vcmp.ge.f32.partialorder %v1792, %v1943
      %vm2081 = vcmp.ge.f32.partialorder %v1793, %v1943
      %vm2082 = vcmp.ge.f32.partialorder %v1794, %v1948
      %vm2083 = vcmp.ge.f32.partialorder %v1795, %v1948
      %vm2084 = vcmp.ge.f32.partialorder %v1796, %v1948
      %vm2085 = vcmp.ge.f32.partialorder %v1797, %v1948
      %vm2086 = vcmp.ge.f32.partialorder %v1798, %v1953
      %vm2087 = vcmp.ge.f32.partialorder %v1799, %v1953
      %vm2088 = vcmp.ge.f32.partialorder %v1800, %v1953
      %vm2089 = vcmp.ge.f32.partialorder %v1801, %v1953
      %vm2090 = vcmp.ge.f32.partialorder %v1802, %v1958
      %vm2091 = vcmp.ge.f32.partialorder %v1803, %v1958
      %vm2092 = vcmp.ge.f32.partialorder %v1804, %v1958
      %vm2093 = vcmp.ge.f32.partialorder %v1805, %v1958
      %vm2094 = vcmp.ge.f32.partialorder %v1806, %v1963
      %vm2095 = vcmp.ge.f32.partialorder %v1807, %v1963
      %vm2096 = vcmp.ge.f32.partialorder %v1808, %v1963
      %vm2097 = vcmp.ge.f32.partialorder %v1809, %v1963
      %vm2098 = vcmp.ge.f32.partialorder %v1810, %v1968
      %vm2099 = vcmp.ge.f32.partialorder %v1811, %v1968
      %vm2100 = vcmp.ge.f32.partialorder %v1812, %v1968
      %vm2101 = vcmp.ge.f32.partialorder %v1813, %v1968
      %vm2102 = vcmp.ge.f32.partialorder %v1814, %v1973
      %vm2103 = vcmp.ge.f32.partialorder %v1815, %v1973
      %vm2104 = vcmp.ge.f32.partialorder %v1816, %v1973
      %vm2105 = vcmp.ge.f32.partialorder %v1817, %v1973
      %vm2106 = vcmp.ge.f32.partialorder %v1818, %v1978
      %vm2107 = vcmp.ge.f32.partialorder %v1819, %v1978
      %vm2108 = vcmp.ge.f32.partialorder %v1820, %v1978
      %vm2109 = vcmp.ge.f32.partialorder %v1821, %v1978
      %vm2110 = vcmp.ge.f32.partialorder %v1822, %v1983
      %vm2111 = vcmp.ge.f32.partialorder %v1823, %v1983
      %vm2112 = vcmp.ge.f32.partialorder %v1824, %v1983
      %vm2113 = vcmp.ge.f32.partialorder %v1825, %v1983
      %vm2114 = vcmp.ge.f32.partialorder %v1826, %v1988
      %vm2115 = vcmp.ge.f32.partialorder %v1827, %v1988
      %vm2116 = vcmp.ge.f32.partialorder %v1828, %v1988
      %vm2117 = vcmp.ge.f32.partialorder %v1829, %v1988
      %vm2118 = vcmp.ge.f32.partialorder %v1830, %v1993
      %vm2119 = vcmp.ge.f32.partialorder %v1831, %v1993
      %vm2120 = vcmp.ge.f32.partialorder %v1832, %v1993
      %vm2121 = vcmp.ge.f32.partialorder %v1833, %v1993
      %v2122 = vsel %vm1994, %v1106, 512
      %v2123 = vsel %vm1995, %v1107, 512
      %v2124 = vsel %vm1996, %v1108, 512
      %v2125 = vsel %vm1997, %v1109, 512
      %v2126 = vsel %vm1998, %v1106, 512
      %v2127 = vsel %vm1999, %v1107, 512
      %v2128 = vsel %vm2000, %v1108, 512
      %v2129 = vsel %vm2001, %v1109, 512
      %v2130 = vsel %vm2002, %v1106, 512
      %v2131 = vsel %vm2003, %v1107, 512
      %v2132 = vsel %vm2004, %v1108, 512
      %v2133 = vsel %vm2005, %v1109, 512
      %v2134 = vsel %vm2006, %v1106, 512
      %v2135 = vsel %vm2007, %v1107, 512
      %v2136 = vsel %vm2008, %v1108, 512
      %v2137 = vsel %vm2009, %v1109, 512
      %v2138 = vsel %vm2010, %v1106, 512
      %v2139 = vsel %vm2011, %v1107, 512
      %v2140 = vsel %vm2012, %v1108, 512
      %v2141 = vsel %vm2013, %v1109, 512
      %v2142 = vsel %vm2014, %v1106, 512
      %v2143 = vsel %vm2015, %v1107, 512
      %v2144 = vsel %vm2016, %v1108, 512
      %v2145 = vsel %vm2017, %v1109, 512
      %v2146 = vsel %vm2018, %v1106, 512
      %v2147 = vsel %vm2019, %v1107, 512
      %v2148 = vsel %vm2020, %v1108, 512
      %v2149 = vsel %vm2021, %v1109, 512
      %v2150 = vsel %vm2022, %v1106, 512
      %v2151 = vsel %vm2023, %v1107, 512
      %v2152 = vsel %vm2024, %v1108, 512
      %v2153 = vsel %vm2025, %v1109, 512
      %v2154 = vsel %vm2026, %v1106, 512
      %v2155 = vsel %vm2027, %v1107, 512
      %v2156 = vsel %vm2028, %v1108, 512
      %v2157 = vsel %vm2029, %v1109, 512
      %v2158 = vsel %vm2030, %v1106, 512
      %v2159 = vsel %vm2031, %v1107, 512
      %v2160 = vsel %vm2032, %v1108, 512
      %v2161 = vsel %vm2033, %v1109, 512
      %v2162 = vsel %vm2034, %v1106, 512
      %v2163 = vsel %vm2035, %v1107, 512
      %v2164 = vsel %vm2036, %v1108, 512
      %v2165 = vsel %vm2037, %v1109, 512
      %v2166 = vsel %vm2038, %v1106, 512
      %v2167 = vsel %vm2039, %v1107, 512
      %v2168 = vsel %vm2040, %v1108, 512
      %v2169 = vsel %vm2041, %v1109, 512
      %v2170 = vsel %vm2042, %v1106, 512
      %v2171 = vsel %vm2043, %v1107, 512
      %v2172 = vsel %vm2044, %v1108, 512
      %v2173 = vsel %vm2045, %v1109, 512
      %v2174 = vsel %vm2046, %v1106, 512
      %v2175 = vsel %vm2047, %v1107, 512
      %v2176 = vsel %vm2048, %v1108, 512
      %v2177 = vsel %vm2049, %v1109, 512
      %v2178 = vsel %vm2050, %v1106, 512
      %v2179 = vsel %vm2051, %v1107, 512
      %v2180 = vsel %vm2052, %v1108, 512
      %v2181 = vsel %vm2053, %v1109, 512
      %v2182 = vsel %vm2054, %v1106, 512
      %v2183 = vsel %vm2055, %v1107, 512
      %v2184 = vsel %vm2056, %v1108, 512
      %v2185 = vsel %vm2057, %v1109, 512
      %v2186 = vsel %vm2058, %v1106, 512
      %v2187 = vsel %vm2059, %v1107, 512
      %v2188 = vsel %vm2060, %v1108, 512
      %v2189 = vsel %vm2061, %v1109, 512
      %v2190 = vsel %vm2062, %v1106, 512
      %v2191 = vsel %vm2063, %v1107, 512
      %v2192 = vsel %vm2064, %v1108, 512
      %v2193 = vsel %vm2065, %v1109, 512
      %v2194 = vsel %vm2066, %v1106, 512
      %v2195 = vsel %vm2067, %v1107, 512
      %v2196 = vsel %vm2068, %v1108, 512
      %v2197 = vsel %vm2069, %v1109, 512
      %v2198 = vsel %vm2070, %v1106, 512
      %v2199 = vsel %vm2071, %v1107, 512
      %v2200 = vsel %vm2072, %v1108, 512
      %v2201 = vsel %vm2073, %v1109, 512
      %v2202 = vsel %vm2074, %v1106, 512
      %v2203 = vsel %vm2075, %v1107, 512
      %v2204 = vsel %vm2076, %v1108, 512
      %v2205 = vsel %vm2077, %v1109, 512
      %v2206 = vsel %vm2078, %v1106, 512
      %v2207 = vsel %vm2079, %v1107, 512
      %v2208 = vsel %vm2080, %v1108, 512
      %v2209 = vsel %vm2081, %v1109, 512
      %v2210 = vsel %vm2082, %v1106, 512
      %v2211 = vsel %vm2083, %v1107, 512
      %v2212 = vsel %vm2084, %v1108, 512
      %v2213 = vsel %vm2085, %v1109, 512
      %v2214 = vsel %vm2086, %v1106, 512
      %v2215 = vsel %vm2087, %v1107, 512
      %v2216 = vsel %vm2088, %v1108, 512
      %v2217 = vsel %vm2089, %v1109, 512
      %v2218 = vsel %vm2090, %v1106, 512
      %v2219 = vsel %vm2091, %v1107, 512
      %v2220 = vsel %vm2092, %v1108, 512
      %v2221 = vsel %vm2093, %v1109, 512
      %v2222 = vsel %vm2094, %v1106, 512
      %v2223 = vsel %vm2095, %v1107, 512
      %v2224 = vsel %vm2096, %v1108, 512
      %v2225 = vsel %vm2097, %v1109, 512
      %v2226 = vsel %vm2098, %v1106, 512
      %v2227 = vsel %vm2099, %v1107, 512
      %v2228 = vsel %vm2100, %v1108, 512
      %v2229 = vsel %vm2101, %v1109, 512
      %v2230 = vsel %vm2102, %v1106, 512
      %v2231 = vsel %vm2103, %v1107, 512
      %v2232 = vsel %vm2104, %v1108, 512
      %v2233 = vsel %vm2105, %v1109, 512
      %v2234 = vsel %vm2106, %v1106, 512
      %v2235 = vsel %vm2107, %v1107, 512
      %v2236 = vsel %vm2108, %v1108, 512
      %v2237 = vsel %vm2109, %v1109, 512
      %v2238 = vsel %vm2110, %v1106, 512
      %v2239 = vsel %vm2111, %v1107, 512
      %v2240 = vsel %vm2112, %v1108, 512
      %v2241 = vsel %vm2113, %v1109, 512
      %v2242 = vsel %vm2114, %v1106, 512
      %v2243 = vsel %vm2115, %v1107, 512
      %v2244 = vsel %vm2116, %v1108, 512
      %v2245 = vsel %vm2117, %v1109, 512
      %v2246 = vsel %vm2118, %v1106, 512
      %v2247 = vsel %vm2119, %v1107, 512
      %v2248 = vsel %vm2120, %v1108, 512
      %v2249 = vsel %vm2121, %v1109, 512
      %vm2250 = vcmp.lt.s32.totalorder %v2122, %v2123
      %v2251 = vsel %vm2250, %v2122, %v2123
      %vm2252 = vcmp.lt.s32.totalorder %v2251, %v2124
      %v2253 = vsel %vm2252, %v2251, %v2124
      %vm2254 = vcmp.lt.s32.totalorder %v2253, %v2125
      %v2255 = vsel %vm2254, %v2253, %v2125
      %v2256 = vand.u32 %v2255, 65535
      %v2257 = vshra.s32 %v2255, 16
      %v2258 = vcvt.s32.f32 %v2256
      %v2259 = vcvt.s32.f32 %v2257
      %2260 = vmin.xlane.f32.xlu0 %v2259
      %v2261 = vpop.xlane.xlu0 %2260
      %vm2262 = vcmp.eq.f32.partialorder %v2259, %v2261
      %v2263 = vsel %vm2262, %v2258, inf
      %2264 = vmin.xlane.f32.xlu0 %v2263
      %v2265 = vpop.xlane.xlu0 %2264
      %v2266 = vcvt.f32.s32 %v2265
      %v2267 = vcvt.f32.s32 %v2261
      %v2268 = vshll.u32 %v2267, 16
      %v2269 = vadd.s32 %v2268, %v2266
      %vm2270 = vcmp.lt.s32.totalorder %v2126, %v2127
      %v2271 = vsel %vm2270, %v2126, %v2127
      %vm2272 = vcmp.lt.s32.totalorder %v2271, %v2128
      %v2273 = vsel %vm2272, %v2271, %v2128
      %vm2274 = vcmp.lt.s32.totalorder %v2273, %v2129
      %v2275 = vsel %vm2274, %v2273, %v2129
      %v2276 = vand.u32 %v2275, 65535
      %v2277 = vshra.s32 %v2275, 16
      %v2278 = vcvt.s32.f32 %v2276
      %v2279 = vcvt.s32.f32 %v2277
      %2280 = vmin.xlane.f32.xlu0 %v2279
      %v2281 = vpop.xlane.xlu0 %2280
      %vm2282 = vcmp.eq.f32.partialorder %v2279, %v2281
      %v2283 = vsel %vm2282, %v2278, inf
      %2284 = vmin.xlane.f32.xlu0 %v2283
      %v2285 = vpop.xlane.xlu0 %2284
      %v2286 = vcvt.f32.s32 %v2285
      %v2287 = vcvt.f32.s32 %v2281
      %v2288 = vshll.u32 %v2287, 16
      %v2289 = vadd.s32 %v2288, %v2286
      %vm2290 = vcmp.lt.s32.totalorder %v2130, %v2131
      %v2291 = vsel %vm2290, %v2130, %v2131
      %vm2292 = vcmp.lt.s32.totalorder %v2291, %v2132
      %v2293 = vsel %vm2292, %v2291, %v2132
      %vm2294 = vcmp.lt.s32.totalorder %v2293, %v2133
      %v2295 = vsel %vm2294, %v2293, %v2133
      %v2296 = vand.u32 %v2295, 65535
      %v2297 = vshra.s32 %v2295, 16
      %v2298 = vcvt.s32.f32 %v2296
      %v2299 = vcvt.s32.f32 %v2297
      %2300 = vmin.xlane.f32.xlu0 %v2299
      %v2301 = vpop.xlane.xlu0 %2300
      %vm2302 = vcmp.eq.f32.partialorder %v2299, %v2301
      %v2303 = vsel %vm2302, %v2298, inf
      %2304 = vmin.xlane.f32.xlu0 %v2303
      %v2305 = vpop.xlane.xlu0 %2304
      %v2306 = vcvt.f32.s32 %v2305
      %v2307 = vcvt.f32.s32 %v2301
      %v2308 = vshll.u32 %v2307, 16
      %v2309 = vadd.s32 %v2308, %v2306
      %vm2310 = vcmp.lt.s32.totalorder %v2134, %v2135
      %v2311 = vsel %vm2310, %v2134, %v2135
      %vm2312 = vcmp.lt.s32.totalorder %v2311, %v2136
      %v2313 = vsel %vm2312, %v2311, %v2136
      %vm2314 = vcmp.lt.s32.totalorder %v2313, %v2137
      %v2315 = vsel %vm2314, %v2313, %v2137
      %v2316 = vand.u32 %v2315, 65535
      %v2317 = vshra.s32 %v2315, 16
      %v2318 = vcvt.s32.f32 %v2316
      %v2319 = vcvt.s32.f32 %v2317
      %2320 = vmin.xlane.f32.xlu0 %v2319
      %v2321 = vpop.xlane.xlu0 %2320
      %vm2322 = vcmp.eq.f32.partialorder %v2319, %v2321
      %v2323 = vsel %vm2322, %v2318, inf
      %2324 = vmin.xlane.f32.xlu0 %v2323
      %v2325 = vpop.xlane.xlu0 %2324
      %v2326 = vcvt.f32.s32 %v2325
      %v2327 = vcvt.f32.s32 %v2321
      %v2328 = vshll.u32 %v2327, 16
      %v2329 = vadd.s32 %v2328, %v2326
      %vm2330 = vcmp.lt.s32.totalorder %v2138, %v2139
      %v2331 = vsel %vm2330, %v2138, %v2139
      %vm2332 = vcmp.lt.s32.totalorder %v2331, %v2140
      %v2333 = vsel %vm2332, %v2331, %v2140
      %vm2334 = vcmp.lt.s32.totalorder %v2333, %v2141
      %v2335 = vsel %vm2334, %v2333, %v2141
      %v2336 = vand.u32 %v2335, 65535
      %v2337 = vshra.s32 %v2335, 16
      %v2338 = vcvt.s32.f32 %v2336
      %v2339 = vcvt.s32.f32 %v2337
      %2340 = vmin.xlane.f32.xlu0 %v2339
      %v2341 = vpop.xlane.xlu0 %2340
      %vm2342 = vcmp.eq.f32.partialorder %v2339, %v2341
      %v2343 = vsel %vm2342, %v2338, inf
      %2344 = vmin.xlane.f32.xlu0 %v2343
      %v2345 = vpop.xlane.xlu0 %2344
      %v2346 = vcvt.f32.s32 %v2345
      %v2347 = vcvt.f32.s32 %v2341
      %v2348 = vshll.u32 %v2347, 16
      %v2349 = vadd.s32 %v2348, %v2346
      %vm2350 = vcmp.lt.s32.totalorder %v2142, %v2143
      %v2351 = vsel %vm2350, %v2142, %v2143
      %vm2352 = vcmp.lt.s32.totalorder %v2351, %v2144
      %v2353 = vsel %vm2352, %v2351, %v2144
      %vm2354 = vcmp.lt.s32.totalorder %v2353, %v2145
      %v2355 = vsel %vm2354, %v2353, %v2145
      %v2356 = vand.u32 %v2355, 65535
      %v2357 = vshra.s32 %v2355, 16
      %v2358 = vcvt.s32.f32 %v2356
      %v2359 = vcvt.s32.f32 %v2357
      %2360 = vmin.xlane.f32.xlu0 %v2359
      %v2361 = vpop.xlane.xlu0 %2360
      %vm2362 = vcmp.eq.f32.partialorder %v2359, %v2361
      %v2363 = vsel %vm2362, %v2358, inf
      %2364 = vmin.xlane.f32.xlu0 %v2363
      %v2365 = vpop.xlane.xlu0 %2364
      %v2366 = vcvt.f32.s32 %v2365
      %v2367 = vcvt.f32.s32 %v2361
      %v2368 = vshll.u32 %v2367, 16
      %v2369 = vadd.s32 %v2368, %v2366
      %vm2370 = vcmp.lt.s32.totalorder %v2146, %v2147
      %v2371 = vsel %vm2370, %v2146, %v2147
      %vm2372 = vcmp.lt.s32.totalorder %v2371, %v2148
      %v2373 = vsel %vm2372, %v2371, %v2148
      %vm2374 = vcmp.lt.s32.totalorder %v2373, %v2149
      %v2375 = vsel %vm2374, %v2373, %v2149
      %v2376 = vand.u32 %v2375, 65535
      %v2377 = vshra.s32 %v2375, 16
      %v2378 = vcvt.s32.f32 %v2376
      %v2379 = vcvt.s32.f32 %v2377
      %2380 = vmin.xlane.f32.xlu0 %v2379
      %v2381 = vpop.xlane.xlu0 %2380
      %vm2382 = vcmp.eq.f32.partialorder %v2379, %v2381
      %v2383 = vsel %vm2382, %v2378, inf
      %2384 = vmin.xlane.f32.xlu0 %v2383
      %v2385 = vpop.xlane.xlu0 %2384
      %v2386 = vcvt.f32.s32 %v2385
      %v2387 = vcvt.f32.s32 %v2381
      %v2388 = vshll.u32 %v2387, 16
      %v2389 = vadd.s32 %v2388, %v2386
      %vm2390 = vcmp.lt.s32.totalorder %v2150, %v2151
      %v2391 = vsel %vm2390, %v2150, %v2151
      %vm2392 = vcmp.lt.s32.totalorder %v2391, %v2152
      %v2393 = vsel %vm2392, %v2391, %v2152
      %vm2394 = vcmp.lt.s32.totalorder %v2393, %v2153
      %v2395 = vsel %vm2394, %v2393, %v2153
      %v2396 = vand.u32 %v2395, 65535
      %v2397 = vshra.s32 %v2395, 16
      %v2398 = vcvt.s32.f32 %v2396
      %v2399 = vcvt.s32.f32 %v2397
      %2400 = vmin.xlane.f32.xlu0 %v2399
      %v2401 = vpop.xlane.xlu0 %2400
      %vm2402 = vcmp.eq.f32.partialorder %v2399, %v2401
      %v2403 = vsel %vm2402, %v2398, inf
      %2404 = vmin.xlane.f32.xlu0 %v2403
      %v2405 = vpop.xlane.xlu0 %2404
      %v2406 = vcvt.f32.s32 %v2405
      %v2407 = vcvt.f32.s32 %v2401
      %v2408 = vshll.u32 %v2407, 16
      %v2409 = vadd.s32 %v2408, %v2406
      %vm2410 = vcmp.lt.s32.totalorder %v2154, %v2155
      %v2411 = vsel %vm2410, %v2154, %v2155
      %vm2412 = vcmp.lt.s32.totalorder %v2411, %v2156
      %v2413 = vsel %vm2412, %v2411, %v2156
      %vm2414 = vcmp.lt.s32.totalorder %v2413, %v2157
      %v2415 = vsel %vm2414, %v2413, %v2157
      %v2416 = vand.u32 %v2415, 65535
      %v2417 = vshra.s32 %v2415, 16
      %v2418 = vcvt.s32.f32 %v2416
      %v2419 = vcvt.s32.f32 %v2417
      %2420 = vmin.xlane.f32.xlu0 %v2419
      %v2421 = vpop.xlane.xlu0 %2420
      %vm2422 = vcmp.eq.f32.partialorder %v2419, %v2421
      %v2423 = vsel %vm2422, %v2418, inf
      %2424 = vmin.xlane.f32.xlu0 %v2423
      %v2425 = vpop.xlane.xlu0 %2424
      %v2426 = vcvt.f32.s32 %v2425
      %v2427 = vcvt.f32.s32 %v2421
      %v2428 = vshll.u32 %v2427, 16
      %v2429 = vadd.s32 %v2428, %v2426
      %vm2430 = vcmp.lt.s32.totalorder %v2158, %v2159
      %v2431 = vsel %vm2430, %v2158, %v2159
      %vm2432 = vcmp.lt.s32.totalorder %v2431, %v2160
      %v2433 = vsel %vm2432, %v2431, %v2160
      %vm2434 = vcmp.lt.s32.totalorder %v2433, %v2161
      %v2435 = vsel %vm2434, %v2433, %v2161
      %v2436 = vand.u32 %v2435, 65535
      %v2437 = vshra.s32 %v2435, 16
      %v2438 = vcvt.s32.f32 %v2436
      %v2439 = vcvt.s32.f32 %v2437
      %2440 = vmin.xlane.f32.xlu0 %v2439
      %v2441 = vpop.xlane.xlu0 %2440
      %vm2442 = vcmp.eq.f32.partialorder %v2439, %v2441
      %v2443 = vsel %vm2442, %v2438, inf
      %2444 = vmin.xlane.f32.xlu0 %v2443
      %v2445 = vpop.xlane.xlu0 %2444
      %v2446 = vcvt.f32.s32 %v2445
      %v2447 = vcvt.f32.s32 %v2441
      %v2448 = vshll.u32 %v2447, 16
      %v2449 = vadd.s32 %v2448, %v2446
      %vm2450 = vcmp.lt.s32.totalorder %v2162, %v2163
      %v2451 = vsel %vm2450, %v2162, %v2163
      %vm2452 = vcmp.lt.s32.totalorder %v2451, %v2164
      %v2453 = vsel %vm2452, %v2451, %v2164
      %vm2454 = vcmp.lt.s32.totalorder %v2453, %v2165
      %v2455 = vsel %vm2454, %v2453, %v2165
      %v2456 = vand.u32 %v2455, 65535
      %v2457 = vshra.s32 %v2455, 16
      %v2458 = vcvt.s32.f32 %v2456
      %v2459 = vcvt.s32.f32 %v2457
      %2460 = vmin.xlane.f32.xlu0 %v2459
      %v2461 = vpop.xlane.xlu0 %2460
      %vm2462 = vcmp.eq.f32.partialorder %v2459, %v2461
      %v2463 = vsel %vm2462, %v2458, inf
      %2464 = vmin.xlane.f32.xlu0 %v2463
      %v2465 = vpop.xlane.xlu0 %2464
      %v2466 = vcvt.f32.s32 %v2465
      %v2467 = vcvt.f32.s32 %v2461
      %v2468 = vshll.u32 %v2467, 16
      %v2469 = vadd.s32 %v2468, %v2466
      %vm2470 = vcmp.lt.s32.totalorder %v2166, %v2167
      %v2471 = vsel %vm2470, %v2166, %v2167
      %vm2472 = vcmp.lt.s32.totalorder %v2471, %v2168
      %v2473 = vsel %vm2472, %v2471, %v2168
      %vm2474 = vcmp.lt.s32.totalorder %v2473, %v2169
      %v2475 = vsel %vm2474, %v2473, %v2169
      %v2476 = vand.u32 %v2475, 65535
      %v2477 = vshra.s32 %v2475, 16
      %v2478 = vcvt.s32.f32 %v2476
      %v2479 = vcvt.s32.f32 %v2477
      %2480 = vmin.xlane.f32.xlu0 %v2479
      %v2481 = vpop.xlane.xlu0 %2480
      %vm2482 = vcmp.eq.f32.partialorder %v2479, %v2481
      %v2483 = vsel %vm2482, %v2478, inf
      %2484 = vmin.xlane.f32.xlu0 %v2483
      %v2485 = vpop.xlane.xlu0 %2484
      %v2486 = vcvt.f32.s32 %v2485
      %v2487 = vcvt.f32.s32 %v2481
      %v2488 = vshll.u32 %v2487, 16
      %v2489 = vadd.s32 %v2488, %v2486
      %vm2490 = vcmp.lt.s32.totalorder %v2170, %v2171
      %v2491 = vsel %vm2490, %v2170, %v2171
      %vm2492 = vcmp.lt.s32.totalorder %v2491, %v2172
      %v2493 = vsel %vm2492, %v2491, %v2172
      %vm2494 = vcmp.lt.s32.totalorder %v2493, %v2173
      %v2495 = vsel %vm2494, %v2493, %v2173
      %v2496 = vand.u32 %v2495, 65535
      %v2497 = vshra.s32 %v2495, 16
      %v2498 = vcvt.s32.f32 %v2496
      %v2499 = vcvt.s32.f32 %v2497
      %2500 = vmin.xlane.f32.xlu0 %v2499
      %v2501 = vpop.xlane.xlu0 %2500
      %vm2502 = vcmp.eq.f32.partialorder %v2499, %v2501
      %v2503 = vsel %vm2502, %v2498, inf
      %2504 = vmin.xlane.f32.xlu0 %v2503
      %v2505 = vpop.xlane.xlu0 %2504
      %v2506 = vcvt.f32.s32 %v2505
      %v2507 = vcvt.f32.s32 %v2501
      %v2508 = vshll.u32 %v2507, 16
      %v2509 = vadd.s32 %v2508, %v2506
      %vm2510 = vcmp.lt.s32.totalorder %v2174, %v2175
      %v2511 = vsel %vm2510, %v2174, %v2175
      %vm2512 = vcmp.lt.s32.totalorder %v2511, %v2176
      %v2513 = vsel %vm2512, %v2511, %v2176
      %vm2514 = vcmp.lt.s32.totalorder %v2513, %v2177
      %v2515 = vsel %vm2514, %v2513, %v2177
      %v2516 = vand.u32 %v2515, 65535
      %v2517 = vshra.s32 %v2515, 16
      %v2518 = vcvt.s32.f32 %v2516
      %v2519 = vcvt.s32.f32 %v2517
      %2520 = vmin.xlane.f32.xlu0 %v2519
      %v2521 = vpop.xlane.xlu0 %2520
      %vm2522 = vcmp.eq.f32.partialorder %v2519, %v2521
      %v2523 = vsel %vm2522, %v2518, inf
      %2524 = vmin.xlane.f32.xlu0 %v2523
      %v2525 = vpop.xlane.xlu0 %2524
      %v2526 = vcvt.f32.s32 %v2525
      %v2527 = vcvt.f32.s32 %v2521
      %v2528 = vshll.u32 %v2527, 16
      %v2529 = vadd.s32 %v2528, %v2526
      %vm2530 = vcmp.lt.s32.totalorder %v2178, %v2179
      %v2531 = vsel %vm2530, %v2178, %v2179
      %vm2532 = vcmp.lt.s32.totalorder %v2531, %v2180
      %v2533 = vsel %vm2532, %v2531, %v2180
      %vm2534 = vcmp.lt.s32.totalorder %v2533, %v2181
      %v2535 = vsel %vm2534, %v2533, %v2181
      %v2536 = vand.u32 %v2535, 65535
      %v2537 = vshra.s32 %v2535, 16
      %v2538 = vcvt.s32.f32 %v2536
      %v2539 = vcvt.s32.f32 %v2537
      %2540 = vmin.xlane.f32.xlu0 %v2539
      %v2541 = vpop.xlane.xlu0 %2540
      %vm2542 = vcmp.eq.f32.partialorder %v2539, %v2541
      %v2543 = vsel %vm2542, %v2538, inf
      %2544 = vmin.xlane.f32.xlu0 %v2543
      %v2545 = vpop.xlane.xlu0 %2544
      %v2546 = vcvt.f32.s32 %v2545
      %v2547 = vcvt.f32.s32 %v2541
      %v2548 = vshll.u32 %v2547, 16
      %v2549 = vadd.s32 %v2548, %v2546
      %vm2550 = vcmp.lt.s32.totalorder %v2182, %v2183
      %v2551 = vsel %vm2550, %v2182, %v2183
      %vm2552 = vcmp.lt.s32.totalorder %v2551, %v2184
      %v2553 = vsel %vm2552, %v2551, %v2184
      %vm2554 = vcmp.lt.s32.totalorder %v2553, %v2185
      %v2555 = vsel %vm2554, %v2553, %v2185
      %v2556 = vand.u32 %v2555, 65535
      %v2557 = vshra.s32 %v2555, 16
      %v2558 = vcvt.s32.f32 %v2556
      %v2559 = vcvt.s32.f32 %v2557
      %2560 = vmin.xlane.f32.xlu0 %v2559
      %v2561 = vpop.xlane.xlu0 %2560
      %vm2562 = vcmp.eq.f32.partialorder %v2559, %v2561
      %v2563 = vsel %vm2562, %v2558, inf
      %2564 = vmin.xlane.f32.xlu0 %v2563
      %v2565 = vpop.xlane.xlu0 %2564
      %v2566 = vcvt.f32.s32 %v2565
      %v2567 = vcvt.f32.s32 %v2561
      %v2568 = vshll.u32 %v2567, 16
      %v2569 = vadd.s32 %v2568, %v2566
      %vm2570 = vcmp.lt.s32.totalorder %v2186, %v2187
      %v2571 = vsel %vm2570, %v2186, %v2187
      %vm2572 = vcmp.lt.s32.totalorder %v2571, %v2188
      %v2573 = vsel %vm2572, %v2571, %v2188
      %vm2574 = vcmp.lt.s32.totalorder %v2573, %v2189
      %v2575 = vsel %vm2574, %v2573, %v2189
      %v2576 = vand.u32 %v2575, 65535
      %v2577 = vshra.s32 %v2575, 16
      %v2578 = vcvt.s32.f32 %v2576
      %v2579 = vcvt.s32.f32 %v2577
      %2580 = vmin.xlane.f32.xlu0 %v2579
      %v2581 = vpop.xlane.xlu0 %2580
      %vm2582 = vcmp.eq.f32.partialorder %v2579, %v2581
      %v2583 = vsel %vm2582, %v2578, inf
      %2584 = vmin.xlane.f32.xlu0 %v2583
      %v2585 = vpop.xlane.xlu0 %2584
      %v2586 = vcvt.f32.s32 %v2585
      %v2587 = vcvt.f32.s32 %v2581
      %v2588 = vshll.u32 %v2587, 16
      %v2589 = vadd.s32 %v2588, %v2586
      %vm2590 = vcmp.lt.s32.totalorder %v2190, %v2191
      %v2591 = vsel %vm2590, %v2190, %v2191
      %vm2592 = vcmp.lt.s32.totalorder %v2591, %v2192
      %v2593 = vsel %vm2592, %v2591, %v2192
      %vm2594 = vcmp.lt.s32.totalorder %v2593, %v2193
      %v2595 = vsel %vm2594, %v2593, %v2193
      %v2596 = vand.u32 %v2595, 65535
      %v2597 = vshra.s32 %v2595, 16
      %v2598 = vcvt.s32.f32 %v2596
      %v2599 = vcvt.s32.f32 %v2597
      %2600 = vmin.xlane.f32.xlu0 %v2599
      %v2601 = vpop.xlane.xlu0 %2600
      %vm2602 = vcmp.eq.f32.partialorder %v2599, %v2601
      %v2603 = vsel %vm2602, %v2598, inf
      %2604 = vmin.xlane.f32.xlu0 %v2603
      %v2605 = vpop.xlane.xlu0 %2604
      %v2606 = vcvt.f32.s32 %v2605
      %v2607 = vcvt.f32.s32 %v2601
      %v2608 = vshll.u32 %v2607, 16
      %v2609 = vadd.s32 %v2608, %v2606
      %vm2610 = vcmp.lt.s32.totalorder %v2194, %v2195
      %v2611 = vsel %vm2610, %v2194, %v2195
      %vm2612 = vcmp.lt.s32.totalorder %v2611, %v2196
      %v2613 = vsel %vm2612, %v2611, %v2196
      %vm2614 = vcmp.lt.s32.totalorder %v2613, %v2197
      %v2615 = vsel %vm2614, %v2613, %v2197
      %v2616 = vand.u32 %v2615, 65535
      %v2617 = vshra.s32 %v2615, 16
      %v2618 = vcvt.s32.f32 %v2616
      %v2619 = vcvt.s32.f32 %v2617
      %2620 = vmin.xlane.f32.xlu0 %v2619
      %v2621 = vpop.xlane.xlu0 %2620
      %vm2622 = vcmp.eq.f32.partialorder %v2619, %v2621
      %v2623 = vsel %vm2622, %v2618, inf
      %2624 = vmin.xlane.f32.xlu0 %v2623
      %v2625 = vpop.xlane.xlu0 %2624
      %v2626 = vcvt.f32.s32 %v2625
      %v2627 = vcvt.f32.s32 %v2621
      %v2628 = vshll.u32 %v2627, 16
      %v2629 = vadd.s32 %v2628, %v2626
      %vm2630 = vcmp.lt.s32.totalorder %v2198, %v2199
      %v2631 = vsel %vm2630, %v2198, %v2199
      %vm2632 = vcmp.lt.s32.totalorder %v2631, %v2200
      %v2633 = vsel %vm2632, %v2631, %v2200
      %vm2634 = vcmp.lt.s32.totalorder %v2633, %v2201
      %v2635 = vsel %vm2634, %v2633, %v2201
      %v2636 = vand.u32 %v2635, 65535
      %v2637 = vshra.s32 %v2635, 16
      %v2638 = vcvt.s32.f32 %v2636
      %v2639 = vcvt.s32.f32 %v2637
      %2640 = vmin.xlane.f32.xlu0 %v2639
      %v2641 = vpop.xlane.xlu0 %2640
      %vm2642 = vcmp.eq.f32.partialorder %v2639, %v2641
      %v2643 = vsel %vm2642, %v2638, inf
      %2644 = vmin.xlane.f32.xlu0 %v2643
      %v2645 = vpop.xlane.xlu0 %2644
      %v2646 = vcvt.f32.s32 %v2645
      %v2647 = vcvt.f32.s32 %v2641
      %v2648 = vshll.u32 %v2647, 16
      %v2649 = vadd.s32 %v2648, %v2646
      %vm2650 = vcmp.lt.s32.totalorder %v2202, %v2203
      %v2651 = vsel %vm2650, %v2202, %v2203
      %vm2652 = vcmp.lt.s32.totalorder %v2651, %v2204
      %v2653 = vsel %vm2652, %v2651, %v2204
      %vm2654 = vcmp.lt.s32.totalorder %v2653, %v2205
      %v2655 = vsel %vm2654, %v2653, %v2205
      %v2656 = vand.u32 %v2655, 65535
      %v2657 = vshra.s32 %v2655, 16
      %v2658 = vcvt.s32.f32 %v2656
      %v2659 = vcvt.s32.f32 %v2657
      %2660 = vmin.xlane.f32.xlu0 %v2659
      %v2661 = vpop.xlane.xlu0 %2660
      %vm2662 = vcmp.eq.f32.partialorder %v2659, %v2661
      %v2663 = vsel %vm2662, %v2658, inf
      %2664 = vmin.xlane.f32.xlu0 %v2663
      %v2665 = vpop.xlane.xlu0 %2664
      %v2666 = vcvt.f32.s32 %v2665
      %v2667 = vcvt.f32.s32 %v2661
      %v2668 = vshll.u32 %v2667, 16
      %v2669 = vadd.s32 %v2668, %v2666
      %vm2670 = vcmp.lt.s32.totalorder %v2206, %v2207
      %v2671 = vsel %vm2670, %v2206, %v2207
      %vm2672 = vcmp.lt.s32.totalorder %v2671, %v2208
      %v2673 = vsel %vm2672, %v2671, %v2208
      %vm2674 = vcmp.lt.s32.totalorder %v2673, %v2209
      %v2675 = vsel %vm2674, %v2673, %v2209
      %v2676 = vand.u32 %v2675, 65535
      %v2677 = vshra.s32 %v2675, 16
      %v2678 = vcvt.s32.f32 %v2676
      %v2679 = vcvt.s32.f32 %v2677
      %2680 = vmin.xlane.f32.xlu0 %v2679
      %v2681 = vpop.xlane.xlu0 %2680
      %vm2682 = vcmp.eq.f32.partialorder %v2679, %v2681
      %v2683 = vsel %vm2682, %v2678, inf
      %2684 = vmin.xlane.f32.xlu0 %v2683
      %v2685 = vpop.xlane.xlu0 %2684
      %v2686 = vcvt.f32.s32 %v2685
      %v2687 = vcvt.f32.s32 %v2681
      %v2688 = vshll.u32 %v2687, 16
      %v2689 = vadd.s32 %v2688, %v2686
      %vm2690 = vcmp.lt.s32.totalorder %v2210, %v2211
      %v2691 = vsel %vm2690, %v2210, %v2211
      %vm2692 = vcmp.lt.s32.totalorder %v2691, %v2212
      %v2693 = vsel %vm2692, %v2691, %v2212
      %vm2694 = vcmp.lt.s32.totalorder %v2693, %v2213
      %v2695 = vsel %vm2694, %v2693, %v2213
      %v2696 = vand.u32 %v2695, 65535
      %v2697 = vshra.s32 %v2695, 16
      %v2698 = vcvt.s32.f32 %v2696
      %v2699 = vcvt.s32.f32 %v2697
      %2700 = vmin.xlane.f32.xlu0 %v2699
      %v2701 = vpop.xlane.xlu0 %2700
      %vm2702 = vcmp.eq.f32.partialorder %v2699, %v2701
      %v2703 = vsel %vm2702, %v2698, inf
      %2704 = vmin.xlane.f32.xlu0 %v2703
      %v2705 = vpop.xlane.xlu0 %2704
      %v2706 = vcvt.f32.s32 %v2705
      %v2707 = vcvt.f32.s32 %v2701
      %v2708 = vshll.u32 %v2707, 16
      %v2709 = vadd.s32 %v2708, %v2706
      %vm2710 = vcmp.lt.s32.totalorder %v2214, %v2215
      %v2711 = vsel %vm2710, %v2214, %v2215
      %vm2712 = vcmp.lt.s32.totalorder %v2711, %v2216
      %v2713 = vsel %vm2712, %v2711, %v2216
      %vm2714 = vcmp.lt.s32.totalorder %v2713, %v2217
      %v2715 = vsel %vm2714, %v2713, %v2217
      %v2716 = vand.u32 %v2715, 65535
      %v2717 = vshra.s32 %v2715, 16
      %v2718 = vcvt.s32.f32 %v2716
      %v2719 = vcvt.s32.f32 %v2717
      %2720 = vmin.xlane.f32.xlu0 %v2719
      %v2721 = vpop.xlane.xlu0 %2720
      %vm2722 = vcmp.eq.f32.partialorder %v2719, %v2721
      %v2723 = vsel %vm2722, %v2718, inf
      %2724 = vmin.xlane.f32.xlu0 %v2723
      %v2725 = vpop.xlane.xlu0 %2724
      %v2726 = vcvt.f32.s32 %v2725
      %v2727 = vcvt.f32.s32 %v2721
      %v2728 = vshll.u32 %v2727, 16
      %v2729 = vadd.s32 %v2728, %v2726
      %vm2730 = vcmp.lt.s32.totalorder %v2218, %v2219
      %v2731 = vsel %vm2730, %v2218, %v2219
      %vm2732 = vcmp.lt.s32.totalorder %v2731, %v2220
      %v2733 = vsel %vm2732, %v2731, %v2220
      %vm2734 = vcmp.lt.s32.totalorder %v2733, %v2221
      %v2735 = vsel %vm2734, %v2733, %v2221
      %v2736 = vand.u32 %v2735, 65535
      %v2737 = vshra.s32 %v2735, 16
      %v2738 = vcvt.s32.f32 %v2736
      %v2739 = vcvt.s32.f32 %v2737
      %2740 = vmin.xlane.f32.xlu0 %v2739
      %v2741 = vpop.xlane.xlu0 %2740
      %vm2742 = vcmp.eq.f32.partialorder %v2739, %v2741
      %v2743 = vsel %vm2742, %v2738, inf
      %2744 = vmin.xlane.f32.xlu0 %v2743
      %v2745 = vpop.xlane.xlu0 %2744
      %v2746 = vcvt.f32.s32 %v2745
      %v2747 = vcvt.f32.s32 %v2741
      %v2748 = vshll.u32 %v2747, 16
      %v2749 = vadd.s32 %v2748, %v2746
      %vm2750 = vcmp.lt.s32.totalorder %v2222, %v2223
      %v2751 = vsel %vm2750, %v2222, %v2223
      %vm2752 = vcmp.lt.s32.totalorder %v2751, %v2224
      %v2753 = vsel %vm2752, %v2751, %v2224
      %vm2754 = vcmp.lt.s32.totalorder %v2753, %v2225
      %v2755 = vsel %vm2754, %v2753, %v2225
      %v2756 = vand.u32 %v2755, 65535
      %v2757 = vshra.s32 %v2755, 16
      %v2758 = vcvt.s32.f32 %v2756
      %v2759 = vcvt.s32.f32 %v2757
      %2760 = vmin.xlane.f32.xlu0 %v2759
      %v2761 = vpop.xlane.xlu0 %2760
      %vm2762 = vcmp.eq.f32.partialorder %v2759, %v2761
      %v2763 = vsel %vm2762, %v2758, inf
      %2764 = vmin.xlane.f32.xlu0 %v2763
      %v2765 = vpop.xlane.xlu0 %2764
      %v2766 = vcvt.f32.s32 %v2765
      %v2767 = vcvt.f32.s32 %v2761
      %v2768 = vshll.u32 %v2767, 16
      %v2769 = vadd.s32 %v2768, %v2766
      %vm2770 = vcmp.lt.s32.totalorder %v2226, %v2227
      %v2771 = vsel %vm2770, %v2226, %v2227
      %vm2772 = vcmp.lt.s32.totalorder %v2771, %v2228
      %v2773 = vsel %vm2772, %v2771, %v2228
      %vm2774 = vcmp.lt.s32.totalorder %v2773, %v2229
      %v2775 = vsel %vm2774, %v2773, %v2229
      %v2776 = vand.u32 %v2775, 65535
      %v2777 = vshra.s32 %v2775, 16
      %v2778 = vcvt.s32.f32 %v2776
      %v2779 = vcvt.s32.f32 %v2777
      %2780 = vmin.xlane.f32.xlu0 %v2779
      %v2781 = vpop.xlane.xlu0 %2780
      %vm2782 = vcmp.eq.f32.partialorder %v2779, %v2781
      %v2783 = vsel %vm2782, %v2778, inf
      %2784 = vmin.xlane.f32.xlu0 %v2783
      %v2785 = vpop.xlane.xlu0 %2784
      %v2786 = vcvt.f32.s32 %v2785
      %v2787 = vcvt.f32.s32 %v2781
      %v2788 = vshll.u32 %v2787, 16
      %v2789 = vadd.s32 %v2788, %v2786
      %vm2790 = vcmp.lt.s32.totalorder %v2230, %v2231
      %v2791 = vsel %vm2790, %v2230, %v2231
      %vm2792 = vcmp.lt.s32.totalorder %v2791, %v2232
      %v2793 = vsel %vm2792, %v2791, %v2232
      %vm2794 = vcmp.lt.s32.totalorder %v2793, %v2233
      %v2795 = vsel %vm2794, %v2793, %v2233
      %v2796 = vand.u32 %v2795, 65535
      %v2797 = vshra.s32 %v2795, 16
      %v2798 = vcvt.s32.f32 %v2796
      %v2799 = vcvt.s32.f32 %v2797
      %2800 = vmin.xlane.f32.xlu0 %v2799
      %v2801 = vpop.xlane.xlu0 %2800
      %vm2802 = vcmp.eq.f32.partialorder %v2799, %v2801
      %v2803 = vsel %vm2802, %v2798, inf
      %2804 = vmin.xlane.f32.xlu0 %v2803
      %v2805 = vpop.xlane.xlu0 %2804
      %v2806 = vcvt.f32.s32 %v2805
      %v2807 = vcvt.f32.s32 %v2801
      %v2808 = vshll.u32 %v2807, 16
      %v2809 = vadd.s32 %v2808, %v2806
      %vm2810 = vcmp.lt.s32.totalorder %v2234, %v2235
      %v2811 = vsel %vm2810, %v2234, %v2235
      %vm2812 = vcmp.lt.s32.totalorder %v2811, %v2236
      %v2813 = vsel %vm2812, %v2811, %v2236
      %vm2814 = vcmp.lt.s32.totalorder %v2813, %v2237
      %v2815 = vsel %vm2814, %v2813, %v2237
      %v2816 = vand.u32 %v2815, 65535
      %v2817 = vshra.s32 %v2815, 16
      %v2818 = vcvt.s32.f32 %v2816
      %v2819 = vcvt.s32.f32 %v2817
      %2820 = vmin.xlane.f32.xlu0 %v2819
      %v2821 = vpop.xlane.xlu0 %2820
      %vm2822 = vcmp.eq.f32.partialorder %v2819, %v2821
      %v2823 = vsel %vm2822, %v2818, inf
      %2824 = vmin.xlane.f32.xlu0 %v2823
      %v2825 = vpop.xlane.xlu0 %2824
      %v2826 = vcvt.f32.s32 %v2825
      %v2827 = vcvt.f32.s32 %v2821
      %v2828 = vshll.u32 %v2827, 16
      %v2829 = vadd.s32 %v2828, %v2826
      %vm2830 = vcmp.lt.s32.totalorder %v2238, %v2239
      %v2831 = vsel %vm2830, %v2238, %v2239
      %vm2832 = vcmp.lt.s32.totalorder %v2831, %v2240
      %v2833 = vsel %vm2832, %v2831, %v2240
      %vm2834 = vcmp.lt.s32.totalorder %v2833, %v2241
      %v2835 = vsel %vm2834, %v2833, %v2241
      %v2836 = vand.u32 %v2835, 65535
      %v2837 = vshra.s32 %v2835, 16
      %v2838 = vcvt.s32.f32 %v2836
      %v2839 = vcvt.s32.f32 %v2837
      %2840 = vmin.xlane.f32.xlu0 %v2839
      %v2841 = vpop.xlane.xlu0 %2840
      %vm2842 = vcmp.eq.f32.partialorder %v2839, %v2841
      %v2843 = vsel %vm2842, %v2838, inf
      %2844 = vmin.xlane.f32.xlu0 %v2843
      %v2845 = vpop.xlane.xlu0 %2844
      %v2846 = vcvt.f32.s32 %v2845
      %v2847 = vcvt.f32.s32 %v2841
      %v2848 = vshll.u32 %v2847, 16
      %v2849 = vadd.s32 %v2848, %v2846
      %vm2850 = vcmp.lt.s32.totalorder %v2242, %v2243
      %v2851 = vsel %vm2850, %v2242, %v2243
      %vm2852 = vcmp.lt.s32.totalorder %v2851, %v2244
      %v2853 = vsel %vm2852, %v2851, %v2244
      %vm2854 = vcmp.lt.s32.totalorder %v2853, %v2245
      %v2855 = vsel %vm2854, %v2853, %v2245
      %v2856 = vand.u32 %v2855, 65535
      %v2857 = vshra.s32 %v2855, 16
      %v2858 = vcvt.s32.f32 %v2856
      %v2859 = vcvt.s32.f32 %v2857
      %2860 = vmin.xlane.f32.xlu0 %v2859
      %v2861 = vpop.xlane.xlu0 %2860
      %vm2862 = vcmp.eq.f32.partialorder %v2859, %v2861
      %v2863 = vsel %vm2862, %v2858, inf
      %2864 = vmin.xlane.f32.xlu0 %v2863
      %v2865 = vpop.xlane.xlu0 %2864
      %v2866 = vcvt.f32.s32 %v2865
      %v2867 = vcvt.f32.s32 %v2861
      %v2868 = vshll.u32 %v2867, 16
      %v2869 = vadd.s32 %v2868, %v2866
      %vm2870 = vcmp.lt.s32.totalorder %v2246, %v2247
      %v2871 = vsel %vm2870, %v2246, %v2247
      %vm2872 = vcmp.lt.s32.totalorder %v2871, %v2248
      %v2873 = vsel %vm2872, %v2871, %v2248
      %vm2874 = vcmp.lt.s32.totalorder %v2873, %v2249
      %v2875 = vsel %vm2874, %v2873, %v2249
      %v2876 = vand.u32 %v2875, 65535
      %v2877 = vshra.s32 %v2875, 16
      %v2878 = vcvt.s32.f32 %v2876
      %v2879 = vcvt.s32.f32 %v2877
      %2880 = vmin.xlane.f32.xlu0 %v2879
      %v2881 = vpop.xlane.xlu0 %2880
      %vm2882 = vcmp.eq.f32.partialorder %v2879, %v2881
      %v2883 = vsel %vm2882, %v2878, inf
      %2884 = vmin.xlane.f32.xlu0 %v2883
      %v2885 = vpop.xlane.xlu0 %2884
      %v2886 = vcvt.f32.s32 %v2885
      %v2887 = vcvt.f32.s32 %v2881
      %v2888 = vshll.u32 %v2887, 16
      %v2889 = vadd.s32 %v2888, %v2886
      %v2890 = vstv %s233
      %v2891 = vadd.s32 %v2269, %v2890
      %v2892 = vadd.s32 %v2289, %v2890
      %v2893 = vadd.s32 %v2309, %v2890
      %v2894 = vadd.s32 %v2329, %v2890
      %v2895 = vadd.s32 %v2349, %v2890
      %v2896 = vadd.s32 %v2369, %v2890
      %v2897 = vadd.s32 %v2389, %v2890
      %v2898 = vadd.s32 %v2409, %v2890
      %v2899 = vadd.s32 %v2429, %v2890
      %v2900 = vadd.s32 %v2449, %v2890
      %v2901 = vadd.s32 %v2469, %v2890
      %v2902 = vadd.s32 %v2489, %v2890
      %v2903 = vadd.s32 %v2509, %v2890
      %v2904 = vadd.s32 %v2529, %v2890
      %v2905 = vadd.s32 %v2549, %v2890
      %v2906 = vadd.s32 %v2569, %v2890
      %v2907 = vadd.s32 %v2589, %v2890
      %v2908 = vadd.s32 %v2609, %v2890
      %v2909 = vadd.s32 %v2629, %v2890
      %v2910 = vadd.s32 %v2649, %v2890
      %v2911 = vadd.s32 %v2669, %v2890
      %v2912 = vadd.s32 %v2689, %v2890
      %v2913 = vadd.s32 %v2709, %v2890
      %v2914 = vadd.s32 %v2729, %v2890
      %v2915 = vadd.s32 %v2749, %v2890
      %v2916 = vadd.s32 %v2769, %v2890
      %v2917 = vadd.s32 %v2789, %v2890
      %v2918 = vadd.s32 %v2809, %v2890
      %v2919 = vadd.s32 %v2829, %v2890
      %v2920 = vadd.s32 %v2849, %v2890
      %v2921 = vadd.s32 %v2869, %v2890
      %v2922 = vadd.s32 %v2889, %v2890
      %vm2923 = vcmp.eq.s32.totalorder %v1106, %v2269
      %vm2924 = vcmp.eq.s32.totalorder %v1107, %v2269
      %vm2925 = vcmp.eq.s32.totalorder %v1108, %v2269
      %vm2926 = vcmp.eq.s32.totalorder %v1109, %v2269
      %vm2927 = vcmp.eq.s32.totalorder %v1106, %v2289
      %vm2928 = vcmp.eq.s32.totalorder %v1107, %v2289
      %vm2929 = vcmp.eq.s32.totalorder %v1108, %v2289
      %vm2930 = vcmp.eq.s32.totalorder %v1109, %v2289
      %vm2931 = vcmp.eq.s32.totalorder %v1106, %v2309
      %vm2932 = vcmp.eq.s32.totalorder %v1107, %v2309
      %vm2933 = vcmp.eq.s32.totalorder %v1108, %v2309
      %vm2934 = vcmp.eq.s32.totalorder %v1109, %v2309
      %vm2935 = vcmp.eq.s32.totalorder %v1106, %v2329
      %vm2936 = vcmp.eq.s32.totalorder %v1107, %v2329
      %vm2937 = vcmp.eq.s32.totalorder %v1108, %v2329
      %vm2938 = vcmp.eq.s32.totalorder %v1109, %v2329
      %vm2939 = vcmp.eq.s32.totalorder %v1106, %v2349
      %vm2940 = vcmp.eq.s32.totalorder %v1107, %v2349
      %vm2941 = vcmp.eq.s32.totalorder %v1108, %v2349
      %vm2942 = vcmp.eq.s32.totalorder %v1109, %v2349
      %vm2943 = vcmp.eq.s32.totalorder %v1106, %v2369
      %vm2944 = vcmp.eq.s32.totalorder %v1107, %v2369
      %vm2945 = vcmp.eq.s32.totalorder %v1108, %v2369
      %vm2946 = vcmp.eq.s32.totalorder %v1109, %v2369
      %vm2947 = vcmp.eq.s32.totalorder %v1106, %v2389
      %vm2948 = vcmp.eq.s32.totalorder %v1107, %v2389
      %vm2949 = vcmp.eq.s32.totalorder %v1108, %v2389
      %vm2950 = vcmp.eq.s32.totalorder %v1109, %v2389
      %vm2951 = vcmp.eq.s32.totalorder %v1106, %v2409
      %vm2952 = vcmp.eq.s32.totalorder %v1107, %v2409
      %vm2953 = vcmp.eq.s32.totalorder %v1108, %v2409
      %vm2954 = vcmp.eq.s32.totalorder %v1109, %v2409
      %vm2955 = vcmp.eq.s32.totalorder %v1106, %v2429
      %vm2956 = vcmp.eq.s32.totalorder %v1107, %v2429
      %vm2957 = vcmp.eq.s32.totalorder %v1108, %v2429
      %vm2958 = vcmp.eq.s32.totalorder %v1109, %v2429
      %vm2959 = vcmp.eq.s32.totalorder %v1106, %v2449
      %vm2960 = vcmp.eq.s32.totalorder %v1107, %v2449
      %vm2961 = vcmp.eq.s32.totalorder %v1108, %v2449
      %vm2962 = vcmp.eq.s32.totalorder %v1109, %v2449
      %vm2963 = vcmp.eq.s32.totalorder %v1106, %v2469
      %vm2964 = vcmp.eq.s32.totalorder %v1107, %v2469
      %vm2965 = vcmp.eq.s32.totalorder %v1108, %v2469
      %vm2966 = vcmp.eq.s32.totalorder %v1109, %v2469
      %vm2967 = vcmp.eq.s32.totalorder %v1106, %v2489
      %vm2968 = vcmp.eq.s32.totalorder %v1107, %v2489
      %vm2969 = vcmp.eq.s32.totalorder %v1108, %v2489
      %vm2970 = vcmp.eq.s32.totalorder %v1109, %v2489
      %vm2971 = vcmp.eq.s32.totalorder %v1106, %v2509
      %vm2972 = vcmp.eq.s32.totalorder %v1107, %v2509
      %vm2973 = vcmp.eq.s32.totalorder %v1108, %v2509
      %vm2974 = vcmp.eq.s32.totalorder %v1109, %v2509
      %vm2975 = vcmp.eq.s32.totalorder %v1106, %v2529
      %vm2976 = vcmp.eq.s32.totalorder %v1107, %v2529
      %vm2977 = vcmp.eq.s32.totalorder %v1108, %v2529
      %vm2978 = vcmp.eq.s32.totalorder %v1109, %v2529
      %vm2979 = vcmp.eq.s32.totalorder %v1106, %v2549
      %vm2980 = vcmp.eq.s32.totalorder %v1107, %v2549
      %vm2981 = vcmp.eq.s32.totalorder %v1108, %v2549
      %vm2982 = vcmp.eq.s32.totalorder %v1109, %v2549
      %vm2983 = vcmp.eq.s32.totalorder %v1106, %v2569
      %vm2984 = vcmp.eq.s32.totalorder %v1107, %v2569
      %vm2985 = vcmp.eq.s32.totalorder %v1108, %v2569
      %vm2986 = vcmp.eq.s32.totalorder %v1109, %v2569
      %vm2987 = vcmp.eq.s32.totalorder %v1106, %v2589
      %vm2988 = vcmp.eq.s32.totalorder %v1107, %v2589
      %vm2989 = vcmp.eq.s32.totalorder %v1108, %v2589
      %vm2990 = vcmp.eq.s32.totalorder %v1109, %v2589
      %vm2991 = vcmp.eq.s32.totalorder %v1106, %v2609
      %vm2992 = vcmp.eq.s32.totalorder %v1107, %v2609
      %vm2993 = vcmp.eq.s32.totalorder %v1108, %v2609
      %vm2994 = vcmp.eq.s32.totalorder %v1109, %v2609
      %vm2995 = vcmp.eq.s32.totalorder %v1106, %v2629
      %vm2996 = vcmp.eq.s32.totalorder %v1107, %v2629
      %vm2997 = vcmp.eq.s32.totalorder %v1108, %v2629
      %vm2998 = vcmp.eq.s32.totalorder %v1109, %v2629
      %vm2999 = vcmp.eq.s32.totalorder %v1106, %v2649
      %vm3000 = vcmp.eq.s32.totalorder %v1107, %v2649
      %vm3001 = vcmp.eq.s32.totalorder %v1108, %v2649
      %vm3002 = vcmp.eq.s32.totalorder %v1109, %v2649
      %vm3003 = vcmp.eq.s32.totalorder %v1106, %v2669
      %vm3004 = vcmp.eq.s32.totalorder %v1107, %v2669
      %vm3005 = vcmp.eq.s32.totalorder %v1108, %v2669
      %vm3006 = vcmp.eq.s32.totalorder %v1109, %v2669
      %vm3007 = vcmp.eq.s32.totalorder %v1106, %v2689
      %vm3008 = vcmp.eq.s32.totalorder %v1107, %v2689
      %vm3009 = vcmp.eq.s32.totalorder %v1108, %v2689
      %vm3010 = vcmp.eq.s32.totalorder %v1109, %v2689
      %vm3011 = vcmp.eq.s32.totalorder %v1106, %v2709
      %vm3012 = vcmp.eq.s32.totalorder %v1107, %v2709
      %vm3013 = vcmp.eq.s32.totalorder %v1108, %v2709
      %vm3014 = vcmp.eq.s32.totalorder %v1109, %v2709
      %vm3015 = vcmp.eq.s32.totalorder %v1106, %v2729
      %vm3016 = vcmp.eq.s32.totalorder %v1107, %v2729
      %vm3017 = vcmp.eq.s32.totalorder %v1108, %v2729
      %vm3018 = vcmp.eq.s32.totalorder %v1109, %v2729
      %vm3019 = vcmp.eq.s32.totalorder %v1106, %v2749
      %vm3020 = vcmp.eq.s32.totalorder %v1107, %v2749
      %vm3021 = vcmp.eq.s32.totalorder %v1108, %v2749
      %vm3022 = vcmp.eq.s32.totalorder %v1109, %v2749
      %vm3023 = vcmp.eq.s32.totalorder %v1106, %v2769
      %vm3024 = vcmp.eq.s32.totalorder %v1107, %v2769
      %vm3025 = vcmp.eq.s32.totalorder %v1108, %v2769
      %vm3026 = vcmp.eq.s32.totalorder %v1109, %v2769
      %vm3027 = vcmp.eq.s32.totalorder %v1106, %v2789
      %vm3028 = vcmp.eq.s32.totalorder %v1107, %v2789
      %vm3029 = vcmp.eq.s32.totalorder %v1108, %v2789
      %vm3030 = vcmp.eq.s32.totalorder %v1109, %v2789
      %vm3031 = vcmp.eq.s32.totalorder %v1106, %v2809
      %vm3032 = vcmp.eq.s32.totalorder %v1107, %v2809
      %vm3033 = vcmp.eq.s32.totalorder %v1108, %v2809
      %vm3034 = vcmp.eq.s32.totalorder %v1109, %v2809
      %vm3035 = vcmp.eq.s32.totalorder %v1106, %v2829
      %vm3036 = vcmp.eq.s32.totalorder %v1107, %v2829
      %vm3037 = vcmp.eq.s32.totalorder %v1108, %v2829
      %vm3038 = vcmp.eq.s32.totalorder %v1109, %v2829
      %vm3039 = vcmp.eq.s32.totalorder %v1106, %v2849
      %vm3040 = vcmp.eq.s32.totalorder %v1107, %v2849
      %vm3041 = vcmp.eq.s32.totalorder %v1108, %v2849
      %vm3042 = vcmp.eq.s32.totalorder %v1109, %v2849
      %vm3043 = vcmp.eq.s32.totalorder %v1106, %v2869
      %vm3044 = vcmp.eq.s32.totalorder %v1107, %v2869
      %vm3045 = vcmp.eq.s32.totalorder %v1108, %v2869
      %vm3046 = vcmp.eq.s32.totalorder %v1109, %v2869
      %vm3047 = vcmp.eq.s32.totalorder %v1106, %v2889
      %vm3048 = vcmp.eq.s32.totalorder %v1107, %v2889
      %vm3049 = vcmp.eq.s32.totalorder %v1108, %v2889
      %vm3050 = vcmp.eq.s32.totalorder %v1109, %v2889
      %v3051 = vsel %vm2923, -inf, %v1706
      %v3052 = vsel %vm2924, -inf, %v1707
      %v3053 = vsel %vm2925, -inf, %v1708
      %v3054 = vsel %vm2926, -inf, %v1709
      %v3055 = vsel %vm2927, -inf, %v1710
      %v3056 = vsel %vm2928, -inf, %v1711
      %v3057 = vsel %vm2929, -inf, %v1712
      %v3058 = vsel %vm2930, -inf, %v1713
      %v3059 = vsel %vm2931, -inf, %v1714
      %v3060 = vsel %vm2932, -inf, %v1715
      %v3061 = vsel %vm2933, -inf, %v1716
      %v3062 = vsel %vm2934, -inf, %v1717
      %v3063 = vsel %vm2935, -inf, %v1718
      %v3064 = vsel %vm2936, -inf, %v1719
      %v3065 = vsel %vm2937, -inf, %v1720
      %v3066 = vsel %vm2938, -inf, %v1721
      %v3067 = vsel %vm2939, -inf, %v1722
      %v3068 = vsel %vm2940, -inf, %v1723
      %v3069 = vsel %vm2941, -inf, %v1724
      %v3070 = vsel %vm2942, -inf, %v1725
      %v3071 = vsel %vm2943, -inf, %v1726
      %v3072 = vsel %vm2944, -inf, %v1727
      %v3073 = vsel %vm2945, -inf, %v1728
      %v3074 = vsel %vm2946, -inf, %v1729
      %v3075 = vsel %vm2947, -inf, %v1730
      %v3076 = vsel %vm2948, -inf, %v1731
      %v3077 = vsel %vm2949, -inf, %v1732
      %v3078 = vsel %vm2950, -inf, %v1733
      %v3079 = vsel %vm2951, -inf, %v1734
      %v3080 = vsel %vm2952, -inf, %v1735
      %v3081 = vsel %vm2953, -inf, %v1736
      %v3082 = vsel %vm2954, -inf, %v1737
      %v3083 = vsel %vm2955, -inf, %v1738
      %v3084 = vsel %vm2956, -inf, %v1739
      %v3085 = vsel %vm2957, -inf, %v1740
      %v3086 = vsel %vm2958, -inf, %v1741
      %v3087 = vsel %vm2959, -inf, %v1742
      %v3088 = vsel %vm2960, -inf, %v1743
      %v3089 = vsel %vm2961, -inf, %v1744
      %v3090 = vsel %vm2962, -inf, %v1745
      %v3091 = vsel %vm2963, -inf, %v1746
      %v3092 = vsel %vm2964, -inf, %v1747
      %v3093 = vsel %vm2965, -inf, %v1748
      %v3094 = vsel %vm2966, -inf, %v1749
      %v3095 = vsel %vm2967, -inf, %v1750
      %v3096 = vsel %vm2968, -inf, %v1751
      %v3097 = vsel %vm2969, -inf, %v1752
      %v3098 = vsel %vm2970, -inf, %v1753
      %v3099 = vsel %vm2971, -inf, %v1754
      %v3100 = vsel %vm2972, -inf, %v1755
      %v3101 = vsel %vm2973, -inf, %v1756
      %v3102 = vsel %vm2974, -inf, %v1757
      %v3103 = vsel %vm2975, -inf, %v1758
      %v3104 = vsel %vm2976, -inf, %v1759
      %v3105 = vsel %vm2977, -inf, %v1760
      %v3106 = vsel %vm2978, -inf, %v1761
      %v3107 = vsel %vm2979, -inf, %v1762
      %v3108 = vsel %vm2980, -inf, %v1763
      %v3109 = vsel %vm2981, -inf, %v1764
      %v3110 = vsel %vm2982, -inf, %v1765
      %v3111 = vsel %vm2983, -inf, %v1766
      %v3112 = vsel %vm2984, -inf, %v1767
      %v3113 = vsel %vm2985, -inf, %v1768
      %v3114 = vsel %vm2986, -inf, %v1769
      %v3115 = vsel %vm2987, -inf, %v1770
      %v3116 = vsel %vm2988, -inf, %v1771
      %v3117 = vsel %vm2989, -inf, %v1772
      %v3118 = vsel %vm2990, -inf, %v1773
      %v3119 = vsel %vm2991, -inf, %v1774
      %v3120 = vsel %vm2992, -inf, %v1775
      %v3121 = vsel %vm2993, -inf, %v1776
      %v3122 = vsel %vm2994, -inf, %v1777
      %v3123 = vsel %vm2995, -inf, %v1778
      %v3124 = vsel %vm2996, -inf, %v1779
      %v3125 = vsel %vm2997, -inf, %v1780
      %v3126 = vsel %vm2998, -inf, %v1781
      %v3127 = vsel %vm2999, -inf, %v1782
      %v3128 = vsel %vm3000, -inf, %v1783
      %v3129 = vsel %vm3001, -inf, %v1784
      %v3130 = vsel %vm3002, -inf, %v1785
      %v3131 = vsel %vm3003, -inf, %v1786
      %v3132 = vsel %vm3004, -inf, %v1787
      %v3133 = vsel %vm3005, -inf, %v1788
      %v3134 = vsel %vm3006, -inf, %v1789
      %v3135 = vsel %vm3007, -inf, %v1790
      %v3136 = vsel %vm3008, -inf, %v1791
      %v3137 = vsel %vm3009, -inf, %v1792
      %v3138 = vsel %vm3010, -inf, %v1793
      %v3139 = vsel %vm3011, -inf, %v1794
      %v3140 = vsel %vm3012, -inf, %v1795
      %v3141 = vsel %vm3013, -inf, %v1796
      %v3142 = vsel %vm3014, -inf, %v1797
      %v3143 = vsel %vm3015, -inf, %v1798
      %v3144 = vsel %vm3016, -inf, %v1799
      %v3145 = vsel %vm3017, -inf, %v1800
      %v3146 = vsel %vm3018, -inf, %v1801
      %v3147 = vsel %vm3019, -inf, %v1802
      %v3148 = vsel %vm3020, -inf, %v1803
      %v3149 = vsel %vm3021, -inf, %v1804
      %v3150 = vsel %vm3022, -inf, %v1805
      %v3151 = vsel %vm3023, -inf, %v1806
      %v3152 = vsel %vm3024, -inf, %v1807
      %v3153 = vsel %vm3025, -inf, %v1808
      %v3154 = vsel %vm3026, -inf, %v1809
      %v3155 = vsel %vm3027, -inf, %v1810
      %v3156 = vsel %vm3028, -inf, %v1811
      %v3157 = vsel %vm3029, -inf, %v1812
      %v3158 = vsel %vm3030, -inf, %v1813
      %v3159 = vsel %vm3031, -inf, %v1814
      %v3160 = vsel %vm3032, -inf, %v1815
      %v3161 = vsel %vm3033, -inf, %v1816
      %v3162 = vsel %vm3034, -inf, %v1817
      %v3163 = vsel %vm3035, -inf, %v1818
      %v3164 = vsel %vm3036, -inf, %v1819
      %v3165 = vsel %vm3037, -inf, %v1820
      %v3166 = vsel %vm3038, -inf, %v1821
      %v3167 = vsel %vm3039, -inf, %v1822
      %v3168 = vsel %vm3040, -inf, %v1823
      %v3169 = vsel %vm3041, -inf, %v1824
      %v3170 = vsel %vm3042, -inf, %v1825
      %v3171 = vsel %vm3043, -inf, %v1826
      %v3172 = vsel %vm3044, -inf, %v1827
      %v3173 = vsel %vm3045, -inf, %v1828
      %v3174 = vsel %vm3046, -inf, %v1829
      %v3175 = vsel %vm3047, -inf, %v1830
      %v3176 = vsel %vm3048, -inf, %v1831
      %v3177 = vsel %vm3049, -inf, %v1832
      %v3178 = vsel %vm3050, -inf, %v1833
      %v3179 = vmax.f32 %v3051, %v3052
      %v3180 = vmax.f32 %v3179, %v3053
      %v3181 = vmax.f32 %v3180, %v3054
      %3182 = vmax.xlane.f32.xlu0 %v3181
      %v3183 = vpop.xlane.xlu0 %3182
      %v3184 = vmax.f32 %v3055, %v3056
      %v3185 = vmax.f32 %v3184, %v3057
      %v3186 = vmax.f32 %v3185, %v3058
      %3187 = vmax.xlane.f32.xlu0 %v3186
      %v3188 = vpop.xlane.xlu0 %3187
      %v3189 = vmax.f32 %v3059, %v3060
      %v3190 = vmax.f32 %v3189, %v3061
      %v3191 = vmax.f32 %v3190, %v3062
      %3192 = vmax.xlane.f32.xlu0 %v3191
      %v3193 = vpop.xlane.xlu0 %3192
      %v3194 = vmax.f32 %v3063, %v3064
      %v3195 = vmax.f32 %v3194, %v3065
      %v3196 = vmax.f32 %v3195, %v3066
      %3197 = vmax.xlane.f32.xlu0 %v3196
      %v3198 = vpop.xlane.xlu0 %3197
      %v3199 = vmax.f32 %v3067, %v3068
      %v3200 = vmax.f32 %v3199, %v3069
      %v3201 = vmax.f32 %v3200, %v3070
      %3202 = vmax.xlane.f32.xlu0 %v3201
      %v3203 = vpop.xlane.xlu0 %3202
      %v3204 = vmax.f32 %v3071, %v3072
      %v3205 = vmax.f32 %v3204, %v3073
      %v3206 = vmax.f32 %v3205, %v3074
      %3207 = vmax.xlane.f32.xlu0 %v3206
      %v3208 = vpop.xlane.xlu0 %3207
      %v3209 = vmax.f32 %v3075, %v3076
      %v3210 = vmax.f32 %v3209, %v3077
      %v3211 = vmax.f32 %v3210, %v3078
      %3212 = vmax.xlane.f32.xlu0 %v3211
      %v3213 = vpop.xlane.xlu0 %3212
      %v3214 = vmax.f32 %v3079, %v3080
      %v3215 = vmax.f32 %v3214, %v3081
      %v3216 = vmax.f32 %v3215, %v3082
      %3217 = vmax.xlane.f32.xlu0 %v3216
      %v3218 = vpop.xlane.xlu0 %3217
      %v3219 = vmax.f32 %v3083, %v3084
      %v3220 = vmax.f32 %v3219, %v3085
      %v3221 = vmax.f32 %v3220, %v3086
      %3222 = vmax.xlane.f32.xlu0 %v3221
      %v3223 = vpop.xlane.xlu0 %3222
      %v3224 = vmax.f32 %v3087, %v3088
      %v3225 = vmax.f32 %v3224, %v3089
      %v3226 = vmax.f32 %v3225, %v3090
      %3227 = vmax.xlane.f32.xlu0 %v3226
      %v3228 = vpop.xlane.xlu0 %3227
      %v3229 = vmax.f32 %v3091, %v3092
      %v3230 = vmax.f32 %v3229, %v3093
      %v3231 = vmax.f32 %v3230, %v3094
      %3232 = vmax.xlane.f32.xlu0 %v3231
      %v3233 = vpop.xlane.xlu0 %3232
      %v3234 = vmax.f32 %v3095, %v3096
      %v3235 = vmax.f32 %v3234, %v3097
      %v3236 = vmax.f32 %v3235, %v3098
      %3237 = vmax.xlane.f32.xlu0 %v3236
      %v3238 = vpop.xlane.xlu0 %3237
      %v3239 = vmax.f32 %v3099, %v3100
      %v3240 = vmax.f32 %v3239, %v3101
      %v3241 = vmax.f32 %v3240, %v3102
      %3242 = vmax.xlane.f32.xlu0 %v3241
      %v3243 = vpop.xlane.xlu0 %3242
      %v3244 = vmax.f32 %v3103, %v3104
      %v3245 = vmax.f32 %v3244, %v3105
      %v3246 = vmax.f32 %v3245, %v3106
      %3247 = vmax.xlane.f32.xlu0 %v3246
      %v3248 = vpop.xlane.xlu0 %3247
      %v3249 = vmax.f32 %v3107, %v3108
      %v3250 = vmax.f32 %v3249, %v3109
      %v3251 = vmax.f32 %v3250, %v3110
      %3252 = vmax.xlane.f32.xlu0 %v3251
      %v3253 = vpop.xlane.xlu0 %3252
      %v3254 = vmax.f32 %v3111, %v3112
      %v3255 = vmax.f32 %v3254, %v3113
      %v3256 = vmax.f32 %v3255, %v3114
      %3257 = vmax.xlane.f32.xlu0 %v3256
      %v3258 = vpop.xlane.xlu0 %3257
      %v3259 = vmax.f32 %v3115, %v3116
      %v3260 = vmax.f32 %v3259, %v3117
      %v3261 = vmax.f32 %v3260, %v3118
      %3262 = vmax.xlane.f32.xlu0 %v3261
      %v3263 = vpop.xlane.xlu0 %3262
      %v3264 = vmax.f32 %v3119, %v3120
      %v3265 = vmax.f32 %v3264, %v3121
      %v3266 = vmax.f32 %v3265, %v3122
      %3267 = vmax.xlane.f32.xlu0 %v3266
      %v3268 = vpop.xlane.xlu0 %3267
      %v3269 = vmax.f32 %v3123, %v3124
      %v3270 = vmax.f32 %v3269, %v3125
      %v3271 = vmax.f32 %v3270, %v3126
      %3272 = vmax.xlane.f32.xlu0 %v3271
      %v3273 = vpop.xlane.xlu0 %3272
      %v3274 = vmax.f32 %v3127, %v3128
      %v3275 = vmax.f32 %v3274, %v3129
      %v3276 = vmax.f32 %v3275, %v3130
      %3277 = vmax.xlane.f32.xlu0 %v3276
      %v3278 = vpop.xlane.xlu0 %3277
      %v3279 = vmax.f32 %v3131, %v3132
      %v3280 = vmax.f32 %v3279, %v3133
      %v3281 = vmax.f32 %v3280, %v3134
      %3282 = vmax.xlane.f32.xlu0 %v3281
      %v3283 = vpop.xlane.xlu0 %3282
      %v3284 = vmax.f32 %v3135, %v3136
      %v3285 = vmax.f32 %v3284, %v3137
      %v3286 = vmax.f32 %v3285, %v3138
      %3287 = vmax.xlane.f32.xlu0 %v3286
      %v3288 = vpop.xlane.xlu0 %3287
      %v3289 = vmax.f32 %v3139, %v3140
      %v3290 = vmax.f32 %v3289, %v3141
      %v3291 = vmax.f32 %v3290, %v3142
      %3292 = vmax.xlane.f32.xlu0 %v3291
      %v3293 = vpop.xlane.xlu0 %3292
      %v3294 = vmax.f32 %v3143, %v3144
      %v3295 = vmax.f32 %v3294, %v3145
      %v3296 = vmax.f32 %v3295, %v3146
      %3297 = vmax.xlane.f32.xlu0 %v3296
      %v3298 = vpop.xlane.xlu0 %3297
      %v3299 = vmax.f32 %v3147, %v3148
      %v3300 = vmax.f32 %v3299, %v3149
      %v3301 = vmax.f32 %v3300, %v3150
      %3302 = vmax.xlane.f32.xlu0 %v3301
      %v3303 = vpop.xlane.xlu0 %3302
      %v3304 = vmax.f32 %v3151, %v3152
      %v3305 = vmax.f32 %v3304, %v3153
      %v3306 = vmax.f32 %v3305, %v3154
      %3307 = vmax.xlane.f32.xlu0 %v3306
      %v3308 = vpop.xlane.xlu0 %3307
      %v3309 = vmax.f32 %v3155, %v3156
      %v3310 = vmax.f32 %v3309, %v3157
      %v3311 = vmax.f32 %v3310, %v3158
      %3312 = vmax.xlane.f32.xlu0 %v3311
      %v3313 = vpop.xlane.xlu0 %3312
      %v3314 = vmax.f32 %v3159, %v3160
      %v3315 = vmax.f32 %v3314, %v3161
      %v3316 = vmax.f32 %v3315, %v3162
      %3317 = vmax.xlane.f32.xlu0 %v3316
      %v3318 = vpop.xlane.xlu0 %3317
      %v3319 = vmax.f32 %v3163, %v3164
      %v3320 = vmax.f32 %v3319, %v3165
      %v3321 = vmax.f32 %v3320, %v3166
      %3322 = vmax.xlane.f32.xlu0 %v3321
      %v3323 = vpop.xlane.xlu0 %3322
      %v3324 = vmax.f32 %v3167, %v3168
      %v3325 = vmax.f32 %v3324, %v3169
      %v3326 = vmax.f32 %v3325, %v3170
      %3327 = vmax.xlane.f32.xlu0 %v3326
      %v3328 = vpop.xlane.xlu0 %3327
      %v3329 = vmax.f32 %v3171, %v3172
      %v3330 = vmax.f32 %v3329, %v3173
      %v3331 = vmax.f32 %v3330, %v3174
      %3332 = vmax.xlane.f32.xlu0 %v3331
      %v3333 = vpop.xlane.xlu0 %3332
      %v3334 = vmax.f32 %v3175, %v3176
      %v3335 = vmax.f32 %v3334, %v3177
      %v3336 = vmax.f32 %v3335, %v3178
      %3337 = vmax.xlane.f32.xlu0 %v3336
      %v3338 = vpop.xlane.xlu0 %3337
      %vm3339 = vcmp.ge.f32.partialorder %v3051, %v3183
      %vm3340 = vcmp.ge.f32.partialorder %v3052, %v3183
      %vm3341 = vcmp.ge.f32.partialorder %v3053, %v3183
      %vm3342 = vcmp.ge.f32.partialorder %v3054, %v3183
      %vm3343 = vcmp.ge.f32.partialorder %v3055, %v3188
      %vm3344 = vcmp.ge.f32.partialorder %v3056, %v3188
      %vm3345 = vcmp.ge.f32.partialorder %v3057, %v3188
      %vm3346 = vcmp.ge.f32.partialorder %v3058, %v3188
      %vm3347 = vcmp.ge.f32.partialorder %v3059, %v3193
      %vm3348 = vcmp.ge.f32.partialorder %v3060, %v3193
      %vm3349 = vcmp.ge.f32.partialorder %v3061, %v3193
      %vm3350 = vcmp.ge.f32.partialorder %v3062, %v3193
      %vm3351 = vcmp.ge.f32.partialorder %v3063, %v3198
      %vm3352 = vcmp.ge.f32.partialorder %v3064, %v3198
      %vm3353 = vcmp.ge.f32.partialorder %v3065, %v3198
      %vm3354 = vcmp.ge.f32.partialorder %v3066, %v3198
      %vm3355 = vcmp.ge.f32.partialorder %v3067, %v3203
      %vm3356 = vcmp.ge.f32.partialorder %v3068, %v3203
      %vm3357 = vcmp.ge.f32.partialorder %v3069, %v3203
      %vm3358 = vcmp.ge.f32.partialorder %v3070, %v3203
      %vm3359 = vcmp.ge.f32.partialorder %v3071, %v3208
      %vm3360 = vcmp.ge.f32.partialorder %v3072, %v3208
      %vm3361 = vcmp.ge.f32.partialorder %v3073, %v3208
      %vm3362 = vcmp.ge.f32.partialorder %v3074, %v3208
      %vm3363 = vcmp.ge.f32.partialorder %v3075, %v3213
      %vm3364 = vcmp.ge.f32.partialorder %v3076, %v3213
      %vm3365 = vcmp.ge.f32.partialorder %v3077, %v3213
      %vm3366 = vcmp.ge.f32.partialorder %v3078, %v3213
      %vm3367 = vcmp.ge.f32.partialorder %v3079, %v3218
      %vm3368 = vcmp.ge.f32.partialorder %v3080, %v3218
      %vm3369 = vcmp.ge.f32.partialorder %v3081, %v3218
      %vm3370 = vcmp.ge.f32.partialorder %v3082, %v3218
      %vm3371 = vcmp.ge.f32.partialorder %v3083, %v3223
      %vm3372 = vcmp.ge.f32.partialorder %v3084, %v3223
      %vm3373 = vcmp.ge.f32.partialorder %v3085, %v3223
      %vm3374 = vcmp.ge.f32.partialorder %v3086, %v3223
      %vm3375 = vcmp.ge.f32.partialorder %v3087, %v3228
      %vm3376 = vcmp.ge.f32.partialorder %v3088, %v3228
      %vm3377 = vcmp.ge.f32.partialorder %v3089, %v3228
      %vm3378 = vcmp.ge.f32.partialorder %v3090, %v3228
      %vm3379 = vcmp.ge.f32.partialorder %v3091, %v3233
      %vm3380 = vcmp.ge.f32.partialorder %v3092, %v3233
      %vm3381 = vcmp.ge.f32.partialorder %v3093, %v3233
      %vm3382 = vcmp.ge.f32.partialorder %v3094, %v3233
      %vm3383 = vcmp.ge.f32.partialorder %v3095, %v3238
      %vm3384 = vcmp.ge.f32.partialorder %v3096, %v3238
      %vm3385 = vcmp.ge.f32.partialorder %v3097, %v3238
      %vm3386 = vcmp.ge.f32.partialorder %v3098, %v3238
      %vm3387 = vcmp.ge.f32.partialorder %v3099, %v3243
      %vm3388 = vcmp.ge.f32.partialorder %v3100, %v3243
      %vm3389 = vcmp.ge.f32.partialorder %v3101, %v3243
      %vm3390 = vcmp.ge.f32.partialorder %v3102, %v3243
      %vm3391 = vcmp.ge.f32.partialorder %v3103, %v3248
      %vm3392 = vcmp.ge.f32.partialorder %v3104, %v3248
      %vm3393 = vcmp.ge.f32.partialorder %v3105, %v3248
      %vm3394 = vcmp.ge.f32.partialorder %v3106, %v3248
      %vm3395 = vcmp.ge.f32.partialorder %v3107, %v3253
      %vm3396 = vcmp.ge.f32.partialorder %v3108, %v3253
      %vm3397 = vcmp.ge.f32.partialorder %v3109, %v3253
      %vm3398 = vcmp.ge.f32.partialorder %v3110, %v3253
      %vm3399 = vcmp.ge.f32.partialorder %v3111, %v3258
      %vm3400 = vcmp.ge.f32.partialorder %v3112, %v3258
      %vm3401 = vcmp.ge.f32.partialorder %v3113, %v3258
      %vm3402 = vcmp.ge.f32.partialorder %v3114, %v3258
      %vm3403 = vcmp.ge.f32.partialorder %v3115, %v3263
      %vm3404 = vcmp.ge.f32.partialorder %v3116, %v3263
      %vm3405 = vcmp.ge.f32.partialorder %v3117, %v3263
      %vm3406 = vcmp.ge.f32.partialorder %v3118, %v3263
      %vm3407 = vcmp.ge.f32.partialorder %v3119, %v3268
      %vm3408 = vcmp.ge.f32.partialorder %v3120, %v3268
      %vm3409 = vcmp.ge.f32.partialorder %v3121, %v3268
      %vm3410 = vcmp.ge.f32.partialorder %v3122, %v3268
      %vm3411 = vcmp.ge.f32.partialorder %v3123, %v3273
      %vm3412 = vcmp.ge.f32.partialorder %v3124, %v3273
      %vm3413 = vcmp.ge.f32.partialorder %v3125, %v3273
      %vm3414 = vcmp.ge.f32.partialorder %v3126, %v3273
      %vm3415 = vcmp.ge.f32.partialorder %v3127, %v3278
      %vm3416 = vcmp.ge.f32.partialorder %v3128, %v3278
      %vm3417 = vcmp.ge.f32.partialorder %v3129, %v3278
      %vm3418 = vcmp.ge.f32.partialorder %v3130, %v3278
      %vm3419 = vcmp.ge.f32.partialorder %v3131, %v3283
      %vm3420 = vcmp.ge.f32.partialorder %v3132, %v3283
      %vm3421 = vcmp.ge.f32.partialorder %v3133, %v3283
      %vm3422 = vcmp.ge.f32.partialorder %v3134, %v3283
      %vm3423 = vcmp.ge.f32.partialorder %v3135, %v3288
      %vm3424 = vcmp.ge.f32.partialorder %v3136, %v3288
      %vm3425 = vcmp.ge.f32.partialorder %v3137, %v3288
      %vm3426 = vcmp.ge.f32.partialorder %v3138, %v3288
      %vm3427 = vcmp.ge.f32.partialorder %v3139, %v3293
      %vm3428 = vcmp.ge.f32.partialorder %v3140, %v3293
      %vm3429 = vcmp.ge.f32.partialorder %v3141, %v3293
      %vm3430 = vcmp.ge.f32.partialorder %v3142, %v3293
      %vm3431 = vcmp.ge.f32.partialorder %v3143, %v3298
      %vm3432 = vcmp.ge.f32.partialorder %v3144, %v3298
      %vm3433 = vcmp.ge.f32.partialorder %v3145, %v3298
      %vm3434 = vcmp.ge.f32.partialorder %v3146, %v3298
      %vm3435 = vcmp.ge.f32.partialorder %v3147, %v3303
      %vm3436 = vcmp.ge.f32.partialorder %v3148, %v3303
      %vm3437 = vcmp.ge.f32.partialorder %v3149, %v3303
      %vm3438 = vcmp.ge.f32.partialorder %v3150, %v3303
      %vm3439 = vcmp.ge.f32.partialorder %v3151, %v3308
      %vm3440 = vcmp.ge.f32.partialorder %v3152, %v3308
      %vm3441 = vcmp.ge.f32.partialorder %v3153, %v3308
      %vm3442 = vcmp.ge.f32.partialorder %v3154, %v3308
      %vm3443 = vcmp.ge.f32.partialorder %v3155, %v3313
      %vm3444 = vcmp.ge.f32.partialorder %v3156, %v3313
      %vm3445 = vcmp.ge.f32.partialorder %v3157, %v3313
      %vm3446 = vcmp.ge.f32.partialorder %v3158, %v3313
      %vm3447 = vcmp.ge.f32.partialorder %v3159, %v3318
      %vm3448 = vcmp.ge.f32.partialorder %v3160, %v3318
      %vm3449 = vcmp.ge.f32.partialorder %v3161, %v3318
      %vm3450 = vcmp.ge.f32.partialorder %v3162, %v3318
      %vm3451 = vcmp.ge.f32.partialorder %v3163, %v3323
      %vm3452 = vcmp.ge.f32.partialorder %v3164, %v3323
      %vm3453 = vcmp.ge.f32.partialorder %v3165, %v3323
      %vm3454 = vcmp.ge.f32.partialorder %v3166, %v3323
      %vm3455 = vcmp.ge.f32.partialorder %v3167, %v3328
      %vm3456 = vcmp.ge.f32.partialorder %v3168, %v3328
      %vm3457 = vcmp.ge.f32.partialorder %v3169, %v3328
      %vm3458 = vcmp.ge.f32.partialorder %v3170, %v3328
      %vm3459 = vcmp.ge.f32.partialorder %v3171, %v3333
      %vm3460 = vcmp.ge.f32.partialorder %v3172, %v3333
      %vm3461 = vcmp.ge.f32.partialorder %v3173, %v3333
      %vm3462 = vcmp.ge.f32.partialorder %v3174, %v3333
      %vm3463 = vcmp.ge.f32.partialorder %v3175, %v3338
      %vm3464 = vcmp.ge.f32.partialorder %v3176, %v3338
      %vm3465 = vcmp.ge.f32.partialorder %v3177, %v3338
      %vm3466 = vcmp.ge.f32.partialorder %v3178, %v3338
      %v3467 = vsel %vm3339, %v1106, 512
      %v3468 = vsel %vm3340, %v1107, 512
      %v3469 = vsel %vm3341, %v1108, 512
      %v3470 = vsel %vm3342, %v1109, 512
      %v3471 = vsel %vm3343, %v1106, 512
      %v3472 = vsel %vm3344, %v1107, 512
      %v3473 = vsel %vm3345, %v1108, 512
      %v3474 = vsel %vm3346, %v1109, 512
      %v3475 = vsel %vm3347, %v1106, 512
      %v3476 = vsel %vm3348, %v1107, 512
      %v3477 = vsel %vm3349, %v1108, 512
      %v3478 = vsel %vm3350, %v1109, 512
      %v3479 = vsel %vm3351, %v1106, 512
      %v3480 = vsel %vm3352, %v1107, 512
      %v3481 = vsel %vm3353, %v1108, 512
      %v3482 = vsel %vm3354, %v1109, 512
      %v3483 = vsel %vm3355, %v1106, 512
      %v3484 = vsel %vm3356, %v1107, 512
      %v3485 = vsel %vm3357, %v1108, 512
      %v3486 = vsel %vm3358, %v1109, 512
      %v3487 = vsel %vm3359, %v1106, 512
      %v3488 = vsel %vm3360, %v1107, 512
      %v3489 = vsel %vm3361, %v1108, 512
      %v3490 = vsel %vm3362, %v1109, 512
      %v3491 = vsel %vm3363, %v1106, 512
      %v3492 = vsel %vm3364, %v1107, 512
      %v3493 = vsel %vm3365, %v1108, 512
      %v3494 = vsel %vm3366, %v1109, 512
      %v3495 = vsel %vm3367, %v1106, 512
      %v3496 = vsel %vm3368, %v1107, 512
      %v3497 = vsel %vm3369, %v1108, 512
      %v3498 = vsel %vm3370, %v1109, 512
      %v3499 = vsel %vm3371, %v1106, 512
      %v3500 = vsel %vm3372, %v1107, 512
      %v3501 = vsel %vm3373, %v1108, 512
      %v3502 = vsel %vm3374, %v1109, 512
      %v3503 = vsel %vm3375, %v1106, 512
      %v3504 = vsel %vm3376, %v1107, 512
      %v3505 = vsel %vm3377, %v1108, 512
      %v3506 = vsel %vm3378, %v1109, 512
      %v3507 = vsel %vm3379, %v1106, 512
      %v3508 = vsel %vm3380, %v1107, 512
      %v3509 = vsel %vm3381, %v1108, 512
      %v3510 = vsel %vm3382, %v1109, 512
      %v3511 = vsel %vm3383, %v1106, 512
      %v3512 = vsel %vm3384, %v1107, 512
      %v3513 = vsel %vm3385, %v1108, 512
      %v3514 = vsel %vm3386, %v1109, 512
      %v3515 = vsel %vm3387, %v1106, 512
      %v3516 = vsel %vm3388, %v1107, 512
      %v3517 = vsel %vm3389, %v1108, 512
      %v3518 = vsel %vm3390, %v1109, 512
      %v3519 = vsel %vm3391, %v1106, 512
      %v3520 = vsel %vm3392, %v1107, 512
      %v3521 = vsel %vm3393, %v1108, 512
      %v3522 = vsel %vm3394, %v1109, 512
      %v3523 = vsel %vm3395, %v1106, 512
      %v3524 = vsel %vm3396, %v1107, 512
      %v3525 = vsel %vm3397, %v1108, 512
      %v3526 = vsel %vm3398, %v1109, 512
      %v3527 = vsel %vm3399, %v1106, 512
      %v3528 = vsel %vm3400, %v1107, 512
      %v3529 = vsel %vm3401, %v1108, 512
      %v3530 = vsel %vm3402, %v1109, 512
      %v3531 = vsel %vm3403, %v1106, 512
      %v3532 = vsel %vm3404, %v1107, 512
      %v3533 = vsel %vm3405, %v1108, 512
      %v3534 = vsel %vm3406, %v1109, 512
      %v3535 = vsel %vm3407, %v1106, 512
      %v3536 = vsel %vm3408, %v1107, 512
      %v3537 = vsel %vm3409, %v1108, 512
      %v3538 = vsel %vm3410, %v1109, 512
      %v3539 = vsel %vm3411, %v1106, 512
      %v3540 = vsel %vm3412, %v1107, 512
      %v3541 = vsel %vm3413, %v1108, 512
      %v3542 = vsel %vm3414, %v1109, 512
      %v3543 = vsel %vm3415, %v1106, 512
      %v3544 = vsel %vm3416, %v1107, 512
      %v3545 = vsel %vm3417, %v1108, 512
      %v3546 = vsel %vm3418, %v1109, 512
      %v3547 = vsel %vm3419, %v1106, 512
      %v3548 = vsel %vm3420, %v1107, 512
      %v3549 = vsel %vm3421, %v1108, 512
      %v3550 = vsel %vm3422, %v1109, 512
      %v3551 = vsel %vm3423, %v1106, 512
      %v3552 = vsel %vm3424, %v1107, 512
      %v3553 = vsel %vm3425, %v1108, 512
      %v3554 = vsel %vm3426, %v1109, 512
      %v3555 = vsel %vm3427, %v1106, 512
      %v3556 = vsel %vm3428, %v1107, 512
      %v3557 = vsel %vm3429, %v1108, 512
      %v3558 = vsel %vm3430, %v1109, 512
      %v3559 = vsel %vm3431, %v1106, 512
      %v3560 = vsel %vm3432, %v1107, 512
      %v3561 = vsel %vm3433, %v1108, 512
      %v3562 = vsel %vm3434, %v1109, 512
      %v3563 = vsel %vm3435, %v1106, 512
      %v3564 = vsel %vm3436, %v1107, 512
      %v3565 = vsel %vm3437, %v1108, 512
      %v3566 = vsel %vm3438, %v1109, 512
      %v3567 = vsel %vm3439, %v1106, 512
      %v3568 = vsel %vm3440, %v1107, 512
      %v3569 = vsel %vm3441, %v1108, 512
      %v3570 = vsel %vm3442, %v1109, 512
      %v3571 = vsel %vm3443, %v1106, 512
      %v3572 = vsel %vm3444, %v1107, 512
      %v3573 = vsel %vm3445, %v1108, 512
      %v3574 = vsel %vm3446, %v1109, 512
      %v3575 = vsel %vm3447, %v1106, 512
      %v3576 = vsel %vm3448, %v1107, 512
      %v3577 = vsel %vm3449, %v1108, 512
      %v3578 = vsel %vm3450, %v1109, 512
      %v3579 = vsel %vm3451, %v1106, 512
      %v3580 = vsel %vm3452, %v1107, 512
      %v3581 = vsel %vm3453, %v1108, 512
      %v3582 = vsel %vm3454, %v1109, 512
      %v3583 = vsel %vm3455, %v1106, 512
      %v3584 = vsel %vm3456, %v1107, 512
      %v3585 = vsel %vm3457, %v1108, 512
      %v3586 = vsel %vm3458, %v1109, 512
      %v3587 = vsel %vm3459, %v1106, 512
      %v3588 = vsel %vm3460, %v1107, 512
      %v3589 = vsel %vm3461, %v1108, 512
      %v3590 = vsel %vm3462, %v1109, 512
      %v3591 = vsel %vm3463, %v1106, 512
      %v3592 = vsel %vm3464, %v1107, 512
      %v3593 = vsel %vm3465, %v1108, 512
      %v3594 = vsel %vm3466, %v1109, 512
      %vm3595 = vcmp.lt.s32.totalorder %v3467, %v3468
      %v3596 = vsel %vm3595, %v3467, %v3468
      %vm3597 = vcmp.lt.s32.totalorder %v3596, %v3469
      %v3598 = vsel %vm3597, %v3596, %v3469
      %vm3599 = vcmp.lt.s32.totalorder %v3598, %v3470
      %v3600 = vsel %vm3599, %v3598, %v3470
      %v3601 = vand.u32 %v3600, 65535
      %v3602 = vshra.s32 %v3600, 16
      %v3603 = vcvt.s32.f32 %v3601
      %v3604 = vcvt.s32.f32 %v3602
      %3605 = vmin.xlane.f32.xlu0 %v3604
      %v3606 = vpop.xlane.xlu0 %3605
      %vm3607 = vcmp.eq.f32.partialorder %v3604, %v3606
      %v3608 = vsel %vm3607, %v3603, inf
      %3609 = vmin.xlane.f32.xlu0 %v3608
      %v3610 = vpop.xlane.xlu0 %3609
      %v3611 = vcvt.f32.s32 %v3610
      %v3612 = vcvt.f32.s32 %v3606
      %v3613 = vshll.u32 %v3612, 16
      %v3614 = vadd.s32 %v3613, %v3611
      %vm3615 = vcmp.lt.s32.totalorder %v3471, %v3472
      %v3616 = vsel %vm3615, %v3471, %v3472
      %vm3617 = vcmp.lt.s32.totalorder %v3616, %v3473
      %v3618 = vsel %vm3617, %v3616, %v3473
      %vm3619 = vcmp.lt.s32.totalorder %v3618, %v3474
      %v3620 = vsel %vm3619, %v3618, %v3474
      %v3621 = vand.u32 %v3620, 65535
      %v3622 = vshra.s32 %v3620, 16
      %v3623 = vcvt.s32.f32 %v3621
      %v3624 = vcvt.s32.f32 %v3622
      %3625 = vmin.xlane.f32.xlu0 %v3624
      %v3626 = vpop.xlane.xlu0 %3625
      %vm3627 = vcmp.eq.f32.partialorder %v3624, %v3626
      %v3628 = vsel %vm3627, %v3623, inf
      %3629 = vmin.xlane.f32.xlu0 %v3628
      %v3630 = vpop.xlane.xlu0 %3629
      %v3631 = vcvt.f32.s32 %v3630
      %v3632 = vcvt.f32.s32 %v3626
      %v3633 = vshll.u32 %v3632, 16
      %v3634 = vadd.s32 %v3633, %v3631
      %vm3635 = vcmp.lt.s32.totalorder %v3475, %v3476
      %v3636 = vsel %vm3635, %v3475, %v3476
      %vm3637 = vcmp.lt.s32.totalorder %v3636, %v3477
      %v3638 = vsel %vm3637, %v3636, %v3477
      %vm3639 = vcmp.lt.s32.totalorder %v3638, %v3478
      %v3640 = vsel %vm3639, %v3638, %v3478
      %v3641 = vand.u32 %v3640, 65535
      %v3642 = vshra.s32 %v3640, 16
      %v3643 = vcvt.s32.f32 %v3641
      %v3644 = vcvt.s32.f32 %v3642
      %3645 = vmin.xlane.f32.xlu0 %v3644
      %v3646 = vpop.xlane.xlu0 %3645
      %vm3647 = vcmp.eq.f32.partialorder %v3644, %v3646
      %v3648 = vsel %vm3647, %v3643, inf
      %3649 = vmin.xlane.f32.xlu0 %v3648
      %v3650 = vpop.xlane.xlu0 %3649
      %v3651 = vcvt.f32.s32 %v3650
      %v3652 = vcvt.f32.s32 %v3646
      %v3653 = vshll.u32 %v3652, 16
      %v3654 = vadd.s32 %v3653, %v3651
      %vm3655 = vcmp.lt.s32.totalorder %v3479, %v3480
      %v3656 = vsel %vm3655, %v3479, %v3480
      %vm3657 = vcmp.lt.s32.totalorder %v3656, %v3481
      %v3658 = vsel %vm3657, %v3656, %v3481
      %vm3659 = vcmp.lt.s32.totalorder %v3658, %v3482
      %v3660 = vsel %vm3659, %v3658, %v3482
      %v3661 = vand.u32 %v3660, 65535
      %v3662 = vshra.s32 %v3660, 16
      %v3663 = vcvt.s32.f32 %v3661
      %v3664 = vcvt.s32.f32 %v3662
      %3665 = vmin.xlane.f32.xlu0 %v3664
      %v3666 = vpop.xlane.xlu0 %3665
      %vm3667 = vcmp.eq.f32.partialorder %v3664, %v3666
      %v3668 = vsel %vm3667, %v3663, inf
      %3669 = vmin.xlane.f32.xlu0 %v3668
      %v3670 = vpop.xlane.xlu0 %3669
      %v3671 = vcvt.f32.s32 %v3670
      %v3672 = vcvt.f32.s32 %v3666
      %v3673 = vshll.u32 %v3672, 16
      %v3674 = vadd.s32 %v3673, %v3671
      %vm3675 = vcmp.lt.s32.totalorder %v3483, %v3484
      %v3676 = vsel %vm3675, %v3483, %v3484
      %vm3677 = vcmp.lt.s32.totalorder %v3676, %v3485
      %v3678 = vsel %vm3677, %v3676, %v3485
      %vm3679 = vcmp.lt.s32.totalorder %v3678, %v3486
      %v3680 = vsel %vm3679, %v3678, %v3486
      %v3681 = vand.u32 %v3680, 65535
      %v3682 = vshra.s32 %v3680, 16
      %v3683 = vcvt.s32.f32 %v3681
      %v3684 = vcvt.s32.f32 %v3682
      %3685 = vmin.xlane.f32.xlu0 %v3684
      %v3686 = vpop.xlane.xlu0 %3685
      %vm3687 = vcmp.eq.f32.partialorder %v3684, %v3686
      %v3688 = vsel %vm3687, %v3683, inf
      %3689 = vmin.xlane.f32.xlu0 %v3688
      %v3690 = vpop.xlane.xlu0 %3689
      %v3691 = vcvt.f32.s32 %v3690
      %v3692 = vcvt.f32.s32 %v3686
      %v3693 = vshll.u32 %v3692, 16
      %v3694 = vadd.s32 %v3693, %v3691
      %vm3695 = vcmp.lt.s32.totalorder %v3487, %v3488
      %v3696 = vsel %vm3695, %v3487, %v3488
      %vm3697 = vcmp.lt.s32.totalorder %v3696, %v3489
      %v3698 = vsel %vm3697, %v3696, %v3489
      %vm3699 = vcmp.lt.s32.totalorder %v3698, %v3490
      %v3700 = vsel %vm3699, %v3698, %v3490
      %v3701 = vand.u32 %v3700, 65535
      %v3702 = vshra.s32 %v3700, 16
      %v3703 = vcvt.s32.f32 %v3701
      %v3704 = vcvt.s32.f32 %v3702
      %3705 = vmin.xlane.f32.xlu0 %v3704
      %v3706 = vpop.xlane.xlu0 %3705
      %vm3707 = vcmp.eq.f32.partialorder %v3704, %v3706
      %v3708 = vsel %vm3707, %v3703, inf
      %3709 = vmin.xlane.f32.xlu0 %v3708
      %v3710 = vpop.xlane.xlu0 %3709
      %v3711 = vcvt.f32.s32 %v3710
      %v3712 = vcvt.f32.s32 %v3706
      %v3713 = vshll.u32 %v3712, 16
      %v3714 = vadd.s32 %v3713, %v3711
      %vm3715 = vcmp.lt.s32.totalorder %v3491, %v3492
      %v3716 = vsel %vm3715, %v3491, %v3492
      %vm3717 = vcmp.lt.s32.totalorder %v3716, %v3493
      %v3718 = vsel %vm3717, %v3716, %v3493
      %vm3719 = vcmp.lt.s32.totalorder %v3718, %v3494
      %v3720 = vsel %vm3719, %v3718, %v3494
      %v3721 = vand.u32 %v3720, 65535
      %v3722 = vshra.s32 %v3720, 16
      %v3723 = vcvt.s32.f32 %v3721
      %v3724 = vcvt.s32.f32 %v3722
      %3725 = vmin.xlane.f32.xlu0 %v3724
      %v3726 = vpop.xlane.xlu0 %3725
      %vm3727 = vcmp.eq.f32.partialorder %v3724, %v3726
      %v3728 = vsel %vm3727, %v3723, inf
      %3729 = vmin.xlane.f32.xlu0 %v3728
      %v3730 = vpop.xlane.xlu0 %3729
      %v3731 = vcvt.f32.s32 %v3730
      %v3732 = vcvt.f32.s32 %v3726
      %v3733 = vshll.u32 %v3732, 16
      %v3734 = vadd.s32 %v3733, %v3731
      %vm3735 = vcmp.lt.s32.totalorder %v3495, %v3496
      %v3736 = vsel %vm3735, %v3495, %v3496
      %vm3737 = vcmp.lt.s32.totalorder %v3736, %v3497
      %v3738 = vsel %vm3737, %v3736, %v3497
      %vm3739 = vcmp.lt.s32.totalorder %v3738, %v3498
      %v3740 = vsel %vm3739, %v3738, %v3498
      %v3741 = vand.u32 %v3740, 65535
      %v3742 = vshra.s32 %v3740, 16
      %v3743 = vcvt.s32.f32 %v3741
      %v3744 = vcvt.s32.f32 %v3742
      %3745 = vmin.xlane.f32.xlu0 %v3744
      %v3746 = vpop.xlane.xlu0 %3745
      %vm3747 = vcmp.eq.f32.partialorder %v3744, %v3746
      %v3748 = vsel %vm3747, %v3743, inf
      %3749 = vmin.xlane.f32.xlu0 %v3748
      %v3750 = vpop.xlane.xlu0 %3749
      %v3751 = vcvt.f32.s32 %v3750
      %v3752 = vcvt.f32.s32 %v3746
      %v3753 = vshll.u32 %v3752, 16
      %v3754 = vadd.s32 %v3753, %v3751
      %vm3755 = vcmp.lt.s32.totalorder %v3499, %v3500
      %v3756 = vsel %vm3755, %v3499, %v3500
      %vm3757 = vcmp.lt.s32.totalorder %v3756, %v3501
      %v3758 = vsel %vm3757, %v3756, %v3501
      %vm3759 = vcmp.lt.s32.totalorder %v3758, %v3502
      %v3760 = vsel %vm3759, %v3758, %v3502
      %v3761 = vand.u32 %v3760, 65535
      %v3762 = vshra.s32 %v3760, 16
      %v3763 = vcvt.s32.f32 %v3761
      %v3764 = vcvt.s32.f32 %v3762
      %3765 = vmin.xlane.f32.xlu0 %v3764
      %v3766 = vpop.xlane.xlu0 %3765
      %vm3767 = vcmp.eq.f32.partialorder %v3764, %v3766
      %v3768 = vsel %vm3767, %v3763, inf
      %3769 = vmin.xlane.f32.xlu0 %v3768
      %v3770 = vpop.xlane.xlu0 %3769
      %v3771 = vcvt.f32.s32 %v3770
      %v3772 = vcvt.f32.s32 %v3766
      %v3773 = vshll.u32 %v3772, 16
      %v3774 = vadd.s32 %v3773, %v3771
      %vm3775 = vcmp.lt.s32.totalorder %v3503, %v3504
      %v3776 = vsel %vm3775, %v3503, %v3504
      %vm3777 = vcmp.lt.s32.totalorder %v3776, %v3505
      %v3778 = vsel %vm3777, %v3776, %v3505
      %vm3779 = vcmp.lt.s32.totalorder %v3778, %v3506
      %v3780 = vsel %vm3779, %v3778, %v3506
      %v3781 = vand.u32 %v3780, 65535
      %v3782 = vshra.s32 %v3780, 16
      %v3783 = vcvt.s32.f32 %v3781
      %v3784 = vcvt.s32.f32 %v3782
      %3785 = vmin.xlane.f32.xlu0 %v3784
      %v3786 = vpop.xlane.xlu0 %3785
      %vm3787 = vcmp.eq.f32.partialorder %v3784, %v3786
      %v3788 = vsel %vm3787, %v3783, inf
      %3789 = vmin.xlane.f32.xlu0 %v3788
      %v3790 = vpop.xlane.xlu0 %3789
      %v3791 = vcvt.f32.s32 %v3790
      %v3792 = vcvt.f32.s32 %v3786
      %v3793 = vshll.u32 %v3792, 16
      %v3794 = vadd.s32 %v3793, %v3791
      %vm3795 = vcmp.lt.s32.totalorder %v3507, %v3508
      %v3796 = vsel %vm3795, %v3507, %v3508
      %vm3797 = vcmp.lt.s32.totalorder %v3796, %v3509
      %v3798 = vsel %vm3797, %v3796, %v3509
      %vm3799 = vcmp.lt.s32.totalorder %v3798, %v3510
      %v3800 = vsel %vm3799, %v3798, %v3510
      %v3801 = vand.u32 %v3800, 65535
      %v3802 = vshra.s32 %v3800, 16
      %v3803 = vcvt.s32.f32 %v3801
      %v3804 = vcvt.s32.f32 %v3802
      %3805 = vmin.xlane.f32.xlu0 %v3804
      %v3806 = vpop.xlane.xlu0 %3805
      %vm3807 = vcmp.eq.f32.partialorder %v3804, %v3806
      %v3808 = vsel %vm3807, %v3803, inf
      %3809 = vmin.xlane.f32.xlu0 %v3808
      %v3810 = vpop.xlane.xlu0 %3809
      %v3811 = vcvt.f32.s32 %v3810
      %v3812 = vcvt.f32.s32 %v3806
      %v3813 = vshll.u32 %v3812, 16
      %v3814 = vadd.s32 %v3813, %v3811
      %vm3815 = vcmp.lt.s32.totalorder %v3511, %v3512
      %v3816 = vsel %vm3815, %v3511, %v3512
      %vm3817 = vcmp.lt.s32.totalorder %v3816, %v3513
      %v3818 = vsel %vm3817, %v3816, %v3513
      %vm3819 = vcmp.lt.s32.totalorder %v3818, %v3514
      %v3820 = vsel %vm3819, %v3818, %v3514
      %v3821 = vand.u32 %v3820, 65535
      %v3822 = vshra.s32 %v3820, 16
      %v3823 = vcvt.s32.f32 %v3821
      %v3824 = vcvt.s32.f32 %v3822
      %3825 = vmin.xlane.f32.xlu0 %v3824
      %v3826 = vpop.xlane.xlu0 %3825
      %vm3827 = vcmp.eq.f32.partialorder %v3824, %v3826
      %v3828 = vsel %vm3827, %v3823, inf
      %3829 = vmin.xlane.f32.xlu0 %v3828
      %v3830 = vpop.xlane.xlu0 %3829
      %v3831 = vcvt.f32.s32 %v3830
      %v3832 = vcvt.f32.s32 %v3826
      %v3833 = vshll.u32 %v3832, 16
      %v3834 = vadd.s32 %v3833, %v3831
      %vm3835 = vcmp.lt.s32.totalorder %v3515, %v3516
      %v3836 = vsel %vm3835, %v3515, %v3516
      %vm3837 = vcmp.lt.s32.totalorder %v3836, %v3517
      %v3838 = vsel %vm3837, %v3836, %v3517
      %vm3839 = vcmp.lt.s32.totalorder %v3838, %v3518
      %v3840 = vsel %vm3839, %v3838, %v3518
      %v3841 = vand.u32 %v3840, 65535
      %v3842 = vshra.s32 %v3840, 16
      %v3843 = vcvt.s32.f32 %v3841
      %v3844 = vcvt.s32.f32 %v3842
      %3845 = vmin.xlane.f32.xlu0 %v3844
      %v3846 = vpop.xlane.xlu0 %3845
      %vm3847 = vcmp.eq.f32.partialorder %v3844, %v3846
      %v3848 = vsel %vm3847, %v3843, inf
      %3849 = vmin.xlane.f32.xlu0 %v3848
      %v3850 = vpop.xlane.xlu0 %3849
      %v3851 = vcvt.f32.s32 %v3850
      %v3852 = vcvt.f32.s32 %v3846
      %v3853 = vshll.u32 %v3852, 16
      %v3854 = vadd.s32 %v3853, %v3851
      %vm3855 = vcmp.lt.s32.totalorder %v3519, %v3520
      %v3856 = vsel %vm3855, %v3519, %v3520
      %vm3857 = vcmp.lt.s32.totalorder %v3856, %v3521
      %v3858 = vsel %vm3857, %v3856, %v3521
      %vm3859 = vcmp.lt.s32.totalorder %v3858, %v3522
      %v3860 = vsel %vm3859, %v3858, %v3522
      %v3861 = vand.u32 %v3860, 65535
      %v3862 = vshra.s32 %v3860, 16
      %v3863 = vcvt.s32.f32 %v3861
      %v3864 = vcvt.s32.f32 %v3862
      %3865 = vmin.xlane.f32.xlu0 %v3864
      %v3866 = vpop.xlane.xlu0 %3865
      %vm3867 = vcmp.eq.f32.partialorder %v3864, %v3866
      %v3868 = vsel %vm3867, %v3863, inf
      %3869 = vmin.xlane.f32.xlu0 %v3868
      %v3870 = vpop.xlane.xlu0 %3869
      %v3871 = vcvt.f32.s32 %v3870
      %v3872 = vcvt.f32.s32 %v3866
      %v3873 = vshll.u32 %v3872, 16
      %v3874 = vadd.s32 %v3873, %v3871
      %vm3875 = vcmp.lt.s32.totalorder %v3523, %v3524
      %v3876 = vsel %vm3875, %v3523, %v3524
      %vm3877 = vcmp.lt.s32.totalorder %v3876, %v3525
      %v3878 = vsel %vm3877, %v3876, %v3525
      %vm3879 = vcmp.lt.s32.totalorder %v3878, %v3526
      %v3880 = vsel %vm3879, %v3878, %v3526
      %v3881 = vand.u32 %v3880, 65535
      %v3882 = vshra.s32 %v3880, 16
      %v3883 = vcvt.s32.f32 %v3881
      %v3884 = vcvt.s32.f32 %v3882
      %3885 = vmin.xlane.f32.xlu0 %v3884
      %v3886 = vpop.xlane.xlu0 %3885
      %vm3887 = vcmp.eq.f32.partialorder %v3884, %v3886
      %v3888 = vsel %vm3887, %v3883, inf
      %3889 = vmin.xlane.f32.xlu0 %v3888
      %v3890 = vpop.xlane.xlu0 %3889
      %v3891 = vcvt.f32.s32 %v3890
      %v3892 = vcvt.f32.s32 %v3886
      %v3893 = vshll.u32 %v3892, 16
      %v3894 = vadd.s32 %v3893, %v3891
      %vm3895 = vcmp.lt.s32.totalorder %v3527, %v3528
      %v3896 = vsel %vm3895, %v3527, %v3528
      %vm3897 = vcmp.lt.s32.totalorder %v3896, %v3529
      %v3898 = vsel %vm3897, %v3896, %v3529
      %vm3899 = vcmp.lt.s32.totalorder %v3898, %v3530
      %v3900 = vsel %vm3899, %v3898, %v3530
      %v3901 = vand.u32 %v3900, 65535
      %v3902 = vshra.s32 %v3900, 16
      %v3903 = vcvt.s32.f32 %v3901
      %v3904 = vcvt.s32.f32 %v3902
      %3905 = vmin.xlane.f32.xlu0 %v3904
      %v3906 = vpop.xlane.xlu0 %3905
      %vm3907 = vcmp.eq.f32.partialorder %v3904, %v3906
      %v3908 = vsel %vm3907, %v3903, inf
      %3909 = vmin.xlane.f32.xlu0 %v3908
      %v3910 = vpop.xlane.xlu0 %3909
      %v3911 = vcvt.f32.s32 %v3910
      %v3912 = vcvt.f32.s32 %v3906
      %v3913 = vshll.u32 %v3912, 16
      %v3914 = vadd.s32 %v3913, %v3911
      %vm3915 = vcmp.lt.s32.totalorder %v3531, %v3532
      %v3916 = vsel %vm3915, %v3531, %v3532
      %vm3917 = vcmp.lt.s32.totalorder %v3916, %v3533
      %v3918 = vsel %vm3917, %v3916, %v3533
      %vm3919 = vcmp.lt.s32.totalorder %v3918, %v3534
      %v3920 = vsel %vm3919, %v3918, %v3534
      %v3921 = vand.u32 %v3920, 65535
      %v3922 = vshra.s32 %v3920, 16
      %v3923 = vcvt.s32.f32 %v3921
      %v3924 = vcvt.s32.f32 %v3922
      %3925 = vmin.xlane.f32.xlu0 %v3924
      %v3926 = vpop.xlane.xlu0 %3925
      %vm3927 = vcmp.eq.f32.partialorder %v3924, %v3926
      %v3928 = vsel %vm3927, %v3923, inf
      %3929 = vmin.xlane.f32.xlu0 %v3928
      %v3930 = vpop.xlane.xlu0 %3929
      %v3931 = vcvt.f32.s32 %v3930
      %v3932 = vcvt.f32.s32 %v3926
      %v3933 = vshll.u32 %v3932, 16
      %v3934 = vadd.s32 %v3933, %v3931
      %vm3935 = vcmp.lt.s32.totalorder %v3535, %v3536
      %v3936 = vsel %vm3935, %v3535, %v3536
      %vm3937 = vcmp.lt.s32.totalorder %v3936, %v3537
      %v3938 = vsel %vm3937, %v3936, %v3537
      %vm3939 = vcmp.lt.s32.totalorder %v3938, %v3538
      %v3940 = vsel %vm3939, %v3938, %v3538
      %v3941 = vand.u32 %v3940, 65535
      %v3942 = vshra.s32 %v3940, 16
      %v3943 = vcvt.s32.f32 %v3941
      %v3944 = vcvt.s32.f32 %v3942
      %3945 = vmin.xlane.f32.xlu0 %v3944
      %v3946 = vpop.xlane.xlu0 %3945
      %vm3947 = vcmp.eq.f32.partialorder %v3944, %v3946
      %v3948 = vsel %vm3947, %v3943, inf
      %3949 = vmin.xlane.f32.xlu0 %v3948
      %v3950 = vpop.xlane.xlu0 %3949
      %v3951 = vcvt.f32.s32 %v3950
      %v3952 = vcvt.f32.s32 %v3946
      %v3953 = vshll.u32 %v3952, 16
      %v3954 = vadd.s32 %v3953, %v3951
      %vm3955 = vcmp.lt.s32.totalorder %v3539, %v3540
      %v3956 = vsel %vm3955, %v3539, %v3540
      %vm3957 = vcmp.lt.s32.totalorder %v3956, %v3541
      %v3958 = vsel %vm3957, %v3956, %v3541
      %vm3959 = vcmp.lt.s32.totalorder %v3958, %v3542
      %v3960 = vsel %vm3959, %v3958, %v3542
      %v3961 = vand.u32 %v3960, 65535
      %v3962 = vshra.s32 %v3960, 16
      %v3963 = vcvt.s32.f32 %v3961
      %v3964 = vcvt.s32.f32 %v3962
      %3965 = vmin.xlane.f32.xlu0 %v3964
      %v3966 = vpop.xlane.xlu0 %3965
      %vm3967 = vcmp.eq.f32.partialorder %v3964, %v3966
      %v3968 = vsel %vm3967, %v3963, inf
      %3969 = vmin.xlane.f32.xlu0 %v3968
      %v3970 = vpop.xlane.xlu0 %3969
      %v3971 = vcvt.f32.s32 %v3970
      %v3972 = vcvt.f32.s32 %v3966
      %v3973 = vshll.u32 %v3972, 16
      %v3974 = vadd.s32 %v3973, %v3971
      %vm3975 = vcmp.lt.s32.totalorder %v3543, %v3544
      %v3976 = vsel %vm3975, %v3543, %v3544
      %vm3977 = vcmp.lt.s32.totalorder %v3976, %v3545
      %v3978 = vsel %vm3977, %v3976, %v3545
      %vm3979 = vcmp.lt.s32.totalorder %v3978, %v3546
      %v3980 = vsel %vm3979, %v3978, %v3546
      %v3981 = vand.u32 %v3980, 65535
      %v3982 = vshra.s32 %v3980, 16
      %v3983 = vcvt.s32.f32 %v3981
      %v3984 = vcvt.s32.f32 %v3982
      %3985 = vmin.xlane.f32.xlu0 %v3984
      %v3986 = vpop.xlane.xlu0 %3985
      %vm3987 = vcmp.eq.f32.partialorder %v3984, %v3986
      %v3988 = vsel %vm3987, %v3983, inf
      %3989 = vmin.xlane.f32.xlu0 %v3988
      %v3990 = vpop.xlane.xlu0 %3989
      %v3991 = vcvt.f32.s32 %v3990
      %v3992 = vcvt.f32.s32 %v3986
      %v3993 = vshll.u32 %v3992, 16
      %v3994 = vadd.s32 %v3993, %v3991
      %vm3995 = vcmp.lt.s32.totalorder %v3547, %v3548
      %v3996 = vsel %vm3995, %v3547, %v3548
      %vm3997 = vcmp.lt.s32.totalorder %v3996, %v3549
      %v3998 = vsel %vm3997, %v3996, %v3549
      %vm3999 = vcmp.lt.s32.totalorder %v3998, %v3550
      %v4000 = vsel %vm3999, %v3998, %v3550
      %v4001 = vand.u32 %v4000, 65535
      %v4002 = vshra.s32 %v4000, 16
      %v4003 = vcvt.s32.f32 %v4001
      %v4004 = vcvt.s32.f32 %v4002
      %4005 = vmin.xlane.f32.xlu0 %v4004
      %v4006 = vpop.xlane.xlu0 %4005
      %vm4007 = vcmp.eq.f32.partialorder %v4004, %v4006
      %v4008 = vsel %vm4007, %v4003, inf
      %4009 = vmin.xlane.f32.xlu0 %v4008
      %v4010 = vpop.xlane.xlu0 %4009
      %v4011 = vcvt.f32.s32 %v4010
      %v4012 = vcvt.f32.s32 %v4006
      %v4013 = vshll.u32 %v4012, 16
      %v4014 = vadd.s32 %v4013, %v4011
      %vm4015 = vcmp.lt.s32.totalorder %v3551, %v3552
      %v4016 = vsel %vm4015, %v3551, %v3552
      %vm4017 = vcmp.lt.s32.totalorder %v4016, %v3553
      %v4018 = vsel %vm4017, %v4016, %v3553
      %vm4019 = vcmp.lt.s32.totalorder %v4018, %v3554
      %v4020 = vsel %vm4019, %v4018, %v3554
      %v4021 = vand.u32 %v4020, 65535
      %v4022 = vshra.s32 %v4020, 16
      %v4023 = vcvt.s32.f32 %v4021
      %v4024 = vcvt.s32.f32 %v4022
      %4025 = vmin.xlane.f32.xlu0 %v4024
      %v4026 = vpop.xlane.xlu0 %4025
      %vm4027 = vcmp.eq.f32.partialorder %v4024, %v4026
      %v4028 = vsel %vm4027, %v4023, inf
      %4029 = vmin.xlane.f32.xlu0 %v4028
      %v4030 = vpop.xlane.xlu0 %4029
      %v4031 = vcvt.f32.s32 %v4030
      %v4032 = vcvt.f32.s32 %v4026
      %v4033 = vshll.u32 %v4032, 16
      %v4034 = vadd.s32 %v4033, %v4031
      %vm4035 = vcmp.lt.s32.totalorder %v3555, %v3556
      %v4036 = vsel %vm4035, %v3555, %v3556
      %vm4037 = vcmp.lt.s32.totalorder %v4036, %v3557
      %v4038 = vsel %vm4037, %v4036, %v3557
      %vm4039 = vcmp.lt.s32.totalorder %v4038, %v3558
      %v4040 = vsel %vm4039, %v4038, %v3558
      %v4041 = vand.u32 %v4040, 65535
      %v4042 = vshra.s32 %v4040, 16
      %v4043 = vcvt.s32.f32 %v4041
      %v4044 = vcvt.s32.f32 %v4042
      %4045 = vmin.xlane.f32.xlu0 %v4044
      %v4046 = vpop.xlane.xlu0 %4045
      %vm4047 = vcmp.eq.f32.partialorder %v4044, %v4046
      %v4048 = vsel %vm4047, %v4043, inf
      %4049 = vmin.xlane.f32.xlu0 %v4048
      %v4050 = vpop.xlane.xlu0 %4049
      %v4051 = vcvt.f32.s32 %v4050
      %v4052 = vcvt.f32.s32 %v4046
      %v4053 = vshll.u32 %v4052, 16
      %v4054 = vadd.s32 %v4053, %v4051
      %vm4055 = vcmp.lt.s32.totalorder %v3559, %v3560
      %v4056 = vsel %vm4055, %v3559, %v3560
      %vm4057 = vcmp.lt.s32.totalorder %v4056, %v3561
      %v4058 = vsel %vm4057, %v4056, %v3561
      %vm4059 = vcmp.lt.s32.totalorder %v4058, %v3562
      %v4060 = vsel %vm4059, %v4058, %v3562
      %v4061 = vand.u32 %v4060, 65535
      %v4062 = vshra.s32 %v4060, 16
      %v4063 = vcvt.s32.f32 %v4061
      %v4064 = vcvt.s32.f32 %v4062
      %4065 = vmin.xlane.f32.xlu0 %v4064
      %v4066 = vpop.xlane.xlu0 %4065
      %vm4067 = vcmp.eq.f32.partialorder %v4064, %v4066
      %v4068 = vsel %vm4067, %v4063, inf
      %4069 = vmin.xlane.f32.xlu0 %v4068
      %v4070 = vpop.xlane.xlu0 %4069
      %v4071 = vcvt.f32.s32 %v4070
      %v4072 = vcvt.f32.s32 %v4066
      %v4073 = vshll.u32 %v4072, 16
      %v4074 = vadd.s32 %v4073, %v4071
      %vm4075 = vcmp.lt.s32.totalorder %v3563, %v3564
      %v4076 = vsel %vm4075, %v3563, %v3564
      %vm4077 = vcmp.lt.s32.totalorder %v4076, %v3565
      %v4078 = vsel %vm4077, %v4076, %v3565
      %vm4079 = vcmp.lt.s32.totalorder %v4078, %v3566
      %v4080 = vsel %vm4079, %v4078, %v3566
      %v4081 = vand.u32 %v4080, 65535
      %v4082 = vshra.s32 %v4080, 16
      %v4083 = vcvt.s32.f32 %v4081
      %v4084 = vcvt.s32.f32 %v4082
      %4085 = vmin.xlane.f32.xlu0 %v4084
      %v4086 = vpop.xlane.xlu0 %4085
      %vm4087 = vcmp.eq.f32.partialorder %v4084, %v4086
      %v4088 = vsel %vm4087, %v4083, inf
      %4089 = vmin.xlane.f32.xlu0 %v4088
      %v4090 = vpop.xlane.xlu0 %4089
      %v4091 = vcvt.f32.s32 %v4090
      %v4092 = vcvt.f32.s32 %v4086
      %v4093 = vshll.u32 %v4092, 16
      %v4094 = vadd.s32 %v4093, %v4091
      %vm4095 = vcmp.lt.s32.totalorder %v3567, %v3568
      %v4096 = vsel %vm4095, %v3567, %v3568
      %vm4097 = vcmp.lt.s32.totalorder %v4096, %v3569
      %v4098 = vsel %vm4097, %v4096, %v3569
      %vm4099 = vcmp.lt.s32.totalorder %v4098, %v3570
      %v4100 = vsel %vm4099, %v4098, %v3570
      %v4101 = vand.u32 %v4100, 65535
      %v4102 = vshra.s32 %v4100, 16
      %v4103 = vcvt.s32.f32 %v4101
      %v4104 = vcvt.s32.f32 %v4102
      %4105 = vmin.xlane.f32.xlu0 %v4104
      %v4106 = vpop.xlane.xlu0 %4105
      %vm4107 = vcmp.eq.f32.partialorder %v4104, %v4106
      %v4108 = vsel %vm4107, %v4103, inf
      %4109 = vmin.xlane.f32.xlu0 %v4108
      %v4110 = vpop.xlane.xlu0 %4109
      %v4111 = vcvt.f32.s32 %v4110
      %v4112 = vcvt.f32.s32 %v4106
      %v4113 = vshll.u32 %v4112, 16
      %v4114 = vadd.s32 %v4113, %v4111
      %vm4115 = vcmp.lt.s32.totalorder %v3571, %v3572
      %v4116 = vsel %vm4115, %v3571, %v3572
      %vm4117 = vcmp.lt.s32.totalorder %v4116, %v3573
      %v4118 = vsel %vm4117, %v4116, %v3573
      %vm4119 = vcmp.lt.s32.totalorder %v4118, %v3574
      %v4120 = vsel %vm4119, %v4118, %v3574
      %v4121 = vand.u32 %v4120, 65535
      %v4122 = vshra.s32 %v4120, 16
      %v4123 = vcvt.s32.f32 %v4121
      %v4124 = vcvt.s32.f32 %v4122
      %4125 = vmin.xlane.f32.xlu0 %v4124
      %v4126 = vpop.xlane.xlu0 %4125
      %vm4127 = vcmp.eq.f32.partialorder %v4124, %v4126
      %v4128 = vsel %vm4127, %v4123, inf
      %4129 = vmin.xlane.f32.xlu0 %v4128
      %v4130 = vpop.xlane.xlu0 %4129
      %v4131 = vcvt.f32.s32 %v4130
      %v4132 = vcvt.f32.s32 %v4126
      %v4133 = vshll.u32 %v4132, 16
      %v4134 = vadd.s32 %v4133, %v4131
      %vm4135 = vcmp.lt.s32.totalorder %v3575, %v3576
      %v4136 = vsel %vm4135, %v3575, %v3576
      %vm4137 = vcmp.lt.s32.totalorder %v4136, %v3577
      %v4138 = vsel %vm4137, %v4136, %v3577
      %vm4139 = vcmp.lt.s32.totalorder %v4138, %v3578
      %v4140 = vsel %vm4139, %v4138, %v3578
      %v4141 = vand.u32 %v4140, 65535
      %v4142 = vshra.s32 %v4140, 16
      %v4143 = vcvt.s32.f32 %v4141
      %v4144 = vcvt.s32.f32 %v4142
      %4145 = vmin.xlane.f32.xlu0 %v4144
      %v4146 = vpop.xlane.xlu0 %4145
      %vm4147 = vcmp.eq.f32.partialorder %v4144, %v4146
      %v4148 = vsel %vm4147, %v4143, inf
      %4149 = vmin.xlane.f32.xlu0 %v4148
      %v4150 = vpop.xlane.xlu0 %4149
      %v4151 = vcvt.f32.s32 %v4150
      %v4152 = vcvt.f32.s32 %v4146
      %v4153 = vshll.u32 %v4152, 16
      %v4154 = vadd.s32 %v4153, %v4151
      %vm4155 = vcmp.lt.s32.totalorder %v3579, %v3580
      %v4156 = vsel %vm4155, %v3579, %v3580
      %vm4157 = vcmp.lt.s32.totalorder %v4156, %v3581
      %v4158 = vsel %vm4157, %v4156, %v3581
      %vm4159 = vcmp.lt.s32.totalorder %v4158, %v3582
      %v4160 = vsel %vm4159, %v4158, %v3582
      %v4161 = vand.u32 %v4160, 65535
      %v4162 = vshra.s32 %v4160, 16
      %v4163 = vcvt.s32.f32 %v4161
      %v4164 = vcvt.s32.f32 %v4162
      %4165 = vmin.xlane.f32.xlu0 %v4164
      %v4166 = vpop.xlane.xlu0 %4165
      %vm4167 = vcmp.eq.f32.partialorder %v4164, %v4166
      %v4168 = vsel %vm4167, %v4163, inf
      %4169 = vmin.xlane.f32.xlu0 %v4168
      %v4170 = vpop.xlane.xlu0 %4169
      %v4171 = vcvt.f32.s32 %v4170
      %v4172 = vcvt.f32.s32 %v4166
      %v4173 = vshll.u32 %v4172, 16
      %v4174 = vadd.s32 %v4173, %v4171
      %vm4175 = vcmp.lt.s32.totalorder %v3583, %v3584
      %v4176 = vsel %vm4175, %v3583, %v3584
      %vm4177 = vcmp.lt.s32.totalorder %v4176, %v3585
      %v4178 = vsel %vm4177, %v4176, %v3585
      %vm4179 = vcmp.lt.s32.totalorder %v4178, %v3586
      %v4180 = vsel %vm4179, %v4178, %v3586
      %v4181 = vand.u32 %v4180, 65535
      %v4182 = vshra.s32 %v4180, 16
      %v4183 = vcvt.s32.f32 %v4181
      %v4184 = vcvt.s32.f32 %v4182
      %4185 = vmin.xlane.f32.xlu0 %v4184
      %v4186 = vpop.xlane.xlu0 %4185
      %vm4187 = vcmp.eq.f32.partialorder %v4184, %v4186
      %v4188 = vsel %vm4187, %v4183, inf
      %4189 = vmin.xlane.f32.xlu0 %v4188
      %v4190 = vpop.xlane.xlu0 %4189
      %v4191 = vcvt.f32.s32 %v4190
      %v4192 = vcvt.f32.s32 %v4186
      %v4193 = vshll.u32 %v4192, 16
      %v4194 = vadd.s32 %v4193, %v4191
      %vm4195 = vcmp.lt.s32.totalorder %v3587, %v3588
      %v4196 = vsel %vm4195, %v3587, %v3588
      %vm4197 = vcmp.lt.s32.totalorder %v4196, %v3589
      %v4198 = vsel %vm4197, %v4196, %v3589
      %vm4199 = vcmp.lt.s32.totalorder %v4198, %v3590
      %v4200 = vsel %vm4199, %v4198, %v3590
      %v4201 = vand.u32 %v4200, 65535
      %v4202 = vshra.s32 %v4200, 16
      %v4203 = vcvt.s32.f32 %v4201
      %v4204 = vcvt.s32.f32 %v4202
      %4205 = vmin.xlane.f32.xlu0 %v4204
      %v4206 = vpop.xlane.xlu0 %4205
      %vm4207 = vcmp.eq.f32.partialorder %v4204, %v4206
      %v4208 = vsel %vm4207, %v4203, inf
      %4209 = vmin.xlane.f32.xlu0 %v4208
      %v4210 = vpop.xlane.xlu0 %4209
      %v4211 = vcvt.f32.s32 %v4210
      %v4212 = vcvt.f32.s32 %v4206
      %v4213 = vshll.u32 %v4212, 16
      %v4214 = vadd.s32 %v4213, %v4211
      %vm4215 = vcmp.lt.s32.totalorder %v3591, %v3592
      %v4216 = vsel %vm4215, %v3591, %v3592
      %vm4217 = vcmp.lt.s32.totalorder %v4216, %v3593
      %v4218 = vsel %vm4217, %v4216, %v3593
      %vm4219 = vcmp.lt.s32.totalorder %v4218, %v3594
      %v4220 = vsel %vm4219, %v4218, %v3594
      %v4221 = vand.u32 %v4220, 65535
      %v4222 = vshra.s32 %v4220, 16
      %v4223 = vcvt.s32.f32 %v4221
      %v4224 = vcvt.s32.f32 %v4222
      %4225 = vmin.xlane.f32.xlu0 %v4224
      %v4226 = vpop.xlane.xlu0 %4225
      %vm4227 = vcmp.eq.f32.partialorder %v4224, %v4226
      %v4228 = vsel %vm4227, %v4223, inf
      %4229 = vmin.xlane.f32.xlu0 %v4228
      %v4230 = vpop.xlane.xlu0 %4229
      %v4231 = vcvt.f32.s32 %v4230
      %v4232 = vcvt.f32.s32 %v4226
      %v4233 = vshll.u32 %v4232, 16
      %v4234 = vadd.s32 %v4233, %v4231
      %v4235 = vadd.s32 %v3614, %v2890
      %v4236 = vadd.s32 %v3634, %v2890
      %v4237 = vadd.s32 %v3654, %v2890
      %v4238 = vadd.s32 %v3674, %v2890
      %v4239 = vadd.s32 %v3694, %v2890
      %v4240 = vadd.s32 %v3714, %v2890
      %v4241 = vadd.s32 %v3734, %v2890
      %v4242 = vadd.s32 %v3754, %v2890
      %v4243 = vadd.s32 %v3774, %v2890
      %v4244 = vadd.s32 %v3794, %v2890
      %v4245 = vadd.s32 %v3814, %v2890
      %v4246 = vadd.s32 %v3834, %v2890
      %v4247 = vadd.s32 %v3854, %v2890
      %v4248 = vadd.s32 %v3874, %v2890
      %v4249 = vadd.s32 %v3894, %v2890
      %v4250 = vadd.s32 %v3914, %v2890
      %v4251 = vadd.s32 %v3934, %v2890
      %v4252 = vadd.s32 %v3954, %v2890
      %v4253 = vadd.s32 %v3974, %v2890
      %v4254 = vadd.s32 %v3994, %v2890
      %v4255 = vadd.s32 %v4014, %v2890
      %v4256 = vadd.s32 %v4034, %v2890
      %v4257 = vadd.s32 %v4054, %v2890
      %v4258 = vadd.s32 %v4074, %v2890
      %v4259 = vadd.s32 %v4094, %v2890
      %v4260 = vadd.s32 %v4114, %v2890
      %v4261 = vadd.s32 %v4134, %v2890
      %v4262 = vadd.s32 %v4154, %v2890
      %v4263 = vadd.s32 %v4174, %v2890
      %v4264 = vadd.s32 %v4194, %v2890
      %v4265 = vadd.s32 %v4214, %v2890
      %v4266 = vadd.s32 %v4234, %v2890
      %vm4267 = vcmp.eq.s32.totalorder %v1106, %v3614
      %vm4268 = vcmp.eq.s32.totalorder %v1107, %v3614
      %vm4269 = vcmp.eq.s32.totalorder %v1108, %v3614
      %vm4270 = vcmp.eq.s32.totalorder %v1109, %v3614
      %vm4271 = vcmp.eq.s32.totalorder %v1106, %v3634
      %vm4272 = vcmp.eq.s32.totalorder %v1107, %v3634
      %vm4273 = vcmp.eq.s32.totalorder %v1108, %v3634
      %vm4274 = vcmp.eq.s32.totalorder %v1109, %v3634
      %vm4275 = vcmp.eq.s32.totalorder %v1106, %v3654
      %vm4276 = vcmp.eq.s32.totalorder %v1107, %v3654
      %vm4277 = vcmp.eq.s32.totalorder %v1108, %v3654
      %vm4278 = vcmp.eq.s32.totalorder %v1109, %v3654
      %vm4279 = vcmp.eq.s32.totalorder %v1106, %v3674
      %vm4280 = vcmp.eq.s32.totalorder %v1107, %v3674
      %vm4281 = vcmp.eq.s32.totalorder %v1108, %v3674
      %vm4282 = vcmp.eq.s32.totalorder %v1109, %v3674
      %vm4283 = vcmp.eq.s32.totalorder %v1106, %v3694
      %vm4284 = vcmp.eq.s32.totalorder %v1107, %v3694
      %vm4285 = vcmp.eq.s32.totalorder %v1108, %v3694
      %vm4286 = vcmp.eq.s32.totalorder %v1109, %v3694
      %vm4287 = vcmp.eq.s32.totalorder %v1106, %v3714
      %vm4288 = vcmp.eq.s32.totalorder %v1107, %v3714
      %vm4289 = vcmp.eq.s32.totalorder %v1108, %v3714
      %vm4290 = vcmp.eq.s32.totalorder %v1109, %v3714
      %vm4291 = vcmp.eq.s32.totalorder %v1106, %v3734
      %vm4292 = vcmp.eq.s32.totalorder %v1107, %v3734
      %vm4293 = vcmp.eq.s32.totalorder %v1108, %v3734
      %vm4294 = vcmp.eq.s32.totalorder %v1109, %v3734
      %vm4295 = vcmp.eq.s32.totalorder %v1106, %v3754
      %vm4296 = vcmp.eq.s32.totalorder %v1107, %v3754
      %vm4297 = vcmp.eq.s32.totalorder %v1108, %v3754
      %vm4298 = vcmp.eq.s32.totalorder %v1109, %v3754
      %vm4299 = vcmp.eq.s32.totalorder %v1106, %v3774
      %vm4300 = vcmp.eq.s32.totalorder %v1107, %v3774
      %vm4301 = vcmp.eq.s32.totalorder %v1108, %v3774
      %vm4302 = vcmp.eq.s32.totalorder %v1109, %v3774
      %vm4303 = vcmp.eq.s32.totalorder %v1106, %v3794
      %vm4304 = vcmp.eq.s32.totalorder %v1107, %v3794
      %vm4305 = vcmp.eq.s32.totalorder %v1108, %v3794
      %vm4306 = vcmp.eq.s32.totalorder %v1109, %v3794
      %vm4307 = vcmp.eq.s32.totalorder %v1106, %v3814
      %vm4308 = vcmp.eq.s32.totalorder %v1107, %v3814
      %vm4309 = vcmp.eq.s32.totalorder %v1108, %v3814
      %vm4310 = vcmp.eq.s32.totalorder %v1109, %v3814
      %vm4311 = vcmp.eq.s32.totalorder %v1106, %v3834
      %vm4312 = vcmp.eq.s32.totalorder %v1107, %v3834
      %vm4313 = vcmp.eq.s32.totalorder %v1108, %v3834
      %vm4314 = vcmp.eq.s32.totalorder %v1109, %v3834
      %vm4315 = vcmp.eq.s32.totalorder %v1106, %v3854
      %vm4316 = vcmp.eq.s32.totalorder %v1107, %v3854
      %vm4317 = vcmp.eq.s32.totalorder %v1108, %v3854
      %vm4318 = vcmp.eq.s32.totalorder %v1109, %v3854
      %vm4319 = vcmp.eq.s32.totalorder %v1106, %v3874
      %vm4320 = vcmp.eq.s32.totalorder %v1107, %v3874
      %vm4321 = vcmp.eq.s32.totalorder %v1108, %v3874
      %vm4322 = vcmp.eq.s32.totalorder %v1109, %v3874
      %vm4323 = vcmp.eq.s32.totalorder %v1106, %v3894
      %vm4324 = vcmp.eq.s32.totalorder %v1107, %v3894
      %vm4325 = vcmp.eq.s32.totalorder %v1108, %v3894
      %vm4326 = vcmp.eq.s32.totalorder %v1109, %v3894
      %vm4327 = vcmp.eq.s32.totalorder %v1106, %v3914
      %vm4328 = vcmp.eq.s32.totalorder %v1107, %v3914
      %vm4329 = vcmp.eq.s32.totalorder %v1108, %v3914
      %vm4330 = vcmp.eq.s32.totalorder %v1109, %v3914
      %vm4331 = vcmp.eq.s32.totalorder %v1106, %v3934
      %vm4332 = vcmp.eq.s32.totalorder %v1107, %v3934
      %vm4333 = vcmp.eq.s32.totalorder %v1108, %v3934
      %vm4334 = vcmp.eq.s32.totalorder %v1109, %v3934
      %vm4335 = vcmp.eq.s32.totalorder %v1106, %v3954
      %vm4336 = vcmp.eq.s32.totalorder %v1107, %v3954
      %vm4337 = vcmp.eq.s32.totalorder %v1108, %v3954
      %vm4338 = vcmp.eq.s32.totalorder %v1109, %v3954
      %vm4339 = vcmp.eq.s32.totalorder %v1106, %v3974
      %vm4340 = vcmp.eq.s32.totalorder %v1107, %v3974
      %vm4341 = vcmp.eq.s32.totalorder %v1108, %v3974
      %vm4342 = vcmp.eq.s32.totalorder %v1109, %v3974
      %vm4343 = vcmp.eq.s32.totalorder %v1106, %v3994
      %vm4344 = vcmp.eq.s32.totalorder %v1107, %v3994
      %vm4345 = vcmp.eq.s32.totalorder %v1108, %v3994
      %vm4346 = vcmp.eq.s32.totalorder %v1109, %v3994
      %vm4347 = vcmp.eq.s32.totalorder %v1106, %v4014
      %vm4348 = vcmp.eq.s32.totalorder %v1107, %v4014
      %vm4349 = vcmp.eq.s32.totalorder %v1108, %v4014
      %vm4350 = vcmp.eq.s32.totalorder %v1109, %v4014
      %vm4351 = vcmp.eq.s32.totalorder %v1106, %v4034
      %vm4352 = vcmp.eq.s32.totalorder %v1107, %v4034
      %vm4353 = vcmp.eq.s32.totalorder %v1108, %v4034
      %vm4354 = vcmp.eq.s32.totalorder %v1109, %v4034
      %vm4355 = vcmp.eq.s32.totalorder %v1106, %v4054
      %vm4356 = vcmp.eq.s32.totalorder %v1107, %v4054
      %vm4357 = vcmp.eq.s32.totalorder %v1108, %v4054
      %vm4358 = vcmp.eq.s32.totalorder %v1109, %v4054
      %vm4359 = vcmp.eq.s32.totalorder %v1106, %v4074
      %vm4360 = vcmp.eq.s32.totalorder %v1107, %v4074
      %vm4361 = vcmp.eq.s32.totalorder %v1108, %v4074
      %vm4362 = vcmp.eq.s32.totalorder %v1109, %v4074
      %vm4363 = vcmp.eq.s32.totalorder %v1106, %v4094
      %vm4364 = vcmp.eq.s32.totalorder %v1107, %v4094
      %vm4365 = vcmp.eq.s32.totalorder %v1108, %v4094
      %vm4366 = vcmp.eq.s32.totalorder %v1109, %v4094
      %vm4367 = vcmp.eq.s32.totalorder %v1106, %v4114
      %vm4368 = vcmp.eq.s32.totalorder %v1107, %v4114
      %vm4369 = vcmp.eq.s32.totalorder %v1108, %v4114
      %vm4370 = vcmp.eq.s32.totalorder %v1109, %v4114
      %vm4371 = vcmp.eq.s32.totalorder %v1106, %v4134
      %vm4372 = vcmp.eq.s32.totalorder %v1107, %v4134
      %vm4373 = vcmp.eq.s32.totalorder %v1108, %v4134
      %vm4374 = vcmp.eq.s32.totalorder %v1109, %v4134
      %vm4375 = vcmp.eq.s32.totalorder %v1106, %v4154
      %vm4376 = vcmp.eq.s32.totalorder %v1107, %v4154
      %vm4377 = vcmp.eq.s32.totalorder %v1108, %v4154
      %vm4378 = vcmp.eq.s32.totalorder %v1109, %v4154
      %vm4379 = vcmp.eq.s32.totalorder %v1106, %v4174
      %vm4380 = vcmp.eq.s32.totalorder %v1107, %v4174
      %vm4381 = vcmp.eq.s32.totalorder %v1108, %v4174
      %vm4382 = vcmp.eq.s32.totalorder %v1109, %v4174
      %vm4383 = vcmp.eq.s32.totalorder %v1106, %v4194
      %vm4384 = vcmp.eq.s32.totalorder %v1107, %v4194
      %vm4385 = vcmp.eq.s32.totalorder %v1108, %v4194
      %vm4386 = vcmp.eq.s32.totalorder %v1109, %v4194
      %vm4387 = vcmp.eq.s32.totalorder %v1106, %v4214
      %vm4388 = vcmp.eq.s32.totalorder %v1107, %v4214
      %vm4389 = vcmp.eq.s32.totalorder %v1108, %v4214
      %vm4390 = vcmp.eq.s32.totalorder %v1109, %v4214
      %vm4391 = vcmp.eq.s32.totalorder %v1106, %v4234
      %vm4392 = vcmp.eq.s32.totalorder %v1107, %v4234
      %vm4393 = vcmp.eq.s32.totalorder %v1108, %v4234
      %vm4394 = vcmp.eq.s32.totalorder %v1109, %v4234
      %v4395 = vsel %vm4267, -inf, %v3051
      %v4396 = vsel %vm4268, -inf, %v3052
      %v4397 = vsel %vm4269, -inf, %v3053
      %v4398 = vsel %vm4270, -inf, %v3054
      %v4399 = vsel %vm4271, -inf, %v3055
      %v4400 = vsel %vm4272, -inf, %v3056
      %v4401 = vsel %vm4273, -inf, %v3057
      %v4402 = vsel %vm4274, -inf, %v3058
      %v4403 = vsel %vm4275, -inf, %v3059
      %v4404 = vsel %vm4276, -inf, %v3060
      %v4405 = vsel %vm4277, -inf, %v3061
      %v4406 = vsel %vm4278, -inf, %v3062
      %v4407 = vsel %vm4279, -inf, %v3063
      %v4408 = vsel %vm4280, -inf, %v3064
      %v4409 = vsel %vm4281, -inf, %v3065
      %v4410 = vsel %vm4282, -inf, %v3066
      %v4411 = vsel %vm4283, -inf, %v3067
      %v4412 = vsel %vm4284, -inf, %v3068
      %v4413 = vsel %vm4285, -inf, %v3069
      %v4414 = vsel %vm4286, -inf, %v3070
      %v4415 = vsel %vm4287, -inf, %v3071
      %v4416 = vsel %vm4288, -inf, %v3072
      %v4417 = vsel %vm4289, -inf, %v3073
      %v4418 = vsel %vm4290, -inf, %v3074
      %v4419 = vsel %vm4291, -inf, %v3075
      %v4420 = vsel %vm4292, -inf, %v3076
      %v4421 = vsel %vm4293, -inf, %v3077
      %v4422 = vsel %vm4294, -inf, %v3078
      %v4423 = vsel %vm4295, -inf, %v3079
      %v4424 = vsel %vm4296, -inf, %v3080
      %v4425 = vsel %vm4297, -inf, %v3081
      %v4426 = vsel %vm4298, -inf, %v3082
      %v4427 = vsel %vm4299, -inf, %v3083
      %v4428 = vsel %vm4300, -inf, %v3084
      %v4429 = vsel %vm4301, -inf, %v3085
      %v4430 = vsel %vm4302, -inf, %v3086
      %v4431 = vsel %vm4303, -inf, %v3087
      %v4432 = vsel %vm4304, -inf, %v3088
      %v4433 = vsel %vm4305, -inf, %v3089
      %v4434 = vsel %vm4306, -inf, %v3090
      %v4435 = vsel %vm4307, -inf, %v3091
      %v4436 = vsel %vm4308, -inf, %v3092
      %v4437 = vsel %vm4309, -inf, %v3093
      %v4438 = vsel %vm4310, -inf, %v3094
      %v4439 = vsel %vm4311, -inf, %v3095
      %v4440 = vsel %vm4312, -inf, %v3096
      %v4441 = vsel %vm4313, -inf, %v3097
      %v4442 = vsel %vm4314, -inf, %v3098
      %v4443 = vsel %vm4315, -inf, %v3099
      %v4444 = vsel %vm4316, -inf, %v3100
      %v4445 = vsel %vm4317, -inf, %v3101
      %v4446 = vsel %vm4318, -inf, %v3102
      %v4447 = vsel %vm4319, -inf, %v3103
      %v4448 = vsel %vm4320, -inf, %v3104
      %v4449 = vsel %vm4321, -inf, %v3105
      %v4450 = vsel %vm4322, -inf, %v3106
      %v4451 = vsel %vm4323, -inf, %v3107
      %v4452 = vsel %vm4324, -inf, %v3108
      %v4453 = vsel %vm4325, -inf, %v3109
      %v4454 = vsel %vm4326, -inf, %v3110
      %v4455 = vsel %vm4327, -inf, %v3111
      %v4456 = vsel %vm4328, -inf, %v3112
      %v4457 = vsel %vm4329, -inf, %v3113
      %v4458 = vsel %vm4330, -inf, %v3114
      %v4459 = vsel %vm4331, -inf, %v3115
      %v4460 = vsel %vm4332, -inf, %v3116
      %v4461 = vsel %vm4333, -inf, %v3117
      %v4462 = vsel %vm4334, -inf, %v3118
      %v4463 = vsel %vm4335, -inf, %v3119
      %v4464 = vsel %vm4336, -inf, %v3120
      %v4465 = vsel %vm4337, -inf, %v3121
      %v4466 = vsel %vm4338, -inf, %v3122
      %v4467 = vsel %vm4339, -inf, %v3123
      %v4468 = vsel %vm4340, -inf, %v3124
      %v4469 = vsel %vm4341, -inf, %v3125
      %v4470 = vsel %vm4342, -inf, %v3126
      %v4471 = vsel %vm4343, -inf, %v3127
      %v4472 = vsel %vm4344, -inf, %v3128
      %v4473 = vsel %vm4345, -inf, %v3129
      %v4474 = vsel %vm4346, -inf, %v3130
      %v4475 = vsel %vm4347, -inf, %v3131
      %v4476 = vsel %vm4348, -inf, %v3132
      %v4477 = vsel %vm4349, -inf, %v3133
      %v4478 = vsel %vm4350, -inf, %v3134
      %v4479 = vsel %vm4351, -inf, %v3135
      %v4480 = vsel %vm4352, -inf, %v3136
      %v4481 = vsel %vm4353, -inf, %v3137
      %v4482 = vsel %vm4354, -inf, %v3138
      %v4483 = vsel %vm4355, -inf, %v3139
      %v4484 = vsel %vm4356, -inf, %v3140
      %v4485 = vsel %vm4357, -inf, %v3141
      %v4486 = vsel %vm4358, -inf, %v3142
      %v4487 = vsel %vm4359, -inf, %v3143
      %v4488 = vsel %vm4360, -inf, %v3144
      %v4489 = vsel %vm4361, -inf, %v3145
      %v4490 = vsel %vm4362, -inf, %v3146
      %v4491 = vsel %vm4363, -inf, %v3147
      %v4492 = vsel %vm4364, -inf, %v3148
      %v4493 = vsel %vm4365, -inf, %v3149
      %v4494 = vsel %vm4366, -inf, %v3150
      %v4495 = vsel %vm4367, -inf, %v3151
      %v4496 = vsel %vm4368, -inf, %v3152
      %v4497 = vsel %vm4369, -inf, %v3153
      %v4498 = vsel %vm4370, -inf, %v3154
      %v4499 = vsel %vm4371, -inf, %v3155
      %v4500 = vsel %vm4372, -inf, %v3156
      %v4501 = vsel %vm4373, -inf, %v3157
      %v4502 = vsel %vm4374, -inf, %v3158
      %v4503 = vsel %vm4375, -inf, %v3159
      %v4504 = vsel %vm4376, -inf, %v3160
      %v4505 = vsel %vm4377, -inf, %v3161
      %v4506 = vsel %vm4378, -inf, %v3162
      %v4507 = vsel %vm4379, -inf, %v3163
      %v4508 = vsel %vm4380, -inf, %v3164
      %v4509 = vsel %vm4381, -inf, %v3165
      %v4510 = vsel %vm4382, -inf, %v3166
      %v4511 = vsel %vm4383, -inf, %v3167
      %v4512 = vsel %vm4384, -inf, %v3168
      %v4513 = vsel %vm4385, -inf, %v3169
      %v4514 = vsel %vm4386, -inf, %v3170
      %v4515 = vsel %vm4387, -inf, %v3171
      %v4516 = vsel %vm4388, -inf, %v3172
      %v4517 = vsel %vm4389, -inf, %v3173
      %v4518 = vsel %vm4390, -inf, %v3174
      %v4519 = vsel %vm4391, -inf, %v3175
      %v4520 = vsel %vm4392, -inf, %v3176
      %v4521 = vsel %vm4393, -inf, %v3177
      %v4522 = vsel %vm4394, -inf, %v3178
      %v4523 = vmax.f32 %v4395, %v4396
      %v4524 = vmax.f32 %v4523, %v4397
      %v4525 = vmax.f32 %v4524, %v4398
      %4526 = vmax.xlane.f32.xlu0 %v4525
      %v4527 = vpop.xlane.xlu0 %4526
      %v4528 = vmax.f32 %v4399, %v4400
      %v4529 = vmax.f32 %v4528, %v4401
      %v4530 = vmax.f32 %v4529, %v4402
      %4531 = vmax.xlane.f32.xlu0 %v4530
      %v4532 = vpop.xlane.xlu0 %4531
      %v4533 = vmax.f32 %v4403, %v4404
      %v4534 = vmax.f32 %v4533, %v4405
      %v4535 = vmax.f32 %v4534, %v4406
      %4536 = vmax.xlane.f32.xlu0 %v4535
      %v4537 = vpop.xlane.xlu0 %4536
      %v4538 = vmax.f32 %v4407, %v4408
      %v4539 = vmax.f32 %v4538, %v4409
      %v4540 = vmax.f32 %v4539, %v4410
      %4541 = vmax.xlane.f32.xlu0 %v4540
      %v4542 = vpop.xlane.xlu0 %4541
      %v4543 = vmax.f32 %v4411, %v4412
      %v4544 = vmax.f32 %v4543, %v4413
      %v4545 = vmax.f32 %v4544, %v4414
      %4546 = vmax.xlane.f32.xlu0 %v4545
      %v4547 = vpop.xlane.xlu0 %4546
      %v4548 = vmax.f32 %v4415, %v4416
      %v4549 = vmax.f32 %v4548, %v4417
      %v4550 = vmax.f32 %v4549, %v4418
      %4551 = vmax.xlane.f32.xlu0 %v4550
      %v4552 = vpop.xlane.xlu0 %4551
      %v4553 = vmax.f32 %v4419, %v4420
      %v4554 = vmax.f32 %v4553, %v4421
      %v4555 = vmax.f32 %v4554, %v4422
      %4556 = vmax.xlane.f32.xlu0 %v4555
      %v4557 = vpop.xlane.xlu0 %4556
      %v4558 = vmax.f32 %v4423, %v4424
      %v4559 = vmax.f32 %v4558, %v4425
      %v4560 = vmax.f32 %v4559, %v4426
      %4561 = vmax.xlane.f32.xlu0 %v4560
      %v4562 = vpop.xlane.xlu0 %4561
      %v4563 = vmax.f32 %v4427, %v4428
      %v4564 = vmax.f32 %v4563, %v4429
      %v4565 = vmax.f32 %v4564, %v4430
      %4566 = vmax.xlane.f32.xlu0 %v4565
      %v4567 = vpop.xlane.xlu0 %4566
      %v4568 = vmax.f32 %v4431, %v4432
      %v4569 = vmax.f32 %v4568, %v4433
      %v4570 = vmax.f32 %v4569, %v4434
      %4571 = vmax.xlane.f32.xlu0 %v4570
      %v4572 = vpop.xlane.xlu0 %4571
      %v4573 = vmax.f32 %v4435, %v4436
      %v4574 = vmax.f32 %v4573, %v4437
      %v4575 = vmax.f32 %v4574, %v4438
      %4576 = vmax.xlane.f32.xlu0 %v4575
      %v4577 = vpop.xlane.xlu0 %4576
      %v4578 = vmax.f32 %v4439, %v4440
      %v4579 = vmax.f32 %v4578, %v4441
      %v4580 = vmax.f32 %v4579, %v4442
      %4581 = vmax.xlane.f32.xlu0 %v4580
      %v4582 = vpop.xlane.xlu0 %4581
      %v4583 = vmax.f32 %v4443, %v4444
      %v4584 = vmax.f32 %v4583, %v4445
      %v4585 = vmax.f32 %v4584, %v4446
      %4586 = vmax.xlane.f32.xlu0 %v4585
      %v4587 = vpop.xlane.xlu0 %4586
      %v4588 = vmax.f32 %v4447, %v4448
      %v4589 = vmax.f32 %v4588, %v4449
      %v4590 = vmax.f32 %v4589, %v4450
      %4591 = vmax.xlane.f32.xlu0 %v4590
      %v4592 = vpop.xlane.xlu0 %4591
      %v4593 = vmax.f32 %v4451, %v4452
      %v4594 = vmax.f32 %v4593, %v4453
      %v4595 = vmax.f32 %v4594, %v4454
      %4596 = vmax.xlane.f32.xlu0 %v4595
      %v4597 = vpop.xlane.xlu0 %4596
      %v4598 = vmax.f32 %v4455, %v4456
      %v4599 = vmax.f32 %v4598, %v4457
      %v4600 = vmax.f32 %v4599, %v4458
      %4601 = vmax.xlane.f32.xlu0 %v4600
      %v4602 = vpop.xlane.xlu0 %4601
      %v4603 = vmax.f32 %v4459, %v4460
      %v4604 = vmax.f32 %v4603, %v4461
      %v4605 = vmax.f32 %v4604, %v4462
      %4606 = vmax.xlane.f32.xlu0 %v4605
      %v4607 = vpop.xlane.xlu0 %4606
      %v4608 = vmax.f32 %v4463, %v4464
      %v4609 = vmax.f32 %v4608, %v4465
      %v4610 = vmax.f32 %v4609, %v4466
      %4611 = vmax.xlane.f32.xlu0 %v4610
      %v4612 = vpop.xlane.xlu0 %4611
      %v4613 = vmax.f32 %v4467, %v4468
      %v4614 = vmax.f32 %v4613, %v4469
      %v4615 = vmax.f32 %v4614, %v4470
      %4616 = vmax.xlane.f32.xlu0 %v4615
      %v4617 = vpop.xlane.xlu0 %4616
      %v4618 = vmax.f32 %v4471, %v4472
      %v4619 = vmax.f32 %v4618, %v4473
      %v4620 = vmax.f32 %v4619, %v4474
      %4621 = vmax.xlane.f32.xlu0 %v4620
      %v4622 = vpop.xlane.xlu0 %4621
      %v4623 = vmax.f32 %v4475, %v4476
      %v4624 = vmax.f32 %v4623, %v4477
      %v4625 = vmax.f32 %v4624, %v4478
      %4626 = vmax.xlane.f32.xlu0 %v4625
      %v4627 = vpop.xlane.xlu0 %4626
      %v4628 = vmax.f32 %v4479, %v4480
      %v4629 = vmax.f32 %v4628, %v4481
      %v4630 = vmax.f32 %v4629, %v4482
      %4631 = vmax.xlane.f32.xlu0 %v4630
      %v4632 = vpop.xlane.xlu0 %4631
      %v4633 = vmax.f32 %v4483, %v4484
      %v4634 = vmax.f32 %v4633, %v4485
      %v4635 = vmax.f32 %v4634, %v4486
      %4636 = vmax.xlane.f32.xlu0 %v4635
      %v4637 = vpop.xlane.xlu0 %4636
      %v4638 = vmax.f32 %v4487, %v4488
      %v4639 = vmax.f32 %v4638, %v4489
      %v4640 = vmax.f32 %v4639, %v4490
      %4641 = vmax.xlane.f32.xlu0 %v4640
      %v4642 = vpop.xlane.xlu0 %4641
      %v4643 = vmax.f32 %v4491, %v4492
      %v4644 = vmax.f32 %v4643, %v4493
      %v4645 = vmax.f32 %v4644, %v4494
      %4646 = vmax.xlane.f32.xlu0 %v4645
      %v4647 = vpop.xlane.xlu0 %4646
      %v4648 = vmax.f32 %v4495, %v4496
      %v4649 = vmax.f32 %v4648, %v4497
      %v4650 = vmax.f32 %v4649, %v4498
      %4651 = vmax.xlane.f32.xlu0 %v4650
      %v4652 = vpop.xlane.xlu0 %4651
      %v4653 = vmax.f32 %v4499, %v4500
      %v4654 = vmax.f32 %v4653, %v4501
      %v4655 = vmax.f32 %v4654, %v4502
      %4656 = vmax.xlane.f32.xlu0 %v4655
      %v4657 = vpop.xlane.xlu0 %4656
      %v4658 = vmax.f32 %v4503, %v4504
      %v4659 = vmax.f32 %v4658, %v4505
      %v4660 = vmax.f32 %v4659, %v4506
      %4661 = vmax.xlane.f32.xlu0 %v4660
      %v4662 = vpop.xlane.xlu0 %4661
      %v4663 = vmax.f32 %v4507, %v4508
      %v4664 = vmax.f32 %v4663, %v4509
      %v4665 = vmax.f32 %v4664, %v4510
      %4666 = vmax.xlane.f32.xlu0 %v4665
      %v4667 = vpop.xlane.xlu0 %4666
      %v4668 = vmax.f32 %v4511, %v4512
      %v4669 = vmax.f32 %v4668, %v4513
      %v4670 = vmax.f32 %v4669, %v4514
      %4671 = vmax.xlane.f32.xlu0 %v4670
      %v4672 = vpop.xlane.xlu0 %4671
      %v4673 = vmax.f32 %v4515, %v4516
      %v4674 = vmax.f32 %v4673, %v4517
      %v4675 = vmax.f32 %v4674, %v4518
      %4676 = vmax.xlane.f32.xlu0 %v4675
      %v4677 = vpop.xlane.xlu0 %4676
      %v4678 = vmax.f32 %v4519, %v4520
      %v4679 = vmax.f32 %v4678, %v4521
      %v4680 = vmax.f32 %v4679, %v4522
      %4681 = vmax.xlane.f32.xlu0 %v4680
      %v4682 = vpop.xlane.xlu0 %4681
      %vm4683 = vcmp.ge.f32.partialorder %v4395, %v4527
      %vm4684 = vcmp.ge.f32.partialorder %v4396, %v4527
      %vm4685 = vcmp.ge.f32.partialorder %v4397, %v4527
      %vm4686 = vcmp.ge.f32.partialorder %v4398, %v4527
      %vm4687 = vcmp.ge.f32.partialorder %v4399, %v4532
      %vm4688 = vcmp.ge.f32.partialorder %v4400, %v4532
      %vm4689 = vcmp.ge.f32.partialorder %v4401, %v4532
      %vm4690 = vcmp.ge.f32.partialorder %v4402, %v4532
      %vm4691 = vcmp.ge.f32.partialorder %v4403, %v4537
      %vm4692 = vcmp.ge.f32.partialorder %v4404, %v4537
      %vm4693 = vcmp.ge.f32.partialorder %v4405, %v4537
      %vm4694 = vcmp.ge.f32.partialorder %v4406, %v4537
      %vm4695 = vcmp.ge.f32.partialorder %v4407, %v4542
      %vm4696 = vcmp.ge.f32.partialorder %v4408, %v4542
      %vm4697 = vcmp.ge.f32.partialorder %v4409, %v4542
      %vm4698 = vcmp.ge.f32.partialorder %v4410, %v4542
      %vm4699 = vcmp.ge.f32.partialorder %v4411, %v4547
      %vm4700 = vcmp.ge.f32.partialorder %v4412, %v4547
      %vm4701 = vcmp.ge.f32.partialorder %v4413, %v4547
      %vm4702 = vcmp.ge.f32.partialorder %v4414, %v4547
      %vm4703 = vcmp.ge.f32.partialorder %v4415, %v4552
      %vm4704 = vcmp.ge.f32.partialorder %v4416, %v4552
      %vm4705 = vcmp.ge.f32.partialorder %v4417, %v4552
      %vm4706 = vcmp.ge.f32.partialorder %v4418, %v4552
      %vm4707 = vcmp.ge.f32.partialorder %v4419, %v4557
      %vm4708 = vcmp.ge.f32.partialorder %v4420, %v4557
      %vm4709 = vcmp.ge.f32.partialorder %v4421, %v4557
      %vm4710 = vcmp.ge.f32.partialorder %v4422, %v4557
      %vm4711 = vcmp.ge.f32.partialorder %v4423, %v4562
      %vm4712 = vcmp.ge.f32.partialorder %v4424, %v4562
      %vm4713 = vcmp.ge.f32.partialorder %v4425, %v4562
      %vm4714 = vcmp.ge.f32.partialorder %v4426, %v4562
      %vm4715 = vcmp.ge.f32.partialorder %v4427, %v4567
      %vm4716 = vcmp.ge.f32.partialorder %v4428, %v4567
      %vm4717 = vcmp.ge.f32.partialorder %v4429, %v4567
      %vm4718 = vcmp.ge.f32.partialorder %v4430, %v4567
      %vm4719 = vcmp.ge.f32.partialorder %v4431, %v4572
      %vm4720 = vcmp.ge.f32.partialorder %v4432, %v4572
      %vm4721 = vcmp.ge.f32.partialorder %v4433, %v4572
      %vm4722 = vcmp.ge.f32.partialorder %v4434, %v4572
      %vm4723 = vcmp.ge.f32.partialorder %v4435, %v4577
      %vm4724 = vcmp.ge.f32.partialorder %v4436, %v4577
      %vm4725 = vcmp.ge.f32.partialorder %v4437, %v4577
      %vm4726 = vcmp.ge.f32.partialorder %v4438, %v4577
      %vm4727 = vcmp.ge.f32.partialorder %v4439, %v4582
      %vm4728 = vcmp.ge.f32.partialorder %v4440, %v4582
      %vm4729 = vcmp.ge.f32.partialorder %v4441, %v4582
      %vm4730 = vcmp.ge.f32.partialorder %v4442, %v4582
      %vm4731 = vcmp.ge.f32.partialorder %v4443, %v4587
      %vm4732 = vcmp.ge.f32.partialorder %v4444, %v4587
      %vm4733 = vcmp.ge.f32.partialorder %v4445, %v4587
      %vm4734 = vcmp.ge.f32.partialorder %v4446, %v4587
      %vm4735 = vcmp.ge.f32.partialorder %v4447, %v4592
      %vm4736 = vcmp.ge.f32.partialorder %v4448, %v4592
      %vm4737 = vcmp.ge.f32.partialorder %v4449, %v4592
      %vm4738 = vcmp.ge.f32.partialorder %v4450, %v4592
      %vm4739 = vcmp.ge.f32.partialorder %v4451, %v4597
      %vm4740 = vcmp.ge.f32.partialorder %v4452, %v4597
      %vm4741 = vcmp.ge.f32.partialorder %v4453, %v4597
      %vm4742 = vcmp.ge.f32.partialorder %v4454, %v4597
      %vm4743 = vcmp.ge.f32.partialorder %v4455, %v4602
      %vm4744 = vcmp.ge.f32.partialorder %v4456, %v4602
      %vm4745 = vcmp.ge.f32.partialorder %v4457, %v4602
      %vm4746 = vcmp.ge.f32.partialorder %v4458, %v4602
      %vm4747 = vcmp.ge.f32.partialorder %v4459, %v4607
      %vm4748 = vcmp.ge.f32.partialorder %v4460, %v4607
      %vm4749 = vcmp.ge.f32.partialorder %v4461, %v4607
      %vm4750 = vcmp.ge.f32.partialorder %v4462, %v4607
      %vm4751 = vcmp.ge.f32.partialorder %v4463, %v4612
      %vm4752 = vcmp.ge.f32.partialorder %v4464, %v4612
      %vm4753 = vcmp.ge.f32.partialorder %v4465, %v4612
      %vm4754 = vcmp.ge.f32.partialorder %v4466, %v4612
      %vm4755 = vcmp.ge.f32.partialorder %v4467, %v4617
      %vm4756 = vcmp.ge.f32.partialorder %v4468, %v4617
      %vm4757 = vcmp.ge.f32.partialorder %v4469, %v4617
      %vm4758 = vcmp.ge.f32.partialorder %v4470, %v4617
      %vm4759 = vcmp.ge.f32.partialorder %v4471, %v4622
      %vm4760 = vcmp.ge.f32.partialorder %v4472, %v4622
      %vm4761 = vcmp.ge.f32.partialorder %v4473, %v4622
      %vm4762 = vcmp.ge.f32.partialorder %v4474, %v4622
      %vm4763 = vcmp.ge.f32.partialorder %v4475, %v4627
      %vm4764 = vcmp.ge.f32.partialorder %v4476, %v4627
      %vm4765 = vcmp.ge.f32.partialorder %v4477, %v4627
      %vm4766 = vcmp.ge.f32.partialorder %v4478, %v4627
      %vm4767 = vcmp.ge.f32.partialorder %v4479, %v4632
      %vm4768 = vcmp.ge.f32.partialorder %v4480, %v4632
      %vm4769 = vcmp.ge.f32.partialorder %v4481, %v4632
      %vm4770 = vcmp.ge.f32.partialorder %v4482, %v4632
      %vm4771 = vcmp.ge.f32.partialorder %v4483, %v4637
      %vm4772 = vcmp.ge.f32.partialorder %v4484, %v4637
      %vm4773 = vcmp.ge.f32.partialorder %v4485, %v4637
      %vm4774 = vcmp.ge.f32.partialorder %v4486, %v4637
      %vm4775 = vcmp.ge.f32.partialorder %v4487, %v4642
      %vm4776 = vcmp.ge.f32.partialorder %v4488, %v4642
      %vm4777 = vcmp.ge.f32.partialorder %v4489, %v4642
      %vm4778 = vcmp.ge.f32.partialorder %v4490, %v4642
      %vm4779 = vcmp.ge.f32.partialorder %v4491, %v4647
      %vm4780 = vcmp.ge.f32.partialorder %v4492, %v4647
      %vm4781 = vcmp.ge.f32.partialorder %v4493, %v4647
      %vm4782 = vcmp.ge.f32.partialorder %v4494, %v4647
      %vm4783 = vcmp.ge.f32.partialorder %v4495, %v4652
      %vm4784 = vcmp.ge.f32.partialorder %v4496, %v4652
      %vm4785 = vcmp.ge.f32.partialorder %v4497, %v4652
      %vm4786 = vcmp.ge.f32.partialorder %v4498, %v4652
      %vm4787 = vcmp.ge.f32.partialorder %v4499, %v4657
      %vm4788 = vcmp.ge.f32.partialorder %v4500, %v4657
      %vm4789 = vcmp.ge.f32.partialorder %v4501, %v4657
      %vm4790 = vcmp.ge.f32.partialorder %v4502, %v4657
      %vm4791 = vcmp.ge.f32.partialorder %v4503, %v4662
      %vm4792 = vcmp.ge.f32.partialorder %v4504, %v4662
      %vm4793 = vcmp.ge.f32.partialorder %v4505, %v4662
      %vm4794 = vcmp.ge.f32.partialorder %v4506, %v4662
      %vm4795 = vcmp.ge.f32.partialorder %v4507, %v4667
      %vm4796 = vcmp.ge.f32.partialorder %v4508, %v4667
      %vm4797 = vcmp.ge.f32.partialorder %v4509, %v4667
      %vm4798 = vcmp.ge.f32.partialorder %v4510, %v4667
      %vm4799 = vcmp.ge.f32.partialorder %v4511, %v4672
      %vm4800 = vcmp.ge.f32.partialorder %v4512, %v4672
      %vm4801 = vcmp.ge.f32.partialorder %v4513, %v4672
      %vm4802 = vcmp.ge.f32.partialorder %v4514, %v4672
      %vm4803 = vcmp.ge.f32.partialorder %v4515, %v4677
      %vm4804 = vcmp.ge.f32.partialorder %v4516, %v4677
      %vm4805 = vcmp.ge.f32.partialorder %v4517, %v4677
      %vm4806 = vcmp.ge.f32.partialorder %v4518, %v4677
      %vm4807 = vcmp.ge.f32.partialorder %v4519, %v4682
      %vm4808 = vcmp.ge.f32.partialorder %v4520, %v4682
      %vm4809 = vcmp.ge.f32.partialorder %v4521, %v4682
      %vm4810 = vcmp.ge.f32.partialorder %v4522, %v4682
      %v4811 = vsel %vm4683, %v1106, 512
      %v4812 = vsel %vm4684, %v1107, 512
      %v4813 = vsel %vm4685, %v1108, 512
      %v4814 = vsel %vm4686, %v1109, 512
      %v4815 = vsel %vm4687, %v1106, 512
      %v4816 = vsel %vm4688, %v1107, 512
      %v4817 = vsel %vm4689, %v1108, 512
      %v4818 = vsel %vm4690, %v1109, 512
      %v4819 = vsel %vm4691, %v1106, 512
      %v4820 = vsel %vm4692, %v1107, 512
      %v4821 = vsel %vm4693, %v1108, 512
      %v4822 = vsel %vm4694, %v1109, 512
      %v4823 = vsel %vm4695, %v1106, 512
      %v4824 = vsel %vm4696, %v1107, 512
      %v4825 = vsel %vm4697, %v1108, 512
      %v4826 = vsel %vm4698, %v1109, 512
      %v4827 = vsel %vm4699, %v1106, 512
      %v4828 = vsel %vm4700, %v1107, 512
      %v4829 = vsel %vm4701, %v1108, 512
      %v4830 = vsel %vm4702, %v1109, 512
      %v4831 = vsel %vm4703, %v1106, 512
      %v4832 = vsel %vm4704, %v1107, 512
      %v4833 = vsel %vm4705, %v1108, 512
      %v4834 = vsel %vm4706, %v1109, 512
      %v4835 = vsel %vm4707, %v1106, 512
      %v4836 = vsel %vm4708, %v1107, 512
      %v4837 = vsel %vm4709, %v1108, 512
      %v4838 = vsel %vm4710, %v1109, 512
      %v4839 = vsel %vm4711, %v1106, 512
      %v4840 = vsel %vm4712, %v1107, 512
      %v4841 = vsel %vm4713, %v1108, 512
      %v4842 = vsel %vm4714, %v1109, 512
      %v4843 = vsel %vm4715, %v1106, 512
      %v4844 = vsel %vm4716, %v1107, 512
      %v4845 = vsel %vm4717, %v1108, 512
      %v4846 = vsel %vm4718, %v1109, 512
      %v4847 = vsel %vm4719, %v1106, 512
      %v4848 = vsel %vm4720, %v1107, 512
      %v4849 = vsel %vm4721, %v1108, 512
      %v4850 = vsel %vm4722, %v1109, 512
      %v4851 = vsel %vm4723, %v1106, 512
      %v4852 = vsel %vm4724, %v1107, 512
      %v4853 = vsel %vm4725, %v1108, 512
      %v4854 = vsel %vm4726, %v1109, 512
      %v4855 = vsel %vm4727, %v1106, 512
      %v4856 = vsel %vm4728, %v1107, 512
      %v4857 = vsel %vm4729, %v1108, 512
      %v4858 = vsel %vm4730, %v1109, 512
      %v4859 = vsel %vm4731, %v1106, 512
      %v4860 = vsel %vm4732, %v1107, 512
      %v4861 = vsel %vm4733, %v1108, 512
      %v4862 = vsel %vm4734, %v1109, 512
      %v4863 = vsel %vm4735, %v1106, 512
      %v4864 = vsel %vm4736, %v1107, 512
      %v4865 = vsel %vm4737, %v1108, 512
      %v4866 = vsel %vm4738, %v1109, 512
      %v4867 = vsel %vm4739, %v1106, 512
      %v4868 = vsel %vm4740, %v1107, 512
      %v4869 = vsel %vm4741, %v1108, 512
      %v4870 = vsel %vm4742, %v1109, 512
      %v4871 = vsel %vm4743, %v1106, 512
      %v4872 = vsel %vm4744, %v1107, 512
      %v4873 = vsel %vm4745, %v1108, 512
      %v4874 = vsel %vm4746, %v1109, 512
      %v4875 = vsel %vm4747, %v1106, 512
      %v4876 = vsel %vm4748, %v1107, 512
      %v4877 = vsel %vm4749, %v1108, 512
      %v4878 = vsel %vm4750, %v1109, 512
      %v4879 = vsel %vm4751, %v1106, 512
      %v4880 = vsel %vm4752, %v1107, 512
      %v4881 = vsel %vm4753, %v1108, 512
      %v4882 = vsel %vm4754, %v1109, 512
      %v4883 = vsel %vm4755, %v1106, 512
      %v4884 = vsel %vm4756, %v1107, 512
      %v4885 = vsel %vm4757, %v1108, 512
      %v4886 = vsel %vm4758, %v1109, 512
      %v4887 = vsel %vm4759, %v1106, 512
      %v4888 = vsel %vm4760, %v1107, 512
      %v4889 = vsel %vm4761, %v1108, 512
      %v4890 = vsel %vm4762, %v1109, 512
      %v4891 = vsel %vm4763, %v1106, 512
      %v4892 = vsel %vm4764, %v1107, 512
      %v4893 = vsel %vm4765, %v1108, 512
      %v4894 = vsel %vm4766, %v1109, 512
      %v4895 = vsel %vm4767, %v1106, 512
      %v4896 = vsel %vm4768, %v1107, 512
      %v4897 = vsel %vm4769, %v1108, 512
      %v4898 = vsel %vm4770, %v1109, 512
      %v4899 = vsel %vm4771, %v1106, 512
      %v4900 = vsel %vm4772, %v1107, 512
      %v4901 = vsel %vm4773, %v1108, 512
      %v4902 = vsel %vm4774, %v1109, 512
      %v4903 = vsel %vm4775, %v1106, 512
      %v4904 = vsel %vm4776, %v1107, 512
      %v4905 = vsel %vm4777, %v1108, 512
      %v4906 = vsel %vm4778, %v1109, 512
      %v4907 = vsel %vm4779, %v1106, 512
      %v4908 = vsel %vm4780, %v1107, 512
      %v4909 = vsel %vm4781, %v1108, 512
      %v4910 = vsel %vm4782, %v1109, 512
      %v4911 = vsel %vm4783, %v1106, 512
      %v4912 = vsel %vm4784, %v1107, 512
      %v4913 = vsel %vm4785, %v1108, 512
      %v4914 = vsel %vm4786, %v1109, 512
      %v4915 = vsel %vm4787, %v1106, 512
      %v4916 = vsel %vm4788, %v1107, 512
      %v4917 = vsel %vm4789, %v1108, 512
      %v4918 = vsel %vm4790, %v1109, 512
      %v4919 = vsel %vm4791, %v1106, 512
      %v4920 = vsel %vm4792, %v1107, 512
      %v4921 = vsel %vm4793, %v1108, 512
      %v4922 = vsel %vm4794, %v1109, 512
      %v4923 = vsel %vm4795, %v1106, 512
      %v4924 = vsel %vm4796, %v1107, 512
      %v4925 = vsel %vm4797, %v1108, 512
      %v4926 = vsel %vm4798, %v1109, 512
      %v4927 = vsel %vm4799, %v1106, 512
      %v4928 = vsel %vm4800, %v1107, 512
      %v4929 = vsel %vm4801, %v1108, 512
      %v4930 = vsel %vm4802, %v1109, 512
      %v4931 = vsel %vm4803, %v1106, 512
      %v4932 = vsel %vm4804, %v1107, 512
      %v4933 = vsel %vm4805, %v1108, 512
      %v4934 = vsel %vm4806, %v1109, 512
      %v4935 = vsel %vm4807, %v1106, 512
      %v4936 = vsel %vm4808, %v1107, 512
      %v4937 = vsel %vm4809, %v1108, 512
      %v4938 = vsel %vm4810, %v1109, 512
      %vm4939 = vcmp.lt.s32.totalorder %v4811, %v4812
      %v4940 = vsel %vm4939, %v4811, %v4812
      %vm4941 = vcmp.lt.s32.totalorder %v4940, %v4813
      %v4942 = vsel %vm4941, %v4940, %v4813
      %vm4943 = vcmp.lt.s32.totalorder %v4942, %v4814
      %v4944 = vsel %vm4943, %v4942, %v4814
      %v4945 = vand.u32 %v4944, 65535
      %v4946 = vshra.s32 %v4944, 16
      %v4947 = vcvt.s32.f32 %v4945
      %v4948 = vcvt.s32.f32 %v4946
      %4949 = vmin.xlane.f32.xlu0 %v4948
      %v4950 = vpop.xlane.xlu0 %4949
      %vm4951 = vcmp.eq.f32.partialorder %v4948, %v4950
      %v4952 = vsel %vm4951, %v4947, inf
      %4953 = vmin.xlane.f32.xlu0 %v4952
      %v4954 = vpop.xlane.xlu0 %4953
      %v4955 = vcvt.f32.s32 %v4954
      %v4956 = vcvt.f32.s32 %v4950
      %v4957 = vshll.u32 %v4956, 16
      %v4958 = vadd.s32 %v4957, %v4955
      %vm4959 = vcmp.lt.s32.totalorder %v4815, %v4816
      %v4960 = vsel %vm4959, %v4815, %v4816
      %vm4961 = vcmp.lt.s32.totalorder %v4960, %v4817
      %v4962 = vsel %vm4961, %v4960, %v4817
      %vm4963 = vcmp.lt.s32.totalorder %v4962, %v4818
      %v4964 = vsel %vm4963, %v4962, %v4818
      %v4965 = vand.u32 %v4964, 65535
      %v4966 = vshra.s32 %v4964, 16
      %v4967 = vcvt.s32.f32 %v4965
      %v4968 = vcvt.s32.f32 %v4966
      %4969 = vmin.xlane.f32.xlu0 %v4968
      %v4970 = vpop.xlane.xlu0 %4969
      %vm4971 = vcmp.eq.f32.partialorder %v4968, %v4970
      %v4972 = vsel %vm4971, %v4967, inf
      %4973 = vmin.xlane.f32.xlu0 %v4972
      %v4974 = vpop.xlane.xlu0 %4973
      %v4975 = vcvt.f32.s32 %v4974
      %v4976 = vcvt.f32.s32 %v4970
      %v4977 = vshll.u32 %v4976, 16
      %v4978 = vadd.s32 %v4977, %v4975
      %vm4979 = vcmp.lt.s32.totalorder %v4819, %v4820
      %v4980 = vsel %vm4979, %v4819, %v4820
      %vm4981 = vcmp.lt.s32.totalorder %v4980, %v4821
      %v4982 = vsel %vm4981, %v4980, %v4821
      %vm4983 = vcmp.lt.s32.totalorder %v4982, %v4822
      %v4984 = vsel %vm4983, %v4982, %v4822
      %v4985 = vand.u32 %v4984, 65535
      %v4986 = vshra.s32 %v4984, 16
      %v4987 = vcvt.s32.f32 %v4985
      %v4988 = vcvt.s32.f32 %v4986
      %4989 = vmin.xlane.f32.xlu0 %v4988
      %v4990 = vpop.xlane.xlu0 %4989
      %vm4991 = vcmp.eq.f32.partialorder %v4988, %v4990
      %v4992 = vsel %vm4991, %v4987, inf
      %4993 = vmin.xlane.f32.xlu0 %v4992
      %v4994 = vpop.xlane.xlu0 %4993
      %v4995 = vcvt.f32.s32 %v4994
      %v4996 = vcvt.f32.s32 %v4990
      %v4997 = vshll.u32 %v4996, 16
      %v4998 = vadd.s32 %v4997, %v4995
      %vm4999 = vcmp.lt.s32.totalorder %v4823, %v4824
      %v5000 = vsel %vm4999, %v4823, %v4824
      %vm5001 = vcmp.lt.s32.totalorder %v5000, %v4825
      %v5002 = vsel %vm5001, %v5000, %v4825
      %vm5003 = vcmp.lt.s32.totalorder %v5002, %v4826
      %v5004 = vsel %vm5003, %v5002, %v4826
      %v5005 = vand.u32 %v5004, 65535
      %v5006 = vshra.s32 %v5004, 16
      %v5007 = vcvt.s32.f32 %v5005
      %v5008 = vcvt.s32.f32 %v5006
      %5009 = vmin.xlane.f32.xlu0 %v5008
      %v5010 = vpop.xlane.xlu0 %5009
      %vm5011 = vcmp.eq.f32.partialorder %v5008, %v5010
      %v5012 = vsel %vm5011, %v5007, inf
      %5013 = vmin.xlane.f32.xlu0 %v5012
      %v5014 = vpop.xlane.xlu0 %5013
      %v5015 = vcvt.f32.s32 %v5014
      %v5016 = vcvt.f32.s32 %v5010
      %v5017 = vshll.u32 %v5016, 16
      %v5018 = vadd.s32 %v5017, %v5015
      %vm5019 = vcmp.lt.s32.totalorder %v4827, %v4828
      %v5020 = vsel %vm5019, %v4827, %v4828
      %vm5021 = vcmp.lt.s32.totalorder %v5020, %v4829
      %v5022 = vsel %vm5021, %v5020, %v4829
      %vm5023 = vcmp.lt.s32.totalorder %v5022, %v4830
      %v5024 = vsel %vm5023, %v5022, %v4830
      %v5025 = vand.u32 %v5024, 65535
      %v5026 = vshra.s32 %v5024, 16
      %v5027 = vcvt.s32.f32 %v5025
      %v5028 = vcvt.s32.f32 %v5026
      %5029 = vmin.xlane.f32.xlu0 %v5028
      %v5030 = vpop.xlane.xlu0 %5029
      %vm5031 = vcmp.eq.f32.partialorder %v5028, %v5030
      %v5032 = vsel %vm5031, %v5027, inf
      %5033 = vmin.xlane.f32.xlu0 %v5032
      %v5034 = vpop.xlane.xlu0 %5033
      %v5035 = vcvt.f32.s32 %v5034
      %v5036 = vcvt.f32.s32 %v5030
      %v5037 = vshll.u32 %v5036, 16
      %v5038 = vadd.s32 %v5037, %v5035
      %vm5039 = vcmp.lt.s32.totalorder %v4831, %v4832
      %v5040 = vsel %vm5039, %v4831, %v4832
      %vm5041 = vcmp.lt.s32.totalorder %v5040, %v4833
      %v5042 = vsel %vm5041, %v5040, %v4833
      %vm5043 = vcmp.lt.s32.totalorder %v5042, %v4834
      %v5044 = vsel %vm5043, %v5042, %v4834
      %v5045 = vand.u32 %v5044, 65535
      %v5046 = vshra.s32 %v5044, 16
      %v5047 = vcvt.s32.f32 %v5045
      %v5048 = vcvt.s32.f32 %v5046
      %5049 = vmin.xlane.f32.xlu0 %v5048
      %v5050 = vpop.xlane.xlu0 %5049
      %vm5051 = vcmp.eq.f32.partialorder %v5048, %v5050
      %v5052 = vsel %vm5051, %v5047, inf
      %5053 = vmin.xlane.f32.xlu0 %v5052
      %v5054 = vpop.xlane.xlu0 %5053
      %v5055 = vcvt.f32.s32 %v5054
      %v5056 = vcvt.f32.s32 %v5050
      %v5057 = vshll.u32 %v5056, 16
      %v5058 = vadd.s32 %v5057, %v5055
      %vm5059 = vcmp.lt.s32.totalorder %v4835, %v4836
      %v5060 = vsel %vm5059, %v4835, %v4836
      %vm5061 = vcmp.lt.s32.totalorder %v5060, %v4837
      %v5062 = vsel %vm5061, %v5060, %v4837
      %vm5063 = vcmp.lt.s32.totalorder %v5062, %v4838
      %v5064 = vsel %vm5063, %v5062, %v4838
      %v5065 = vand.u32 %v5064, 65535
      %v5066 = vshra.s32 %v5064, 16
      %v5067 = vcvt.s32.f32 %v5065
      %v5068 = vcvt.s32.f32 %v5066
      %5069 = vmin.xlane.f32.xlu0 %v5068
      %v5070 = vpop.xlane.xlu0 %5069
      %vm5071 = vcmp.eq.f32.partialorder %v5068, %v5070
      %v5072 = vsel %vm5071, %v5067, inf
      %5073 = vmin.xlane.f32.xlu0 %v5072
      %v5074 = vpop.xlane.xlu0 %5073
      %v5075 = vcvt.f32.s32 %v5074
      %v5076 = vcvt.f32.s32 %v5070
      %v5077 = vshll.u32 %v5076, 16
      %v5078 = vadd.s32 %v5077, %v5075
      %vm5079 = vcmp.lt.s32.totalorder %v4839, %v4840
      %v5080 = vsel %vm5079, %v4839, %v4840
      %vm5081 = vcmp.lt.s32.totalorder %v5080, %v4841
      %v5082 = vsel %vm5081, %v5080, %v4841
      %vm5083 = vcmp.lt.s32.totalorder %v5082, %v4842
      %v5084 = vsel %vm5083, %v5082, %v4842
      %v5085 = vand.u32 %v5084, 65535
      %v5086 = vshra.s32 %v5084, 16
      %v5087 = vcvt.s32.f32 %v5085
      %v5088 = vcvt.s32.f32 %v5086
      %5089 = vmin.xlane.f32.xlu0 %v5088
      %v5090 = vpop.xlane.xlu0 %5089
      %vm5091 = vcmp.eq.f32.partialorder %v5088, %v5090
      %v5092 = vsel %vm5091, %v5087, inf
      %5093 = vmin.xlane.f32.xlu0 %v5092
      %v5094 = vpop.xlane.xlu0 %5093
      %v5095 = vcvt.f32.s32 %v5094
      %v5096 = vcvt.f32.s32 %v5090
      %v5097 = vshll.u32 %v5096, 16
      %v5098 = vadd.s32 %v5097, %v5095
      %vm5099 = vcmp.lt.s32.totalorder %v4843, %v4844
      %v5100 = vsel %vm5099, %v4843, %v4844
      %vm5101 = vcmp.lt.s32.totalorder %v5100, %v4845
      %v5102 = vsel %vm5101, %v5100, %v4845
      %vm5103 = vcmp.lt.s32.totalorder %v5102, %v4846
      %v5104 = vsel %vm5103, %v5102, %v4846
      %v5105 = vand.u32 %v5104, 65535
      %v5106 = vshra.s32 %v5104, 16
      %v5107 = vcvt.s32.f32 %v5105
      %v5108 = vcvt.s32.f32 %v5106
      %5109 = vmin.xlane.f32.xlu0 %v5108
      %v5110 = vpop.xlane.xlu0 %5109
      %vm5111 = vcmp.eq.f32.partialorder %v5108, %v5110
      %v5112 = vsel %vm5111, %v5107, inf
      %5113 = vmin.xlane.f32.xlu0 %v5112
      %v5114 = vpop.xlane.xlu0 %5113
      %v5115 = vcvt.f32.s32 %v5114
      %v5116 = vcvt.f32.s32 %v5110
      %v5117 = vshll.u32 %v5116, 16
      %v5118 = vadd.s32 %v5117, %v5115
      %vm5119 = vcmp.lt.s32.totalorder %v4847, %v4848
      %v5120 = vsel %vm5119, %v4847, %v4848
      %vm5121 = vcmp.lt.s32.totalorder %v5120, %v4849
      %v5122 = vsel %vm5121, %v5120, %v4849
      %vm5123 = vcmp.lt.s32.totalorder %v5122, %v4850
      %v5124 = vsel %vm5123, %v5122, %v4850
      %v5125 = vand.u32 %v5124, 65535
      %v5126 = vshra.s32 %v5124, 16
      %v5127 = vcvt.s32.f32 %v5125
      %v5128 = vcvt.s32.f32 %v5126
      %5129 = vmin.xlane.f32.xlu0 %v5128
      %v5130 = vpop.xlane.xlu0 %5129
      %vm5131 = vcmp.eq.f32.partialorder %v5128, %v5130
      %v5132 = vsel %vm5131, %v5127, inf
      %5133 = vmin.xlane.f32.xlu0 %v5132
      %v5134 = vpop.xlane.xlu0 %5133
      %v5135 = vcvt.f32.s32 %v5134
      %v5136 = vcvt.f32.s32 %v5130
      %v5137 = vshll.u32 %v5136, 16
      %v5138 = vadd.s32 %v5137, %v5135
      %vm5139 = vcmp.lt.s32.totalorder %v4851, %v4852
      %v5140 = vsel %vm5139, %v4851, %v4852
      %vm5141 = vcmp.lt.s32.totalorder %v5140, %v4853
      %v5142 = vsel %vm5141, %v5140, %v4853
      %vm5143 = vcmp.lt.s32.totalorder %v5142, %v4854
      %v5144 = vsel %vm5143, %v5142, %v4854
      %v5145 = vand.u32 %v5144, 65535
      %v5146 = vshra.s32 %v5144, 16
      %v5147 = vcvt.s32.f32 %v5145
      %v5148 = vcvt.s32.f32 %v5146
      %5149 = vmin.xlane.f32.xlu0 %v5148
      %v5150 = vpop.xlane.xlu0 %5149
      %vm5151 = vcmp.eq.f32.partialorder %v5148, %v5150
      %v5152 = vsel %vm5151, %v5147, inf
      %5153 = vmin.xlane.f32.xlu0 %v5152
      %v5154 = vpop.xlane.xlu0 %5153
      %v5155 = vcvt.f32.s32 %v5154
      %v5156 = vcvt.f32.s32 %v5150
      %v5157 = vshll.u32 %v5156, 16
      %v5158 = vadd.s32 %v5157, %v5155
      %vm5159 = vcmp.lt.s32.totalorder %v4855, %v4856
      %v5160 = vsel %vm5159, %v4855, %v4856
      %vm5161 = vcmp.lt.s32.totalorder %v5160, %v4857
      %v5162 = vsel %vm5161, %v5160, %v4857
      %vm5163 = vcmp.lt.s32.totalorder %v5162, %v4858
      %v5164 = vsel %vm5163, %v5162, %v4858
      %v5165 = vand.u32 %v5164, 65535
      %v5166 = vshra.s32 %v5164, 16
      %v5167 = vcvt.s32.f32 %v5165
      %v5168 = vcvt.s32.f32 %v5166
      %5169 = vmin.xlane.f32.xlu0 %v5168
      %v5170 = vpop.xlane.xlu0 %5169
      %vm5171 = vcmp.eq.f32.partialorder %v5168, %v5170
      %v5172 = vsel %vm5171, %v5167, inf
      %5173 = vmin.xlane.f32.xlu0 %v5172
      %v5174 = vpop.xlane.xlu0 %5173
      %v5175 = vcvt.f32.s32 %v5174
      %v5176 = vcvt.f32.s32 %v5170
      %v5177 = vshll.u32 %v5176, 16
      %v5178 = vadd.s32 %v5177, %v5175
      %vm5179 = vcmp.lt.s32.totalorder %v4859, %v4860
      %v5180 = vsel %vm5179, %v4859, %v4860
      %vm5181 = vcmp.lt.s32.totalorder %v5180, %v4861
      %v5182 = vsel %vm5181, %v5180, %v4861
      %vm5183 = vcmp.lt.s32.totalorder %v5182, %v4862
      %v5184 = vsel %vm5183, %v5182, %v4862
      %v5185 = vand.u32 %v5184, 65535
      %v5186 = vshra.s32 %v5184, 16
      %v5187 = vcvt.s32.f32 %v5185
      %v5188 = vcvt.s32.f32 %v5186
      %5189 = vmin.xlane.f32.xlu0 %v5188
      %v5190 = vpop.xlane.xlu0 %5189
      %vm5191 = vcmp.eq.f32.partialorder %v5188, %v5190
      %v5192 = vsel %vm5191, %v5187, inf
      %5193 = vmin.xlane.f32.xlu0 %v5192
      %v5194 = vpop.xlane.xlu0 %5193
      %v5195 = vcvt.f32.s32 %v5194
      %v5196 = vcvt.f32.s32 %v5190
      %v5197 = vshll.u32 %v5196, 16
      %v5198 = vadd.s32 %v5197, %v5195
      %vm5199 = vcmp.lt.s32.totalorder %v4863, %v4864
      %v5200 = vsel %vm5199, %v4863, %v4864
      %vm5201 = vcmp.lt.s32.totalorder %v5200, %v4865
      %v5202 = vsel %vm5201, %v5200, %v4865
      %vm5203 = vcmp.lt.s32.totalorder %v5202, %v4866
      %v5204 = vsel %vm5203, %v5202, %v4866
      %v5205 = vand.u32 %v5204, 65535
      %v5206 = vshra.s32 %v5204, 16
      %v5207 = vcvt.s32.f32 %v5205
      %v5208 = vcvt.s32.f32 %v5206
      %5209 = vmin.xlane.f32.xlu0 %v5208
      %v5210 = vpop.xlane.xlu0 %5209
      %vm5211 = vcmp.eq.f32.partialorder %v5208, %v5210
      %v5212 = vsel %vm5211, %v5207, inf
      %5213 = vmin.xlane.f32.xlu0 %v5212
      %v5214 = vpop.xlane.xlu0 %5213
      %v5215 = vcvt.f32.s32 %v5214
      %v5216 = vcvt.f32.s32 %v5210
      %v5217 = vshll.u32 %v5216, 16
      %v5218 = vadd.s32 %v5217, %v5215
      %vm5219 = vcmp.lt.s32.totalorder %v4867, %v4868
      %v5220 = vsel %vm5219, %v4867, %v4868
      %vm5221 = vcmp.lt.s32.totalorder %v5220, %v4869
      %v5222 = vsel %vm5221, %v5220, %v4869
      %vm5223 = vcmp.lt.s32.totalorder %v5222, %v4870
      %v5224 = vsel %vm5223, %v5222, %v4870
      %v5225 = vand.u32 %v5224, 65535
      %v5226 = vshra.s32 %v5224, 16
      %v5227 = vcvt.s32.f32 %v5225
      %v5228 = vcvt.s32.f32 %v5226
      %5229 = vmin.xlane.f32.xlu0 %v5228
      %v5230 = vpop.xlane.xlu0 %5229
      %vm5231 = vcmp.eq.f32.partialorder %v5228, %v5230
      %v5232 = vsel %vm5231, %v5227, inf
      %5233 = vmin.xlane.f32.xlu0 %v5232
      %v5234 = vpop.xlane.xlu0 %5233
      %v5235 = vcvt.f32.s32 %v5234
      %v5236 = vcvt.f32.s32 %v5230
      %v5237 = vshll.u32 %v5236, 16
      %v5238 = vadd.s32 %v5237, %v5235
      %vm5239 = vcmp.lt.s32.totalorder %v4871, %v4872
      %v5240 = vsel %vm5239, %v4871, %v4872
      %vm5241 = vcmp.lt.s32.totalorder %v5240, %v4873
      %v5242 = vsel %vm5241, %v5240, %v4873
      %vm5243 = vcmp.lt.s32.totalorder %v5242, %v4874
      %v5244 = vsel %vm5243, %v5242, %v4874
      %v5245 = vand.u32 %v5244, 65535
      %v5246 = vshra.s32 %v5244, 16
      %v5247 = vcvt.s32.f32 %v5245
      %v5248 = vcvt.s32.f32 %v5246
      %5249 = vmin.xlane.f32.xlu0 %v5248
      %v5250 = vpop.xlane.xlu0 %5249
      %vm5251 = vcmp.eq.f32.partialorder %v5248, %v5250
      %v5252 = vsel %vm5251, %v5247, inf
      %5253 = vmin.xlane.f32.xlu0 %v5252
      %v5254 = vpop.xlane.xlu0 %5253
      %v5255 = vcvt.f32.s32 %v5254
      %v5256 = vcvt.f32.s32 %v5250
      %v5257 = vshll.u32 %v5256, 16
      %v5258 = vadd.s32 %v5257, %v5255
      %vm5259 = vcmp.lt.s32.totalorder %v4875, %v4876
      %v5260 = vsel %vm5259, %v4875, %v4876
      %vm5261 = vcmp.lt.s32.totalorder %v5260, %v4877
      %v5262 = vsel %vm5261, %v5260, %v4877
      %vm5263 = vcmp.lt.s32.totalorder %v5262, %v4878
      %v5264 = vsel %vm5263, %v5262, %v4878
      %v5265 = vand.u32 %v5264, 65535
      %v5266 = vshra.s32 %v5264, 16
      %v5267 = vcvt.s32.f32 %v5265
      %v5268 = vcvt.s32.f32 %v5266
      %5269 = vmin.xlane.f32.xlu0 %v5268
      %v5270 = vpop.xlane.xlu0 %5269
      %vm5271 = vcmp.eq.f32.partialorder %v5268, %v5270
      %v5272 = vsel %vm5271, %v5267, inf
      %5273 = vmin.xlane.f32.xlu0 %v5272
      %v5274 = vpop.xlane.xlu0 %5273
      %v5275 = vcvt.f32.s32 %v5274
      %v5276 = vcvt.f32.s32 %v5270
      %v5277 = vshll.u32 %v5276, 16
      %v5278 = vadd.s32 %v5277, %v5275
      %vm5279 = vcmp.lt.s32.totalorder %v4879, %v4880
      %v5280 = vsel %vm5279, %v4879, %v4880
      %vm5281 = vcmp.lt.s32.totalorder %v5280, %v4881
      %v5282 = vsel %vm5281, %v5280, %v4881
      %vm5283 = vcmp.lt.s32.totalorder %v5282, %v4882
      %v5284 = vsel %vm5283, %v5282, %v4882
      %v5285 = vand.u32 %v5284, 65535
      %v5286 = vshra.s32 %v5284, 16
      %v5287 = vcvt.s32.f32 %v5285
      %v5288 = vcvt.s32.f32 %v5286
      %5289 = vmin.xlane.f32.xlu0 %v5288
      %v5290 = vpop.xlane.xlu0 %5289
      %vm5291 = vcmp.eq.f32.partialorder %v5288, %v5290
      %v5292 = vsel %vm5291, %v5287, inf
      %5293 = vmin.xlane.f32.xlu0 %v5292
      %v5294 = vpop.xlane.xlu0 %5293
      %v5295 = vcvt.f32.s32 %v5294
      %v5296 = vcvt.f32.s32 %v5290
      %v5297 = vshll.u32 %v5296, 16
      %v5298 = vadd.s32 %v5297, %v5295
      %vm5299 = vcmp.lt.s32.totalorder %v4883, %v4884
      %v5300 = vsel %vm5299, %v4883, %v4884
      %vm5301 = vcmp.lt.s32.totalorder %v5300, %v4885
      %v5302 = vsel %vm5301, %v5300, %v4885
      %vm5303 = vcmp.lt.s32.totalorder %v5302, %v4886
      %v5304 = vsel %vm5303, %v5302, %v4886
      %v5305 = vand.u32 %v5304, 65535
      %v5306 = vshra.s32 %v5304, 16
      %v5307 = vcvt.s32.f32 %v5305
      %v5308 = vcvt.s32.f32 %v5306
      %5309 = vmin.xlane.f32.xlu0 %v5308
      %v5310 = vpop.xlane.xlu0 %5309
      %vm5311 = vcmp.eq.f32.partialorder %v5308, %v5310
      %v5312 = vsel %vm5311, %v5307, inf
      %5313 = vmin.xlane.f32.xlu0 %v5312
      %v5314 = vpop.xlane.xlu0 %5313
      %v5315 = vcvt.f32.s32 %v5314
      %v5316 = vcvt.f32.s32 %v5310
      %v5317 = vshll.u32 %v5316, 16
      %v5318 = vadd.s32 %v5317, %v5315
      %vm5319 = vcmp.lt.s32.totalorder %v4887, %v4888
      %v5320 = vsel %vm5319, %v4887, %v4888
      %vm5321 = vcmp.lt.s32.totalorder %v5320, %v4889
      %v5322 = vsel %vm5321, %v5320, %v4889
      %vm5323 = vcmp.lt.s32.totalorder %v5322, %v4890
      %v5324 = vsel %vm5323, %v5322, %v4890
      %v5325 = vand.u32 %v5324, 65535
      %v5326 = vshra.s32 %v5324, 16
      %v5327 = vcvt.s32.f32 %v5325
      %v5328 = vcvt.s32.f32 %v5326
      %5329 = vmin.xlane.f32.xlu0 %v5328
      %v5330 = vpop.xlane.xlu0 %5329
      %vm5331 = vcmp.eq.f32.partialorder %v5328, %v5330
      %v5332 = vsel %vm5331, %v5327, inf
      %5333 = vmin.xlane.f32.xlu0 %v5332
      %v5334 = vpop.xlane.xlu0 %5333
      %v5335 = vcvt.f32.s32 %v5334
      %v5336 = vcvt.f32.s32 %v5330
      %v5337 = vshll.u32 %v5336, 16
      %v5338 = vadd.s32 %v5337, %v5335
      %vm5339 = vcmp.lt.s32.totalorder %v4891, %v4892
      %v5340 = vsel %vm5339, %v4891, %v4892
      %vm5341 = vcmp.lt.s32.totalorder %v5340, %v4893
      %v5342 = vsel %vm5341, %v5340, %v4893
      %vm5343 = vcmp.lt.s32.totalorder %v5342, %v4894
      %v5344 = vsel %vm5343, %v5342, %v4894
      %v5345 = vand.u32 %v5344, 65535
      %v5346 = vshra.s32 %v5344, 16
      %v5347 = vcvt.s32.f32 %v5345
      %v5348 = vcvt.s32.f32 %v5346
      %5349 = vmin.xlane.f32.xlu0 %v5348
      %v5350 = vpop.xlane.xlu0 %5349
      %vm5351 = vcmp.eq.f32.partialorder %v5348, %v5350
      %v5352 = vsel %vm5351, %v5347, inf
      %5353 = vmin.xlane.f32.xlu0 %v5352
      %v5354 = vpop.xlane.xlu0 %5353
      %v5355 = vcvt.f32.s32 %v5354
      %v5356 = vcvt.f32.s32 %v5350
      %v5357 = vshll.u32 %v5356, 16
      %v5358 = vadd.s32 %v5357, %v5355
      %vm5359 = vcmp.lt.s32.totalorder %v4895, %v4896
      %v5360 = vsel %vm5359, %v4895, %v4896
      %vm5361 = vcmp.lt.s32.totalorder %v5360, %v4897
      %v5362 = vsel %vm5361, %v5360, %v4897
      %vm5363 = vcmp.lt.s32.totalorder %v5362, %v4898
      %v5364 = vsel %vm5363, %v5362, %v4898
      %v5365 = vand.u32 %v5364, 65535
      %v5366 = vshra.s32 %v5364, 16
      %v5367 = vcvt.s32.f32 %v5365
      %v5368 = vcvt.s32.f32 %v5366
      %5369 = vmin.xlane.f32.xlu0 %v5368
      %v5370 = vpop.xlane.xlu0 %5369
      %vm5371 = vcmp.eq.f32.partialorder %v5368, %v5370
      %v5372 = vsel %vm5371, %v5367, inf
      %5373 = vmin.xlane.f32.xlu0 %v5372
      %v5374 = vpop.xlane.xlu0 %5373
      %v5375 = vcvt.f32.s32 %v5374
      %v5376 = vcvt.f32.s32 %v5370
      %v5377 = vshll.u32 %v5376, 16
      %v5378 = vadd.s32 %v5377, %v5375
      %vm5379 = vcmp.lt.s32.totalorder %v4899, %v4900
      %v5380 = vsel %vm5379, %v4899, %v4900
      %vm5381 = vcmp.lt.s32.totalorder %v5380, %v4901
      %v5382 = vsel %vm5381, %v5380, %v4901
      %vm5383 = vcmp.lt.s32.totalorder %v5382, %v4902
      %v5384 = vsel %vm5383, %v5382, %v4902
      %v5385 = vand.u32 %v5384, 65535
      %v5386 = vshra.s32 %v5384, 16
      %v5387 = vcvt.s32.f32 %v5385
      %v5388 = vcvt.s32.f32 %v5386
      %5389 = vmin.xlane.f32.xlu0 %v5388
      %v5390 = vpop.xlane.xlu0 %5389
      %vm5391 = vcmp.eq.f32.partialorder %v5388, %v5390
      %v5392 = vsel %vm5391, %v5387, inf
      %5393 = vmin.xlane.f32.xlu0 %v5392
      %v5394 = vpop.xlane.xlu0 %5393
      %v5395 = vcvt.f32.s32 %v5394
      %v5396 = vcvt.f32.s32 %v5390
      %v5397 = vshll.u32 %v5396, 16
      %v5398 = vadd.s32 %v5397, %v5395
      %vm5399 = vcmp.lt.s32.totalorder %v4903, %v4904
      %v5400 = vsel %vm5399, %v4903, %v4904
      %vm5401 = vcmp.lt.s32.totalorder %v5400, %v4905
      %v5402 = vsel %vm5401, %v5400, %v4905
      %vm5403 = vcmp.lt.s32.totalorder %v5402, %v4906
      %v5404 = vsel %vm5403, %v5402, %v4906
      %v5405 = vand.u32 %v5404, 65535
      %v5406 = vshra.s32 %v5404, 16
      %v5407 = vcvt.s32.f32 %v5405
      %v5408 = vcvt.s32.f32 %v5406
      %5409 = vmin.xlane.f32.xlu0 %v5408
      %v5410 = vpop.xlane.xlu0 %5409
      %vm5411 = vcmp.eq.f32.partialorder %v5408, %v5410
      %v5412 = vsel %vm5411, %v5407, inf
      %5413 = vmin.xlane.f32.xlu0 %v5412
      %v5414 = vpop.xlane.xlu0 %5413
      %v5415 = vcvt.f32.s32 %v5414
      %v5416 = vcvt.f32.s32 %v5410
      %v5417 = vshll.u32 %v5416, 16
      %v5418 = vadd.s32 %v5417, %v5415
      %vm5419 = vcmp.lt.s32.totalorder %v4907, %v4908
      %v5420 = vsel %vm5419, %v4907, %v4908
      %vm5421 = vcmp.lt.s32.totalorder %v5420, %v4909
      %v5422 = vsel %vm5421, %v5420, %v4909
      %vm5423 = vcmp.lt.s32.totalorder %v5422, %v4910
      %v5424 = vsel %vm5423, %v5422, %v4910
      %v5425 = vand.u32 %v5424, 65535
      %v5426 = vshra.s32 %v5424, 16
      %v5427 = vcvt.s32.f32 %v5425
      %v5428 = vcvt.s32.f32 %v5426
      %5429 = vmin.xlane.f32.xlu0 %v5428
      %v5430 = vpop.xlane.xlu0 %5429
      %vm5431 = vcmp.eq.f32.partialorder %v5428, %v5430
      %v5432 = vsel %vm5431, %v5427, inf
      %5433 = vmin.xlane.f32.xlu0 %v5432
      %v5434 = vpop.xlane.xlu0 %5433
      %v5435 = vcvt.f32.s32 %v5434
      %v5436 = vcvt.f32.s32 %v5430
      %v5437 = vshll.u32 %v5436, 16
      %v5438 = vadd.s32 %v5437, %v5435
      %vm5439 = vcmp.lt.s32.totalorder %v4911, %v4912
      %v5440 = vsel %vm5439, %v4911, %v4912
      %vm5441 = vcmp.lt.s32.totalorder %v5440, %v4913
      %v5442 = vsel %vm5441, %v5440, %v4913
      %vm5443 = vcmp.lt.s32.totalorder %v5442, %v4914
      %v5444 = vsel %vm5443, %v5442, %v4914
      %v5445 = vand.u32 %v5444, 65535
      %v5446 = vshra.s32 %v5444, 16
      %v5447 = vcvt.s32.f32 %v5445
      %v5448 = vcvt.s32.f32 %v5446
      %5449 = vmin.xlane.f32.xlu0 %v5448
      %v5450 = vpop.xlane.xlu0 %5449
      %vm5451 = vcmp.eq.f32.partialorder %v5448, %v5450
      %v5452 = vsel %vm5451, %v5447, inf
      %5453 = vmin.xlane.f32.xlu0 %v5452
      %v5454 = vpop.xlane.xlu0 %5453
      %v5455 = vcvt.f32.s32 %v5454
      %v5456 = vcvt.f32.s32 %v5450
      %v5457 = vshll.u32 %v5456, 16
      %v5458 = vadd.s32 %v5457, %v5455
      %vm5459 = vcmp.lt.s32.totalorder %v4915, %v4916
      %v5460 = vsel %vm5459, %v4915, %v4916
      %vm5461 = vcmp.lt.s32.totalorder %v5460, %v4917
      %v5462 = vsel %vm5461, %v5460, %v4917
      %vm5463 = vcmp.lt.s32.totalorder %v5462, %v4918
      %v5464 = vsel %vm5463, %v5462, %v4918
      %v5465 = vand.u32 %v5464, 65535
      %v5466 = vshra.s32 %v5464, 16
      %v5467 = vcvt.s32.f32 %v5465
      %v5468 = vcvt.s32.f32 %v5466
      %5469 = vmin.xlane.f32.xlu0 %v5468
      %v5470 = vpop.xlane.xlu0 %5469
      %vm5471 = vcmp.eq.f32.partialorder %v5468, %v5470
      %v5472 = vsel %vm5471, %v5467, inf
      %5473 = vmin.xlane.f32.xlu0 %v5472
      %v5474 = vpop.xlane.xlu0 %5473
      %v5475 = vcvt.f32.s32 %v5474
      %v5476 = vcvt.f32.s32 %v5470
      %v5477 = vshll.u32 %v5476, 16
      %v5478 = vadd.s32 %v5477, %v5475
      %vm5479 = vcmp.lt.s32.totalorder %v4919, %v4920
      %v5480 = vsel %vm5479, %v4919, %v4920
      %vm5481 = vcmp.lt.s32.totalorder %v5480, %v4921
      %v5482 = vsel %vm5481, %v5480, %v4921
      %vm5483 = vcmp.lt.s32.totalorder %v5482, %v4922
      %v5484 = vsel %vm5483, %v5482, %v4922
      %v5485 = vand.u32 %v5484, 65535
      %v5486 = vshra.s32 %v5484, 16
      %v5487 = vcvt.s32.f32 %v5485
      %v5488 = vcvt.s32.f32 %v5486
      %5489 = vmin.xlane.f32.xlu0 %v5488
      %v5490 = vpop.xlane.xlu0 %5489
      %vm5491 = vcmp.eq.f32.partialorder %v5488, %v5490
      %v5492 = vsel %vm5491, %v5487, inf
      %5493 = vmin.xlane.f32.xlu0 %v5492
      %v5494 = vpop.xlane.xlu0 %5493
      %v5495 = vcvt.f32.s32 %v5494
      %v5496 = vcvt.f32.s32 %v5490
      %v5497 = vshll.u32 %v5496, 16
      %v5498 = vadd.s32 %v5497, %v5495
      %vm5499 = vcmp.lt.s32.totalorder %v4923, %v4924
      %v5500 = vsel %vm5499, %v4923, %v4924
      %vm5501 = vcmp.lt.s32.totalorder %v5500, %v4925
      %v5502 = vsel %vm5501, %v5500, %v4925
      %vm5503 = vcmp.lt.s32.totalorder %v5502, %v4926
      %v5504 = vsel %vm5503, %v5502, %v4926
      %v5505 = vand.u32 %v5504, 65535
      %v5506 = vshra.s32 %v5504, 16
      %v5507 = vcvt.s32.f32 %v5505
      %v5508 = vcvt.s32.f32 %v5506
      %5509 = vmin.xlane.f32.xlu0 %v5508
      %v5510 = vpop.xlane.xlu0 %5509
      %vm5511 = vcmp.eq.f32.partialorder %v5508, %v5510
      %v5512 = vsel %vm5511, %v5507, inf
      %5513 = vmin.xlane.f32.xlu0 %v5512
      %v5514 = vpop.xlane.xlu0 %5513
      %v5515 = vcvt.f32.s32 %v5514
      %v5516 = vcvt.f32.s32 %v5510
      %v5517 = vshll.u32 %v5516, 16
      %v5518 = vadd.s32 %v5517, %v5515
      %vm5519 = vcmp.lt.s32.totalorder %v4927, %v4928
      %v5520 = vsel %vm5519, %v4927, %v4928
      %vm5521 = vcmp.lt.s32.totalorder %v5520, %v4929
      %v5522 = vsel %vm5521, %v5520, %v4929
      %vm5523 = vcmp.lt.s32.totalorder %v5522, %v4930
      %v5524 = vsel %vm5523, %v5522, %v4930
      %v5525 = vand.u32 %v5524, 65535
      %v5526 = vshra.s32 %v5524, 16
      %v5527 = vcvt.s32.f32 %v5525
      %v5528 = vcvt.s32.f32 %v5526
      %5529 = vmin.xlane.f32.xlu0 %v5528
      %v5530 = vpop.xlane.xlu0 %5529
      %vm5531 = vcmp.eq.f32.partialorder %v5528, %v5530
      %v5532 = vsel %vm5531, %v5527, inf
      %5533 = vmin.xlane.f32.xlu0 %v5532
      %v5534 = vpop.xlane.xlu0 %5533
      %v5535 = vcvt.f32.s32 %v5534
      %v5536 = vcvt.f32.s32 %v5530
      %v5537 = vshll.u32 %v5536, 16
      %v5538 = vadd.s32 %v5537, %v5535
      %vm5539 = vcmp.lt.s32.totalorder %v4931, %v4932
      %v5540 = vsel %vm5539, %v4931, %v4932
      %vm5541 = vcmp.lt.s32.totalorder %v5540, %v4933
      %v5542 = vsel %vm5541, %v5540, %v4933
      %vm5543 = vcmp.lt.s32.totalorder %v5542, %v4934
      %v5544 = vsel %vm5543, %v5542, %v4934
      %v5545 = vand.u32 %v5544, 65535
      %v5546 = vshra.s32 %v5544, 16
      %v5547 = vcvt.s32.f32 %v5545
      %v5548 = vcvt.s32.f32 %v5546
      %5549 = vmin.xlane.f32.xlu0 %v5548
      %v5550 = vpop.xlane.xlu0 %5549
      %vm5551 = vcmp.eq.f32.partialorder %v5548, %v5550
      %v5552 = vsel %vm5551, %v5547, inf
      %5553 = vmin.xlane.f32.xlu0 %v5552
      %v5554 = vpop.xlane.xlu0 %5553
      %v5555 = vcvt.f32.s32 %v5554
      %v5556 = vcvt.f32.s32 %v5550
      %v5557 = vshll.u32 %v5556, 16
      %v5558 = vadd.s32 %v5557, %v5555
      %vm5559 = vcmp.lt.s32.totalorder %v4935, %v4936
      %v5560 = vsel %vm5559, %v4935, %v4936
      %vm5561 = vcmp.lt.s32.totalorder %v5560, %v4937
      %v5562 = vsel %vm5561, %v5560, %v4937
      %vm5563 = vcmp.lt.s32.totalorder %v5562, %v4938
      %v5564 = vsel %vm5563, %v5562, %v4938
      %v5565 = vand.u32 %v5564, 65535
      %v5566 = vshra.s32 %v5564, 16
      %v5567 = vcvt.s32.f32 %v5565
      %v5568 = vcvt.s32.f32 %v5566
      %5569 = vmin.xlane.f32.xlu0 %v5568
      %v5570 = vpop.xlane.xlu0 %5569
      %vm5571 = vcmp.eq.f32.partialorder %v5568, %v5570
      %v5572 = vsel %vm5571, %v5567, inf
      %5573 = vmin.xlane.f32.xlu0 %v5572
      %v5574 = vpop.xlane.xlu0 %5573
      %v5575 = vcvt.f32.s32 %v5574
      %v5576 = vcvt.f32.s32 %v5570
      %v5577 = vshll.u32 %v5576, 16
      %v5578 = vadd.s32 %v5577, %v5575
      %v5579 = vadd.s32 %v4958, %v2890
      %v5580 = vadd.s32 %v4978, %v2890
      %v5581 = vadd.s32 %v4998, %v2890
      %v5582 = vadd.s32 %v5018, %v2890
      %v5583 = vadd.s32 %v5038, %v2890
      %v5584 = vadd.s32 %v5058, %v2890
      %v5585 = vadd.s32 %v5078, %v2890
      %v5586 = vadd.s32 %v5098, %v2890
      %v5587 = vadd.s32 %v5118, %v2890
      %v5588 = vadd.s32 %v5138, %v2890
      %v5589 = vadd.s32 %v5158, %v2890
      %v5590 = vadd.s32 %v5178, %v2890
      %v5591 = vadd.s32 %v5198, %v2890
      %v5592 = vadd.s32 %v5218, %v2890
      %v5593 = vadd.s32 %v5238, %v2890
      %v5594 = vadd.s32 %v5258, %v2890
      %v5595 = vadd.s32 %v5278, %v2890
      %v5596 = vadd.s32 %v5298, %v2890
      %v5597 = vadd.s32 %v5318, %v2890
      %v5598 = vadd.s32 %v5338, %v2890
      %v5599 = vadd.s32 %v5358, %v2890
      %v5600 = vadd.s32 %v5378, %v2890
      %v5601 = vadd.s32 %v5398, %v2890
      %v5602 = vadd.s32 %v5418, %v2890
      %v5603 = vadd.s32 %v5438, %v2890
      %v5604 = vadd.s32 %v5458, %v2890
      %v5605 = vadd.s32 %v5478, %v2890
      %v5606 = vadd.s32 %v5498, %v2890
      %v5607 = vadd.s32 %v5518, %v2890
      %v5608 = vadd.s32 %v5538, %v2890
      %v5609 = vadd.s32 %v5558, %v2890
      %v5610 = vadd.s32 %v5578, %v2890
      %vm5611 = vcmp.eq.s32.totalorder %v1106, %v4958
      %vm5612 = vcmp.eq.s32.totalorder %v1107, %v4958
      %vm5613 = vcmp.eq.s32.totalorder %v1108, %v4958
      %vm5614 = vcmp.eq.s32.totalorder %v1109, %v4958
      %vm5615 = vcmp.eq.s32.totalorder %v1106, %v4978
      %vm5616 = vcmp.eq.s32.totalorder %v1107, %v4978
      %vm5617 = vcmp.eq.s32.totalorder %v1108, %v4978
      %vm5618 = vcmp.eq.s32.totalorder %v1109, %v4978
      %vm5619 = vcmp.eq.s32.totalorder %v1106, %v4998
      %vm5620 = vcmp.eq.s32.totalorder %v1107, %v4998
      %vm5621 = vcmp.eq.s32.totalorder %v1108, %v4998
      %vm5622 = vcmp.eq.s32.totalorder %v1109, %v4998
      %vm5623 = vcmp.eq.s32.totalorder %v1106, %v5018
      %vm5624 = vcmp.eq.s32.totalorder %v1107, %v5018
      %vm5625 = vcmp.eq.s32.totalorder %v1108, %v5018
      %vm5626 = vcmp.eq.s32.totalorder %v1109, %v5018
      %vm5627 = vcmp.eq.s32.totalorder %v1106, %v5038
      %vm5628 = vcmp.eq.s32.totalorder %v1107, %v5038
      %vm5629 = vcmp.eq.s32.totalorder %v1108, %v5038
      %vm5630 = vcmp.eq.s32.totalorder %v1109, %v5038
      %vm5631 = vcmp.eq.s32.totalorder %v1106, %v5058
      %vm5632 = vcmp.eq.s32.totalorder %v1107, %v5058
      %vm5633 = vcmp.eq.s32.totalorder %v1108, %v5058
      %vm5634 = vcmp.eq.s32.totalorder %v1109, %v5058
      %vm5635 = vcmp.eq.s32.totalorder %v1106, %v5078
      %vm5636 = vcmp.eq.s32.totalorder %v1107, %v5078
      %vm5637 = vcmp.eq.s32.totalorder %v1108, %v5078
      %vm5638 = vcmp.eq.s32.totalorder %v1109, %v5078
      %vm5639 = vcmp.eq.s32.totalorder %v1106, %v5098
      %vm5640 = vcmp.eq.s32.totalorder %v1107, %v5098
      %vm5641 = vcmp.eq.s32.totalorder %v1108, %v5098
      %vm5642 = vcmp.eq.s32.totalorder %v1109, %v5098
      %vm5643 = vcmp.eq.s32.totalorder %v1106, %v5118
      %vm5644 = vcmp.eq.s32.totalorder %v1107, %v5118
      %vm5645 = vcmp.eq.s32.totalorder %v1108, %v5118
      %vm5646 = vcmp.eq.s32.totalorder %v1109, %v5118
      %vm5647 = vcmp.eq.s32.totalorder %v1106, %v5138
      %vm5648 = vcmp.eq.s32.totalorder %v1107, %v5138
      %vm5649 = vcmp.eq.s32.totalorder %v1108, %v5138
      %vm5650 = vcmp.eq.s32.totalorder %v1109, %v5138
      %vm5651 = vcmp.eq.s32.totalorder %v1106, %v5158
      %vm5652 = vcmp.eq.s32.totalorder %v1107, %v5158
      %vm5653 = vcmp.eq.s32.totalorder %v1108, %v5158
      %vm5654 = vcmp.eq.s32.totalorder %v1109, %v5158
      %vm5655 = vcmp.eq.s32.totalorder %v1106, %v5178
      %vm5656 = vcmp.eq.s32.totalorder %v1107, %v5178
      %vm5657 = vcmp.eq.s32.totalorder %v1108, %v5178
      %vm5658 = vcmp.eq.s32.totalorder %v1109, %v5178
      %vm5659 = vcmp.eq.s32.totalorder %v1106, %v5198
      %vm5660 = vcmp.eq.s32.totalorder %v1107, %v5198
      %vm5661 = vcmp.eq.s32.totalorder %v1108, %v5198
      %vm5662 = vcmp.eq.s32.totalorder %v1109, %v5198
      %vm5663 = vcmp.eq.s32.totalorder %v1106, %v5218
      %vm5664 = vcmp.eq.s32.totalorder %v1107, %v5218
      %vm5665 = vcmp.eq.s32.totalorder %v1108, %v5218
      %vm5666 = vcmp.eq.s32.totalorder %v1109, %v5218
      %vm5667 = vcmp.eq.s32.totalorder %v1106, %v5238
      %vm5668 = vcmp.eq.s32.totalorder %v1107, %v5238
      %vm5669 = vcmp.eq.s32.totalorder %v1108, %v5238
      %vm5670 = vcmp.eq.s32.totalorder %v1109, %v5238
      %vm5671 = vcmp.eq.s32.totalorder %v1106, %v5258
      %vm5672 = vcmp.eq.s32.totalorder %v1107, %v5258
      %vm5673 = vcmp.eq.s32.totalorder %v1108, %v5258
      %vm5674 = vcmp.eq.s32.totalorder %v1109, %v5258
      %vm5675 = vcmp.eq.s32.totalorder %v1106, %v5278
      %vm5676 = vcmp.eq.s32.totalorder %v1107, %v5278
      %vm5677 = vcmp.eq.s32.totalorder %v1108, %v5278
      %vm5678 = vcmp.eq.s32.totalorder %v1109, %v5278
      %vm5679 = vcmp.eq.s32.totalorder %v1106, %v5298
      %vm5680 = vcmp.eq.s32.totalorder %v1107, %v5298
      %vm5681 = vcmp.eq.s32.totalorder %v1108, %v5298
      %vm5682 = vcmp.eq.s32.totalorder %v1109, %v5298
      %vm5683 = vcmp.eq.s32.totalorder %v1106, %v5318
      %vm5684 = vcmp.eq.s32.totalorder %v1107, %v5318
      %vm5685 = vcmp.eq.s32.totalorder %v1108, %v5318
      %vm5686 = vcmp.eq.s32.totalorder %v1109, %v5318
      %vm5687 = vcmp.eq.s32.totalorder %v1106, %v5338
      %vm5688 = vcmp.eq.s32.totalorder %v1107, %v5338
      %vm5689 = vcmp.eq.s32.totalorder %v1108, %v5338
      %vm5690 = vcmp.eq.s32.totalorder %v1109, %v5338
      %vm5691 = vcmp.eq.s32.totalorder %v1106, %v5358
      %vm5692 = vcmp.eq.s32.totalorder %v1107, %v5358
      %vm5693 = vcmp.eq.s32.totalorder %v1108, %v5358
      %vm5694 = vcmp.eq.s32.totalorder %v1109, %v5358
      %vm5695 = vcmp.eq.s32.totalorder %v1106, %v5378
      %vm5696 = vcmp.eq.s32.totalorder %v1107, %v5378
      %vm5697 = vcmp.eq.s32.totalorder %v1108, %v5378
      %vm5698 = vcmp.eq.s32.totalorder %v1109, %v5378
      %vm5699 = vcmp.eq.s32.totalorder %v1106, %v5398
      %vm5700 = vcmp.eq.s32.totalorder %v1107, %v5398
      %vm5701 = vcmp.eq.s32.totalorder %v1108, %v5398
      %vm5702 = vcmp.eq.s32.totalorder %v1109, %v5398
      %vm5703 = vcmp.eq.s32.totalorder %v1106, %v5418
      %vm5704 = vcmp.eq.s32.totalorder %v1107, %v5418
      %vm5705 = vcmp.eq.s32.totalorder %v1108, %v5418
      %vm5706 = vcmp.eq.s32.totalorder %v1109, %v5418
      %vm5707 = vcmp.eq.s32.totalorder %v1106, %v5438
      %vm5708 = vcmp.eq.s32.totalorder %v1107, %v5438
      %vm5709 = vcmp.eq.s32.totalorder %v1108, %v5438
      %vm5710 = vcmp.eq.s32.totalorder %v1109, %v5438
      %vm5711 = vcmp.eq.s32.totalorder %v1106, %v5458
      %vm5712 = vcmp.eq.s32.totalorder %v1107, %v5458
      %vm5713 = vcmp.eq.s32.totalorder %v1108, %v5458
      %vm5714 = vcmp.eq.s32.totalorder %v1109, %v5458
      %vm5715 = vcmp.eq.s32.totalorder %v1106, %v5478
      %vm5716 = vcmp.eq.s32.totalorder %v1107, %v5478
      %vm5717 = vcmp.eq.s32.totalorder %v1108, %v5478
      %vm5718 = vcmp.eq.s32.totalorder %v1109, %v5478
      %vm5719 = vcmp.eq.s32.totalorder %v1106, %v5498
      %vm5720 = vcmp.eq.s32.totalorder %v1107, %v5498
      %vm5721 = vcmp.eq.s32.totalorder %v1108, %v5498
      %vm5722 = vcmp.eq.s32.totalorder %v1109, %v5498
      %vm5723 = vcmp.eq.s32.totalorder %v1106, %v5518
      %vm5724 = vcmp.eq.s32.totalorder %v1107, %v5518
      %vm5725 = vcmp.eq.s32.totalorder %v1108, %v5518
      %vm5726 = vcmp.eq.s32.totalorder %v1109, %v5518
      %vm5727 = vcmp.eq.s32.totalorder %v1106, %v5538
      %vm5728 = vcmp.eq.s32.totalorder %v1107, %v5538
      %vm5729 = vcmp.eq.s32.totalorder %v1108, %v5538
      %vm5730 = vcmp.eq.s32.totalorder %v1109, %v5538
      %vm5731 = vcmp.eq.s32.totalorder %v1106, %v5558
      %vm5732 = vcmp.eq.s32.totalorder %v1107, %v5558
      %vm5733 = vcmp.eq.s32.totalorder %v1108, %v5558
      %vm5734 = vcmp.eq.s32.totalorder %v1109, %v5558
      %vm5735 = vcmp.eq.s32.totalorder %v1106, %v5578
      %vm5736 = vcmp.eq.s32.totalorder %v1107, %v5578
      %vm5737 = vcmp.eq.s32.totalorder %v1108, %v5578
      %vm5738 = vcmp.eq.s32.totalorder %v1109, %v5578
      %v5739 = vsel %vm5611, -inf, %v4395
      %v5740 = vsel %vm5612, -inf, %v4396
      %v5741 = vsel %vm5613, -inf, %v4397
      %v5742 = vsel %vm5614, -inf, %v4398
      %v5743 = vsel %vm5615, -inf, %v4399
      %v5744 = vsel %vm5616, -inf, %v4400
      %v5745 = vsel %vm5617, -inf, %v4401
      %v5746 = vsel %vm5618, -inf, %v4402
      %v5747 = vsel %vm5619, -inf, %v4403
      %v5748 = vsel %vm5620, -inf, %v4404
      %v5749 = vsel %vm5621, -inf, %v4405
      %v5750 = vsel %vm5622, -inf, %v4406
      %v5751 = vsel %vm5623, -inf, %v4407
      %v5752 = vsel %vm5624, -inf, %v4408
      %v5753 = vsel %vm5625, -inf, %v4409
      %v5754 = vsel %vm5626, -inf, %v4410
      %v5755 = vsel %vm5627, -inf, %v4411
      %v5756 = vsel %vm5628, -inf, %v4412
      %v5757 = vsel %vm5629, -inf, %v4413
      %v5758 = vsel %vm5630, -inf, %v4414
      %v5759 = vsel %vm5631, -inf, %v4415
      %v5760 = vsel %vm5632, -inf, %v4416
      %v5761 = vsel %vm5633, -inf, %v4417
      %v5762 = vsel %vm5634, -inf, %v4418
      %v5763 = vsel %vm5635, -inf, %v4419
      %v5764 = vsel %vm5636, -inf, %v4420
      %v5765 = vsel %vm5637, -inf, %v4421
      %v5766 = vsel %vm5638, -inf, %v4422
      %v5767 = vsel %vm5639, -inf, %v4423
      %v5768 = vsel %vm5640, -inf, %v4424
      %v5769 = vsel %vm5641, -inf, %v4425
      %v5770 = vsel %vm5642, -inf, %v4426
      %v5771 = vsel %vm5643, -inf, %v4427
      %v5772 = vsel %vm5644, -inf, %v4428
      %v5773 = vsel %vm5645, -inf, %v4429
      %v5774 = vsel %vm5646, -inf, %v4430
      %v5775 = vsel %vm5647, -inf, %v4431
      %v5776 = vsel %vm5648, -inf, %v4432
      %v5777 = vsel %vm5649, -inf, %v4433
      %v5778 = vsel %vm5650, -inf, %v4434
      %v5779 = vsel %vm5651, -inf, %v4435
      %v5780 = vsel %vm5652, -inf, %v4436
      %v5781 = vsel %vm5653, -inf, %v4437
      %v5782 = vsel %vm5654, -inf, %v4438
      %v5783 = vsel %vm5655, -inf, %v4439
      %v5784 = vsel %vm5656, -inf, %v4440
      %v5785 = vsel %vm5657, -inf, %v4441
      %v5786 = vsel %vm5658, -inf, %v4442
      %v5787 = vsel %vm5659, -inf, %v4443
      %v5788 = vsel %vm5660, -inf, %v4444
      %v5789 = vsel %vm5661, -inf, %v4445
      %v5790 = vsel %vm5662, -inf, %v4446
      %v5791 = vsel %vm5663, -inf, %v4447
      %v5792 = vsel %vm5664, -inf, %v4448
      %v5793 = vsel %vm5665, -inf, %v4449
      %v5794 = vsel %vm5666, -inf, %v4450
      %v5795 = vsel %vm5667, -inf, %v4451
      %v5796 = vsel %vm5668, -inf, %v4452
      %v5797 = vsel %vm5669, -inf, %v4453
      %v5798 = vsel %vm5670, -inf, %v4454
      %v5799 = vsel %vm5671, -inf, %v4455
      %v5800 = vsel %vm5672, -inf, %v4456
      %v5801 = vsel %vm5673, -inf, %v4457
      %v5802 = vsel %vm5674, -inf, %v4458
      %v5803 = vsel %vm5675, -inf, %v4459
      %v5804 = vsel %vm5676, -inf, %v4460
      %v5805 = vsel %vm5677, -inf, %v4461
      %v5806 = vsel %vm5678, -inf, %v4462
      %v5807 = vsel %vm5679, -inf, %v4463
      %v5808 = vsel %vm5680, -inf, %v4464
      %v5809 = vsel %vm5681, -inf, %v4465
      %v5810 = vsel %vm5682, -inf, %v4466
      %v5811 = vsel %vm5683, -inf, %v4467
      %v5812 = vsel %vm5684, -inf, %v4468
      %v5813 = vsel %vm5685, -inf, %v4469
      %v5814 = vsel %vm5686, -inf, %v4470
      %v5815 = vsel %vm5687, -inf, %v4471
      %v5816 = vsel %vm5688, -inf, %v4472
      %v5817 = vsel %vm5689, -inf, %v4473
      %v5818 = vsel %vm5690, -inf, %v4474
      %v5819 = vsel %vm5691, -inf, %v4475
      %v5820 = vsel %vm5692, -inf, %v4476
      %v5821 = vsel %vm5693, -inf, %v4477
      %v5822 = vsel %vm5694, -inf, %v4478
      %v5823 = vsel %vm5695, -inf, %v4479
      %v5824 = vsel %vm5696, -inf, %v4480
      %v5825 = vsel %vm5697, -inf, %v4481
      %v5826 = vsel %vm5698, -inf, %v4482
      %v5827 = vsel %vm5699, -inf, %v4483
      %v5828 = vsel %vm5700, -inf, %v4484
      %v5829 = vsel %vm5701, -inf, %v4485
      %v5830 = vsel %vm5702, -inf, %v4486
      %v5831 = vsel %vm5703, -inf, %v4487
      %v5832 = vsel %vm5704, -inf, %v4488
      %v5833 = vsel %vm5705, -inf, %v4489
      %v5834 = vsel %vm5706, -inf, %v4490
      %v5835 = vsel %vm5707, -inf, %v4491
      %v5836 = vsel %vm5708, -inf, %v4492
      %v5837 = vsel %vm5709, -inf, %v4493
      %v5838 = vsel %vm5710, -inf, %v4494
      %v5839 = vsel %vm5711, -inf, %v4495
      %v5840 = vsel %vm5712, -inf, %v4496
      %v5841 = vsel %vm5713, -inf, %v4497
      %v5842 = vsel %vm5714, -inf, %v4498
      %v5843 = vsel %vm5715, -inf, %v4499
      %v5844 = vsel %vm5716, -inf, %v4500
      %v5845 = vsel %vm5717, -inf, %v4501
      %v5846 = vsel %vm5718, -inf, %v4502
      %v5847 = vsel %vm5719, -inf, %v4503
      %v5848 = vsel %vm5720, -inf, %v4504
      %v5849 = vsel %vm5721, -inf, %v4505
      %v5850 = vsel %vm5722, -inf, %v4506
      %v5851 = vsel %vm5723, -inf, %v4507
      %v5852 = vsel %vm5724, -inf, %v4508
      %v5853 = vsel %vm5725, -inf, %v4509
      %v5854 = vsel %vm5726, -inf, %v4510
      %v5855 = vsel %vm5727, -inf, %v4511
      %v5856 = vsel %vm5728, -inf, %v4512
      %v5857 = vsel %vm5729, -inf, %v4513
      %v5858 = vsel %vm5730, -inf, %v4514
      %v5859 = vsel %vm5731, -inf, %v4515
      %v5860 = vsel %vm5732, -inf, %v4516
      %v5861 = vsel %vm5733, -inf, %v4517
      %v5862 = vsel %vm5734, -inf, %v4518
      %v5863 = vsel %vm5735, -inf, %v4519
      %v5864 = vsel %vm5736, -inf, %v4520
      %v5865 = vsel %vm5737, -inf, %v4521
      %v5866 = vsel %vm5738, -inf, %v4522
      %v5867 = vmax.f32 %v5739, %v5740
      %v5868 = vmax.f32 %v5867, %v5741
      %v5869 = vmax.f32 %v5868, %v5742
      %5870 = vmax.xlane.f32.xlu0 %v5869
      %v5871 = vpop.xlane.xlu0 %5870
      %v5872 = vmax.f32 %v5743, %v5744
      %v5873 = vmax.f32 %v5872, %v5745
      %v5874 = vmax.f32 %v5873, %v5746
      %5875 = vmax.xlane.f32.xlu0 %v5874
      %v5876 = vpop.xlane.xlu0 %5875
      %v5877 = vmax.f32 %v5747, %v5748
      %v5878 = vmax.f32 %v5877, %v5749
      %v5879 = vmax.f32 %v5878, %v5750
      %5880 = vmax.xlane.f32.xlu0 %v5879
      %v5881 = vpop.xlane.xlu0 %5880
      %v5882 = vmax.f32 %v5751, %v5752
      %v5883 = vmax.f32 %v5882, %v5753
      %v5884 = vmax.f32 %v5883, %v5754
      %5885 = vmax.xlane.f32.xlu0 %v5884
      %v5886 = vpop.xlane.xlu0 %5885
      %v5887 = vmax.f32 %v5755, %v5756
      %v5888 = vmax.f32 %v5887, %v5757
      %v5889 = vmax.f32 %v5888, %v5758
      %5890 = vmax.xlane.f32.xlu0 %v5889
      %v5891 = vpop.xlane.xlu0 %5890
      %v5892 = vmax.f32 %v5759, %v5760
      %v5893 = vmax.f32 %v5892, %v5761
      %v5894 = vmax.f32 %v5893, %v5762
      %5895 = vmax.xlane.f32.xlu0 %v5894
      %v5896 = vpop.xlane.xlu0 %5895
      %v5897 = vmax.f32 %v5763, %v5764
      %v5898 = vmax.f32 %v5897, %v5765
      %v5899 = vmax.f32 %v5898, %v5766
      %5900 = vmax.xlane.f32.xlu0 %v5899
      %v5901 = vpop.xlane.xlu0 %5900
      %v5902 = vmax.f32 %v5767, %v5768
      %v5903 = vmax.f32 %v5902, %v5769
      %v5904 = vmax.f32 %v5903, %v5770
      %5905 = vmax.xlane.f32.xlu0 %v5904
      %v5906 = vpop.xlane.xlu0 %5905
      %v5907 = vmax.f32 %v5771, %v5772
      %v5908 = vmax.f32 %v5907, %v5773
      %v5909 = vmax.f32 %v5908, %v5774
      %5910 = vmax.xlane.f32.xlu0 %v5909
      %v5911 = vpop.xlane.xlu0 %5910
      %v5912 = vmax.f32 %v5775, %v5776
      %v5913 = vmax.f32 %v5912, %v5777
      %v5914 = vmax.f32 %v5913, %v5778
      %5915 = vmax.xlane.f32.xlu0 %v5914
      %v5916 = vpop.xlane.xlu0 %5915
      %v5917 = vmax.f32 %v5779, %v5780
      %v5918 = vmax.f32 %v5917, %v5781
      %v5919 = vmax.f32 %v5918, %v5782
      %5920 = vmax.xlane.f32.xlu0 %v5919
      %v5921 = vpop.xlane.xlu0 %5920
      %v5922 = vmax.f32 %v5783, %v5784
      %v5923 = vmax.f32 %v5922, %v5785
      %v5924 = vmax.f32 %v5923, %v5786
      %5925 = vmax.xlane.f32.xlu0 %v5924
      %v5926 = vpop.xlane.xlu0 %5925
      %v5927 = vmax.f32 %v5787, %v5788
      %v5928 = vmax.f32 %v5927, %v5789
      %v5929 = vmax.f32 %v5928, %v5790
      %5930 = vmax.xlane.f32.xlu0 %v5929
      %v5931 = vpop.xlane.xlu0 %5930
      %v5932 = vmax.f32 %v5791, %v5792
      %v5933 = vmax.f32 %v5932, %v5793
      %v5934 = vmax.f32 %v5933, %v5794
      %5935 = vmax.xlane.f32.xlu0 %v5934
      %v5936 = vpop.xlane.xlu0 %5935
      %v5937 = vmax.f32 %v5795, %v5796
      %v5938 = vmax.f32 %v5937, %v5797
      %v5939 = vmax.f32 %v5938, %v5798
      %5940 = vmax.xlane.f32.xlu0 %v5939
      %v5941 = vpop.xlane.xlu0 %5940
      %v5942 = vmax.f32 %v5799, %v5800
      %v5943 = vmax.f32 %v5942, %v5801
      %v5944 = vmax.f32 %v5943, %v5802
      %5945 = vmax.xlane.f32.xlu0 %v5944
      %v5946 = vpop.xlane.xlu0 %5945
      %v5947 = vmax.f32 %v5803, %v5804
      %v5948 = vmax.f32 %v5947, %v5805
      %v5949 = vmax.f32 %v5948, %v5806
      %5950 = vmax.xlane.f32.xlu0 %v5949
      %v5951 = vpop.xlane.xlu0 %5950
      %v5952 = vmax.f32 %v5807, %v5808
      %v5953 = vmax.f32 %v5952, %v5809
      %v5954 = vmax.f32 %v5953, %v5810
      %5955 = vmax.xlane.f32.xlu0 %v5954
      %v5956 = vpop.xlane.xlu0 %5955
      %v5957 = vmax.f32 %v5811, %v5812
      %v5958 = vmax.f32 %v5957, %v5813
      %v5959 = vmax.f32 %v5958, %v5814
      %5960 = vmax.xlane.f32.xlu0 %v5959
      %v5961 = vpop.xlane.xlu0 %5960
      %v5962 = vmax.f32 %v5815, %v5816
      %v5963 = vmax.f32 %v5962, %v5817
      %v5964 = vmax.f32 %v5963, %v5818
      %5965 = vmax.xlane.f32.xlu0 %v5964
      %v5966 = vpop.xlane.xlu0 %5965
      %v5967 = vmax.f32 %v5819, %v5820
      %v5968 = vmax.f32 %v5967, %v5821
      %v5969 = vmax.f32 %v5968, %v5822
      %5970 = vmax.xlane.f32.xlu0 %v5969
      %v5971 = vpop.xlane.xlu0 %5970
      %v5972 = vmax.f32 %v5823, %v5824
      %v5973 = vmax.f32 %v5972, %v5825
      %v5974 = vmax.f32 %v5973, %v5826
      %5975 = vmax.xlane.f32.xlu0 %v5974
      %v5976 = vpop.xlane.xlu0 %5975
      %v5977 = vmax.f32 %v5827, %v5828
      %v5978 = vmax.f32 %v5977, %v5829
      %v5979 = vmax.f32 %v5978, %v5830
      %5980 = vmax.xlane.f32.xlu0 %v5979
      %v5981 = vpop.xlane.xlu0 %5980
      %v5982 = vmax.f32 %v5831, %v5832
      %v5983 = vmax.f32 %v5982, %v5833
      %v5984 = vmax.f32 %v5983, %v5834
      %5985 = vmax.xlane.f32.xlu0 %v5984
      %v5986 = vpop.xlane.xlu0 %5985
      %v5987 = vmax.f32 %v5835, %v5836
      %v5988 = vmax.f32 %v5987, %v5837
      %v5989 = vmax.f32 %v5988, %v5838
      %5990 = vmax.xlane.f32.xlu0 %v5989
      %v5991 = vpop.xlane.xlu0 %5990
      %v5992 = vmax.f32 %v5839, %v5840
      %v5993 = vmax.f32 %v5992, %v5841
      %v5994 = vmax.f32 %v5993, %v5842
      %5995 = vmax.xlane.f32.xlu0 %v5994
      %v5996 = vpop.xlane.xlu0 %5995
      %v5997 = vmax.f32 %v5843, %v5844
      %v5998 = vmax.f32 %v5997, %v5845
      %v5999 = vmax.f32 %v5998, %v5846
      %6000 = vmax.xlane.f32.xlu0 %v5999
      %v6001 = vpop.xlane.xlu0 %6000
      %v6002 = vmax.f32 %v5847, %v5848
      %v6003 = vmax.f32 %v6002, %v5849
      %v6004 = vmax.f32 %v6003, %v5850
      %6005 = vmax.xlane.f32.xlu0 %v6004
      %v6006 = vpop.xlane.xlu0 %6005
      %v6007 = vmax.f32 %v5851, %v5852
      %v6008 = vmax.f32 %v6007, %v5853
      %v6009 = vmax.f32 %v6008, %v5854
      %6010 = vmax.xlane.f32.xlu0 %v6009
      %v6011 = vpop.xlane.xlu0 %6010
      %v6012 = vmax.f32 %v5855, %v5856
      %v6013 = vmax.f32 %v6012, %v5857
      %v6014 = vmax.f32 %v6013, %v5858
      %6015 = vmax.xlane.f32.xlu0 %v6014
      %v6016 = vpop.xlane.xlu0 %6015
      %v6017 = vmax.f32 %v5859, %v5860
      %v6018 = vmax.f32 %v6017, %v5861
      %v6019 = vmax.f32 %v6018, %v5862
      %6020 = vmax.xlane.f32.xlu0 %v6019
      %v6021 = vpop.xlane.xlu0 %6020
      %v6022 = vmax.f32 %v5863, %v5864
      %v6023 = vmax.f32 %v6022, %v5865
      %v6024 = vmax.f32 %v6023, %v5866
      %6025 = vmax.xlane.f32.xlu0 %v6024
      %v6026 = vpop.xlane.xlu0 %6025
      %vm6027 = vcmp.ge.f32.partialorder %v5739, %v5871
      %vm6028 = vcmp.ge.f32.partialorder %v5740, %v5871
      %vm6029 = vcmp.ge.f32.partialorder %v5741, %v5871
      %vm6030 = vcmp.ge.f32.partialorder %v5742, %v5871
      %vm6031 = vcmp.ge.f32.partialorder %v5743, %v5876
      %vm6032 = vcmp.ge.f32.partialorder %v5744, %v5876
      %vm6033 = vcmp.ge.f32.partialorder %v5745, %v5876
      %vm6034 = vcmp.ge.f32.partialorder %v5746, %v5876
      %vm6035 = vcmp.ge.f32.partialorder %v5747, %v5881
      %vm6036 = vcmp.ge.f32.partialorder %v5748, %v5881
      %vm6037 = vcmp.ge.f32.partialorder %v5749, %v5881
      %vm6038 = vcmp.ge.f32.partialorder %v5750, %v5881
      %vm6039 = vcmp.ge.f32.partialorder %v5751, %v5886
      %vm6040 = vcmp.ge.f32.partialorder %v5752, %v5886
      %vm6041 = vcmp.ge.f32.partialorder %v5753, %v5886
      %vm6042 = vcmp.ge.f32.partialorder %v5754, %v5886
      %vm6043 = vcmp.ge.f32.partialorder %v5755, %v5891
      %vm6044 = vcmp.ge.f32.partialorder %v5756, %v5891
      %vm6045 = vcmp.ge.f32.partialorder %v5757, %v5891
      %vm6046 = vcmp.ge.f32.partialorder %v5758, %v5891
      %vm6047 = vcmp.ge.f32.partialorder %v5759, %v5896
      %vm6048 = vcmp.ge.f32.partialorder %v5760, %v5896
      %vm6049 = vcmp.ge.f32.partialorder %v5761, %v5896
      %vm6050 = vcmp.ge.f32.partialorder %v5762, %v5896
      %vm6051 = vcmp.ge.f32.partialorder %v5763, %v5901
      %vm6052 = vcmp.ge.f32.partialorder %v5764, %v5901
      %vm6053 = vcmp.ge.f32.partialorder %v5765, %v5901
      %vm6054 = vcmp.ge.f32.partialorder %v5766, %v5901
      %vm6055 = vcmp.ge.f32.partialorder %v5767, %v5906
      %vm6056 = vcmp.ge.f32.partialorder %v5768, %v5906
      %vm6057 = vcmp.ge.f32.partialorder %v5769, %v5906
      %vm6058 = vcmp.ge.f32.partialorder %v5770, %v5906
      %vm6059 = vcmp.ge.f32.partialorder %v5771, %v5911
      %vm6060 = vcmp.ge.f32.partialorder %v5772, %v5911
      %vm6061 = vcmp.ge.f32.partialorder %v5773, %v5911
      %vm6062 = vcmp.ge.f32.partialorder %v5774, %v5911
      %vm6063 = vcmp.ge.f32.partialorder %v5775, %v5916
      %vm6064 = vcmp.ge.f32.partialorder %v5776, %v5916
      %vm6065 = vcmp.ge.f32.partialorder %v5777, %v5916
      %vm6066 = vcmp.ge.f32.partialorder %v5778, %v5916
      %vm6067 = vcmp.ge.f32.partialorder %v5779, %v5921
      %vm6068 = vcmp.ge.f32.partialorder %v5780, %v5921
      %vm6069 = vcmp.ge.f32.partialorder %v5781, %v5921
      %vm6070 = vcmp.ge.f32.partialorder %v5782, %v5921
      %vm6071 = vcmp.ge.f32.partialorder %v5783, %v5926
      %vm6072 = vcmp.ge.f32.partialorder %v5784, %v5926
      %vm6073 = vcmp.ge.f32.partialorder %v5785, %v5926
      %vm6074 = vcmp.ge.f32.partialorder %v5786, %v5926
      %vm6075 = vcmp.ge.f32.partialorder %v5787, %v5931
      %vm6076 = vcmp.ge.f32.partialorder %v5788, %v5931
      %vm6077 = vcmp.ge.f32.partialorder %v5789, %v5931
      %vm6078 = vcmp.ge.f32.partialorder %v5790, %v5931
      %vm6079 = vcmp.ge.f32.partialorder %v5791, %v5936
      %vm6080 = vcmp.ge.f32.partialorder %v5792, %v5936
      %vm6081 = vcmp.ge.f32.partialorder %v5793, %v5936
      %vm6082 = vcmp.ge.f32.partialorder %v5794, %v5936
      %vm6083 = vcmp.ge.f32.partialorder %v5795, %v5941
      %vm6084 = vcmp.ge.f32.partialorder %v5796, %v5941
      %vm6085 = vcmp.ge.f32.partialorder %v5797, %v5941
      %vm6086 = vcmp.ge.f32.partialorder %v5798, %v5941
      %vm6087 = vcmp.ge.f32.partialorder %v5799, %v5946
      %vm6088 = vcmp.ge.f32.partialorder %v5800, %v5946
      %vm6089 = vcmp.ge.f32.partialorder %v5801, %v5946
      %vm6090 = vcmp.ge.f32.partialorder %v5802, %v5946
      %vm6091 = vcmp.ge.f32.partialorder %v5803, %v5951
      %vm6092 = vcmp.ge.f32.partialorder %v5804, %v5951
      %vm6093 = vcmp.ge.f32.partialorder %v5805, %v5951
      %vm6094 = vcmp.ge.f32.partialorder %v5806, %v5951
      %vm6095 = vcmp.ge.f32.partialorder %v5807, %v5956
      %vm6096 = vcmp.ge.f32.partialorder %v5808, %v5956
      %vm6097 = vcmp.ge.f32.partialorder %v5809, %v5956
      %vm6098 = vcmp.ge.f32.partialorder %v5810, %v5956
      %vm6099 = vcmp.ge.f32.partialorder %v5811, %v5961
      %vm6100 = vcmp.ge.f32.partialorder %v5812, %v5961
      %vm6101 = vcmp.ge.f32.partialorder %v5813, %v5961
      %vm6102 = vcmp.ge.f32.partialorder %v5814, %v5961
      %vm6103 = vcmp.ge.f32.partialorder %v5815, %v5966
      %vm6104 = vcmp.ge.f32.partialorder %v5816, %v5966
      %vm6105 = vcmp.ge.f32.partialorder %v5817, %v5966
      %vm6106 = vcmp.ge.f32.partialorder %v5818, %v5966
      %vm6107 = vcmp.ge.f32.partialorder %v5819, %v5971
      %vm6108 = vcmp.ge.f32.partialorder %v5820, %v5971
      %vm6109 = vcmp.ge.f32.partialorder %v5821, %v5971
      %vm6110 = vcmp.ge.f32.partialorder %v5822, %v5971
      %vm6111 = vcmp.ge.f32.partialorder %v5823, %v5976
      %vm6112 = vcmp.ge.f32.partialorder %v5824, %v5976
      %vm6113 = vcmp.ge.f32.partialorder %v5825, %v5976
      %vm6114 = vcmp.ge.f32.partialorder %v5826, %v5976
      %vm6115 = vcmp.ge.f32.partialorder %v5827, %v5981
      %vm6116 = vcmp.ge.f32.partialorder %v5828, %v5981
      %vm6117 = vcmp.ge.f32.partialorder %v5829, %v5981
      %vm6118 = vcmp.ge.f32.partialorder %v5830, %v5981
      %vm6119 = vcmp.ge.f32.partialorder %v5831, %v5986
      %vm6120 = vcmp.ge.f32.partialorder %v5832, %v5986
      %vm6121 = vcmp.ge.f32.partialorder %v5833, %v5986
      %vm6122 = vcmp.ge.f32.partialorder %v5834, %v5986
      %vm6123 = vcmp.ge.f32.partialorder %v5835, %v5991
      %vm6124 = vcmp.ge.f32.partialorder %v5836, %v5991
      %vm6125 = vcmp.ge.f32.partialorder %v5837, %v5991
      %vm6126 = vcmp.ge.f32.partialorder %v5838, %v5991
      %vm6127 = vcmp.ge.f32.partialorder %v5839, %v5996
      %vm6128 = vcmp.ge.f32.partialorder %v5840, %v5996
      %vm6129 = vcmp.ge.f32.partialorder %v5841, %v5996
      %vm6130 = vcmp.ge.f32.partialorder %v5842, %v5996
      %vm6131 = vcmp.ge.f32.partialorder %v5843, %v6001
      %vm6132 = vcmp.ge.f32.partialorder %v5844, %v6001
      %vm6133 = vcmp.ge.f32.partialorder %v5845, %v6001
      %vm6134 = vcmp.ge.f32.partialorder %v5846, %v6001
      %vm6135 = vcmp.ge.f32.partialorder %v5847, %v6006
      %vm6136 = vcmp.ge.f32.partialorder %v5848, %v6006
      %vm6137 = vcmp.ge.f32.partialorder %v5849, %v6006
      %vm6138 = vcmp.ge.f32.partialorder %v5850, %v6006
      %vm6139 = vcmp.ge.f32.partialorder %v5851, %v6011
      %vm6140 = vcmp.ge.f32.partialorder %v5852, %v6011
      %vm6141 = vcmp.ge.f32.partialorder %v5853, %v6011
      %vm6142 = vcmp.ge.f32.partialorder %v5854, %v6011
      %vm6143 = vcmp.ge.f32.partialorder %v5855, %v6016
      %vm6144 = vcmp.ge.f32.partialorder %v5856, %v6016
      %vm6145 = vcmp.ge.f32.partialorder %v5857, %v6016
      %vm6146 = vcmp.ge.f32.partialorder %v5858, %v6016
      %vm6147 = vcmp.ge.f32.partialorder %v5859, %v6021
      %vm6148 = vcmp.ge.f32.partialorder %v5860, %v6021
      %vm6149 = vcmp.ge.f32.partialorder %v5861, %v6021
      %vm6150 = vcmp.ge.f32.partialorder %v5862, %v6021
      %vm6151 = vcmp.ge.f32.partialorder %v5863, %v6026
      %vm6152 = vcmp.ge.f32.partialorder %v5864, %v6026
      %vm6153 = vcmp.ge.f32.partialorder %v5865, %v6026
      %vm6154 = vcmp.ge.f32.partialorder %v5866, %v6026
      %v6155 = vsel %vm6027, %v1106, 512
      %v6156 = vsel %vm6028, %v1107, 512
      %v6157 = vsel %vm6029, %v1108, 512
      %v6158 = vsel %vm6030, %v1109, 512
      %v6159 = vsel %vm6031, %v1106, 512
      %v6160 = vsel %vm6032, %v1107, 512
      %v6161 = vsel %vm6033, %v1108, 512
      %v6162 = vsel %vm6034, %v1109, 512
      %v6163 = vsel %vm6035, %v1106, 512
      %v6164 = vsel %vm6036, %v1107, 512
      %v6165 = vsel %vm6037, %v1108, 512
      %v6166 = vsel %vm6038, %v1109, 512
      %v6167 = vsel %vm6039, %v1106, 512
      %v6168 = vsel %vm6040, %v1107, 512
      %v6169 = vsel %vm6041, %v1108, 512
      %v6170 = vsel %vm6042, %v1109, 512
      %v6171 = vsel %vm6043, %v1106, 512
      %v6172 = vsel %vm6044, %v1107, 512
      %v6173 = vsel %vm6045, %v1108, 512
      %v6174 = vsel %vm6046, %v1109, 512
      %v6175 = vsel %vm6047, %v1106, 512
      %v6176 = vsel %vm6048, %v1107, 512
      %v6177 = vsel %vm6049, %v1108, 512
      %v6178 = vsel %vm6050, %v1109, 512
      %v6179 = vsel %vm6051, %v1106, 512
      %v6180 = vsel %vm6052, %v1107, 512
      %v6181 = vsel %vm6053, %v1108, 512
      %v6182 = vsel %vm6054, %v1109, 512
      %v6183 = vsel %vm6055, %v1106, 512
      %v6184 = vsel %vm6056, %v1107, 512
      %v6185 = vsel %vm6057, %v1108, 512
      %v6186 = vsel %vm6058, %v1109, 512
      %v6187 = vsel %vm6059, %v1106, 512
      %v6188 = vsel %vm6060, %v1107, 512
      %v6189 = vsel %vm6061, %v1108, 512
      %v6190 = vsel %vm6062, %v1109, 512
      %v6191 = vsel %vm6063, %v1106, 512
      %v6192 = vsel %vm6064, %v1107, 512
      %v6193 = vsel %vm6065, %v1108, 512
      %v6194 = vsel %vm6066, %v1109, 512
      %v6195 = vsel %vm6067, %v1106, 512
      %v6196 = vsel %vm6068, %v1107, 512
      %v6197 = vsel %vm6069, %v1108, 512
      %v6198 = vsel %vm6070, %v1109, 512
      %v6199 = vsel %vm6071, %v1106, 512
      %v6200 = vsel %vm6072, %v1107, 512
      %v6201 = vsel %vm6073, %v1108, 512
      %v6202 = vsel %vm6074, %v1109, 512
      %v6203 = vsel %vm6075, %v1106, 512
      %v6204 = vsel %vm6076, %v1107, 512
      %v6205 = vsel %vm6077, %v1108, 512
      %v6206 = vsel %vm6078, %v1109, 512
      %v6207 = vsel %vm6079, %v1106, 512
      %v6208 = vsel %vm6080, %v1107, 512
      %v6209 = vsel %vm6081, %v1108, 512
      %v6210 = vsel %vm6082, %v1109, 512
      %v6211 = vsel %vm6083, %v1106, 512
      %v6212 = vsel %vm6084, %v1107, 512
      %v6213 = vsel %vm6085, %v1108, 512
      %v6214 = vsel %vm6086, %v1109, 512
      %v6215 = vsel %vm6087, %v1106, 512
      %v6216 = vsel %vm6088, %v1107, 512
      %v6217 = vsel %vm6089, %v1108, 512
      %v6218 = vsel %vm6090, %v1109, 512
      %v6219 = vsel %vm6091, %v1106, 512
      %v6220 = vsel %vm6092, %v1107, 512
      %v6221 = vsel %vm6093, %v1108, 512
      %v6222 = vsel %vm6094, %v1109, 512
      %v6223 = vsel %vm6095, %v1106, 512
      %v6224 = vsel %vm6096, %v1107, 512
      %v6225 = vsel %vm6097, %v1108, 512
      %v6226 = vsel %vm6098, %v1109, 512
      %v6227 = vsel %vm6099, %v1106, 512
      %v6228 = vsel %vm6100, %v1107, 512
      %v6229 = vsel %vm6101, %v1108, 512
      %v6230 = vsel %vm6102, %v1109, 512
      %v6231 = vsel %vm6103, %v1106, 512
      %v6232 = vsel %vm6104, %v1107, 512
      %v6233 = vsel %vm6105, %v1108, 512
      %v6234 = vsel %vm6106, %v1109, 512
      %v6235 = vsel %vm6107, %v1106, 512
      %v6236 = vsel %vm6108, %v1107, 512
      %v6237 = vsel %vm6109, %v1108, 512
      %v6238 = vsel %vm6110, %v1109, 512
      %v6239 = vsel %vm6111, %v1106, 512
      %v6240 = vsel %vm6112, %v1107, 512
      %v6241 = vsel %vm6113, %v1108, 512
      %v6242 = vsel %vm6114, %v1109, 512
      %v6243 = vsel %vm6115, %v1106, 512
      %v6244 = vsel %vm6116, %v1107, 512
      %v6245 = vsel %vm6117, %v1108, 512
      %v6246 = vsel %vm6118, %v1109, 512
      %v6247 = vsel %vm6119, %v1106, 512
      %v6248 = vsel %vm6120, %v1107, 512
      %v6249 = vsel %vm6121, %v1108, 512
      %v6250 = vsel %vm6122, %v1109, 512
      %v6251 = vsel %vm6123, %v1106, 512
      %v6252 = vsel %vm6124, %v1107, 512
      %v6253 = vsel %vm6125, %v1108, 512
      %v6254 = vsel %vm6126, %v1109, 512
      %v6255 = vsel %vm6127, %v1106, 512
      %v6256 = vsel %vm6128, %v1107, 512
      %v6257 = vsel %vm6129, %v1108, 512
      %v6258 = vsel %vm6130, %v1109, 512
      %v6259 = vsel %vm6131, %v1106, 512
      %v6260 = vsel %vm6132, %v1107, 512
      %v6261 = vsel %vm6133, %v1108, 512
      %v6262 = vsel %vm6134, %v1109, 512
      %v6263 = vsel %vm6135, %v1106, 512
      %v6264 = vsel %vm6136, %v1107, 512
      %v6265 = vsel %vm6137, %v1108, 512
      %v6266 = vsel %vm6138, %v1109, 512
      %v6267 = vsel %vm6139, %v1106, 512
      %v6268 = vsel %vm6140, %v1107, 512
      %v6269 = vsel %vm6141, %v1108, 512
      %v6270 = vsel %vm6142, %v1109, 512
      %v6271 = vsel %vm6143, %v1106, 512
      %v6272 = vsel %vm6144, %v1107, 512
      %v6273 = vsel %vm6145, %v1108, 512
      %v6274 = vsel %vm6146, %v1109, 512
      %v6275 = vsel %vm6147, %v1106, 512
      %v6276 = vsel %vm6148, %v1107, 512
      %v6277 = vsel %vm6149, %v1108, 512
      %v6278 = vsel %vm6150, %v1109, 512
      %v6279 = vsel %vm6151, %v1106, 512
      %v6280 = vsel %vm6152, %v1107, 512
      %v6281 = vsel %vm6153, %v1108, 512
      %v6282 = vsel %vm6154, %v1109, 512
      %vm6283 = vcmp.lt.s32.totalorder %v6155, %v6156
      %v6284 = vsel %vm6283, %v6155, %v6156
      %vm6285 = vcmp.lt.s32.totalorder %v6284, %v6157
      %v6286 = vsel %vm6285, %v6284, %v6157
      %vm6287 = vcmp.lt.s32.totalorder %v6286, %v6158
      %v6288 = vsel %vm6287, %v6286, %v6158
      %v6289 = vand.u32 %v6288, 65535
      %v6290 = vshra.s32 %v6288, 16
      %v6291 = vcvt.s32.f32 %v6289
      %v6292 = vcvt.s32.f32 %v6290
      %6293 = vmin.xlane.f32.xlu0 %v6292
      %v6294 = vpop.xlane.xlu0 %6293
      %vm6295 = vcmp.eq.f32.partialorder %v6292, %v6294
      %v6296 = vsel %vm6295, %v6291, inf
      %6297 = vmin.xlane.f32.xlu0 %v6296
      %v6298 = vpop.xlane.xlu0 %6297
      %v6299 = vcvt.f32.s32 %v6298
      %v6300 = vcvt.f32.s32 %v6294
      %v6301 = vshll.u32 %v6300, 16
      %v6302 = vadd.s32 %v6301, %v6299
      %vm6303 = vcmp.lt.s32.totalorder %v6159, %v6160
      %v6304 = vsel %vm6303, %v6159, %v6160
      %vm6305 = vcmp.lt.s32.totalorder %v6304, %v6161
      %v6306 = vsel %vm6305, %v6304, %v6161
      %vm6307 = vcmp.lt.s32.totalorder %v6306, %v6162
      %v6308 = vsel %vm6307, %v6306, %v6162
      %v6309 = vand.u32 %v6308, 65535
      %v6310 = vshra.s32 %v6308, 16
      %v6311 = vcvt.s32.f32 %v6309
      %v6312 = vcvt.s32.f32 %v6310
      %6313 = vmin.xlane.f32.xlu0 %v6312
      %v6314 = vpop.xlane.xlu0 %6313
      %vm6315 = vcmp.eq.f32.partialorder %v6312, %v6314
      %v6316 = vsel %vm6315, %v6311, inf
      %6317 = vmin.xlane.f32.xlu0 %v6316
      %v6318 = vpop.xlane.xlu0 %6317
      %v6319 = vcvt.f32.s32 %v6318
      %v6320 = vcvt.f32.s32 %v6314
      %v6321 = vshll.u32 %v6320, 16
      %v6322 = vadd.s32 %v6321, %v6319
      %vm6323 = vcmp.lt.s32.totalorder %v6163, %v6164
      %v6324 = vsel %vm6323, %v6163, %v6164
      %vm6325 = vcmp.lt.s32.totalorder %v6324, %v6165
      %v6326 = vsel %vm6325, %v6324, %v6165
      %vm6327 = vcmp.lt.s32.totalorder %v6326, %v6166
      %v6328 = vsel %vm6327, %v6326, %v6166
      %v6329 = vand.u32 %v6328, 65535
      %v6330 = vshra.s32 %v6328, 16
      %v6331 = vcvt.s32.f32 %v6329
      %v6332 = vcvt.s32.f32 %v6330
      %6333 = vmin.xlane.f32.xlu0 %v6332
      %v6334 = vpop.xlane.xlu0 %6333
      %vm6335 = vcmp.eq.f32.partialorder %v6332, %v6334
      %v6336 = vsel %vm6335, %v6331, inf
      %6337 = vmin.xlane.f32.xlu0 %v6336
      %v6338 = vpop.xlane.xlu0 %6337
      %v6339 = vcvt.f32.s32 %v6338
      %v6340 = vcvt.f32.s32 %v6334
      %v6341 = vshll.u32 %v6340, 16
      %v6342 = vadd.s32 %v6341, %v6339
      %vm6343 = vcmp.lt.s32.totalorder %v6167, %v6168
      %v6344 = vsel %vm6343, %v6167, %v6168
      %vm6345 = vcmp.lt.s32.totalorder %v6344, %v6169
      %v6346 = vsel %vm6345, %v6344, %v6169
      %vm6347 = vcmp.lt.s32.totalorder %v6346, %v6170
      %v6348 = vsel %vm6347, %v6346, %v6170
      %v6349 = vand.u32 %v6348, 65535
      %v6350 = vshra.s32 %v6348, 16
      %v6351 = vcvt.s32.f32 %v6349
      %v6352 = vcvt.s32.f32 %v6350
      %6353 = vmin.xlane.f32.xlu0 %v6352
      %v6354 = vpop.xlane.xlu0 %6353
      %vm6355 = vcmp.eq.f32.partialorder %v6352, %v6354
      %v6356 = vsel %vm6355, %v6351, inf
      %6357 = vmin.xlane.f32.xlu0 %v6356
      %v6358 = vpop.xlane.xlu0 %6357
      %v6359 = vcvt.f32.s32 %v6358
      %v6360 = vcvt.f32.s32 %v6354
      %v6361 = vshll.u32 %v6360, 16
      %v6362 = vadd.s32 %v6361, %v6359
      %vm6363 = vcmp.lt.s32.totalorder %v6171, %v6172
      %v6364 = vsel %vm6363, %v6171, %v6172
      %vm6365 = vcmp.lt.s32.totalorder %v6364, %v6173
      %v6366 = vsel %vm6365, %v6364, %v6173
      %vm6367 = vcmp.lt.s32.totalorder %v6366, %v6174
      %v6368 = vsel %vm6367, %v6366, %v6174
      %v6369 = vand.u32 %v6368, 65535
      %v6370 = vshra.s32 %v6368, 16
      %v6371 = vcvt.s32.f32 %v6369
      %v6372 = vcvt.s32.f32 %v6370
      %6373 = vmin.xlane.f32.xlu0 %v6372
      %v6374 = vpop.xlane.xlu0 %6373
      %vm6375 = vcmp.eq.f32.partialorder %v6372, %v6374
      %v6376 = vsel %vm6375, %v6371, inf
      %6377 = vmin.xlane.f32.xlu0 %v6376
      %v6378 = vpop.xlane.xlu0 %6377
      %v6379 = vcvt.f32.s32 %v6378
      %v6380 = vcvt.f32.s32 %v6374
      %v6381 = vshll.u32 %v6380, 16
      %v6382 = vadd.s32 %v6381, %v6379
      %vm6383 = vcmp.lt.s32.totalorder %v6175, %v6176
      %v6384 = vsel %vm6383, %v6175, %v6176
      %vm6385 = vcmp.lt.s32.totalorder %v6384, %v6177
      %v6386 = vsel %vm6385, %v6384, %v6177
      %vm6387 = vcmp.lt.s32.totalorder %v6386, %v6178
      %v6388 = vsel %vm6387, %v6386, %v6178
      %v6389 = vand.u32 %v6388, 65535
      %v6390 = vshra.s32 %v6388, 16
      %v6391 = vcvt.s32.f32 %v6389
      %v6392 = vcvt.s32.f32 %v6390
      %6393 = vmin.xlane.f32.xlu0 %v6392
      %v6394 = vpop.xlane.xlu0 %6393
      %vm6395 = vcmp.eq.f32.partialorder %v6392, %v6394
      %v6396 = vsel %vm6395, %v6391, inf
      %6397 = vmin.xlane.f32.xlu0 %v6396
      %v6398 = vpop.xlane.xlu0 %6397
      %v6399 = vcvt.f32.s32 %v6398
      %v6400 = vcvt.f32.s32 %v6394
      %v6401 = vshll.u32 %v6400, 16
      %v6402 = vadd.s32 %v6401, %v6399
      %vm6403 = vcmp.lt.s32.totalorder %v6179, %v6180
      %v6404 = vsel %vm6403, %v6179, %v6180
      %vm6405 = vcmp.lt.s32.totalorder %v6404, %v6181
      %v6406 = vsel %vm6405, %v6404, %v6181
      %vm6407 = vcmp.lt.s32.totalorder %v6406, %v6182
      %v6408 = vsel %vm6407, %v6406, %v6182
      %v6409 = vand.u32 %v6408, 65535
      %v6410 = vshra.s32 %v6408, 16
      %v6411 = vcvt.s32.f32 %v6409
      %v6412 = vcvt.s32.f32 %v6410
      %6413 = vmin.xlane.f32.xlu0 %v6412
      %v6414 = vpop.xlane.xlu0 %6413
      %vm6415 = vcmp.eq.f32.partialorder %v6412, %v6414
      %v6416 = vsel %vm6415, %v6411, inf
      %6417 = vmin.xlane.f32.xlu0 %v6416
      %v6418 = vpop.xlane.xlu0 %6417
      %v6419 = vcvt.f32.s32 %v6418
      %v6420 = vcvt.f32.s32 %v6414
      %v6421 = vshll.u32 %v6420, 16
      %v6422 = vadd.s32 %v6421, %v6419
      %vm6423 = vcmp.lt.s32.totalorder %v6183, %v6184
      %v6424 = vsel %vm6423, %v6183, %v6184
      %vm6425 = vcmp.lt.s32.totalorder %v6424, %v6185
      %v6426 = vsel %vm6425, %v6424, %v6185
      %vm6427 = vcmp.lt.s32.totalorder %v6426, %v6186
      %v6428 = vsel %vm6427, %v6426, %v6186
      %v6429 = vand.u32 %v6428, 65535
      %v6430 = vshra.s32 %v6428, 16
      %v6431 = vcvt.s32.f32 %v6429
      %v6432 = vcvt.s32.f32 %v6430
      %6433 = vmin.xlane.f32.xlu0 %v6432
      %v6434 = vpop.xlane.xlu0 %6433
      %vm6435 = vcmp.eq.f32.partialorder %v6432, %v6434
      %v6436 = vsel %vm6435, %v6431, inf
      %6437 = vmin.xlane.f32.xlu0 %v6436
      %v6438 = vpop.xlane.xlu0 %6437
      %v6439 = vcvt.f32.s32 %v6438
      %v6440 = vcvt.f32.s32 %v6434
      %v6441 = vshll.u32 %v6440, 16
      %v6442 = vadd.s32 %v6441, %v6439
      %vm6443 = vcmp.lt.s32.totalorder %v6187, %v6188
      %v6444 = vsel %vm6443, %v6187, %v6188
      %vm6445 = vcmp.lt.s32.totalorder %v6444, %v6189
      %v6446 = vsel %vm6445, %v6444, %v6189
      %vm6447 = vcmp.lt.s32.totalorder %v6446, %v6190
      %v6448 = vsel %vm6447, %v6446, %v6190
      %v6449 = vand.u32 %v6448, 65535
      %v6450 = vshra.s32 %v6448, 16
      %v6451 = vcvt.s32.f32 %v6449
      %v6452 = vcvt.s32.f32 %v6450
      %6453 = vmin.xlane.f32.xlu0 %v6452
      %v6454 = vpop.xlane.xlu0 %6453
      %vm6455 = vcmp.eq.f32.partialorder %v6452, %v6454
      %v6456 = vsel %vm6455, %v6451, inf
      %6457 = vmin.xlane.f32.xlu0 %v6456
      %v6458 = vpop.xlane.xlu0 %6457
      %v6459 = vcvt.f32.s32 %v6458
      %v6460 = vcvt.f32.s32 %v6454
      %v6461 = vshll.u32 %v6460, 16
      %v6462 = vadd.s32 %v6461, %v6459
      %vm6463 = vcmp.lt.s32.totalorder %v6191, %v6192
      %v6464 = vsel %vm6463, %v6191, %v6192
      %vm6465 = vcmp.lt.s32.totalorder %v6464, %v6193
      %v6466 = vsel %vm6465, %v6464, %v6193
      %vm6467 = vcmp.lt.s32.totalorder %v6466, %v6194
      %v6468 = vsel %vm6467, %v6466, %v6194
      %v6469 = vand.u32 %v6468, 65535
      %v6470 = vshra.s32 %v6468, 16
      %v6471 = vcvt.s32.f32 %v6469
      %v6472 = vcvt.s32.f32 %v6470
      %6473 = vmin.xlane.f32.xlu0 %v6472
      %v6474 = vpop.xlane.xlu0 %6473
      %vm6475 = vcmp.eq.f32.partialorder %v6472, %v6474
      %v6476 = vsel %vm6475, %v6471, inf
      %6477 = vmin.xlane.f32.xlu0 %v6476
      %v6478 = vpop.xlane.xlu0 %6477
      %v6479 = vcvt.f32.s32 %v6478
      %v6480 = vcvt.f32.s32 %v6474
      %v6481 = vshll.u32 %v6480, 16
      %v6482 = vadd.s32 %v6481, %v6479
      %vm6483 = vcmp.lt.s32.totalorder %v6195, %v6196
      %v6484 = vsel %vm6483, %v6195, %v6196
      %vm6485 = vcmp.lt.s32.totalorder %v6484, %v6197
      %v6486 = vsel %vm6485, %v6484, %v6197
      %vm6487 = vcmp.lt.s32.totalorder %v6486, %v6198
      %v6488 = vsel %vm6487, %v6486, %v6198
      %v6489 = vand.u32 %v6488, 65535
      %v6490 = vshra.s32 %v6488, 16
      %v6491 = vcvt.s32.f32 %v6489
      %v6492 = vcvt.s32.f32 %v6490
      %6493 = vmin.xlane.f32.xlu0 %v6492
      %v6494 = vpop.xlane.xlu0 %6493
      %vm6495 = vcmp.eq.f32.partialorder %v6492, %v6494
      %v6496 = vsel %vm6495, %v6491, inf
      %6497 = vmin.xlane.f32.xlu0 %v6496
      %v6498 = vpop.xlane.xlu0 %6497
      %v6499 = vcvt.f32.s32 %v6498
      %v6500 = vcvt.f32.s32 %v6494
      %v6501 = vshll.u32 %v6500, 16
      %v6502 = vadd.s32 %v6501, %v6499
      %vm6503 = vcmp.lt.s32.totalorder %v6199, %v6200
      %v6504 = vsel %vm6503, %v6199, %v6200
      %vm6505 = vcmp.lt.s32.totalorder %v6504, %v6201
      %v6506 = vsel %vm6505, %v6504, %v6201
      %vm6507 = vcmp.lt.s32.totalorder %v6506, %v6202
      %v6508 = vsel %vm6507, %v6506, %v6202
      %v6509 = vand.u32 %v6508, 65535
      %v6510 = vshra.s32 %v6508, 16
      %v6511 = vcvt.s32.f32 %v6509
      %v6512 = vcvt.s32.f32 %v6510
      %6513 = vmin.xlane.f32.xlu0 %v6512
      %v6514 = vpop.xlane.xlu0 %6513
      %vm6515 = vcmp.eq.f32.partialorder %v6512, %v6514
      %v6516 = vsel %vm6515, %v6511, inf
      %6517 = vmin.xlane.f32.xlu0 %v6516
      %v6518 = vpop.xlane.xlu0 %6517
      %v6519 = vcvt.f32.s32 %v6518
      %v6520 = vcvt.f32.s32 %v6514
      %v6521 = vshll.u32 %v6520, 16
      %v6522 = vadd.s32 %v6521, %v6519
      %vm6523 = vcmp.lt.s32.totalorder %v6203, %v6204
      %v6524 = vsel %vm6523, %v6203, %v6204
      %vm6525 = vcmp.lt.s32.totalorder %v6524, %v6205
      %v6526 = vsel %vm6525, %v6524, %v6205
      %vm6527 = vcmp.lt.s32.totalorder %v6526, %v6206
      %v6528 = vsel %vm6527, %v6526, %v6206
      %v6529 = vand.u32 %v6528, 65535
      %v6530 = vshra.s32 %v6528, 16
      %v6531 = vcvt.s32.f32 %v6529
      %v6532 = vcvt.s32.f32 %v6530
      %6533 = vmin.xlane.f32.xlu0 %v6532
      %v6534 = vpop.xlane.xlu0 %6533
      %vm6535 = vcmp.eq.f32.partialorder %v6532, %v6534
      %v6536 = vsel %vm6535, %v6531, inf
      %6537 = vmin.xlane.f32.xlu0 %v6536
      %v6538 = vpop.xlane.xlu0 %6537
      %v6539 = vcvt.f32.s32 %v6538
      %v6540 = vcvt.f32.s32 %v6534
      %v6541 = vshll.u32 %v6540, 16
      %v6542 = vadd.s32 %v6541, %v6539
      %vm6543 = vcmp.lt.s32.totalorder %v6207, %v6208
      %v6544 = vsel %vm6543, %v6207, %v6208
      %vm6545 = vcmp.lt.s32.totalorder %v6544, %v6209
      %v6546 = vsel %vm6545, %v6544, %v6209
      %vm6547 = vcmp.lt.s32.totalorder %v6546, %v6210
      %v6548 = vsel %vm6547, %v6546, %v6210
      %v6549 = vand.u32 %v6548, 65535
      %v6550 = vshra.s32 %v6548, 16
      %v6551 = vcvt.s32.f32 %v6549
      %v6552 = vcvt.s32.f32 %v6550
      %6553 = vmin.xlane.f32.xlu0 %v6552
      %v6554 = vpop.xlane.xlu0 %6553
      %vm6555 = vcmp.eq.f32.partialorder %v6552, %v6554
      %v6556 = vsel %vm6555, %v6551, inf
      %6557 = vmin.xlane.f32.xlu0 %v6556
      %v6558 = vpop.xlane.xlu0 %6557
      %v6559 = vcvt.f32.s32 %v6558
      %v6560 = vcvt.f32.s32 %v6554
      %v6561 = vshll.u32 %v6560, 16
      %v6562 = vadd.s32 %v6561, %v6559
      %vm6563 = vcmp.lt.s32.totalorder %v6211, %v6212
      %v6564 = vsel %vm6563, %v6211, %v6212
      %vm6565 = vcmp.lt.s32.totalorder %v6564, %v6213
      %v6566 = vsel %vm6565, %v6564, %v6213
      %vm6567 = vcmp.lt.s32.totalorder %v6566, %v6214
      %v6568 = vsel %vm6567, %v6566, %v6214
      %v6569 = vand.u32 %v6568, 65535
      %v6570 = vshra.s32 %v6568, 16
      %v6571 = vcvt.s32.f32 %v6569
      %v6572 = vcvt.s32.f32 %v6570
      %6573 = vmin.xlane.f32.xlu0 %v6572
      %v6574 = vpop.xlane.xlu0 %6573
      %vm6575 = vcmp.eq.f32.partialorder %v6572, %v6574
      %v6576 = vsel %vm6575, %v6571, inf
      %6577 = vmin.xlane.f32.xlu0 %v6576
      %v6578 = vpop.xlane.xlu0 %6577
      %v6579 = vcvt.f32.s32 %v6578
      %v6580 = vcvt.f32.s32 %v6574
      %v6581 = vshll.u32 %v6580, 16
      %v6582 = vadd.s32 %v6581, %v6579
      %vm6583 = vcmp.lt.s32.totalorder %v6215, %v6216
      %v6584 = vsel %vm6583, %v6215, %v6216
      %vm6585 = vcmp.lt.s32.totalorder %v6584, %v6217
      %v6586 = vsel %vm6585, %v6584, %v6217
      %vm6587 = vcmp.lt.s32.totalorder %v6586, %v6218
      %v6588 = vsel %vm6587, %v6586, %v6218
      %v6589 = vand.u32 %v6588, 65535
      %v6590 = vshra.s32 %v6588, 16
      %v6591 = vcvt.s32.f32 %v6589
      %v6592 = vcvt.s32.f32 %v6590
      %6593 = vmin.xlane.f32.xlu0 %v6592
      %v6594 = vpop.xlane.xlu0 %6593
      %vm6595 = vcmp.eq.f32.partialorder %v6592, %v6594
      %v6596 = vsel %vm6595, %v6591, inf
      %6597 = vmin.xlane.f32.xlu0 %v6596
      %v6598 = vpop.xlane.xlu0 %6597
      %v6599 = vcvt.f32.s32 %v6598
      %v6600 = vcvt.f32.s32 %v6594
      %v6601 = vshll.u32 %v6600, 16
      %v6602 = vadd.s32 %v6601, %v6599
      %vm6603 = vcmp.lt.s32.totalorder %v6219, %v6220
      %v6604 = vsel %vm6603, %v6219, %v6220
      %vm6605 = vcmp.lt.s32.totalorder %v6604, %v6221
      %v6606 = vsel %vm6605, %v6604, %v6221
      %vm6607 = vcmp.lt.s32.totalorder %v6606, %v6222
      %v6608 = vsel %vm6607, %v6606, %v6222
      %v6609 = vand.u32 %v6608, 65535
      %v6610 = vshra.s32 %v6608, 16
      %v6611 = vcvt.s32.f32 %v6609
      %v6612 = vcvt.s32.f32 %v6610
      %6613 = vmin.xlane.f32.xlu0 %v6612
      %v6614 = vpop.xlane.xlu0 %6613
      %vm6615 = vcmp.eq.f32.partialorder %v6612, %v6614
      %v6616 = vsel %vm6615, %v6611, inf
      %6617 = vmin.xlane.f32.xlu0 %v6616
      %v6618 = vpop.xlane.xlu0 %6617
      %v6619 = vcvt.f32.s32 %v6618
      %v6620 = vcvt.f32.s32 %v6614
      %v6621 = vshll.u32 %v6620, 16
      %v6622 = vadd.s32 %v6621, %v6619
      %vm6623 = vcmp.lt.s32.totalorder %v6223, %v6224
      %v6624 = vsel %vm6623, %v6223, %v6224
      %vm6625 = vcmp.lt.s32.totalorder %v6624, %v6225
      %v6626 = vsel %vm6625, %v6624, %v6225
      %vm6627 = vcmp.lt.s32.totalorder %v6626, %v6226
      %v6628 = vsel %vm6627, %v6626, %v6226
      %v6629 = vand.u32 %v6628, 65535
      %v6630 = vshra.s32 %v6628, 16
      %v6631 = vcvt.s32.f32 %v6629
      %v6632 = vcvt.s32.f32 %v6630
      %6633 = vmin.xlane.f32.xlu0 %v6632
      %v6634 = vpop.xlane.xlu0 %6633
      %vm6635 = vcmp.eq.f32.partialorder %v6632, %v6634
      %v6636 = vsel %vm6635, %v6631, inf
      %6637 = vmin.xlane.f32.xlu0 %v6636
      %v6638 = vpop.xlane.xlu0 %6637
      %v6639 = vcvt.f32.s32 %v6638
      %v6640 = vcvt.f32.s32 %v6634
      %v6641 = vshll.u32 %v6640, 16
      %v6642 = vadd.s32 %v6641, %v6639
      %vm6643 = vcmp.lt.s32.totalorder %v6227, %v6228
      %v6644 = vsel %vm6643, %v6227, %v6228
      %vm6645 = vcmp.lt.s32.totalorder %v6644, %v6229
      %v6646 = vsel %vm6645, %v6644, %v6229
      %vm6647 = vcmp.lt.s32.totalorder %v6646, %v6230
      %v6648 = vsel %vm6647, %v6646, %v6230
      %v6649 = vand.u32 %v6648, 65535
      %v6650 = vshra.s32 %v6648, 16
      %v6651 = vcvt.s32.f32 %v6649
      %v6652 = vcvt.s32.f32 %v6650
      %6653 = vmin.xlane.f32.xlu0 %v6652
      %v6654 = vpop.xlane.xlu0 %6653
      %vm6655 = vcmp.eq.f32.partialorder %v6652, %v6654
      %v6656 = vsel %vm6655, %v6651, inf
      %6657 = vmin.xlane.f32.xlu0 %v6656
      %v6658 = vpop.xlane.xlu0 %6657
      %v6659 = vcvt.f32.s32 %v6658
      %v6660 = vcvt.f32.s32 %v6654
      %v6661 = vshll.u32 %v6660, 16
      %v6662 = vadd.s32 %v6661, %v6659
      %vm6663 = vcmp.lt.s32.totalorder %v6231, %v6232
      %v6664 = vsel %vm6663, %v6231, %v6232
      %vm6665 = vcmp.lt.s32.totalorder %v6664, %v6233
      %v6666 = vsel %vm6665, %v6664, %v6233
      %vm6667 = vcmp.lt.s32.totalorder %v6666, %v6234
      %v6668 = vsel %vm6667, %v6666, %v6234
      %v6669 = vand.u32 %v6668, 65535
      %v6670 = vshra.s32 %v6668, 16
      %v6671 = vcvt.s32.f32 %v6669
      %v6672 = vcvt.s32.f32 %v6670
      %6673 = vmin.xlane.f32.xlu0 %v6672
      %v6674 = vpop.xlane.xlu0 %6673
      %vm6675 = vcmp.eq.f32.partialorder %v6672, %v6674
      %v6676 = vsel %vm6675, %v6671, inf
      %6677 = vmin.xlane.f32.xlu0 %v6676
      %v6678 = vpop.xlane.xlu0 %6677
      %v6679 = vcvt.f32.s32 %v6678
      %v6680 = vcvt.f32.s32 %v6674
      %v6681 = vshll.u32 %v6680, 16
      %v6682 = vadd.s32 %v6681, %v6679
      %vm6683 = vcmp.lt.s32.totalorder %v6235, %v6236
      %v6684 = vsel %vm6683, %v6235, %v6236
      %vm6685 = vcmp.lt.s32.totalorder %v6684, %v6237
      %v6686 = vsel %vm6685, %v6684, %v6237
      %vm6687 = vcmp.lt.s32.totalorder %v6686, %v6238
      %v6688 = vsel %vm6687, %v6686, %v6238
      %v6689 = vand.u32 %v6688, 65535
      %v6690 = vshra.s32 %v6688, 16
      %v6691 = vcvt.s32.f32 %v6689
      %v6692 = vcvt.s32.f32 %v6690
      %6693 = vmin.xlane.f32.xlu0 %v6692
      %v6694 = vpop.xlane.xlu0 %6693
      %vm6695 = vcmp.eq.f32.partialorder %v6692, %v6694
      %v6696 = vsel %vm6695, %v6691, inf
      %6697 = vmin.xlane.f32.xlu0 %v6696
      %v6698 = vpop.xlane.xlu0 %6697
      %v6699 = vcvt.f32.s32 %v6698
      %v6700 = vcvt.f32.s32 %v6694
      %v6701 = vshll.u32 %v6700, 16
      %v6702 = vadd.s32 %v6701, %v6699
      %vm6703 = vcmp.lt.s32.totalorder %v6239, %v6240
      %v6704 = vsel %vm6703, %v6239, %v6240
      %vm6705 = vcmp.lt.s32.totalorder %v6704, %v6241
      %v6706 = vsel %vm6705, %v6704, %v6241
      %vm6707 = vcmp.lt.s32.totalorder %v6706, %v6242
      %v6708 = vsel %vm6707, %v6706, %v6242
      %v6709 = vand.u32 %v6708, 65535
      %v6710 = vshra.s32 %v6708, 16
      %v6711 = vcvt.s32.f32 %v6709
      %v6712 = vcvt.s32.f32 %v6710
      %6713 = vmin.xlane.f32.xlu0 %v6712
      %v6714 = vpop.xlane.xlu0 %6713
      %vm6715 = vcmp.eq.f32.partialorder %v6712, %v6714
      %v6716 = vsel %vm6715, %v6711, inf
      %6717 = vmin.xlane.f32.xlu0 %v6716
      %v6718 = vpop.xlane.xlu0 %6717
      %v6719 = vcvt.f32.s32 %v6718
      %v6720 = vcvt.f32.s32 %v6714
      %v6721 = vshll.u32 %v6720, 16
      %v6722 = vadd.s32 %v6721, %v6719
      %vm6723 = vcmp.lt.s32.totalorder %v6243, %v6244
      %v6724 = vsel %vm6723, %v6243, %v6244
      %vm6725 = vcmp.lt.s32.totalorder %v6724, %v6245
      %v6726 = vsel %vm6725, %v6724, %v6245
      %vm6727 = vcmp.lt.s32.totalorder %v6726, %v6246
      %v6728 = vsel %vm6727, %v6726, %v6246
      %v6729 = vand.u32 %v6728, 65535
      %v6730 = vshra.s32 %v6728, 16
      %v6731 = vcvt.s32.f32 %v6729
      %v6732 = vcvt.s32.f32 %v6730
      %6733 = vmin.xlane.f32.xlu0 %v6732
      %v6734 = vpop.xlane.xlu0 %6733
      %vm6735 = vcmp.eq.f32.partialorder %v6732, %v6734
      %v6736 = vsel %vm6735, %v6731, inf
      %6737 = vmin.xlane.f32.xlu0 %v6736
      %v6738 = vpop.xlane.xlu0 %6737
      %v6739 = vcvt.f32.s32 %v6738
      %v6740 = vcvt.f32.s32 %v6734
      %v6741 = vshll.u32 %v6740, 16
      %v6742 = vadd.s32 %v6741, %v6739
      %vm6743 = vcmp.lt.s32.totalorder %v6247, %v6248
      %v6744 = vsel %vm6743, %v6247, %v6248
      %vm6745 = vcmp.lt.s32.totalorder %v6744, %v6249
      %v6746 = vsel %vm6745, %v6744, %v6249
      %vm6747 = vcmp.lt.s32.totalorder %v6746, %v6250
      %v6748 = vsel %vm6747, %v6746, %v6250
      %v6749 = vand.u32 %v6748, 65535
      %v6750 = vshra.s32 %v6748, 16
      %v6751 = vcvt.s32.f32 %v6749
      %v6752 = vcvt.s32.f32 %v6750
      %6753 = vmin.xlane.f32.xlu0 %v6752
      %v6754 = vpop.xlane.xlu0 %6753
      %vm6755 = vcmp.eq.f32.partialorder %v6752, %v6754
      %v6756 = vsel %vm6755, %v6751, inf
      %6757 = vmin.xlane.f32.xlu0 %v6756
      %v6758 = vpop.xlane.xlu0 %6757
      %v6759 = vcvt.f32.s32 %v6758
      %v6760 = vcvt.f32.s32 %v6754
      %v6761 = vshll.u32 %v6760, 16
      %v6762 = vadd.s32 %v6761, %v6759
      %vm6763 = vcmp.lt.s32.totalorder %v6251, %v6252
      %v6764 = vsel %vm6763, %v6251, %v6252
      %vm6765 = vcmp.lt.s32.totalorder %v6764, %v6253
      %v6766 = vsel %vm6765, %v6764, %v6253
      %vm6767 = vcmp.lt.s32.totalorder %v6766, %v6254
      %v6768 = vsel %vm6767, %v6766, %v6254
      %v6769 = vand.u32 %v6768, 65535
      %v6770 = vshra.s32 %v6768, 16
      %v6771 = vcvt.s32.f32 %v6769
      %v6772 = vcvt.s32.f32 %v6770
      %6773 = vmin.xlane.f32.xlu0 %v6772
      %v6774 = vpop.xlane.xlu0 %6773
      %vm6775 = vcmp.eq.f32.partialorder %v6772, %v6774
      %v6776 = vsel %vm6775, %v6771, inf
      %6777 = vmin.xlane.f32.xlu0 %v6776
      %v6778 = vpop.xlane.xlu0 %6777
      %v6779 = vcvt.f32.s32 %v6778
      %v6780 = vcvt.f32.s32 %v6774
      %v6781 = vshll.u32 %v6780, 16
      %v6782 = vadd.s32 %v6781, %v6779
      %vm6783 = vcmp.lt.s32.totalorder %v6255, %v6256
      %v6784 = vsel %vm6783, %v6255, %v6256
      %vm6785 = vcmp.lt.s32.totalorder %v6784, %v6257
      %v6786 = vsel %vm6785, %v6784, %v6257
      %vm6787 = vcmp.lt.s32.totalorder %v6786, %v6258
      %v6788 = vsel %vm6787, %v6786, %v6258
      %v6789 = vand.u32 %v6788, 65535
      %v6790 = vshra.s32 %v6788, 16
      %v6791 = vcvt.s32.f32 %v6789
      %v6792 = vcvt.s32.f32 %v6790
      %6793 = vmin.xlane.f32.xlu0 %v6792
      %v6794 = vpop.xlane.xlu0 %6793
      %vm6795 = vcmp.eq.f32.partialorder %v6792, %v6794
      %v6796 = vsel %vm6795, %v6791, inf
      %6797 = vmin.xlane.f32.xlu0 %v6796
      %v6798 = vpop.xlane.xlu0 %6797
      %v6799 = vcvt.f32.s32 %v6798
      %v6800 = vcvt.f32.s32 %v6794
      %v6801 = vshll.u32 %v6800, 16
      %v6802 = vadd.s32 %v6801, %v6799
      %vm6803 = vcmp.lt.s32.totalorder %v6259, %v6260
      %v6804 = vsel %vm6803, %v6259, %v6260
      %vm6805 = vcmp.lt.s32.totalorder %v6804, %v6261
      %v6806 = vsel %vm6805, %v6804, %v6261
      %vm6807 = vcmp.lt.s32.totalorder %v6806, %v6262
      %v6808 = vsel %vm6807, %v6806, %v6262
      %v6809 = vand.u32 %v6808, 65535
      %v6810 = vshra.s32 %v6808, 16
      %v6811 = vcvt.s32.f32 %v6809
      %v6812 = vcvt.s32.f32 %v6810
      %6813 = vmin.xlane.f32.xlu0 %v6812
      %v6814 = vpop.xlane.xlu0 %6813
      %vm6815 = vcmp.eq.f32.partialorder %v6812, %v6814
      %v6816 = vsel %vm6815, %v6811, inf
      %6817 = vmin.xlane.f32.xlu0 %v6816
      %v6818 = vpop.xlane.xlu0 %6817
      %v6819 = vcvt.f32.s32 %v6818
      %v6820 = vcvt.f32.s32 %v6814
      %v6821 = vshll.u32 %v6820, 16
      %v6822 = vadd.s32 %v6821, %v6819
      %vm6823 = vcmp.lt.s32.totalorder %v6263, %v6264
      %v6824 = vsel %vm6823, %v6263, %v6264
      %vm6825 = vcmp.lt.s32.totalorder %v6824, %v6265
      %v6826 = vsel %vm6825, %v6824, %v6265
      %vm6827 = vcmp.lt.s32.totalorder %v6826, %v6266
      %v6828 = vsel %vm6827, %v6826, %v6266
      %v6829 = vand.u32 %v6828, 65535
      %v6830 = vshra.s32 %v6828, 16
      %v6831 = vcvt.s32.f32 %v6829
      %v6832 = vcvt.s32.f32 %v6830
      %6833 = vmin.xlane.f32.xlu0 %v6832
      %v6834 = vpop.xlane.xlu0 %6833
      %vm6835 = vcmp.eq.f32.partialorder %v6832, %v6834
      %v6836 = vsel %vm6835, %v6831, inf
      %6837 = vmin.xlane.f32.xlu0 %v6836
      %v6838 = vpop.xlane.xlu0 %6837
      %v6839 = vcvt.f32.s32 %v6838
      %v6840 = vcvt.f32.s32 %v6834
      %v6841 = vshll.u32 %v6840, 16
      %v6842 = vadd.s32 %v6841, %v6839
      %vm6843 = vcmp.lt.s32.totalorder %v6267, %v6268
      %v6844 = vsel %vm6843, %v6267, %v6268
      %vm6845 = vcmp.lt.s32.totalorder %v6844, %v6269
      %v6846 = vsel %vm6845, %v6844, %v6269
      %vm6847 = vcmp.lt.s32.totalorder %v6846, %v6270
      %v6848 = vsel %vm6847, %v6846, %v6270
      %v6849 = vand.u32 %v6848, 65535
      %v6850 = vshra.s32 %v6848, 16
      %v6851 = vcvt.s32.f32 %v6849
      %v6852 = vcvt.s32.f32 %v6850
      %6853 = vmin.xlane.f32.xlu0 %v6852
      %v6854 = vpop.xlane.xlu0 %6853
      %vm6855 = vcmp.eq.f32.partialorder %v6852, %v6854
      %v6856 = vsel %vm6855, %v6851, inf
      %6857 = vmin.xlane.f32.xlu0 %v6856
      %v6858 = vpop.xlane.xlu0 %6857
      %v6859 = vcvt.f32.s32 %v6858
      %v6860 = vcvt.f32.s32 %v6854
      %v6861 = vshll.u32 %v6860, 16
      %v6862 = vadd.s32 %v6861, %v6859
      %vm6863 = vcmp.lt.s32.totalorder %v6271, %v6272
      %v6864 = vsel %vm6863, %v6271, %v6272
      %vm6865 = vcmp.lt.s32.totalorder %v6864, %v6273
      %v6866 = vsel %vm6865, %v6864, %v6273
      %vm6867 = vcmp.lt.s32.totalorder %v6866, %v6274
      %v6868 = vsel %vm6867, %v6866, %v6274
      %v6869 = vand.u32 %v6868, 65535
      %v6870 = vshra.s32 %v6868, 16
      %v6871 = vcvt.s32.f32 %v6869
      %v6872 = vcvt.s32.f32 %v6870
      %6873 = vmin.xlane.f32.xlu0 %v6872
      %v6874 = vpop.xlane.xlu0 %6873
      %vm6875 = vcmp.eq.f32.partialorder %v6872, %v6874
      %v6876 = vsel %vm6875, %v6871, inf
      %6877 = vmin.xlane.f32.xlu0 %v6876
      %v6878 = vpop.xlane.xlu0 %6877
      %v6879 = vcvt.f32.s32 %v6878
      %v6880 = vcvt.f32.s32 %v6874
      %v6881 = vshll.u32 %v6880, 16
      %v6882 = vadd.s32 %v6881, %v6879
      %vm6883 = vcmp.lt.s32.totalorder %v6275, %v6276
      %v6884 = vsel %vm6883, %v6275, %v6276
      %vm6885 = vcmp.lt.s32.totalorder %v6884, %v6277
      %v6886 = vsel %vm6885, %v6884, %v6277
      %vm6887 = vcmp.lt.s32.totalorder %v6886, %v6278
      %v6888 = vsel %vm6887, %v6886, %v6278
      %v6889 = vand.u32 %v6888, 65535
      %v6890 = vshra.s32 %v6888, 16
      %v6891 = vcvt.s32.f32 %v6889
      %v6892 = vcvt.s32.f32 %v6890
      %6893 = vmin.xlane.f32.xlu0 %v6892
      %v6894 = vpop.xlane.xlu0 %6893
      %vm6895 = vcmp.eq.f32.partialorder %v6892, %v6894
      %v6896 = vsel %vm6895, %v6891, inf
      %6897 = vmin.xlane.f32.xlu0 %v6896
      %v6898 = vpop.xlane.xlu0 %6897
      %v6899 = vcvt.f32.s32 %v6898
      %v6900 = vcvt.f32.s32 %v6894
      %v6901 = vshll.u32 %v6900, 16
      %v6902 = vadd.s32 %v6901, %v6899
      %vm6903 = vcmp.lt.s32.totalorder %v6279, %v6280
      %v6904 = vsel %vm6903, %v6279, %v6280
      %vm6905 = vcmp.lt.s32.totalorder %v6904, %v6281
      %v6906 = vsel %vm6905, %v6904, %v6281
      %vm6907 = vcmp.lt.s32.totalorder %v6906, %v6282
      %v6908 = vsel %vm6907, %v6906, %v6282
      %v6909 = vand.u32 %v6908, 65535
      %v6910 = vshra.s32 %v6908, 16
      %v6911 = vcvt.s32.f32 %v6909
      %v6912 = vcvt.s32.f32 %v6910
      %6913 = vmin.xlane.f32.xlu0 %v6912
      %v6914 = vpop.xlane.xlu0 %6913
      %vm6915 = vcmp.eq.f32.partialorder %v6912, %v6914
      %v6916 = vsel %vm6915, %v6911, inf
      %6917 = vmin.xlane.f32.xlu0 %v6916
      %v6918 = vpop.xlane.xlu0 %6917
      %v6919 = vcvt.f32.s32 %v6918
      %v6920 = vcvt.f32.s32 %v6914
      %v6921 = vshll.u32 %v6920, 16
      %v6922 = vadd.s32 %v6921, %v6919
      %v6923 = vadd.s32 %v6302, %v2890
      %v6924 = vadd.s32 %v6322, %v2890
      %v6925 = vadd.s32 %v6342, %v2890
      %v6926 = vadd.s32 %v6362, %v2890
      %v6927 = vadd.s32 %v6382, %v2890
      %v6928 = vadd.s32 %v6402, %v2890
      %v6929 = vadd.s32 %v6422, %v2890
      %v6930 = vadd.s32 %v6442, %v2890
      %v6931 = vadd.s32 %v6462, %v2890
      %v6932 = vadd.s32 %v6482, %v2890
      %v6933 = vadd.s32 %v6502, %v2890
      %v6934 = vadd.s32 %v6522, %v2890
      %v6935 = vadd.s32 %v6542, %v2890
      %v6936 = vadd.s32 %v6562, %v2890
      %v6937 = vadd.s32 %v6582, %v2890
      %v6938 = vadd.s32 %v6602, %v2890
      %v6939 = vadd.s32 %v6622, %v2890
      %v6940 = vadd.s32 %v6642, %v2890
      %v6941 = vadd.s32 %v6662, %v2890
      %v6942 = vadd.s32 %v6682, %v2890
      %v6943 = vadd.s32 %v6702, %v2890
      %v6944 = vadd.s32 %v6722, %v2890
      %v6945 = vadd.s32 %v6742, %v2890
      %v6946 = vadd.s32 %v6762, %v2890
      %v6947 = vadd.s32 %v6782, %v2890
      %v6948 = vadd.s32 %v6802, %v2890
      %v6949 = vadd.s32 %v6822, %v2890
      %v6950 = vadd.s32 %v6842, %v2890
      %v6951 = vadd.s32 %v6862, %v2890
      %v6952 = vadd.s32 %v6882, %v2890
      %v6953 = vadd.s32 %v6902, %v2890
      %v6954 = vadd.s32 %v6922, %v2890
      %vm6955 = vcmask 7168
      %v6956 = vsel %vm6955, %v1838, %v3183
      %v6957 = vsel %vm6955, %v1843, %v3188
      %v6958 = vsel %vm6955, %v1848, %v3193
      %v6959 = vsel %vm6955, %v1853, %v3198
      %v6960 = vsel %vm6955, %v1858, %v3203
      %v6961 = vsel %vm6955, %v1863, %v3208
      %v6962 = vsel %vm6955, %v1868, %v3213
      %v6963 = vsel %vm6955, %v1873, %v3218
      %v6964 = vsel %vm6955, %v1878, %v3223
      %v6965 = vsel %vm6955, %v1883, %v3228
      %v6966 = vsel %vm6955, %v1888, %v3233
      %v6967 = vsel %vm6955, %v1893, %v3238
      %v6968 = vsel %vm6955, %v1898, %v3243
      %v6969 = vsel %vm6955, %v1903, %v3248
      %v6970 = vsel %vm6955, %v1908, %v3253
      %v6971 = vsel %vm6955, %v1913, %v3258
      %v6972 = vsel %vm6955, %v1918, %v3263
      %v6973 = vsel %vm6955, %v1923, %v3268
      %v6974 = vsel %vm6955, %v1928, %v3273
      %v6975 = vsel %vm6955, %v1933, %v3278
      %v6976 = vsel %vm6955, %v1938, %v3283
      %v6977 = vsel %vm6955, %v1943, %v3288
      %v6978 = vsel %vm6955, %v1948, %v3293
      %v6979 = vsel %vm6955, %v1953, %v3298
      %v6980 = vsel %vm6955, %v1958, %v3303
      %v6981 = vsel %vm6955, %v1963, %v3308
      %v6982 = vsel %vm6955, %v1968, %v3313
      %v6983 = vsel %vm6955, %v1973, %v3318
      %v6984 = vsel %vm6955, %v1978, %v3323
      %v6985 = vsel %vm6955, %v1983, %v3328
      %v6986 = vsel %vm6955, %v1988, %v3333
      %v6987 = vsel %vm6955, %v1993, %v3338
      %vm6988 = vcmask 15360
      %v6989 = vsel %vm6988, %v6956, %v4527
      %v6990 = vsel %vm6988, %v6957, %v4532
      %v6991 = vsel %vm6988, %v6958, %v4537
      %v6992 = vsel %vm6988, %v6959, %v4542
      %v6993 = vsel %vm6988, %v6960, %v4547
      %v6994 = vsel %vm6988, %v6961, %v4552
      %v6995 = vsel %vm6988, %v6962, %v4557
      %v6996 = vsel %vm6988, %v6963, %v4562
      %v6997 = vsel %vm6988, %v6964, %v4567
      %v6998 = vsel %vm6988, %v6965, %v4572
      %v6999 = vsel %vm6988, %v6966, %v4577
      %v7000 = vsel %vm6988, %v6967, %v4582
      %v7001 = vsel %vm6988, %v6968, %v4587
      %v7002 = vsel %vm6988, %v6969, %v4592
      %v7003 = vsel %vm6988, %v6970, %v4597
      %v7004 = vsel %vm6988, %v6971, %v4602
      %v7005 = vsel %vm6988, %v6972, %v4607
      %v7006 = vsel %vm6988, %v6973, %v4612
      %v7007 = vsel %vm6988, %v6974, %v4617
      %v7008 = vsel %vm6988, %v6975, %v4622
      %v7009 = vsel %vm6988, %v6976, %v4627
      %v7010 = vsel %vm6988, %v6977, %v4632
      %v7011 = vsel %vm6988, %v6978, %v4637
      %v7012 = vsel %vm6988, %v6979, %v4642
      %v7013 = vsel %vm6988, %v6980, %v4647
      %v7014 = vsel %vm6988, %v6981, %v4652
      %v7015 = vsel %vm6988, %v6982, %v4657
      %v7016 = vsel %vm6988, %v6983, %v4662
      %v7017 = vsel %vm6988, %v6984, %v4667
      %v7018 = vsel %vm6988, %v6985, %v4672
      %v7019 = vsel %vm6988, %v6986, %v4677
      %v7020 = vsel %vm6988, %v6987, %v4682
      %vm7021 = vcmask 23552
      %v7022 = vsel %vm7021, %v6989, %v5871
      %v7023 = vsel %vm7021, %v6990, %v5876
      %v7024 = vsel %vm7021, %v6991, %v5881
      %v7025 = vsel %vm7021, %v6992, %v5886
      %v7026 = vsel %vm7021, %v6993, %v5891
      %v7027 = vsel %vm7021, %v6994, %v5896
      %v7028 = vsel %vm7021, %v6995, %v5901
      %v7029 = vsel %vm7021, %v6996, %v5906
      %v7030 = vsel %vm7021, %v6997, %v5911
      %v7031 = vsel %vm7021, %v6998, %v5916
      %v7032 = vsel %vm7021, %v6999, %v5921
      %v7033 = vsel %vm7021, %v7000, %v5926
      %v7034 = vsel %vm7021, %v7001, %v5931
      %v7035 = vsel %vm7021, %v7002, %v5936
      %v7036 = vsel %vm7021, %v7003, %v5941
      %v7037 = vsel %vm7021, %v7004, %v5946
      %v7038 = vsel %vm7021, %v7005, %v5951
      %v7039 = vsel %vm7021, %v7006, %v5956
      %v7040 = vsel %vm7021, %v7007, %v5961
      %v7041 = vsel %vm7021, %v7008, %v5966
      %v7042 = vsel %vm7021, %v7009, %v5971
      %v7043 = vsel %vm7021, %v7010, %v5976
      %v7044 = vsel %vm7021, %v7011, %v5981
      %v7045 = vsel %vm7021, %v7012, %v5986
      %v7046 = vsel %vm7021, %v7013, %v5991
      %v7047 = vsel %vm7021, %v7014, %v5996
      %v7048 = vsel %vm7021, %v7015, %v6001
      %v7049 = vsel %vm7021, %v7016, %v6006
      %v7050 = vsel %vm7021, %v7017, %v6011
      %v7051 = vsel %vm7021, %v7018, %v6016
      %v7052 = vsel %vm7021, %v7019, %v6021
      %v7053 = vsel %vm7021, %v7020, %v6026
      %v7054 = vsel %vm6955, %v2891, %v4235
      %v7055 = vsel %vm6955, %v2892, %v4236
      %v7056 = vsel %vm6955, %v2893, %v4237
      %v7057 = vsel %vm6955, %v2894, %v4238
      %v7058 = vsel %vm6955, %v2895, %v4239
      %v7059 = vsel %vm6955, %v2896, %v4240
      %v7060 = vsel %vm6955, %v2897, %v4241
      %v7061 = vsel %vm6955, %v2898, %v4242
      %v7062 = vsel %vm6955, %v2899, %v4243
      %v7063 = vsel %vm6955, %v2900, %v4244
      %v7064 = vsel %vm6955, %v2901, %v4245
      %v7065 = vsel %vm6955, %v2902, %v4246
      %v7066 = vsel %vm6955, %v2903, %v4247
      %v7067 = vsel %vm6955, %v2904, %v4248
      %v7068 = vsel %vm6955, %v2905, %v4249
      %v7069 = vsel %vm6955, %v2906, %v4250
      %v7070 = vsel %vm6955, %v2907, %v4251
      %v7071 = vsel %vm6955, %v2908, %v4252
      %v7072 = vsel %vm6955, %v2909, %v4253
      %v7073 = vsel %vm6955, %v2910, %v4254
      %v7074 = vsel %vm6955, %v2911, %v4255
      %v7075 = vsel %vm6955, %v2912, %v4256
      %v7076 = vsel %vm6955, %v2913, %v4257
      %v7077 = vsel %vm6955, %v2914, %v4258
      %v7078 = vsel %vm6955, %v2915, %v4259
      %v7079 = vsel %vm6955, %v2916, %v4260
      %v7080 = vsel %vm6955, %v2917, %v4261
      %v7081 = vsel %vm6955, %v2918, %v4262
      %v7082 = vsel %vm6955, %v2919, %v4263
      %v7083 = vsel %vm6955, %v2920, %v4264
      %v7084 = vsel %vm6955, %v2921, %v4265
      %v7085 = vsel %vm6955, %v2922, %v4266
      %v7086 = vsel %vm6988, %v7054, %v5579
      %v7087 = vsel %vm6988, %v7055, %v5580
      %v7088 = vsel %vm6988, %v7056, %v5581
      %v7089 = vsel %vm6988, %v7057, %v5582
      %v7090 = vsel %vm6988, %v7058, %v5583
      %v7091 = vsel %vm6988, %v7059, %v5584
      %v7092 = vsel %vm6988, %v7060, %v5585
      %v7093 = vsel %vm6988, %v7061, %v5586
      %v7094 = vsel %vm6988, %v7062, %v5587
      %v7095 = vsel %vm6988, %v7063, %v5588
      %v7096 = vsel %vm6988, %v7064, %v5589
      %v7097 = vsel %vm6988, %v7065, %v5590
      %v7098 = vsel %vm6988, %v7066, %v5591
      %v7099 = vsel %vm6988, %v7067, %v5592
      %v7100 = vsel %vm6988, %v7068, %v5593
      %v7101 = vsel %vm6988, %v7069, %v5594
      %v7102 = vsel %vm6988, %v7070, %v5595
      %v7103 = vsel %vm6988, %v7071, %v5596
      %v7104 = vsel %vm6988, %v7072, %v5597
      %v7105 = vsel %vm6988, %v7073, %v5598
      %v7106 = vsel %vm6988, %v7074, %v5599
      %v7107 = vsel %vm6988, %v7075, %v5600
      %v7108 = vsel %vm6988, %v7076, %v5601
      %v7109 = vsel %vm6988, %v7077, %v5602
      %v7110 = vsel %vm6988, %v7078, %v5603
      %v7111 = vsel %vm6988, %v7079, %v5604
      %v7112 = vsel %vm6988, %v7080, %v5605
      %v7113 = vsel %vm6988, %v7081, %v5606
      %v7114 = vsel %vm6988, %v7082, %v5607
      %v7115 = vsel %vm6988, %v7083, %v5608
      %v7116 = vsel %vm6988, %v7084, %v5609
      %v7117 = vsel %vm6988, %v7085, %v5610
      %v7118 = vsel %vm7021, %v7086, %v6923
      %v7119 = vsel %vm7021, %v7087, %v6924
      %v7120 = vsel %vm7021, %v7088, %v6925
      %v7121 = vsel %vm7021, %v7089, %v6926
      %v7122 = vsel %vm7021, %v7090, %v6927
      %v7123 = vsel %vm7021, %v7091, %v6928
      %v7124 = vsel %vm7021, %v7092, %v6929
      %v7125 = vsel %vm7021, %v7093, %v6930
      %v7126 = vsel %vm7021, %v7094, %v6931
      %v7127 = vsel %vm7021, %v7095, %v6932
      %v7128 = vsel %vm7021, %v7096, %v6933
      %v7129 = vsel %vm7021, %v7097, %v6934
      %v7130 = vsel %vm7021, %v7098, %v6935
      %v7131 = vsel %vm7021, %v7099, %v6936
      %v7132 = vsel %vm7021, %v7100, %v6937
      %v7133 = vsel %vm7021, %v7101, %v6938
      %v7134 = vsel %vm7021, %v7102, %v6939
      %v7135 = vsel %vm7021, %v7103, %v6940
      %v7136 = vsel %vm7021, %v7104, %v6941
      %v7137 = vsel %vm7021, %v7105, %v6942
      %v7138 = vsel %vm7021, %v7106, %v6943
      %v7139 = vsel %vm7021, %v7107, %v6944
      %v7140 = vsel %vm7021, %v7108, %v6945
      %v7141 = vsel %vm7021, %v7109, %v6946
      %v7142 = vsel %vm7021, %v7110, %v6947
      %v7143 = vsel %vm7021, %v7111, %v6948
      %v7144 = vsel %vm7021, %v7112, %v6949
      %v7145 = vsel %vm7021, %v7113, %v6950
      %v7146 = vsel %vm7021, %v7114, %v6951
      %v7147 = vsel %vm7021, %v7115, %v6952
      %v7148 = vsel %vm7021, %v7116, %v6953
      %v7149 = vsel %vm7021, %v7117, %v6954
      %v7150 = vld [vmem:[#allocation2] sm:$0xff]
      %v7151 = vld [vmem:[#allocation2 + $0x8] sm:$0xff]
      %v7152 = vld [vmem:[#allocation2 + $0x10] sm:$0xff]
      %v7153 = vld [vmem:[#allocation2 + $0x18] sm:$0xff]
      %v7154 = vld [vmem:[#allocation2 + $0x20] sm:$0xff]
      %v7155 = vld [vmem:[#allocation2 + $0x28] sm:$0xff]
      %v7156 = vld [vmem:[#allocation2 + $0x30] sm:$0xff]
      %v7157 = vld [vmem:[#allocation2 + $0x38] sm:$0xff]
      %v7158 = vld [vmem:[#allocation2 + $0x40] sm:$0xff]
      %v7159 = vld [vmem:[#allocation2 + $0x48] sm:$0xff]
      %v7160 = vld [vmem:[#allocation2 + $0x50] sm:$0xff]
      %v7161 = vld [vmem:[#allocation2 + $0x58] sm:$0xff]
      %v7162 = vld [vmem:[#allocation2 + $0x60] sm:$0xff]
      %v7163 = vld [vmem:[#allocation2 + $0x68] sm:$0xff]
      %v7164 = vld [vmem:[#allocation2 + $0x70] sm:$0xff]
      %v7165 = vld [vmem:[#allocation2 + $0x78] sm:$0xff]
      %v7166 = vld [vmem:[#allocation2 + $0x80] sm:$0xff]
      %v7167 = vld [vmem:[#allocation2 + $0x88] sm:$0xff]
      %v7168 = vld [vmem:[#allocation2 + $0x90] sm:$0xff]
      %v7169 = vld [vmem:[#allocation2 + $0x98] sm:$0xff]
      %v7170 = vld [vmem:[#allocation2 + $0xa0] sm:$0xff]
      %v7171 = vld [vmem:[#allocation2 + $0xa8] sm:$0xff]
      %v7172 = vld [vmem:[#allocation2 + $0xb0] sm:$0xff]
      %v7173 = vld [vmem:[#allocation2 + $0xb8] sm:$0xff]
      %v7174 = vld [vmem:[#allocation2 + $0xc0] sm:$0xff]
      %v7175 = vld [vmem:[#allocation2 + $0xc8] sm:$0xff]
      %v7176 = vld [vmem:[#allocation2 + $0xd0] sm:$0xff]
      %v7177 = vld [vmem:[#allocation2 + $0xd8] sm:$0xff]
      %v7178 = vld [vmem:[#allocation2 + $0xe0] sm:$0xff]
      %v7179 = vld [vmem:[#allocation2 + $0xe8] sm:$0xff]
      %v7180 = vld [vmem:[#allocation2 + $0xf0] sm:$0xff]
      %v7181 = vld [vmem:[#allocation2 + $0xf8] sm:$0xff]
      %7214 = vrot.lane.b32.xlu0 %v7022, 4
      %v7215 = vpop.permute.xlu0 %7214
      %7216 = vrot.lane.b32.xlu0 %v7023, 4
      %v7217 = vpop.permute.xlu0 %7216
      %7218 = vrot.lane.b32.xlu0 %v7024, 4
      %v7219 = vpop.permute.xlu0 %7218
      %7220 = vrot.lane.b32.xlu0 %v7025, 4
      %v7221 = vpop.permute.xlu0 %7220
      %7222 = vrot.lane.b32.xlu0 %v7026, 4
      %v7223 = vpop.permute.xlu0 %7222
      %7224 = vrot.lane.b32.xlu0 %v7027, 4
      %v7225 = vpop.permute.xlu0 %7224
      %7226 = vrot.lane.b32.xlu0 %v7028, 4
      %v7227 = vpop.permute.xlu0 %7226
      %7228 = vrot.lane.b32.xlu0 %v7029, 4
      %v7229 = vpop.permute.xlu0 %7228
      %7230 = vrot.lane.b32.xlu0 %v7030, 4
      %v7231 = vpop.permute.xlu0 %7230
      %7232 = vrot.lane.b32.xlu0 %v7031, 4
      %v7233 = vpop.permute.xlu0 %7232
      %7234 = vrot.lane.b32.xlu0 %v7032, 4
      %v7235 = vpop.permute.xlu0 %7234
      %7236 = vrot.lane.b32.xlu0 %v7033, 4
      %v7237 = vpop.permute.xlu0 %7236
      %7238 = vrot.lane.b32.xlu0 %v7034, 4
      %v7239 = vpop.permute.xlu0 %7238
      %7240 = vrot.lane.b32.xlu0 %v7035, 4
      %v7241 = vpop.permute.xlu0 %7240
      %7242 = vrot.lane.b32.xlu0 %v7036, 4
      %v7243 = vpop.permute.xlu0 %7242
      %7244 = vrot.lane.b32.xlu0 %v7037, 4
      %v7245 = vpop.permute.xlu0 %7244
      %7246 = vrot.lane.b32.xlu0 %v7038, 4
      %v7247 = vpop.permute.xlu0 %7246
      %7248 = vrot.lane.b32.xlu0 %v7039, 4
      %v7249 = vpop.permute.xlu0 %7248
      %7250 = vrot.lane.b32.xlu0 %v7040, 4
      %v7251 = vpop.permute.xlu0 %7250
      %7252 = vrot.lane.b32.xlu0 %v7041, 4
      %v7253 = vpop.permute.xlu0 %7252
      %7254 = vrot.lane.b32.xlu0 %v7042, 4
      %v7255 = vpop.permute.xlu0 %7254
      %7256 = vrot.lane.b32.xlu0 %v7043, 4
      %v7257 = vpop.permute.xlu0 %7256
      %7258 = vrot.lane.b32.xlu0 %v7044, 4
      %v7259 = vpop.permute.xlu0 %7258
      %7260 = vrot.lane.b32.xlu0 %v7045, 4
      %v7261 = vpop.permute.xlu0 %7260
      %7262 = vrot.lane.b32.xlu0 %v7046, 4
      %v7263 = vpop.permute.xlu0 %7262
      %7264 = vrot.lane.b32.xlu0 %v7047, 4
      %v7265 = vpop.permute.xlu0 %7264
      %7266 = vrot.lane.b32.xlu0 %v7048, 4
      %v7267 = vpop.permute.xlu0 %7266
      %7268 = vrot.lane.b32.xlu0 %v7049, 4
      %v7269 = vpop.permute.xlu0 %7268
      %7270 = vrot.lane.b32.xlu0 %v7050, 4
      %v7271 = vpop.permute.xlu0 %7270
      %7272 = vrot.lane.b32.xlu0 %v7051, 4
      %v7273 = vpop.permute.xlu0 %7272
      %7274 = vrot.lane.b32.xlu0 %v7052, 4
      %v7275 = vpop.permute.xlu0 %7274
      %7276 = vrot.lane.b32.xlu0 %v7053, 4
      %v7277 = vpop.permute.xlu0 %7276
      %vm7310 = vcmask 31744
      %v7311 = vsel %vm7310, %v7150, %v7215
      %v7312 = vsel %vm7310, %v7151, %v7217
      %v7313 = vsel %vm7310, %v7152, %v7219
      %v7314 = vsel %vm7310, %v7153, %v7221
      %v7315 = vsel %vm7310, %v7154, %v7223
      %v7316 = vsel %vm7310, %v7155, %v7225
      %v7317 = vsel %vm7310, %v7156, %v7227
      %v7318 = vsel %vm7310, %v7157, %v7229
      %v7319 = vsel %vm7310, %v7158, %v7231
      %v7320 = vsel %vm7310, %v7159, %v7233
      %v7321 = vsel %vm7310, %v7160, %v7235
      %v7322 = vsel %vm7310, %v7161, %v7237
      %v7323 = vsel %vm7310, %v7162, %v7239
      %v7324 = vsel %vm7310, %v7163, %v7241
      %v7325 = vsel %vm7310, %v7164, %v7243
      %v7326 = vsel %vm7310, %v7165, %v7245
      %v7327 = vsel %vm7310, %v7166, %v7247
      %v7328 = vsel %vm7310, %v7167, %v7249
      %v7329 = vsel %vm7310, %v7168, %v7251
      %v7330 = vsel %vm7310, %v7169, %v7253
      %v7331 = vsel %vm7310, %v7170, %v7255
      %v7332 = vsel %vm7310, %v7171, %v7257
      %v7333 = vsel %vm7310, %v7172, %v7259
      %v7334 = vsel %vm7310, %v7173, %v7261
      %v7335 = vsel %vm7310, %v7174, %v7263
      %v7336 = vsel %vm7310, %v7175, %v7265
      %v7337 = vsel %vm7310, %v7176, %v7267
      %v7338 = vsel %vm7310, %v7177, %v7269
      %v7339 = vsel %vm7310, %v7178, %v7271
      %v7340 = vsel %vm7310, %v7179, %v7273
      %v7341 = vsel %vm7310, %v7180, %v7275
      %v7342 = vsel %vm7310, %v7181, %v7277
      %v7343 = vld [vmem:[#allocation3] sm:$0xff]
      %v7344 = vld [vmem:[#allocation3 + $0x8] sm:$0xff]
      %v7345 = vld [vmem:[#allocation3 + $0x10] sm:$0xff]
      %v7346 = vld [vmem:[#allocation3 + $0x18] sm:$0xff]
      %v7347 = vld [vmem:[#allocation3 + $0x20] sm:$0xff]
      %v7348 = vld [vmem:[#allocation3 + $0x28] sm:$0xff]
      %v7349 = vld [vmem:[#allocation3 + $0x30] sm:$0xff]
      %v7350 = vld [vmem:[#allocation3 + $0x38] sm:$0xff]
      %v7351 = vld [vmem:[#allocation3 + $0x40] sm:$0xff]
      %v7352 = vld [vmem:[#allocation3 + $0x48] sm:$0xff]
      %v7353 = vld [vmem:[#allocation3 + $0x50] sm:$0xff]
      %v7354 = vld [vmem:[#allocation3 + $0x58] sm:$0xff]
      %v7355 = vld [vmem:[#allocation3 + $0x60] sm:$0xff]
      %v7356 = vld [vmem:[#allocation3 + $0x68] sm:$0xff]
      %v7357 = vld [vmem:[#allocation3 + $0x70] sm:$0xff]
      %v7358 = vld [vmem:[#allocation3 + $0x78] sm:$0xff]
      %v7359 = vld [vmem:[#allocation3 + $0x80] sm:$0xff]
      %v7360 = vld [vmem:[#allocation3 + $0x88] sm:$0xff]
      %v7361 = vld [vmem:[#allocation3 + $0x90] sm:$0xff]
      %v7362 = vld [vmem:[#allocation3 + $0x98] sm:$0xff]
      %v7363 = vld [vmem:[#allocation3 + $0xa0] sm:$0xff]
      %v7364 = vld [vmem:[#allocation3 + $0xa8] sm:$0xff]
      %v7365 = vld [vmem:[#allocation3 + $0xb0] sm:$0xff]
      %v7366 = vld [vmem:[#allocation3 + $0xb8] sm:$0xff]
      %v7367 = vld [vmem:[#allocation3 + $0xc0] sm:$0xff]
      %v7368 = vld [vmem:[#allocation3 + $0xc8] sm:$0xff]
      %v7369 = vld [vmem:[#allocation3 + $0xd0] sm:$0xff]
      %v7370 = vld [vmem:[#allocation3 + $0xd8] sm:$0xff]
      %v7371 = vld [vmem:[#allocation3 + $0xe0] sm:$0xff]
      %v7372 = vld [vmem:[#allocation3 + $0xe8] sm:$0xff]
      %v7373 = vld [vmem:[#allocation3 + $0xf0] sm:$0xff]
      %v7374 = vld [vmem:[#allocation3 + $0xf8] sm:$0xff]
      %7375 = vrot.lane.b32.xlu0 %v7118, 4
      %v7376 = vpop.permute.xlu0 %7375
      %7377 = vrot.lane.b32.xlu0 %v7119, 4
      %v7378 = vpop.permute.xlu0 %7377
      %7379 = vrot.lane.b32.xlu0 %v7120, 4
      %v7380 = vpop.permute.xlu0 %7379
      %7381 = vrot.lane.b32.xlu0 %v7121, 4
      %v7382 = vpop.permute.xlu0 %7381
      %7383 = vrot.lane.b32.xlu0 %v7122, 4
      %v7384 = vpop.permute.xlu0 %7383
      %7385 = vrot.lane.b32.xlu0 %v7123, 4
      %v7386 = vpop.permute.xlu0 %7385
      %7387 = vrot.lane.b32.xlu0 %v7124, 4
      %v7388 = vpop.permute.xlu0 %7387
      %7389 = vrot.lane.b32.xlu0 %v7125, 4
      %v7390 = vpop.permute.xlu0 %7389
      %7391 = vrot.lane.b32.xlu0 %v7126, 4
      %v7392 = vpop.permute.xlu0 %7391
      %7393 = vrot.lane.b32.xlu0 %v7127, 4
      %v7394 = vpop.permute.xlu0 %7393
      %7395 = vrot.lane.b32.xlu0 %v7128, 4
      %v7396 = vpop.permute.xlu0 %7395
      %7397 = vrot.lane.b32.xlu0 %v7129, 4
      %v7398 = vpop.permute.xlu0 %7397
      %7399 = vrot.lane.b32.xlu0 %v7130, 4
      %v7400 = vpop.permute.xlu0 %7399
      %7401 = vrot.lane.b32.xlu0 %v7131, 4
      %v7402 = vpop.permute.xlu0 %7401
      %7403 = vrot.lane.b32.xlu0 %v7132, 4
      %v7404 = vpop.permute.xlu0 %7403
      %7405 = vrot.lane.b32.xlu0 %v7133, 4
      %v7406 = vpop.permute.xlu0 %7405
      %7407 = vrot.lane.b32.xlu0 %v7134, 4
      %v7408 = vpop.permute.xlu0 %7407
      %7409 = vrot.lane.b32.xlu0 %v7135, 4
      %v7410 = vpop.permute.xlu0 %7409
      %7411 = vrot.lane.b32.xlu0 %v7136, 4
      %v7412 = vpop.permute.xlu0 %7411
      %7413 = vrot.lane.b32.xlu0 %v7137, 4
      %v7414 = vpop.permute.xlu0 %7413
      %7415 = vrot.lane.b32.xlu0 %v7138, 4
      %v7416 = vpop.permute.xlu0 %7415
      %7417 = vrot.lane.b32.xlu0 %v7139, 4
      %v7418 = vpop.permute.xlu0 %7417
      %7419 = vrot.lane.b32.xlu0 %v7140, 4
      %v7420 = vpop.permute.xlu0 %7419
      %7421 = vrot.lane.b32.xlu0 %v7141, 4
      %v7422 = vpop.permute.xlu0 %7421
      %7423 = vrot.lane.b32.xlu0 %v7142, 4
      %v7424 = vpop.permute.xlu0 %7423
      %7425 = vrot.lane.b32.xlu0 %v7143, 4
      %v7426 = vpop.permute.xlu0 %7425
      %7427 = vrot.lane.b32.xlu0 %v7144, 4
      %v7428 = vpop.permute.xlu0 %7427
      %7429 = vrot.lane.b32.xlu0 %v7145, 4
      %v7430 = vpop.permute.xlu0 %7429
      %7431 = vrot.lane.b32.xlu0 %v7146, 4
      %v7432 = vpop.permute.xlu0 %7431
      %7433 = vrot.lane.b32.xlu0 %v7147, 4
      %v7434 = vpop.permute.xlu0 %7433
      %7435 = vrot.lane.b32.xlu0 %v7148, 4
      %v7436 = vpop.permute.xlu0 %7435
      %7437 = vrot.lane.b32.xlu0 %v7149, 4
      %v7438 = vpop.permute.xlu0 %7437
      %v7439 = vsel %vm7310, %v7343, %v7376
      %v7440 = vsel %vm7310, %v7344, %v7378
      %v7441 = vsel %vm7310, %v7345, %v7380
      %v7442 = vsel %vm7310, %v7346, %v7382
      %v7443 = vsel %vm7310, %v7347, %v7384
      %v7444 = vsel %vm7310, %v7348, %v7386
      %v7445 = vsel %vm7310, %v7349, %v7388
      %v7446 = vsel %vm7310, %v7350, %v7390
      %v7447 = vsel %vm7310, %v7351, %v7392
      %v7448 = vsel %vm7310, %v7352, %v7394
      %v7449 = vsel %vm7310, %v7353, %v7396
      %v7450 = vsel %vm7310, %v7354, %v7398
      %v7451 = vsel %vm7310, %v7355, %v7400
      %v7452 = vsel %vm7310, %v7356, %v7402
      %v7453 = vsel %vm7310, %v7357, %v7404
      %v7454 = vsel %vm7310, %v7358, %v7406
      %v7455 = vsel %vm7310, %v7359, %v7408
      %v7456 = vsel %vm7310, %v7360, %v7410
      %v7457 = vsel %vm7310, %v7361, %v7412
      %v7458 = vsel %vm7310, %v7362, %v7414
      %v7459 = vsel %vm7310, %v7363, %v7416
      %v7460 = vsel %vm7310, %v7364, %v7418
      %v7461 = vsel %vm7310, %v7365, %v7420
      %v7462 = vsel %vm7310, %v7366, %v7422
      %v7463 = vsel %vm7310, %v7367, %v7424
      %v7464 = vsel %vm7310, %v7368, %v7426
      %v7465 = vsel %vm7310, %v7369, %v7428
      %v7466 = vsel %vm7310, %v7370, %v7430
      %v7467 = vsel %vm7310, %v7371, %v7432
      %v7468 = vsel %vm7310, %v7372, %v7434
      %v7469 = vsel %vm7310, %v7373, %v7436
      %v7470 = vsel %vm7310, %v7374, %v7438
      %vm7471 = vcmask 64512
      %v7472 = vsel %vm7471, %v7311, -inf
      %7473 = vmax.xlane.f32.xlu0 %v7472
      %v7474 = vpop.xlane.xlu0 %7473
      %v7475 = vsel %vm7471, %v7312, -inf
      %7476 = vmax.xlane.f32.xlu0 %v7475
      %v7477 = vpop.xlane.xlu0 %7476
      %v7478 = vsel %vm7471, %v7313, -inf
      %7479 = vmax.xlane.f32.xlu0 %v7478
      %v7480 = vpop.xlane.xlu0 %7479
      %v7481 = vsel %vm7471, %v7314, -inf
      %7482 = vmax.xlane.f32.xlu0 %v7481
      %v7483 = vpop.xlane.xlu0 %7482
      %v7484 = vsel %vm7471, %v7315, -inf
      %7485 = vmax.xlane.f32.xlu0 %v7484
      %v7486 = vpop.xlane.xlu0 %7485
      %v7487 = vsel %vm7471, %v7316, -inf
      %7488 = vmax.xlane.f32.xlu0 %v7487
      %v7489 = vpop.xlane.xlu0 %7488
      %v7490 = vsel %vm7471, %v7317, -inf
      %7491 = vmax.xlane.f32.xlu0 %v7490
      %v7492 = vpop.xlane.xlu0 %7491
      %v7493 = vsel %vm7471, %v7318, -inf
      %7494 = vmax.xlane.f32.xlu0 %v7493
      %v7495 = vpop.xlane.xlu0 %7494
      %v7496 = vsel %vm7471, %v7319, -inf
      %7497 = vmax.xlane.f32.xlu0 %v7496
      %v7498 = vpop.xlane.xlu0 %7497
      %v7499 = vsel %vm7471, %v7320, -inf
      %7500 = vmax.xlane.f32.xlu0 %v7499
      %v7501 = vpop.xlane.xlu0 %7500
      %v7502 = vsel %vm7471, %v7321, -inf
      %7503 = vmax.xlane.f32.xlu0 %v7502
      %v7504 = vpop.xlane.xlu0 %7503
      %v7505 = vsel %vm7471, %v7322, -inf
      %7506 = vmax.xlane.f32.xlu0 %v7505
      %v7507 = vpop.xlane.xlu0 %7506
      %v7508 = vsel %vm7471, %v7323, -inf
      %7509 = vmax.xlane.f32.xlu0 %v7508
      %v7510 = vpop.xlane.xlu0 %7509
      %v7511 = vsel %vm7471, %v7324, -inf
      %7512 = vmax.xlane.f32.xlu0 %v7511
      %v7513 = vpop.xlane.xlu0 %7512
      %v7514 = vsel %vm7471, %v7325, -inf
      %7515 = vmax.xlane.f32.xlu0 %v7514
      %v7516 = vpop.xlane.xlu0 %7515
      %v7517 = vsel %vm7471, %v7326, -inf
      %7518 = vmax.xlane.f32.xlu0 %v7517
      %v7519 = vpop.xlane.xlu0 %7518
      %v7520 = vsel %vm7471, %v7327, -inf
      %7521 = vmax.xlane.f32.xlu0 %v7520
      %v7522 = vpop.xlane.xlu0 %7521
      %v7523 = vsel %vm7471, %v7328, -inf
      %7524 = vmax.xlane.f32.xlu0 %v7523
      %v7525 = vpop.xlane.xlu0 %7524
      %v7526 = vsel %vm7471, %v7329, -inf
      %7527 = vmax.xlane.f32.xlu0 %v7526
      %v7528 = vpop.xlane.xlu0 %7527
      %v7529 = vsel %vm7471, %v7330, -inf
      %7530 = vmax.xlane.f32.xlu0 %v7529
      %v7531 = vpop.xlane.xlu0 %7530
      %v7532 = vsel %vm7471, %v7331, -inf
      %7533 = vmax.xlane.f32.xlu0 %v7532
      %v7534 = vpop.xlane.xlu0 %7533
      %v7535 = vsel %vm7471, %v7332, -inf
      %7536 = vmax.xlane.f32.xlu0 %v7535
      %v7537 = vpop.xlane.xlu0 %7536
      %v7538 = vsel %vm7471, %v7333, -inf
      %7539 = vmax.xlane.f32.xlu0 %v7538
      %v7540 = vpop.xlane.xlu0 %7539
      %v7541 = vsel %vm7471, %v7334, -inf
      %7542 = vmax.xlane.f32.xlu0 %v7541
      %v7543 = vpop.xlane.xlu0 %7542
      %v7544 = vsel %vm7471, %v7335, -inf
      %7545 = vmax.xlane.f32.xlu0 %v7544
      %v7546 = vpop.xlane.xlu0 %7545
      %v7547 = vsel %vm7471, %v7336, -inf
      %7548 = vmax.xlane.f32.xlu0 %v7547
      %v7549 = vpop.xlane.xlu0 %7548
      %v7550 = vsel %vm7471, %v7337, -inf
      %7551 = vmax.xlane.f32.xlu0 %v7550
      %v7552 = vpop.xlane.xlu0 %7551
      %v7553 = vsel %vm7471, %v7338, -inf
      %7554 = vmax.xlane.f32.xlu0 %v7553
      %v7555 = vpop.xlane.xlu0 %7554
      %v7556 = vsel %vm7471, %v7339, -inf
      %7557 = vmax.xlane.f32.xlu0 %v7556
      %v7558 = vpop.xlane.xlu0 %7557
      %v7559 = vsel %vm7471, %v7340, -inf
      %7560 = vmax.xlane.f32.xlu0 %v7559
      %v7561 = vpop.xlane.xlu0 %7560
      %v7562 = vsel %vm7471, %v7341, -inf
      %7563 = vmax.xlane.f32.xlu0 %v7562
      %v7564 = vpop.xlane.xlu0 %7563
      %v7565 = vsel %vm7471, %v7342, -inf
      %7566 = vmax.xlane.f32.xlu0 %v7565
      %v7567 = vpop.xlane.xlu0 %7566
      %vm7568 = vcmp.ge.f32.partialorder %v7311, %v7474
      %vm7569 = vcmp.ge.f32.partialorder %v7312, %v7477
      %vm7570 = vcmp.ge.f32.partialorder %v7313, %v7480
      %vm7571 = vcmp.ge.f32.partialorder %v7314, %v7483
      %vm7572 = vcmp.ge.f32.partialorder %v7315, %v7486
      %vm7573 = vcmp.ge.f32.partialorder %v7316, %v7489
      %vm7574 = vcmp.ge.f32.partialorder %v7317, %v7492
      %vm7575 = vcmp.ge.f32.partialorder %v7318, %v7495
      %vm7576 = vcmp.ge.f32.partialorder %v7319, %v7498
      %vm7577 = vcmp.ge.f32.partialorder %v7320, %v7501
      %vm7578 = vcmp.ge.f32.partialorder %v7321, %v7504
      %vm7579 = vcmp.ge.f32.partialorder %v7322, %v7507
      %vm7580 = vcmp.ge.f32.partialorder %v7323, %v7510
      %vm7581 = vcmp.ge.f32.partialorder %v7324, %v7513
      %vm7582 = vcmp.ge.f32.partialorder %v7325, %v7516
      %vm7583 = vcmp.ge.f32.partialorder %v7326, %v7519
      %vm7584 = vcmp.ge.f32.partialorder %v7327, %v7522
      %vm7585 = vcmp.ge.f32.partialorder %v7328, %v7525
      %vm7586 = vcmp.ge.f32.partialorder %v7329, %v7528
      %vm7587 = vcmp.ge.f32.partialorder %v7330, %v7531
      %vm7588 = vcmp.ge.f32.partialorder %v7331, %v7534
      %vm7589 = vcmp.ge.f32.partialorder %v7332, %v7537
      %vm7590 = vcmp.ge.f32.partialorder %v7333, %v7540
      %vm7591 = vcmp.ge.f32.partialorder %v7334, %v7543
      %vm7592 = vcmp.ge.f32.partialorder %v7335, %v7546
      %vm7593 = vcmp.ge.f32.partialorder %v7336, %v7549
      %vm7594 = vcmp.ge.f32.partialorder %v7337, %v7552
      %vm7595 = vcmp.ge.f32.partialorder %v7338, %v7555
      %vm7596 = vcmp.ge.f32.partialorder %v7339, %v7558
      %vm7597 = vcmp.ge.f32.partialorder %v7340, %v7561
      %vm7598 = vcmp.ge.f32.partialorder %v7341, %v7564
      %vm7599 = vcmp.ge.f32.partialorder %v7342, %v7567
      %v7600 = vsel %vm7568, %v7439, 1073741824
      %v7601 = vsel %vm7569, %v7440, 1073741824
      %v7602 = vsel %vm7570, %v7441, 1073741824
      %v7603 = vsel %vm7571, %v7442, 1073741824
      %v7604 = vsel %vm7572, %v7443, 1073741824
      %v7605 = vsel %vm7573, %v7444, 1073741824
      %v7606 = vsel %vm7574, %v7445, 1073741824
      %v7607 = vsel %vm7575, %v7446, 1073741824
      %v7608 = vsel %vm7576, %v7447, 1073741824
      %v7609 = vsel %vm7577, %v7448, 1073741824
      %v7610 = vsel %vm7578, %v7449, 1073741824
      %v7611 = vsel %vm7579, %v7450, 1073741824
      %v7612 = vsel %vm7580, %v7451, 1073741824
      %v7613 = vsel %vm7581, %v7452, 1073741824
      %v7614 = vsel %vm7582, %v7453, 1073741824
      %v7615 = vsel %vm7583, %v7454, 1073741824
      %v7616 = vsel %vm7584, %v7455, 1073741824
      %v7617 = vsel %vm7585, %v7456, 1073741824
      %v7618 = vsel %vm7586, %v7457, 1073741824
      %v7619 = vsel %vm7587, %v7458, 1073741824
      %v7620 = vsel %vm7588, %v7459, 1073741824
      %v7621 = vsel %vm7589, %v7460, 1073741824
      %v7622 = vsel %vm7590, %v7461, 1073741824
      %v7623 = vsel %vm7591, %v7462, 1073741824
      %v7624 = vsel %vm7592, %v7463, 1073741824
      %v7625 = vsel %vm7593, %v7464, 1073741824
      %v7626 = vsel %vm7594, %v7465, 1073741824
      %v7627 = vsel %vm7595, %v7466, 1073741824
      %v7628 = vsel %vm7596, %v7467, 1073741824
      %v7629 = vsel %vm7597, %v7468, 1073741824
      %v7630 = vsel %vm7598, %v7469, 1073741824
      %v7631 = vsel %vm7599, %v7470, 1073741824
      %v7632 = vsel %vm7471, %v7600, 2147483647
      %v7633 = vand.u32 %v7632, 65535
      %v7634 = vshra.s32 %v7632, 16
      %v7635 = vcvt.s32.f32 %v7633
      %v7636 = vcvt.s32.f32 %v7634
      %7637 = vmin.xlane.f32.xlu0 %v7636
      %v7638 = vpop.xlane.xlu0 %7637
      %vm7639 = vcmp.eq.f32.partialorder %v7636, %v7638
      %v7640 = vsel %vm7639, %v7635, inf
      %7641 = vmin.xlane.f32.xlu0 %v7640
      %v7642 = vpop.xlane.xlu0 %7641
      %v7643 = vcvt.f32.s32 %v7642
      %v7644 = vcvt.f32.s32 %v7638
      %v7645 = vshll.u32 %v7644, 16
      %v7646 = vadd.s32 %v7645, %v7643
      %v7647 = vsel %vm7471, %v7601, 2147483647
      %v7648 = vand.u32 %v7647, 65535
      %v7649 = vshra.s32 %v7647, 16
      %v7650 = vcvt.s32.f32 %v7648
      %v7651 = vcvt.s32.f32 %v7649
      %7652 = vmin.xlane.f32.xlu0 %v7651
      %v7653 = vpop.xlane.xlu0 %7652
      %vm7654 = vcmp.eq.f32.partialorder %v7651, %v7653
      %v7655 = vsel %vm7654, %v7650, inf
      %7656 = vmin.xlane.f32.xlu0 %v7655
      %v7657 = vpop.xlane.xlu0 %7656
      %v7658 = vcvt.f32.s32 %v7657
      %v7659 = vcvt.f32.s32 %v7653
      %v7660 = vshll.u32 %v7659, 16
      %v7661 = vadd.s32 %v7660, %v7658
      %v7662 = vsel %vm7471, %v7602, 2147483647
      %v7663 = vand.u32 %v7662, 65535
      %v7664 = vshra.s32 %v7662, 16
      %v7665 = vcvt.s32.f32 %v7663
      %v7666 = vcvt.s32.f32 %v7664
      %7667 = vmin.xlane.f32.xlu0 %v7666
      %v7668 = vpop.xlane.xlu0 %7667
      %vm7669 = vcmp.eq.f32.partialorder %v7666, %v7668
      %v7670 = vsel %vm7669, %v7665, inf
      %7671 = vmin.xlane.f32.xlu0 %v7670
      %v7672 = vpop.xlane.xlu0 %7671
      %v7673 = vcvt.f32.s32 %v7672
      %v7674 = vcvt.f32.s32 %v7668
      %v7675 = vshll.u32 %v7674, 16
      %v7676 = vadd.s32 %v7675, %v7673
      %v7677 = vsel %vm7471, %v7603, 2147483647
      %v7678 = vand.u32 %v7677, 65535
      %v7679 = vshra.s32 %v7677, 16
      %v7680 = vcvt.s32.f32 %v7678
      %v7681 = vcvt.s32.f32 %v7679
      %7682 = vmin.xlane.f32.xlu0 %v7681
      %v7683 = vpop.xlane.xlu0 %7682
      %vm7684 = vcmp.eq.f32.partialorder %v7681, %v7683
      %v7685 = vsel %vm7684, %v7680, inf
      %7686 = vmin.xlane.f32.xlu0 %v7685
      %v7687 = vpop.xlane.xlu0 %7686
      %v7688 = vcvt.f32.s32 %v7687
      %v7689 = vcvt.f32.s32 %v7683
      %v7690 = vshll.u32 %v7689, 16
      %v7691 = vadd.s32 %v7690, %v7688
      %v7692 = vsel %vm7471, %v7604, 2147483647
      %v7693 = vand.u32 %v7692, 65535
      %v7694 = vshra.s32 %v7692, 16
      %v7695 = vcvt.s32.f32 %v7693
      %v7696 = vcvt.s32.f32 %v7694
      %7697 = vmin.xlane.f32.xlu0 %v7696
      %v7698 = vpop.xlane.xlu0 %7697
      %vm7699 = vcmp.eq.f32.partialorder %v7696, %v7698
      %v7700 = vsel %vm7699, %v7695, inf
      %7701 = vmin.xlane.f32.xlu0 %v7700
      %v7702 = vpop.xlane.xlu0 %7701
      %v7703 = vcvt.f32.s32 %v7702
      %v7704 = vcvt.f32.s32 %v7698
      %v7705 = vshll.u32 %v7704, 16
      %v7706 = vadd.s32 %v7705, %v7703
      %v7707 = vsel %vm7471, %v7605, 2147483647
      %v7708 = vand.u32 %v7707, 65535
      %v7709 = vshra.s32 %v7707, 16
      %v7710 = vcvt.s32.f32 %v7708
      %v7711 = vcvt.s32.f32 %v7709
      %7712 = vmin.xlane.f32.xlu0 %v7711
      %v7713 = vpop.xlane.xlu0 %7712
      %vm7714 = vcmp.eq.f32.partialorder %v7711, %v7713
      %v7715 = vsel %vm7714, %v7710, inf
      %7716 = vmin.xlane.f32.xlu0 %v7715
      %v7717 = vpop.xlane.xlu0 %7716
      %v7718 = vcvt.f32.s32 %v7717
      %v7719 = vcvt.f32.s32 %v7713
      %v7720 = vshll.u32 %v7719, 16
      %v7721 = vadd.s32 %v7720, %v7718
      %v7722 = vsel %vm7471, %v7606, 2147483647
      %v7723 = vand.u32 %v7722, 65535
      %v7724 = vshra.s32 %v7722, 16
      %v7725 = vcvt.s32.f32 %v7723
      %v7726 = vcvt.s32.f32 %v7724
      %7727 = vmin.xlane.f32.xlu0 %v7726
      %v7728 = vpop.xlane.xlu0 %7727
      %vm7729 = vcmp.eq.f32.partialorder %v7726, %v7728
      %v7730 = vsel %vm7729, %v7725, inf
      %7731 = vmin.xlane.f32.xlu0 %v7730
      %v7732 = vpop.xlane.xlu0 %7731
      %v7733 = vcvt.f32.s32 %v7732
      %v7734 = vcvt.f32.s32 %v7728
      %v7735 = vshll.u32 %v7734, 16
      %v7736 = vadd.s32 %v7735, %v7733
      %v7737 = vsel %vm7471, %v7607, 2147483647
      %v7738 = vand.u32 %v7737, 65535
      %v7739 = vshra.s32 %v7737, 16
      %v7740 = vcvt.s32.f32 %v7738
      %v7741 = vcvt.s32.f32 %v7739
      %7742 = vmin.xlane.f32.xlu0 %v7741
      %v7743 = vpop.xlane.xlu0 %7742
      %vm7744 = vcmp.eq.f32.partialorder %v7741, %v7743
      %v7745 = vsel %vm7744, %v7740, inf
      %7746 = vmin.xlane.f32.xlu0 %v7745
      %v7747 = vpop.xlane.xlu0 %7746
      %v7748 = vcvt.f32.s32 %v7747
      %v7749 = vcvt.f32.s32 %v7743
      %v7750 = vshll.u32 %v7749, 16
      %v7751 = vadd.s32 %v7750, %v7748
      %v7752 = vsel %vm7471, %v7608, 2147483647
      %v7753 = vand.u32 %v7752, 65535
      %v7754 = vshra.s32 %v7752, 16
      %v7755 = vcvt.s32.f32 %v7753
      %v7756 = vcvt.s32.f32 %v7754
      %7757 = vmin.xlane.f32.xlu0 %v7756
      %v7758 = vpop.xlane.xlu0 %7757
      %vm7759 = vcmp.eq.f32.partialorder %v7756, %v7758
      %v7760 = vsel %vm7759, %v7755, inf
      %7761 = vmin.xlane.f32.xlu0 %v7760
      %v7762 = vpop.xlane.xlu0 %7761
      %v7763 = vcvt.f32.s32 %v7762
      %v7764 = vcvt.f32.s32 %v7758
      %v7765 = vshll.u32 %v7764, 16
      %v7766 = vadd.s32 %v7765, %v7763
      %v7767 = vsel %vm7471, %v7609, 2147483647
      %v7768 = vand.u32 %v7767, 65535
      %v7769 = vshra.s32 %v7767, 16
      %v7770 = vcvt.s32.f32 %v7768
      %v7771 = vcvt.s32.f32 %v7769
      %7772 = vmin.xlane.f32.xlu0 %v7771
      %v7773 = vpop.xlane.xlu0 %7772
      %vm7774 = vcmp.eq.f32.partialorder %v7771, %v7773
      %v7775 = vsel %vm7774, %v7770, inf
      %7776 = vmin.xlane.f32.xlu0 %v7775
      %v7777 = vpop.xlane.xlu0 %7776
      %v7778 = vcvt.f32.s32 %v7777
      %v7779 = vcvt.f32.s32 %v7773
      %v7780 = vshll.u32 %v7779, 16
      %v7781 = vadd.s32 %v7780, %v7778
      %v7782 = vsel %vm7471, %v7610, 2147483647
      %v7783 = vand.u32 %v7782, 65535
      %v7784 = vshra.s32 %v7782, 16
      %v7785 = vcvt.s32.f32 %v7783
      %v7786 = vcvt.s32.f32 %v7784
      %7787 = vmin.xlane.f32.xlu0 %v7786
      %v7788 = vpop.xlane.xlu0 %7787
      %vm7789 = vcmp.eq.f32.partialorder %v7786, %v7788
      %v7790 = vsel %vm7789, %v7785, inf
      %7791 = vmin.xlane.f32.xlu0 %v7790
      %v7792 = vpop.xlane.xlu0 %7791
      %v7793 = vcvt.f32.s32 %v7792
      %v7794 = vcvt.f32.s32 %v7788
      %v7795 = vshll.u32 %v7794, 16
      %v7796 = vadd.s32 %v7795, %v7793
      %v7797 = vsel %vm7471, %v7611, 2147483647
      %v7798 = vand.u32 %v7797, 65535
      %v7799 = vshra.s32 %v7797, 16
      %v7800 = vcvt.s32.f32 %v7798
      %v7801 = vcvt.s32.f32 %v7799
      %7802 = vmin.xlane.f32.xlu0 %v7801
      %v7803 = vpop.xlane.xlu0 %7802
      %vm7804 = vcmp.eq.f32.partialorder %v7801, %v7803
      %v7805 = vsel %vm7804, %v7800, inf
      %7806 = vmin.xlane.f32.xlu0 %v7805
      %v7807 = vpop.xlane.xlu0 %7806
      %v7808 = vcvt.f32.s32 %v7807
      %v7809 = vcvt.f32.s32 %v7803
      %v7810 = vshll.u32 %v7809, 16
      %v7811 = vadd.s32 %v7810, %v7808
      %v7812 = vsel %vm7471, %v7612, 2147483647
      %v7813 = vand.u32 %v7812, 65535
      %v7814 = vshra.s32 %v7812, 16
      %v7815 = vcvt.s32.f32 %v7813
      %v7816 = vcvt.s32.f32 %v7814
      %7817 = vmin.xlane.f32.xlu0 %v7816
      %v7818 = vpop.xlane.xlu0 %7817
      %vm7819 = vcmp.eq.f32.partialorder %v7816, %v7818
      %v7820 = vsel %vm7819, %v7815, inf
      %7821 = vmin.xlane.f32.xlu0 %v7820
      %v7822 = vpop.xlane.xlu0 %7821
      %v7823 = vcvt.f32.s32 %v7822
      %v7824 = vcvt.f32.s32 %v7818
      %v7825 = vshll.u32 %v7824, 16
      %v7826 = vadd.s32 %v7825, %v7823
      %v7827 = vsel %vm7471, %v7613, 2147483647
      %v7828 = vand.u32 %v7827, 65535
      %v7829 = vshra.s32 %v7827, 16
      %v7830 = vcvt.s32.f32 %v7828
      %v7831 = vcvt.s32.f32 %v7829
      %7832 = vmin.xlane.f32.xlu0 %v7831
      %v7833 = vpop.xlane.xlu0 %7832
      %vm7834 = vcmp.eq.f32.partialorder %v7831, %v7833
      %v7835 = vsel %vm7834, %v7830, inf
      %7836 = vmin.xlane.f32.xlu0 %v7835
      %v7837 = vpop.xlane.xlu0 %7836
      %v7838 = vcvt.f32.s32 %v7837
      %v7839 = vcvt.f32.s32 %v7833
      %v7840 = vshll.u32 %v7839, 16
      %v7841 = vadd.s32 %v7840, %v7838
      %v7842 = vsel %vm7471, %v7614, 2147483647
      %v7843 = vand.u32 %v7842, 65535
      %v7844 = vshra.s32 %v7842, 16
      %v7845 = vcvt.s32.f32 %v7843
      %v7846 = vcvt.s32.f32 %v7844
      %7847 = vmin.xlane.f32.xlu0 %v7846
      %v7848 = vpop.xlane.xlu0 %7847
      %vm7849 = vcmp.eq.f32.partialorder %v7846, %v7848
      %v7850 = vsel %vm7849, %v7845, inf
      %7851 = vmin.xlane.f32.xlu0 %v7850
      %v7852 = vpop.xlane.xlu0 %7851
      %v7853 = vcvt.f32.s32 %v7852
      %v7854 = vcvt.f32.s32 %v7848
      %v7855 = vshll.u32 %v7854, 16
      %v7856 = vadd.s32 %v7855, %v7853
      %v7857 = vsel %vm7471, %v7615, 2147483647
      %v7858 = vand.u32 %v7857, 65535
      %v7859 = vshra.s32 %v7857, 16
      %v7860 = vcvt.s32.f32 %v7858
      %v7861 = vcvt.s32.f32 %v7859
      %7862 = vmin.xlane.f32.xlu0 %v7861
      %v7863 = vpop.xlane.xlu0 %7862
      %vm7864 = vcmp.eq.f32.partialorder %v7861, %v7863
      %v7865 = vsel %vm7864, %v7860, inf
      %7866 = vmin.xlane.f32.xlu0 %v7865
      %v7867 = vpop.xlane.xlu0 %7866
      %v7868 = vcvt.f32.s32 %v7867
      %v7869 = vcvt.f32.s32 %v7863
      %v7870 = vshll.u32 %v7869, 16
      %v7871 = vadd.s32 %v7870, %v7868
      %v7872 = vsel %vm7471, %v7616, 2147483647
      %v7873 = vand.u32 %v7872, 65535
      %v7874 = vshra.s32 %v7872, 16
      %v7875 = vcvt.s32.f32 %v7873
      %v7876 = vcvt.s32.f32 %v7874
      %7877 = vmin.xlane.f32.xlu0 %v7876
      %v7878 = vpop.xlane.xlu0 %7877
      %vm7879 = vcmp.eq.f32.partialorder %v7876, %v7878
      %v7880 = vsel %vm7879, %v7875, inf
      %7881 = vmin.xlane.f32.xlu0 %v7880
      %v7882 = vpop.xlane.xlu0 %7881
      %v7883 = vcvt.f32.s32 %v7882
      %v7884 = vcvt.f32.s32 %v7878
      %v7885 = vshll.u32 %v7884, 16
      %v7886 = vadd.s32 %v7885, %v7883
      %v7887 = vsel %vm7471, %v7617, 2147483647
      %v7888 = vand.u32 %v7887, 65535
      %v7889 = vshra.s32 %v7887, 16
      %v7890 = vcvt.s32.f32 %v7888
      %v7891 = vcvt.s32.f32 %v7889
      %7892 = vmin.xlane.f32.xlu0 %v7891
      %v7893 = vpop.xlane.xlu0 %7892
      %vm7894 = vcmp.eq.f32.partialorder %v7891, %v7893
      %v7895 = vsel %vm7894, %v7890, inf
      %7896 = vmin.xlane.f32.xlu0 %v7895
      %v7897 = vpop.xlane.xlu0 %7896
      %v7898 = vcvt.f32.s32 %v7897
      %v7899 = vcvt.f32.s32 %v7893
      %v7900 = vshll.u32 %v7899, 16
      %v7901 = vadd.s32 %v7900, %v7898
      %v7902 = vsel %vm7471, %v7618, 2147483647
      %v7903 = vand.u32 %v7902, 65535
      %v7904 = vshra.s32 %v7902, 16
      %v7905 = vcvt.s32.f32 %v7903
      %v7906 = vcvt.s32.f32 %v7904
      %7907 = vmin.xlane.f32.xlu0 %v7906
      %v7908 = vpop.xlane.xlu0 %7907
      %vm7909 = vcmp.eq.f32.partialorder %v7906, %v7908
      %v7910 = vsel %vm7909, %v7905, inf
      %7911 = vmin.xlane.f32.xlu0 %v7910
      %v7912 = vpop.xlane.xlu0 %7911
      %v7913 = vcvt.f32.s32 %v7912
      %v7914 = vcvt.f32.s32 %v7908
      %v7915 = vshll.u32 %v7914, 16
      %v7916 = vadd.s32 %v7915, %v7913
      %v7917 = vsel %vm7471, %v7619, 2147483647
      %v7918 = vand.u32 %v7917, 65535
      %v7919 = vshra.s32 %v7917, 16
      %v7920 = vcvt.s32.f32 %v7918
      %v7921 = vcvt.s32.f32 %v7919
      %7922 = vmin.xlane.f32.xlu0 %v7921
      %v7923 = vpop.xlane.xlu0 %7922
      %vm7924 = vcmp.eq.f32.partialorder %v7921, %v7923
      %v7925 = vsel %vm7924, %v7920, inf
      %7926 = vmin.xlane.f32.xlu0 %v7925
      %v7927 = vpop.xlane.xlu0 %7926
      %v7928 = vcvt.f32.s32 %v7927
      %v7929 = vcvt.f32.s32 %v7923
      %v7930 = vshll.u32 %v7929, 16
      %v7931 = vadd.s32 %v7930, %v7928
      %v7932 = vsel %vm7471, %v7620, 2147483647
      %v7933 = vand.u32 %v7932, 65535
      %v7934 = vshra.s32 %v7932, 16
      %v7935 = vcvt.s32.f32 %v7933
      %v7936 = vcvt.s32.f32 %v7934
      %7937 = vmin.xlane.f32.xlu0 %v7936
      %v7938 = vpop.xlane.xlu0 %7937
      %vm7939 = vcmp.eq.f32.partialorder %v7936, %v7938
      %v7940 = vsel %vm7939, %v7935, inf
      %7941 = vmin.xlane.f32.xlu0 %v7940
      %v7942 = vpop.xlane.xlu0 %7941
      %v7943 = vcvt.f32.s32 %v7942
      %v7944 = vcvt.f32.s32 %v7938
      %v7945 = vshll.u32 %v7944, 16
      %v7946 = vadd.s32 %v7945, %v7943
      %v7947 = vsel %vm7471, %v7621, 2147483647
      %v7948 = vand.u32 %v7947, 65535
      %v7949 = vshra.s32 %v7947, 16
      %v7950 = vcvt.s32.f32 %v7948
      %v7951 = vcvt.s32.f32 %v7949
      %7952 = vmin.xlane.f32.xlu0 %v7951
      %v7953 = vpop.xlane.xlu0 %7952
      %vm7954 = vcmp.eq.f32.partialorder %v7951, %v7953
      %v7955 = vsel %vm7954, %v7950, inf
      %7956 = vmin.xlane.f32.xlu0 %v7955
      %v7957 = vpop.xlane.xlu0 %7956
      %v7958 = vcvt.f32.s32 %v7957
      %v7959 = vcvt.f32.s32 %v7953
      %v7960 = vshll.u32 %v7959, 16
      %v7961 = vadd.s32 %v7960, %v7958
      %v7962 = vsel %vm7471, %v7622, 2147483647
      %v7963 = vand.u32 %v7962, 65535
      %v7964 = vshra.s32 %v7962, 16
      %v7965 = vcvt.s32.f32 %v7963
      %v7966 = vcvt.s32.f32 %v7964
      %7967 = vmin.xlane.f32.xlu0 %v7966
      %v7968 = vpop.xlane.xlu0 %7967
      %vm7969 = vcmp.eq.f32.partialorder %v7966, %v7968
      %v7970 = vsel %vm7969, %v7965, inf
      %7971 = vmin.xlane.f32.xlu0 %v7970
      %v7972 = vpop.xlane.xlu0 %7971
      %v7973 = vcvt.f32.s32 %v7972
      %v7974 = vcvt.f32.s32 %v7968
      %v7975 = vshll.u32 %v7974, 16
      %v7976 = vadd.s32 %v7975, %v7973
      %v7977 = vsel %vm7471, %v7623, 2147483647
      %v7978 = vand.u32 %v7977, 65535
      %v7979 = vshra.s32 %v7977, 16
      %v7980 = vcvt.s32.f32 %v7978
      %v7981 = vcvt.s32.f32 %v7979
      %7982 = vmin.xlane.f32.xlu0 %v7981
      %v7983 = vpop.xlane.xlu0 %7982
      %vm7984 = vcmp.eq.f32.partialorder %v7981, %v7983
      %v7985 = vsel %vm7984, %v7980, inf
      %7986 = vmin.xlane.f32.xlu0 %v7985
      %v7987 = vpop.xlane.xlu0 %7986
      %v7988 = vcvt.f32.s32 %v7987
      %v7989 = vcvt.f32.s32 %v7983
      %v7990 = vshll.u32 %v7989, 16
      %v7991 = vadd.s32 %v7990, %v7988
      %v7992 = vsel %vm7471, %v7624, 2147483647
      %v7993 = vand.u32 %v7992, 65535
      %v7994 = vshra.s32 %v7992, 16
      %v7995 = vcvt.s32.f32 %v7993
      %v7996 = vcvt.s32.f32 %v7994
      %7997 = vmin.xlane.f32.xlu0 %v7996
      %v7998 = vpop.xlane.xlu0 %7997
      %vm7999 = vcmp.eq.f32.partialorder %v7996, %v7998
      %v8000 = vsel %vm7999, %v7995, inf
      %8001 = vmin.xlane.f32.xlu0 %v8000
      %v8002 = vpop.xlane.xlu0 %8001
      %v8003 = vcvt.f32.s32 %v8002
      %v8004 = vcvt.f32.s32 %v7998
      %v8005 = vshll.u32 %v8004, 16
      %v8006 = vadd.s32 %v8005, %v8003
      %v8007 = vsel %vm7471, %v7625, 2147483647
      %v8008 = vand.u32 %v8007, 65535
      %v8009 = vshra.s32 %v8007, 16
      %v8010 = vcvt.s32.f32 %v8008
      %v8011 = vcvt.s32.f32 %v8009
      %8012 = vmin.xlane.f32.xlu0 %v8011
      %v8013 = vpop.xlane.xlu0 %8012
      %vm8014 = vcmp.eq.f32.partialorder %v8011, %v8013
      %v8015 = vsel %vm8014, %v8010, inf
      %8016 = vmin.xlane.f32.xlu0 %v8015
      %v8017 = vpop.xlane.xlu0 %8016
      %v8018 = vcvt.f32.s32 %v8017
      %v8019 = vcvt.f32.s32 %v8013
      %v8020 = vshll.u32 %v8019, 16
      %v8021 = vadd.s32 %v8020, %v8018
      %v8022 = vsel %vm7471, %v7626, 2147483647
      %v8023 = vand.u32 %v8022, 65535
      %v8024 = vshra.s32 %v8022, 16
      %v8025 = vcvt.s32.f32 %v8023
      %v8026 = vcvt.s32.f32 %v8024
      %8027 = vmin.xlane.f32.xlu0 %v8026
      %v8028 = vpop.xlane.xlu0 %8027
      %vm8029 = vcmp.eq.f32.partialorder %v8026, %v8028
      %v8030 = vsel %vm8029, %v8025, inf
      %8031 = vmin.xlane.f32.xlu0 %v8030
      %v8032 = vpop.xlane.xlu0 %8031
      %v8033 = vcvt.f32.s32 %v8032
      %v8034 = vcvt.f32.s32 %v8028
      %v8035 = vshll.u32 %v8034, 16
      %v8036 = vadd.s32 %v8035, %v8033
      %v8037 = vsel %vm7471, %v7627, 2147483647
      %v8038 = vand.u32 %v8037, 65535
      %v8039 = vshra.s32 %v8037, 16
      %v8040 = vcvt.s32.f32 %v8038
      %v8041 = vcvt.s32.f32 %v8039
      %8042 = vmin.xlane.f32.xlu0 %v8041
      %v8043 = vpop.xlane.xlu0 %8042
      %vm8044 = vcmp.eq.f32.partialorder %v8041, %v8043
      %v8045 = vsel %vm8044, %v8040, inf
      %8046 = vmin.xlane.f32.xlu0 %v8045
      %v8047 = vpop.xlane.xlu0 %8046
      %v8048 = vcvt.f32.s32 %v8047
      %v8049 = vcvt.f32.s32 %v8043
      %v8050 = vshll.u32 %v8049, 16
      %v8051 = vadd.s32 %v8050, %v8048
      %v8052 = vsel %vm7471, %v7628, 2147483647
      %v8053 = vand.u32 %v8052, 65535
      %v8054 = vshra.s32 %v8052, 16
      %v8055 = vcvt.s32.f32 %v8053
      %v8056 = vcvt.s32.f32 %v8054
      %8057 = vmin.xlane.f32.xlu0 %v8056
      %v8058 = vpop.xlane.xlu0 %8057
      %vm8059 = vcmp.eq.f32.partialorder %v8056, %v8058
      %v8060 = vsel %vm8059, %v8055, inf
      %8061 = vmin.xlane.f32.xlu0 %v8060
      %v8062 = vpop.xlane.xlu0 %8061
      %v8063 = vcvt.f32.s32 %v8062
      %v8064 = vcvt.f32.s32 %v8058
      %v8065 = vshll.u32 %v8064, 16
      %v8066 = vadd.s32 %v8065, %v8063
      %v8067 = vsel %vm7471, %v7629, 2147483647
      %v8068 = vand.u32 %v8067, 65535
      %v8069 = vshra.s32 %v8067, 16
      %v8070 = vcvt.s32.f32 %v8068
      %v8071 = vcvt.s32.f32 %v8069
      %8072 = vmin.xlane.f32.xlu0 %v8071
      %v8073 = vpop.xlane.xlu0 %8072
      %vm8074 = vcmp.eq.f32.partialorder %v8071, %v8073
      %v8075 = vsel %vm8074, %v8070, inf
      %8076 = vmin.xlane.f32.xlu0 %v8075
      %v8077 = vpop.xlane.xlu0 %8076
      %v8078 = vcvt.f32.s32 %v8077
      %v8079 = vcvt.f32.s32 %v8073
      %v8080 = vshll.u32 %v8079, 16
      %v8081 = vadd.s32 %v8080, %v8078
      %v8082 = vsel %vm7471, %v7630, 2147483647
      %v8083 = vand.u32 %v8082, 65535
      %v8084 = vshra.s32 %v8082, 16
      %v8085 = vcvt.s32.f32 %v8083
      %v8086 = vcvt.s32.f32 %v8084
      %8087 = vmin.xlane.f32.xlu0 %v8086
      %v8088 = vpop.xlane.xlu0 %8087
      %vm8089 = vcmp.eq.f32.partialorder %v8086, %v8088
      %v8090 = vsel %vm8089, %v8085, inf
      %8091 = vmin.xlane.f32.xlu0 %v8090
      %v8092 = vpop.xlane.xlu0 %8091
      %v8093 = vcvt.f32.s32 %v8092
      %v8094 = vcvt.f32.s32 %v8088
      %v8095 = vshll.u32 %v8094, 16
      %v8096 = vadd.s32 %v8095, %v8093
      %v8097 = vsel %vm7471, %v7631, 2147483647
      %v8098 = vand.u32 %v8097, 65535
      %v8099 = vshra.s32 %v8097, 16
      %v8100 = vcvt.s32.f32 %v8098
      %v8101 = vcvt.s32.f32 %v8099
      %8102 = vmin.xlane.f32.xlu0 %v8101
      %v8103 = vpop.xlane.xlu0 %8102
      %vm8104 = vcmp.eq.f32.partialorder %v8101, %v8103
      %v8105 = vsel %vm8104, %v8100, inf
      %8106 = vmin.xlane.f32.xlu0 %v8105
      %v8107 = vpop.xlane.xlu0 %8106
      %v8108 = vcvt.f32.s32 %v8107
      %v8109 = vcvt.f32.s32 %v8103
      %v8110 = vshll.u32 %v8109, 16
      %v8111 = vadd.s32 %v8110, %v8108
      %vm8112 = vcmp.eq.s32.totalorder %v7439, %v7646
      %vm8113 = vcmp.eq.s32.totalorder %v7440, %v7661
      %vm8114 = vcmp.eq.s32.totalorder %v7441, %v7676
      %vm8115 = vcmp.eq.s32.totalorder %v7442, %v7691
      %vm8116 = vcmp.eq.s32.totalorder %v7443, %v7706
      %vm8117 = vcmp.eq.s32.totalorder %v7444, %v7721
      %vm8118 = vcmp.eq.s32.totalorder %v7445, %v7736
      %vm8119 = vcmp.eq.s32.totalorder %v7446, %v7751
      %vm8120 = vcmp.eq.s32.totalorder %v7447, %v7766
      %vm8121 = vcmp.eq.s32.totalorder %v7448, %v7781
      %vm8122 = vcmp.eq.s32.totalorder %v7449, %v7796
      %vm8123 = vcmp.eq.s32.totalorder %v7450, %v7811
      %vm8124 = vcmp.eq.s32.totalorder %v7451, %v7826
      %vm8125 = vcmp.eq.s32.totalorder %v7452, %v7841
      %vm8126 = vcmp.eq.s32.totalorder %v7453, %v7856
      %vm8127 = vcmp.eq.s32.totalorder %v7454, %v7871
      %vm8128 = vcmp.eq.s32.totalorder %v7455, %v7886
      %vm8129 = vcmp.eq.s32.totalorder %v7456, %v7901
      %vm8130 = vcmp.eq.s32.totalorder %v7457, %v7916
      %vm8131 = vcmp.eq.s32.totalorder %v7458, %v7931
      %vm8132 = vcmp.eq.s32.totalorder %v7459, %v7946
      %vm8133 = vcmp.eq.s32.totalorder %v7460, %v7961
      %vm8134 = vcmp.eq.s32.totalorder %v7461, %v7976
      %vm8135 = vcmp.eq.s32.totalorder %v7462, %v7991
      %vm8136 = vcmp.eq.s32.totalorder %v7463, %v8006
      %vm8137 = vcmp.eq.s32.totalorder %v7464, %v8021
      %vm8138 = vcmp.eq.s32.totalorder %v7465, %v8036
      %vm8139 = vcmp.eq.s32.totalorder %v7466, %v8051
      %vm8140 = vcmp.eq.s32.totalorder %v7467, %v8066
      %vm8141 = vcmp.eq.s32.totalorder %v7468, %v8081
      %vm8142 = vcmp.eq.s32.totalorder %v7469, %v8096
      %vm8143 = vcmp.eq.s32.totalorder %v7470, %v8111
      %v8144 = vsel %vm8112, -inf, %v7311
      %v8145 = vsel %vm8113, -inf, %v7312
      %v8146 = vsel %vm8114, -inf, %v7313
      %v8147 = vsel %vm8115, -inf, %v7314
      %v8148 = vsel %vm8116, -inf, %v7315
      %v8149 = vsel %vm8117, -inf, %v7316
      %v8150 = vsel %vm8118, -inf, %v7317
      %v8151 = vsel %vm8119, -inf, %v7318
      %v8152 = vsel %vm8120, -inf, %v7319
      %v8153 = vsel %vm8121, -inf, %v7320
      %v8154 = vsel %vm8122, -inf, %v7321
      %v8155 = vsel %vm8123, -inf, %v7322
      %v8156 = vsel %vm8124, -inf, %v7323
      %v8157 = vsel %vm8125, -inf, %v7324
      %v8158 = vsel %vm8126, -inf, %v7325
      %v8159 = vsel %vm8127, -inf, %v7326
      %v8160 = vsel %vm8128, -inf, %v7327
      %v8161 = vsel %vm8129, -inf, %v7328
      %v8162 = vsel %vm8130, -inf, %v7329
      %v8163 = vsel %vm8131, -inf, %v7330
      %v8164 = vsel %vm8132, -inf, %v7331
      %v8165 = vsel %vm8133, -inf, %v7332
      %v8166 = vsel %vm8134, -inf, %v7333
      %v8167 = vsel %vm8135, -inf, %v7334
      %v8168 = vsel %vm8136, -inf, %v7335
      %v8169 = vsel %vm8137, -inf, %v7336
      %v8170 = vsel %vm8138, -inf, %v7337
      %v8171 = vsel %vm8139, -inf, %v7338
      %v8172 = vsel %vm8140, -inf, %v7339
      %v8173 = vsel %vm8141, -inf, %v7340
      %v8174 = vsel %vm8142, -inf, %v7341
      %v8175 = vsel %vm8143, -inf, %v7342
      %v8176 = vsel %vm7471, %v8144, -inf
      %8177 = vmax.xlane.f32.xlu0 %v8176
      %v8178 = vpop.xlane.xlu0 %8177
      %v8179 = vsel %vm7471, %v8145, -inf
      %8180 = vmax.xlane.f32.xlu0 %v8179
      %v8181 = vpop.xlane.xlu0 %8180
      %v8182 = vsel %vm7471, %v8146, -inf
      %8183 = vmax.xlane.f32.xlu0 %v8182
      %v8184 = vpop.xlane.xlu0 %8183
      %v8185 = vsel %vm7471, %v8147, -inf
      %8186 = vmax.xlane.f32.xlu0 %v8185
      %v8187 = vpop.xlane.xlu0 %8186
      %v8188 = vsel %vm7471, %v8148, -inf
      %8189 = vmax.xlane.f32.xlu0 %v8188
      %v8190 = vpop.xlane.xlu0 %8189
      %v8191 = vsel %vm7471, %v8149, -inf
      %8192 = vmax.xlane.f32.xlu0 %v8191
      %v8193 = vpop.xlane.xlu0 %8192
      %v8194 = vsel %vm7471, %v8150, -inf
      %8195 = vmax.xlane.f32.xlu0 %v8194
      %v8196 = vpop.xlane.xlu0 %8195
      %v8197 = vsel %vm7471, %v8151, -inf
      %8198 = vmax.xlane.f32.xlu0 %v8197
      %v8199 = vpop.xlane.xlu0 %8198
      %v8200 = vsel %vm7471, %v8152, -inf
      %8201 = vmax.xlane.f32.xlu0 %v8200
      %v8202 = vpop.xlane.xlu0 %8201
      %v8203 = vsel %vm7471, %v8153, -inf
      %8204 = vmax.xlane.f32.xlu0 %v8203
      %v8205 = vpop.xlane.xlu0 %8204
      %v8206 = vsel %vm7471, %v8154, -inf
      %8207 = vmax.xlane.f32.xlu0 %v8206
      %v8208 = vpop.xlane.xlu0 %8207
      %v8209 = vsel %vm7471, %v8155, -inf
      %8210 = vmax.xlane.f32.xlu0 %v8209
      %v8211 = vpop.xlane.xlu0 %8210
      %v8212 = vsel %vm7471, %v8156, -inf
      %8213 = vmax.xlane.f32.xlu0 %v8212
      %v8214 = vpop.xlane.xlu0 %8213
      %v8215 = vsel %vm7471, %v8157, -inf
      %8216 = vmax.xlane.f32.xlu0 %v8215
      %v8217 = vpop.xlane.xlu0 %8216
      %v8218 = vsel %vm7471, %v8158, -inf
      %8219 = vmax.xlane.f32.xlu0 %v8218
      %v8220 = vpop.xlane.xlu0 %8219
      %v8221 = vsel %vm7471, %v8159, -inf
      %8222 = vmax.xlane.f32.xlu0 %v8221
      %v8223 = vpop.xlane.xlu0 %8222
      %v8224 = vsel %vm7471, %v8160, -inf
      %8225 = vmax.xlane.f32.xlu0 %v8224
      %v8226 = vpop.xlane.xlu0 %8225
      %v8227 = vsel %vm7471, %v8161, -inf
      %8228 = vmax.xlane.f32.xlu0 %v8227
      %v8229 = vpop.xlane.xlu0 %8228
      %v8230 = vsel %vm7471, %v8162, -inf
      %8231 = vmax.xlane.f32.xlu0 %v8230
      %v8232 = vpop.xlane.xlu0 %8231
      %v8233 = vsel %vm7471, %v8163, -inf
      %8234 = vmax.xlane.f32.xlu0 %v8233
      %v8235 = vpop.xlane.xlu0 %8234
      %v8236 = vsel %vm7471, %v8164, -inf
      %8237 = vmax.xlane.f32.xlu0 %v8236
      %v8238 = vpop.xlane.xlu0 %8237
      %v8239 = vsel %vm7471, %v8165, -inf
      %8240 = vmax.xlane.f32.xlu0 %v8239
      %v8241 = vpop.xlane.xlu0 %8240
      %v8242 = vsel %vm7471, %v8166, -inf
      %8243 = vmax.xlane.f32.xlu0 %v8242
      %v8244 = vpop.xlane.xlu0 %8243
      %v8245 = vsel %vm7471, %v8167, -inf
      %8246 = vmax.xlane.f32.xlu0 %v8245
      %v8247 = vpop.xlane.xlu0 %8246
      %v8248 = vsel %vm7471, %v8168, -inf
      %8249 = vmax.xlane.f32.xlu0 %v8248
      %v8250 = vpop.xlane.xlu0 %8249
      %v8251 = vsel %vm7471, %v8169, -inf
      %8252 = vmax.xlane.f32.xlu0 %v8251
      %v8253 = vpop.xlane.xlu0 %8252
      %v8254 = vsel %vm7471, %v8170, -inf
      %8255 = vmax.xlane.f32.xlu0 %v8254
      %v8256 = vpop.xlane.xlu0 %8255
      %v8257 = vsel %vm7471, %v8171, -inf
      %8258 = vmax.xlane.f32.xlu0 %v8257
      %v8259 = vpop.xlane.xlu0 %8258
      %v8260 = vsel %vm7471, %v8172, -inf
      %8261 = vmax.xlane.f32.xlu0 %v8260
      %v8262 = vpop.xlane.xlu0 %8261
      %v8263 = vsel %vm7471, %v8173, -inf
      %8264 = vmax.xlane.f32.xlu0 %v8263
      %v8265 = vpop.xlane.xlu0 %8264
      %v8266 = vsel %vm7471, %v8174, -inf
      %8267 = vmax.xlane.f32.xlu0 %v8266
      %v8268 = vpop.xlane.xlu0 %8267
      %v8269 = vsel %vm7471, %v8175, -inf
      %8270 = vmax.xlane.f32.xlu0 %v8269
      %v8271 = vpop.xlane.xlu0 %8270
      %vm8272 = vcmp.ge.f32.partialorder %v8144, %v8178
      %vm8273 = vcmp.ge.f32.partialorder %v8145, %v8181
      %vm8274 = vcmp.ge.f32.partialorder %v8146, %v8184
      %vm8275 = vcmp.ge.f32.partialorder %v8147, %v8187
      %vm8276 = vcmp.ge.f32.partialorder %v8148, %v8190
      %vm8277 = vcmp.ge.f32.partialorder %v8149, %v8193
      %vm8278 = vcmp.ge.f32.partialorder %v8150, %v8196
      %vm8279 = vcmp.ge.f32.partialorder %v8151, %v8199
      %vm8280 = vcmp.ge.f32.partialorder %v8152, %v8202
      %vm8281 = vcmp.ge.f32.partialorder %v8153, %v8205
      %vm8282 = vcmp.ge.f32.partialorder %v8154, %v8208
      %vm8283 = vcmp.ge.f32.partialorder %v8155, %v8211
      %vm8284 = vcmp.ge.f32.partialorder %v8156, %v8214
      %vm8285 = vcmp.ge.f32.partialorder %v8157, %v8217
      %vm8286 = vcmp.ge.f32.partialorder %v8158, %v8220
      %vm8287 = vcmp.ge.f32.partialorder %v8159, %v8223
      %vm8288 = vcmp.ge.f32.partialorder %v8160, %v8226
      %vm8289 = vcmp.ge.f32.partialorder %v8161, %v8229
      %vm8290 = vcmp.ge.f32.partialorder %v8162, %v8232
      %vm8291 = vcmp.ge.f32.partialorder %v8163, %v8235
      %vm8292 = vcmp.ge.f32.partialorder %v8164, %v8238
      %vm8293 = vcmp.ge.f32.partialorder %v8165, %v8241
      %vm8294 = vcmp.ge.f32.partialorder %v8166, %v8244
      %vm8295 = vcmp.ge.f32.partialorder %v8167, %v8247
      %vm8296 = vcmp.ge.f32.partialorder %v8168, %v8250
      %vm8297 = vcmp.ge.f32.partialorder %v8169, %v8253
      %vm8298 = vcmp.ge.f32.partialorder %v8170, %v8256
      %vm8299 = vcmp.ge.f32.partialorder %v8171, %v8259
      %vm8300 = vcmp.ge.f32.partialorder %v8172, %v8262
      %vm8301 = vcmp.ge.f32.partialorder %v8173, %v8265
      %vm8302 = vcmp.ge.f32.partialorder %v8174, %v8268
      %vm8303 = vcmp.ge.f32.partialorder %v8175, %v8271
      %v8304 = vsel %vm8272, %v7439, 1073741824
      %v8305 = vsel %vm8273, %v7440, 1073741824
      %v8306 = vsel %vm8274, %v7441, 1073741824
      %v8307 = vsel %vm8275, %v7442, 1073741824
      %v8308 = vsel %vm8276, %v7443, 1073741824
      %v8309 = vsel %vm8277, %v7444, 1073741824
      %v8310 = vsel %vm8278, %v7445, 1073741824
      %v8311 = vsel %vm8279, %v7446, 1073741824
      %v8312 = vsel %vm8280, %v7447, 1073741824
      %v8313 = vsel %vm8281, %v7448, 1073741824
      %v8314 = vsel %vm8282, %v7449, 1073741824
      %v8315 = vsel %vm8283, %v7450, 1073741824
      %v8316 = vsel %vm8284, %v7451, 1073741824
      %v8317 = vsel %vm8285, %v7452, 1073741824
      %v8318 = vsel %vm8286, %v7453, 1073741824
      %v8319 = vsel %vm8287, %v7454, 1073741824
      %v8320 = vsel %vm8288, %v7455, 1073741824
      %v8321 = vsel %vm8289, %v7456, 1073741824
      %v8322 = vsel %vm8290, %v7457, 1073741824
      %v8323 = vsel %vm8291, %v7458, 1073741824
      %v8324 = vsel %vm8292, %v7459, 1073741824
      %v8325 = vsel %vm8293, %v7460, 1073741824
      %v8326 = vsel %vm8294, %v7461, 1073741824
      %v8327 = vsel %vm8295, %v7462, 1073741824
      %v8328 = vsel %vm8296, %v7463, 1073741824
      %v8329 = vsel %vm8297, %v7464, 1073741824
      %v8330 = vsel %vm8298, %v7465, 1073741824
      %v8331 = vsel %vm8299, %v7466, 1073741824
      %v8332 = vsel %vm8300, %v7467, 1073741824
      %v8333 = vsel %vm8301, %v7468, 1073741824
      %v8334 = vsel %vm8302, %v7469, 1073741824
      %v8335 = vsel %vm8303, %v7470, 1073741824
      %v8336 = vsel %vm7471, %v8304, 2147483647
      %v8337 = vand.u32 %v8336, 65535
      %v8338 = vshra.s32 %v8336, 16
      %v8339 = vcvt.s32.f32 %v8337
      %v8340 = vcvt.s32.f32 %v8338
      %8341 = vmin.xlane.f32.xlu0 %v8340
      %v8342 = vpop.xlane.xlu0 %8341
      %vm8343 = vcmp.eq.f32.partialorder %v8340, %v8342
      %v8344 = vsel %vm8343, %v8339, inf
      %8345 = vmin.xlane.f32.xlu0 %v8344
      %v8346 = vpop.xlane.xlu0 %8345
      %v8347 = vcvt.f32.s32 %v8346
      %v8348 = vcvt.f32.s32 %v8342
      %v8349 = vshll.u32 %v8348, 16
      %v8350 = vadd.s32 %v8349, %v8347
      %v8351 = vsel %vm7471, %v8305, 2147483647
      %v8352 = vand.u32 %v8351, 65535
      %v8353 = vshra.s32 %v8351, 16
      %v8354 = vcvt.s32.f32 %v8352
      %v8355 = vcvt.s32.f32 %v8353
      %8356 = vmin.xlane.f32.xlu0 %v8355
      %v8357 = vpop.xlane.xlu0 %8356
      %vm8358 = vcmp.eq.f32.partialorder %v8355, %v8357
      %v8359 = vsel %vm8358, %v8354, inf
      %8360 = vmin.xlane.f32.xlu0 %v8359
      %v8361 = vpop.xlane.xlu0 %8360
      %v8362 = vcvt.f32.s32 %v8361
      %v8363 = vcvt.f32.s32 %v8357
      %v8364 = vshll.u32 %v8363, 16
      %v8365 = vadd.s32 %v8364, %v8362
      %v8366 = vsel %vm7471, %v8306, 2147483647
      %v8367 = vand.u32 %v8366, 65535
      %v8368 = vshra.s32 %v8366, 16
      %v8369 = vcvt.s32.f32 %v8367
      %v8370 = vcvt.s32.f32 %v8368
      %8371 = vmin.xlane.f32.xlu0 %v8370
      %v8372 = vpop.xlane.xlu0 %8371
      %vm8373 = vcmp.eq.f32.partialorder %v8370, %v8372
      %v8374 = vsel %vm8373, %v8369, inf
      %8375 = vmin.xlane.f32.xlu0 %v8374
      %v8376 = vpop.xlane.xlu0 %8375
      %v8377 = vcvt.f32.s32 %v8376
      %v8378 = vcvt.f32.s32 %v8372
      %v8379 = vshll.u32 %v8378, 16
      %v8380 = vadd.s32 %v8379, %v8377
      %v8381 = vsel %vm7471, %v8307, 2147483647
      %v8382 = vand.u32 %v8381, 65535
      %v8383 = vshra.s32 %v8381, 16
      %v8384 = vcvt.s32.f32 %v8382
      %v8385 = vcvt.s32.f32 %v8383
      %8386 = vmin.xlane.f32.xlu0 %v8385
      %v8387 = vpop.xlane.xlu0 %8386
      %vm8388 = vcmp.eq.f32.partialorder %v8385, %v8387
      %v8389 = vsel %vm8388, %v8384, inf
      %8390 = vmin.xlane.f32.xlu0 %v8389
      %v8391 = vpop.xlane.xlu0 %8390
      %v8392 = vcvt.f32.s32 %v8391
      %v8393 = vcvt.f32.s32 %v8387
      %v8394 = vshll.u32 %v8393, 16
      %v8395 = vadd.s32 %v8394, %v8392
      %v8396 = vsel %vm7471, %v8308, 2147483647
      %v8397 = vand.u32 %v8396, 65535
      %v8398 = vshra.s32 %v8396, 16
      %v8399 = vcvt.s32.f32 %v8397
      %v8400 = vcvt.s32.f32 %v8398
      %8401 = vmin.xlane.f32.xlu0 %v8400
      %v8402 = vpop.xlane.xlu0 %8401
      %vm8403 = vcmp.eq.f32.partialorder %v8400, %v8402
      %v8404 = vsel %vm8403, %v8399, inf
      %8405 = vmin.xlane.f32.xlu0 %v8404
      %v8406 = vpop.xlane.xlu0 %8405
      %v8407 = vcvt.f32.s32 %v8406
      %v8408 = vcvt.f32.s32 %v8402
      %v8409 = vshll.u32 %v8408, 16
      %v8410 = vadd.s32 %v8409, %v8407
      %v8411 = vsel %vm7471, %v8309, 2147483647
      %v8412 = vand.u32 %v8411, 65535
      %v8413 = vshra.s32 %v8411, 16
      %v8414 = vcvt.s32.f32 %v8412
      %v8415 = vcvt.s32.f32 %v8413
      %8416 = vmin.xlane.f32.xlu0 %v8415
      %v8417 = vpop.xlane.xlu0 %8416
      %vm8418 = vcmp.eq.f32.partialorder %v8415, %v8417
      %v8419 = vsel %vm8418, %v8414, inf
      %8420 = vmin.xlane.f32.xlu0 %v8419
      %v8421 = vpop.xlane.xlu0 %8420
      %v8422 = vcvt.f32.s32 %v8421
      %v8423 = vcvt.f32.s32 %v8417
      %v8424 = vshll.u32 %v8423, 16
      %v8425 = vadd.s32 %v8424, %v8422
      %v8426 = vsel %vm7471, %v8310, 2147483647
      %v8427 = vand.u32 %v8426, 65535
      %v8428 = vshra.s32 %v8426, 16
      %v8429 = vcvt.s32.f32 %v8427
      %v8430 = vcvt.s32.f32 %v8428
      %8431 = vmin.xlane.f32.xlu0 %v8430
      %v8432 = vpop.xlane.xlu0 %8431
      %vm8433 = vcmp.eq.f32.partialorder %v8430, %v8432
      %v8434 = vsel %vm8433, %v8429, inf
      %8435 = vmin.xlane.f32.xlu0 %v8434
      %v8436 = vpop.xlane.xlu0 %8435
      %v8437 = vcvt.f32.s32 %v8436
      %v8438 = vcvt.f32.s32 %v8432
      %v8439 = vshll.u32 %v8438, 16
      %v8440 = vadd.s32 %v8439, %v8437
      %v8441 = vsel %vm7471, %v8311, 2147483647
      %v8442 = vand.u32 %v8441, 65535
      %v8443 = vshra.s32 %v8441, 16
      %v8444 = vcvt.s32.f32 %v8442
      %v8445 = vcvt.s32.f32 %v8443
      %8446 = vmin.xlane.f32.xlu0 %v8445
      %v8447 = vpop.xlane.xlu0 %8446
      %vm8448 = vcmp.eq.f32.partialorder %v8445, %v8447
      %v8449 = vsel %vm8448, %v8444, inf
      %8450 = vmin.xlane.f32.xlu0 %v8449
      %v8451 = vpop.xlane.xlu0 %8450
      %v8452 = vcvt.f32.s32 %v8451
      %v8453 = vcvt.f32.s32 %v8447
      %v8454 = vshll.u32 %v8453, 16
      %v8455 = vadd.s32 %v8454, %v8452
      %v8456 = vsel %vm7471, %v8312, 2147483647
      %v8457 = vand.u32 %v8456, 65535
      %v8458 = vshra.s32 %v8456, 16
      %v8459 = vcvt.s32.f32 %v8457
      %v8460 = vcvt.s32.f32 %v8458
      %8461 = vmin.xlane.f32.xlu0 %v8460
      %v8462 = vpop.xlane.xlu0 %8461
      %vm8463 = vcmp.eq.f32.partialorder %v8460, %v8462
      %v8464 = vsel %vm8463, %v8459, inf
      %8465 = vmin.xlane.f32.xlu0 %v8464
      %v8466 = vpop.xlane.xlu0 %8465
      %v8467 = vcvt.f32.s32 %v8466
      %v8468 = vcvt.f32.s32 %v8462
      %v8469 = vshll.u32 %v8468, 16
      %v8470 = vadd.s32 %v8469, %v8467
      %v8471 = vsel %vm7471, %v8313, 2147483647
      %v8472 = vand.u32 %v8471, 65535
      %v8473 = vshra.s32 %v8471, 16
      %v8474 = vcvt.s32.f32 %v8472
      %v8475 = vcvt.s32.f32 %v8473
      %8476 = vmin.xlane.f32.xlu0 %v8475
      %v8477 = vpop.xlane.xlu0 %8476
      %vm8478 = vcmp.eq.f32.partialorder %v8475, %v8477
      %v8479 = vsel %vm8478, %v8474, inf
      %8480 = vmin.xlane.f32.xlu0 %v8479
      %v8481 = vpop.xlane.xlu0 %8480
      %v8482 = vcvt.f32.s32 %v8481
      %v8483 = vcvt.f32.s32 %v8477
      %v8484 = vshll.u32 %v8483, 16
      %v8485 = vadd.s32 %v8484, %v8482
      %v8486 = vsel %vm7471, %v8314, 2147483647
      %v8487 = vand.u32 %v8486, 65535
      %v8488 = vshra.s32 %v8486, 16
      %v8489 = vcvt.s32.f32 %v8487
      %v8490 = vcvt.s32.f32 %v8488
      %8491 = vmin.xlane.f32.xlu0 %v8490
      %v8492 = vpop.xlane.xlu0 %8491
      %vm8493 = vcmp.eq.f32.partialorder %v8490, %v8492
      %v8494 = vsel %vm8493, %v8489, inf
      %8495 = vmin.xlane.f32.xlu0 %v8494
      %v8496 = vpop.xlane.xlu0 %8495
      %v8497 = vcvt.f32.s32 %v8496
      %v8498 = vcvt.f32.s32 %v8492
      %v8499 = vshll.u32 %v8498, 16
      %v8500 = vadd.s32 %v8499, %v8497
      %v8501 = vsel %vm7471, %v8315, 2147483647
      %v8502 = vand.u32 %v8501, 65535
      %v8503 = vshra.s32 %v8501, 16
      %v8504 = vcvt.s32.f32 %v8502
      %v8505 = vcvt.s32.f32 %v8503
      %8506 = vmin.xlane.f32.xlu0 %v8505
      %v8507 = vpop.xlane.xlu0 %8506
      %vm8508 = vcmp.eq.f32.partialorder %v8505, %v8507
      %v8509 = vsel %vm8508, %v8504, inf
      %8510 = vmin.xlane.f32.xlu0 %v8509
      %v8511 = vpop.xlane.xlu0 %8510
      %v8512 = vcvt.f32.s32 %v8511
      %v8513 = vcvt.f32.s32 %v8507
      %v8514 = vshll.u32 %v8513, 16
      %v8515 = vadd.s32 %v8514, %v8512
      %v8516 = vsel %vm7471, %v8316, 2147483647
      %v8517 = vand.u32 %v8516, 65535
      %v8518 = vshra.s32 %v8516, 16
      %v8519 = vcvt.s32.f32 %v8517
      %v8520 = vcvt.s32.f32 %v8518
      %8521 = vmin.xlane.f32.xlu0 %v8520
      %v8522 = vpop.xlane.xlu0 %8521
      %vm8523 = vcmp.eq.f32.partialorder %v8520, %v8522
      %v8524 = vsel %vm8523, %v8519, inf
      %8525 = vmin.xlane.f32.xlu0 %v8524
      %v8526 = vpop.xlane.xlu0 %8525
      %v8527 = vcvt.f32.s32 %v8526
      %v8528 = vcvt.f32.s32 %v8522
      %v8529 = vshll.u32 %v8528, 16
      %v8530 = vadd.s32 %v8529, %v8527
      %v8531 = vsel %vm7471, %v8317, 2147483647
      %v8532 = vand.u32 %v8531, 65535
      %v8533 = vshra.s32 %v8531, 16
      %v8534 = vcvt.s32.f32 %v8532
      %v8535 = vcvt.s32.f32 %v8533
      %8536 = vmin.xlane.f32.xlu0 %v8535
      %v8537 = vpop.xlane.xlu0 %8536
      %vm8538 = vcmp.eq.f32.partialorder %v8535, %v8537
      %v8539 = vsel %vm8538, %v8534, inf
      %8540 = vmin.xlane.f32.xlu0 %v8539
      %v8541 = vpop.xlane.xlu0 %8540
      %v8542 = vcvt.f32.s32 %v8541
      %v8543 = vcvt.f32.s32 %v8537
      %v8544 = vshll.u32 %v8543, 16
      %v8545 = vadd.s32 %v8544, %v8542
      %v8546 = vsel %vm7471, %v8318, 2147483647
      %v8547 = vand.u32 %v8546, 65535
      %v8548 = vshra.s32 %v8546, 16
      %v8549 = vcvt.s32.f32 %v8547
      %v8550 = vcvt.s32.f32 %v8548
      %8551 = vmin.xlane.f32.xlu0 %v8550
      %v8552 = vpop.xlane.xlu0 %8551
      %vm8553 = vcmp.eq.f32.partialorder %v8550, %v8552
      %v8554 = vsel %vm8553, %v8549, inf
      %8555 = vmin.xlane.f32.xlu0 %v8554
      %v8556 = vpop.xlane.xlu0 %8555
      %v8557 = vcvt.f32.s32 %v8556
      %v8558 = vcvt.f32.s32 %v8552
      %v8559 = vshll.u32 %v8558, 16
      %v8560 = vadd.s32 %v8559, %v8557
      %v8561 = vsel %vm7471, %v8319, 2147483647
      %v8562 = vand.u32 %v8561, 65535
      %v8563 = vshra.s32 %v8561, 16
      %v8564 = vcvt.s32.f32 %v8562
      %v8565 = vcvt.s32.f32 %v8563
      %8566 = vmin.xlane.f32.xlu0 %v8565
      %v8567 = vpop.xlane.xlu0 %8566
      %vm8568 = vcmp.eq.f32.partialorder %v8565, %v8567
      %v8569 = vsel %vm8568, %v8564, inf
      %8570 = vmin.xlane.f32.xlu0 %v8569
      %v8571 = vpop.xlane.xlu0 %8570
      %v8572 = vcvt.f32.s32 %v8571
      %v8573 = vcvt.f32.s32 %v8567
      %v8574 = vshll.u32 %v8573, 16
      %v8575 = vadd.s32 %v8574, %v8572
      %v8576 = vsel %vm7471, %v8320, 2147483647
      %v8577 = vand.u32 %v8576, 65535
      %v8578 = vshra.s32 %v8576, 16
      %v8579 = vcvt.s32.f32 %v8577
      %v8580 = vcvt.s32.f32 %v8578
      %8581 = vmin.xlane.f32.xlu0 %v8580
      %v8582 = vpop.xlane.xlu0 %8581
      %vm8583 = vcmp.eq.f32.partialorder %v8580, %v8582
      %v8584 = vsel %vm8583, %v8579, inf
      %8585 = vmin.xlane.f32.xlu0 %v8584
      %v8586 = vpop.xlane.xlu0 %8585
      %v8587 = vcvt.f32.s32 %v8586
      %v8588 = vcvt.f32.s32 %v8582
      %v8589 = vshll.u32 %v8588, 16
      %v8590 = vadd.s32 %v8589, %v8587
      %v8591 = vsel %vm7471, %v8321, 2147483647
      %v8592 = vand.u32 %v8591, 65535
      %v8593 = vshra.s32 %v8591, 16
      %v8594 = vcvt.s32.f32 %v8592
      %v8595 = vcvt.s32.f32 %v8593
      %8596 = vmin.xlane.f32.xlu0 %v8595
      %v8597 = vpop.xlane.xlu0 %8596
      %vm8598 = vcmp.eq.f32.partialorder %v8595, %v8597
      %v8599 = vsel %vm8598, %v8594, inf
      %8600 = vmin.xlane.f32.xlu0 %v8599
      %v8601 = vpop.xlane.xlu0 %8600
      %v8602 = vcvt.f32.s32 %v8601
      %v8603 = vcvt.f32.s32 %v8597
      %v8604 = vshll.u32 %v8603, 16
      %v8605 = vadd.s32 %v8604, %v8602
      %v8606 = vsel %vm7471, %v8322, 2147483647
      %v8607 = vand.u32 %v8606, 65535
      %v8608 = vshra.s32 %v8606, 16
      %v8609 = vcvt.s32.f32 %v8607
      %v8610 = vcvt.s32.f32 %v8608
      %8611 = vmin.xlane.f32.xlu0 %v8610
      %v8612 = vpop.xlane.xlu0 %8611
      %vm8613 = vcmp.eq.f32.partialorder %v8610, %v8612
      %v8614 = vsel %vm8613, %v8609, inf
      %8615 = vmin.xlane.f32.xlu0 %v8614
      %v8616 = vpop.xlane.xlu0 %8615
      %v8617 = vcvt.f32.s32 %v8616
      %v8618 = vcvt.f32.s32 %v8612
      %v8619 = vshll.u32 %v8618, 16
      %v8620 = vadd.s32 %v8619, %v8617
      %v8621 = vsel %vm7471, %v8323, 2147483647
      %v8622 = vand.u32 %v8621, 65535
      %v8623 = vshra.s32 %v8621, 16
      %v8624 = vcvt.s32.f32 %v8622
      %v8625 = vcvt.s32.f32 %v8623
      %8626 = vmin.xlane.f32.xlu0 %v8625
      %v8627 = vpop.xlane.xlu0 %8626
      %vm8628 = vcmp.eq.f32.partialorder %v8625, %v8627
      %v8629 = vsel %vm8628, %v8624, inf
      %8630 = vmin.xlane.f32.xlu0 %v8629
      %v8631 = vpop.xlane.xlu0 %8630
      %v8632 = vcvt.f32.s32 %v8631
      %v8633 = vcvt.f32.s32 %v8627
      %v8634 = vshll.u32 %v8633, 16
      %v8635 = vadd.s32 %v8634, %v8632
      %v8636 = vsel %vm7471, %v8324, 2147483647
      %v8637 = vand.u32 %v8636, 65535
      %v8638 = vshra.s32 %v8636, 16
      %v8639 = vcvt.s32.f32 %v8637
      %v8640 = vcvt.s32.f32 %v8638
      %8641 = vmin.xlane.f32.xlu0 %v8640
      %v8642 = vpop.xlane.xlu0 %8641
      %vm8643 = vcmp.eq.f32.partialorder %v8640, %v8642
      %v8644 = vsel %vm8643, %v8639, inf
      %8645 = vmin.xlane.f32.xlu0 %v8644
      %v8646 = vpop.xlane.xlu0 %8645
      %v8647 = vcvt.f32.s32 %v8646
      %v8648 = vcvt.f32.s32 %v8642
      %v8649 = vshll.u32 %v8648, 16
      %v8650 = vadd.s32 %v8649, %v8647
      %v8651 = vsel %vm7471, %v8325, 2147483647
      %v8652 = vand.u32 %v8651, 65535
      %v8653 = vshra.s32 %v8651, 16
      %v8654 = vcvt.s32.f32 %v8652
      %v8655 = vcvt.s32.f32 %v8653
      %8656 = vmin.xlane.f32.xlu0 %v8655
      %v8657 = vpop.xlane.xlu0 %8656
      %vm8658 = vcmp.eq.f32.partialorder %v8655, %v8657
      %v8659 = vsel %vm8658, %v8654, inf
      %8660 = vmin.xlane.f32.xlu0 %v8659
      %v8661 = vpop.xlane.xlu0 %8660
      %v8662 = vcvt.f32.s32 %v8661
      %v8663 = vcvt.f32.s32 %v8657
      %v8664 = vshll.u32 %v8663, 16
      %v8665 = vadd.s32 %v8664, %v8662
      %v8666 = vsel %vm7471, %v8326, 2147483647
      %v8667 = vand.u32 %v8666, 65535
      %v8668 = vshra.s32 %v8666, 16
      %v8669 = vcvt.s32.f32 %v8667
      %v8670 = vcvt.s32.f32 %v8668
      %8671 = vmin.xlane.f32.xlu0 %v8670
      %v8672 = vpop.xlane.xlu0 %8671
      %vm8673 = vcmp.eq.f32.partialorder %v8670, %v8672
      %v8674 = vsel %vm8673, %v8669, inf
      %8675 = vmin.xlane.f32.xlu0 %v8674
      %v8676 = vpop.xlane.xlu0 %8675
      %v8677 = vcvt.f32.s32 %v8676
      %v8678 = vcvt.f32.s32 %v8672
      %v8679 = vshll.u32 %v8678, 16
      %v8680 = vadd.s32 %v8679, %v8677
      %v8681 = vsel %vm7471, %v8327, 2147483647
      %v8682 = vand.u32 %v8681, 65535
      %v8683 = vshra.s32 %v8681, 16
      %v8684 = vcvt.s32.f32 %v8682
      %v8685 = vcvt.s32.f32 %v8683
      %8686 = vmin.xlane.f32.xlu0 %v8685
      %v8687 = vpop.xlane.xlu0 %8686
      %vm8688 = vcmp.eq.f32.partialorder %v8685, %v8687
      %v8689 = vsel %vm8688, %v8684, inf
      %8690 = vmin.xlane.f32.xlu0 %v8689
      %v8691 = vpop.xlane.xlu0 %8690
      %v8692 = vcvt.f32.s32 %v8691
      %v8693 = vcvt.f32.s32 %v8687
      %v8694 = vshll.u32 %v8693, 16
      %v8695 = vadd.s32 %v8694, %v8692
      %v8696 = vsel %vm7471, %v8328, 2147483647
      %v8697 = vand.u32 %v8696, 65535
      %v8698 = vshra.s32 %v8696, 16
      %v8699 = vcvt.s32.f32 %v8697
      %v8700 = vcvt.s32.f32 %v8698
      %8701 = vmin.xlane.f32.xlu0 %v8700
      %v8702 = vpop.xlane.xlu0 %8701
      %vm8703 = vcmp.eq.f32.partialorder %v8700, %v8702
      %v8704 = vsel %vm8703, %v8699, inf
      %8705 = vmin.xlane.f32.xlu0 %v8704
      %v8706 = vpop.xlane.xlu0 %8705
      %v8707 = vcvt.f32.s32 %v8706
      %v8708 = vcvt.f32.s32 %v8702
      %v8709 = vshll.u32 %v8708, 16
      %v8710 = vadd.s32 %v8709, %v8707
      %v8711 = vsel %vm7471, %v8329, 2147483647
      %v8712 = vand.u32 %v8711, 65535
      %v8713 = vshra.s32 %v8711, 16
      %v8714 = vcvt.s32.f32 %v8712
      %v8715 = vcvt.s32.f32 %v8713
      %8716 = vmin.xlane.f32.xlu0 %v8715
      %v8717 = vpop.xlane.xlu0 %8716
      %vm8718 = vcmp.eq.f32.partialorder %v8715, %v8717
      %v8719 = vsel %vm8718, %v8714, inf
      %8720 = vmin.xlane.f32.xlu0 %v8719
      %v8721 = vpop.xlane.xlu0 %8720
      %v8722 = vcvt.f32.s32 %v8721
      %v8723 = vcvt.f32.s32 %v8717
      %v8724 = vshll.u32 %v8723, 16
      %v8725 = vadd.s32 %v8724, %v8722
      %v8726 = vsel %vm7471, %v8330, 2147483647
      %v8727 = vand.u32 %v8726, 65535
      %v8728 = vshra.s32 %v8726, 16
      %v8729 = vcvt.s32.f32 %v8727
      %v8730 = vcvt.s32.f32 %v8728
      %8731 = vmin.xlane.f32.xlu0 %v8730
      %v8732 = vpop.xlane.xlu0 %8731
      %vm8733 = vcmp.eq.f32.partialorder %v8730, %v8732
      %v8734 = vsel %vm8733, %v8729, inf
      %8735 = vmin.xlane.f32.xlu0 %v8734
      %v8736 = vpop.xlane.xlu0 %8735
      %v8737 = vcvt.f32.s32 %v8736
      %v8738 = vcvt.f32.s32 %v8732
      %v8739 = vshll.u32 %v8738, 16
      %v8740 = vadd.s32 %v8739, %v8737
      %v8741 = vsel %vm7471, %v8331, 2147483647
      %v8742 = vand.u32 %v8741, 65535
      %v8743 = vshra.s32 %v8741, 16
      %v8744 = vcvt.s32.f32 %v8742
      %v8745 = vcvt.s32.f32 %v8743
      %8746 = vmin.xlane.f32.xlu0 %v8745
      %v8747 = vpop.xlane.xlu0 %8746
      %vm8748 = vcmp.eq.f32.partialorder %v8745, %v8747
      %v8749 = vsel %vm8748, %v8744, inf
      %8750 = vmin.xlane.f32.xlu0 %v8749
      %v8751 = vpop.xlane.xlu0 %8750
      %v8752 = vcvt.f32.s32 %v8751
      %v8753 = vcvt.f32.s32 %v8747
      %v8754 = vshll.u32 %v8753, 16
      %v8755 = vadd.s32 %v8754, %v8752
      %v8756 = vsel %vm7471, %v8332, 2147483647
      %v8757 = vand.u32 %v8756, 65535
      %v8758 = vshra.s32 %v8756, 16
      %v8759 = vcvt.s32.f32 %v8757
      %v8760 = vcvt.s32.f32 %v8758
      %8761 = vmin.xlane.f32.xlu0 %v8760
      %v8762 = vpop.xlane.xlu0 %8761
      %vm8763 = vcmp.eq.f32.partialorder %v8760, %v8762
      %v8764 = vsel %vm8763, %v8759, inf
      %8765 = vmin.xlane.f32.xlu0 %v8764
      %v8766 = vpop.xlane.xlu0 %8765
      %v8767 = vcvt.f32.s32 %v8766
      %v8768 = vcvt.f32.s32 %v8762
      %v8769 = vshll.u32 %v8768, 16
      %v8770 = vadd.s32 %v8769, %v8767
      %v8771 = vsel %vm7471, %v8333, 2147483647
      %v8772 = vand.u32 %v8771, 65535
      %v8773 = vshra.s32 %v8771, 16
      %v8774 = vcvt.s32.f32 %v8772
      %v8775 = vcvt.s32.f32 %v8773
      %8776 = vmin.xlane.f32.xlu0 %v8775
      %v8777 = vpop.xlane.xlu0 %8776
      %vm8778 = vcmp.eq.f32.partialorder %v8775, %v8777
      %v8779 = vsel %vm8778, %v8774, inf
      %8780 = vmin.xlane.f32.xlu0 %v8779
      %v8781 = vpop.xlane.xlu0 %8780
      %v8782 = vcvt.f32.s32 %v8781
      %v8783 = vcvt.f32.s32 %v8777
      %v8784 = vshll.u32 %v8783, 16
      %v8785 = vadd.s32 %v8784, %v8782
      %v8786 = vsel %vm7471, %v8334, 2147483647
      %v8787 = vand.u32 %v8786, 65535
      %v8788 = vshra.s32 %v8786, 16
      %v8789 = vcvt.s32.f32 %v8787
      %v8790 = vcvt.s32.f32 %v8788
      %8791 = vmin.xlane.f32.xlu0 %v8790
      %v8792 = vpop.xlane.xlu0 %8791
      %vm8793 = vcmp.eq.f32.partialorder %v8790, %v8792
      %v8794 = vsel %vm8793, %v8789, inf
      %8795 = vmin.xlane.f32.xlu0 %v8794
      %v8796 = vpop.xlane.xlu0 %8795
      %v8797 = vcvt.f32.s32 %v8796
      %v8798 = vcvt.f32.s32 %v8792
      %v8799 = vshll.u32 %v8798, 16
      %v8800 = vadd.s32 %v8799, %v8797
      %v8801 = vsel %vm7471, %v8335, 2147483647
      %v8802 = vand.u32 %v8801, 65535
      %v8803 = vshra.s32 %v8801, 16
      %v8804 = vcvt.s32.f32 %v8802
      %v8805 = vcvt.s32.f32 %v8803
      %8806 = vmin.xlane.f32.xlu0 %v8805
      %v8807 = vpop.xlane.xlu0 %8806
      %vm8808 = vcmp.eq.f32.partialorder %v8805, %v8807
      %v8809 = vsel %vm8808, %v8804, inf
      %8810 = vmin.xlane.f32.xlu0 %v8809
      %v8811 = vpop.xlane.xlu0 %8810
      %v8812 = vcvt.f32.s32 %v8811
      %v8813 = vcvt.f32.s32 %v8807
      %v8814 = vshll.u32 %v8813, 16
      %v8815 = vadd.s32 %v8814, %v8812
      %vm8816 = vcmp.eq.s32.totalorder %v7439, %v8350
      %vm8817 = vcmp.eq.s32.totalorder %v7440, %v8365
      %vm8818 = vcmp.eq.s32.totalorder %v7441, %v8380
      %vm8819 = vcmp.eq.s32.totalorder %v7442, %v8395
      %vm8820 = vcmp.eq.s32.totalorder %v7443, %v8410
      %vm8821 = vcmp.eq.s32.totalorder %v7444, %v8425
      %vm8822 = vcmp.eq.s32.totalorder %v7445, %v8440
      %vm8823 = vcmp.eq.s32.totalorder %v7446, %v8455
      %vm8824 = vcmp.eq.s32.totalorder %v7447, %v8470
      %vm8825 = vcmp.eq.s32.totalorder %v7448, %v8485
      %vm8826 = vcmp.eq.s32.totalorder %v7449, %v8500
      %vm8827 = vcmp.eq.s32.totalorder %v7450, %v8515
      %vm8828 = vcmp.eq.s32.totalorder %v7451, %v8530
      %vm8829 = vcmp.eq.s32.totalorder %v7452, %v8545
      %vm8830 = vcmp.eq.s32.totalorder %v7453, %v8560
      %vm8831 = vcmp.eq.s32.totalorder %v7454, %v8575
      %vm8832 = vcmp.eq.s32.totalorder %v7455, %v8590
      %vm8833 = vcmp.eq.s32.totalorder %v7456, %v8605
      %vm8834 = vcmp.eq.s32.totalorder %v7457, %v8620
      %vm8835 = vcmp.eq.s32.totalorder %v7458, %v8635
      %vm8836 = vcmp.eq.s32.totalorder %v7459, %v8650
      %vm8837 = vcmp.eq.s32.totalorder %v7460, %v8665
      %vm8838 = vcmp.eq.s32.totalorder %v7461, %v8680
      %vm8839 = vcmp.eq.s32.totalorder %v7462, %v8695
      %vm8840 = vcmp.eq.s32.totalorder %v7463, %v8710
      %vm8841 = vcmp.eq.s32.totalorder %v7464, %v8725
      %vm8842 = vcmp.eq.s32.totalorder %v7465, %v8740
      %vm8843 = vcmp.eq.s32.totalorder %v7466, %v8755
      %vm8844 = vcmp.eq.s32.totalorder %v7467, %v8770
      %vm8845 = vcmp.eq.s32.totalorder %v7468, %v8785
      %vm8846 = vcmp.eq.s32.totalorder %v7469, %v8800
      %vm8847 = vcmp.eq.s32.totalorder %v7470, %v8815
      %v8848 = vsel %vm8816, -inf, %v8144
      %v8849 = vsel %vm8817, -inf, %v8145
      %v8850 = vsel %vm8818, -inf, %v8146
      %v8851 = vsel %vm8819, -inf, %v8147
      %v8852 = vsel %vm8820, -inf, %v8148
      %v8853 = vsel %vm8821, -inf, %v8149
      %v8854 = vsel %vm8822, -inf, %v8150
      %v8855 = vsel %vm8823, -inf, %v8151
      %v8856 = vsel %vm8824, -inf, %v8152
      %v8857 = vsel %vm8825, -inf, %v8153
      %v8858 = vsel %vm8826, -inf, %v8154
      %v8859 = vsel %vm8827, -inf, %v8155
      %v8860 = vsel %vm8828, -inf, %v8156
      %v8861 = vsel %vm8829, -inf, %v8157
      %v8862 = vsel %vm8830, -inf, %v8158
      %v8863 = vsel %vm8831, -inf, %v8159
      %v8864 = vsel %vm8832, -inf, %v8160
      %v8865 = vsel %vm8833, -inf, %v8161
      %v8866 = vsel %vm8834, -inf, %v8162
      %v8867 = vsel %vm8835, -inf, %v8163
      %v8868 = vsel %vm8836, -inf, %v8164
      %v8869 = vsel %vm8837, -inf, %v8165
      %v8870 = vsel %vm8838, -inf, %v8166
      %v8871 = vsel %vm8839, -inf, %v8167
      %v8872 = vsel %vm8840, -inf, %v8168
      %v8873 = vsel %vm8841, -inf, %v8169
      %v8874 = vsel %vm8842, -inf, %v8170
      %v8875 = vsel %vm8843, -inf, %v8171
      %v8876 = vsel %vm8844, -inf, %v8172
      %v8877 = vsel %vm8845, -inf, %v8173
      %v8878 = vsel %vm8846, -inf, %v8174
      %v8879 = vsel %vm8847, -inf, %v8175
      %v8880 = vsel %vm7471, %v8848, -inf
      %8881 = vmax.xlane.f32.xlu0 %v8880
      %v8882 = vpop.xlane.xlu0 %8881
      %v8883 = vsel %vm7471, %v8849, -inf
      %8884 = vmax.xlane.f32.xlu0 %v8883
      %v8885 = vpop.xlane.xlu0 %8884
      %v8886 = vsel %vm7471, %v8850, -inf
      %8887 = vmax.xlane.f32.xlu0 %v8886
      %v8888 = vpop.xlane.xlu0 %8887
      %v8889 = vsel %vm7471, %v8851, -inf
      %8890 = vmax.xlane.f32.xlu0 %v8889
      %v8891 = vpop.xlane.xlu0 %8890
      %v8892 = vsel %vm7471, %v8852, -inf
      %8893 = vmax.xlane.f32.xlu0 %v8892
      %v8894 = vpop.xlane.xlu0 %8893
      %v8895 = vsel %vm7471, %v8853, -inf
      %8896 = vmax.xlane.f32.xlu0 %v8895
      %v8897 = vpop.xlane.xlu0 %8896
      %v8898 = vsel %vm7471, %v8854, -inf
      %8899 = vmax.xlane.f32.xlu0 %v8898
      %v8900 = vpop.xlane.xlu0 %8899
      %v8901 = vsel %vm7471, %v8855, -inf
      %8902 = vmax.xlane.f32.xlu0 %v8901
      %v8903 = vpop.xlane.xlu0 %8902
      %v8904 = vsel %vm7471, %v8856, -inf
      %8905 = vmax.xlane.f32.xlu0 %v8904
      %v8906 = vpop.xlane.xlu0 %8905
      %v8907 = vsel %vm7471, %v8857, -inf
      %8908 = vmax.xlane.f32.xlu0 %v8907
      %v8909 = vpop.xlane.xlu0 %8908
      %v8910 = vsel %vm7471, %v8858, -inf
      %8911 = vmax.xlane.f32.xlu0 %v8910
      %v8912 = vpop.xlane.xlu0 %8911
      %v8913 = vsel %vm7471, %v8859, -inf
      %8914 = vmax.xlane.f32.xlu0 %v8913
      %v8915 = vpop.xlane.xlu0 %8914
      %v8916 = vsel %vm7471, %v8860, -inf
      %8917 = vmax.xlane.f32.xlu0 %v8916
      %v8918 = vpop.xlane.xlu0 %8917
      %v8919 = vsel %vm7471, %v8861, -inf
      %8920 = vmax.xlane.f32.xlu0 %v8919
      %v8921 = vpop.xlane.xlu0 %8920
      %v8922 = vsel %vm7471, %v8862, -inf
      %8923 = vmax.xlane.f32.xlu0 %v8922
      %v8924 = vpop.xlane.xlu0 %8923
      %v8925 = vsel %vm7471, %v8863, -inf
      %8926 = vmax.xlane.f32.xlu0 %v8925
      %v8927 = vpop.xlane.xlu0 %8926
      %v8928 = vsel %vm7471, %v8864, -inf
      %8929 = vmax.xlane.f32.xlu0 %v8928
      %v8930 = vpop.xlane.xlu0 %8929
      %v8931 = vsel %vm7471, %v8865, -inf
      %8932 = vmax.xlane.f32.xlu0 %v8931
      %v8933 = vpop.xlane.xlu0 %8932
      %v8934 = vsel %vm7471, %v8866, -inf
      %8935 = vmax.xlane.f32.xlu0 %v8934
      %v8936 = vpop.xlane.xlu0 %8935
      %v8937 = vsel %vm7471, %v8867, -inf
      %8938 = vmax.xlane.f32.xlu0 %v8937
      %v8939 = vpop.xlane.xlu0 %8938
      %v8940 = vsel %vm7471, %v8868, -inf
      %8941 = vmax.xlane.f32.xlu0 %v8940
      %v8942 = vpop.xlane.xlu0 %8941
      %v8943 = vsel %vm7471, %v8869, -inf
      %8944 = vmax.xlane.f32.xlu0 %v8943
      %v8945 = vpop.xlane.xlu0 %8944
      %v8946 = vsel %vm7471, %v8870, -inf
      %8947 = vmax.xlane.f32.xlu0 %v8946
      %v8948 = vpop.xlane.xlu0 %8947
      %v8949 = vsel %vm7471, %v8871, -inf
      %8950 = vmax.xlane.f32.xlu0 %v8949
      %v8951 = vpop.xlane.xlu0 %8950
      %v8952 = vsel %vm7471, %v8872, -inf
      %8953 = vmax.xlane.f32.xlu0 %v8952
      %v8954 = vpop.xlane.xlu0 %8953
      %v8955 = vsel %vm7471, %v8873, -inf
      %8956 = vmax.xlane.f32.xlu0 %v8955
      %v8957 = vpop.xlane.xlu0 %8956
      %v8958 = vsel %vm7471, %v8874, -inf
      %8959 = vmax.xlane.f32.xlu0 %v8958
      %v8960 = vpop.xlane.xlu0 %8959
      %v8961 = vsel %vm7471, %v8875, -inf
      %8962 = vmax.xlane.f32.xlu0 %v8961
      %v8963 = vpop.xlane.xlu0 %8962
      %v8964 = vsel %vm7471, %v8876, -inf
      %8965 = vmax.xlane.f32.xlu0 %v8964
      %v8966 = vpop.xlane.xlu0 %8965
      %v8967 = vsel %vm7471, %v8877, -inf
      %8968 = vmax.xlane.f32.xlu0 %v8967
      %v8969 = vpop.xlane.xlu0 %8968
      %v8970 = vsel %vm7471, %v8878, -inf
      %8971 = vmax.xlane.f32.xlu0 %v8970
      %v8972 = vpop.xlane.xlu0 %8971
      %v8973 = vsel %vm7471, %v8879, -inf
      %8974 = vmax.xlane.f32.xlu0 %v8973
      %v8975 = vpop.xlane.xlu0 %8974
      %vm8976 = vcmp.ge.f32.partialorder %v8848, %v8882
      %vm8977 = vcmp.ge.f32.partialorder %v8849, %v8885
      %vm8978 = vcmp.ge.f32.partialorder %v8850, %v8888
      %vm8979 = vcmp.ge.f32.partialorder %v8851, %v8891
      %vm8980 = vcmp.ge.f32.partialorder %v8852, %v8894
      %vm8981 = vcmp.ge.f32.partialorder %v8853, %v8897
      %vm8982 = vcmp.ge.f32.partialorder %v8854, %v8900
      %vm8983 = vcmp.ge.f32.partialorder %v8855, %v8903
      %vm8984 = vcmp.ge.f32.partialorder %v8856, %v8906
      %vm8985 = vcmp.ge.f32.partialorder %v8857, %v8909
      %vm8986 = vcmp.ge.f32.partialorder %v8858, %v8912
      %vm8987 = vcmp.ge.f32.partialorder %v8859, %v8915
      %vm8988 = vcmp.ge.f32.partialorder %v8860, %v8918
      %vm8989 = vcmp.ge.f32.partialorder %v8861, %v8921
      %vm8990 = vcmp.ge.f32.partialorder %v8862, %v8924
      %vm8991 = vcmp.ge.f32.partialorder %v8863, %v8927
      %vm8992 = vcmp.ge.f32.partialorder %v8864, %v8930
      %vm8993 = vcmp.ge.f32.partialorder %v8865, %v8933
      %vm8994 = vcmp.ge.f32.partialorder %v8866, %v8936
      %vm8995 = vcmp.ge.f32.partialorder %v8867, %v8939
      %vm8996 = vcmp.ge.f32.partialorder %v8868, %v8942
      %vm8997 = vcmp.ge.f32.partialorder %v8869, %v8945
      %vm8998 = vcmp.ge.f32.partialorder %v8870, %v8948
      %vm8999 = vcmp.ge.f32.partialorder %v8871, %v8951
      %vm9000 = vcmp.ge.f32.partialorder %v8872, %v8954
      %vm9001 = vcmp.ge.f32.partialorder %v8873, %v8957
      %vm9002 = vcmp.ge.f32.partialorder %v8874, %v8960
      %vm9003 = vcmp.ge.f32.partialorder %v8875, %v8963
      %vm9004 = vcmp.ge.f32.partialorder %v8876, %v8966
      %vm9005 = vcmp.ge.f32.partialorder %v8877, %v8969
      %vm9006 = vcmp.ge.f32.partialorder %v8878, %v8972
      %vm9007 = vcmp.ge.f32.partialorder %v8879, %v8975
      %v9008 = vsel %vm8976, %v7439, 1073741824
      %v9009 = vsel %vm8977, %v7440, 1073741824
      %v9010 = vsel %vm8978, %v7441, 1073741824
      %v9011 = vsel %vm8979, %v7442, 1073741824
      %v9012 = vsel %vm8980, %v7443, 1073741824
      %v9013 = vsel %vm8981, %v7444, 1073741824
      %v9014 = vsel %vm8982, %v7445, 1073741824
      %v9015 = vsel %vm8983, %v7446, 1073741824
      %v9016 = vsel %vm8984, %v7447, 1073741824
      %v9017 = vsel %vm8985, %v7448, 1073741824
      %v9018 = vsel %vm8986, %v7449, 1073741824
      %v9019 = vsel %vm8987, %v7450, 1073741824
      %v9020 = vsel %vm8988, %v7451, 1073741824
      %v9021 = vsel %vm8989, %v7452, 1073741824
      %v9022 = vsel %vm8990, %v7453, 1073741824
      %v9023 = vsel %vm8991, %v7454, 1073741824
      %v9024 = vsel %vm8992, %v7455, 1073741824
      %v9025 = vsel %vm8993, %v7456, 1073741824
      %v9026 = vsel %vm8994, %v7457, 1073741824
      %v9027 = vsel %vm8995, %v7458, 1073741824
      %v9028 = vsel %vm8996, %v7459, 1073741824
      %v9029 = vsel %vm8997, %v7460, 1073741824
      %v9030 = vsel %vm8998, %v7461, 1073741824
      %v9031 = vsel %vm8999, %v7462, 1073741824
      %v9032 = vsel %vm9000, %v7463, 1073741824
      %v9033 = vsel %vm9001, %v7464, 1073741824
      %v9034 = vsel %vm9002, %v7465, 1073741824
      %v9035 = vsel %vm9003, %v7466, 1073741824
      %v9036 = vsel %vm9004, %v7467, 1073741824
      %v9037 = vsel %vm9005, %v7468, 1073741824
      %v9038 = vsel %vm9006, %v7469, 1073741824
      %v9039 = vsel %vm9007, %v7470, 1073741824
      %v9040 = vsel %vm7471, %v9008, 2147483647
      %v9041 = vand.u32 %v9040, 65535
      %v9042 = vshra.s32 %v9040, 16
      %v9043 = vcvt.s32.f32 %v9041
      %v9044 = vcvt.s32.f32 %v9042
      %9045 = vmin.xlane.f32.xlu0 %v9044
      %v9046 = vpop.xlane.xlu0 %9045
      %vm9047 = vcmp.eq.f32.partialorder %v9044, %v9046
      %v9048 = vsel %vm9047, %v9043, inf
      %9049 = vmin.xlane.f32.xlu0 %v9048
      %v9050 = vpop.xlane.xlu0 %9049
      %v9051 = vcvt.f32.s32 %v9050
      %v9052 = vcvt.f32.s32 %v9046
      %v9053 = vshll.u32 %v9052, 16
      %v9054 = vadd.s32 %v9053, %v9051
      %v9055 = vsel %vm7471, %v9009, 2147483647
      %v9056 = vand.u32 %v9055, 65535
      %v9057 = vshra.s32 %v9055, 16
      %v9058 = vcvt.s32.f32 %v9056
      %v9059 = vcvt.s32.f32 %v9057
      %9060 = vmin.xlane.f32.xlu0 %v9059
      %v9061 = vpop.xlane.xlu0 %9060
      %vm9062 = vcmp.eq.f32.partialorder %v9059, %v9061
      %v9063 = vsel %vm9062, %v9058, inf
      %9064 = vmin.xlane.f32.xlu0 %v9063
      %v9065 = vpop.xlane.xlu0 %9064
      %v9066 = vcvt.f32.s32 %v9065
      %v9067 = vcvt.f32.s32 %v9061
      %v9068 = vshll.u32 %v9067, 16
      %v9069 = vadd.s32 %v9068, %v9066
      %v9070 = vsel %vm7471, %v9010, 2147483647
      %v9071 = vand.u32 %v9070, 65535
      %v9072 = vshra.s32 %v9070, 16
      %v9073 = vcvt.s32.f32 %v9071
      %v9074 = vcvt.s32.f32 %v9072
      %9075 = vmin.xlane.f32.xlu0 %v9074
      %v9076 = vpop.xlane.xlu0 %9075
      %vm9077 = vcmp.eq.f32.partialorder %v9074, %v9076
      %v9078 = vsel %vm9077, %v9073, inf
      %9079 = vmin.xlane.f32.xlu0 %v9078
      %v9080 = vpop.xlane.xlu0 %9079
      %v9081 = vcvt.f32.s32 %v9080
      %v9082 = vcvt.f32.s32 %v9076
      %v9083 = vshll.u32 %v9082, 16
      %v9084 = vadd.s32 %v9083, %v9081
      %v9085 = vsel %vm7471, %v9011, 2147483647
      %v9086 = vand.u32 %v9085, 65535
      %v9087 = vshra.s32 %v9085, 16
      %v9088 = vcvt.s32.f32 %v9086
      %v9089 = vcvt.s32.f32 %v9087
      %9090 = vmin.xlane.f32.xlu0 %v9089
      %v9091 = vpop.xlane.xlu0 %9090
      %vm9092 = vcmp.eq.f32.partialorder %v9089, %v9091
      %v9093 = vsel %vm9092, %v9088, inf
      %9094 = vmin.xlane.f32.xlu0 %v9093
      %v9095 = vpop.xlane.xlu0 %9094
      %v9096 = vcvt.f32.s32 %v9095
      %v9097 = vcvt.f32.s32 %v9091
      %v9098 = vshll.u32 %v9097, 16
      %v9099 = vadd.s32 %v9098, %v9096
      %v9100 = vsel %vm7471, %v9012, 2147483647
      %v9101 = vand.u32 %v9100, 65535
      %v9102 = vshra.s32 %v9100, 16
      %v9103 = vcvt.s32.f32 %v9101
      %v9104 = vcvt.s32.f32 %v9102
      %9105 = vmin.xlane.f32.xlu0 %v9104
      %v9106 = vpop.xlane.xlu0 %9105
      %vm9107 = vcmp.eq.f32.partialorder %v9104, %v9106
      %v9108 = vsel %vm9107, %v9103, inf
      %9109 = vmin.xlane.f32.xlu0 %v9108
      %v9110 = vpop.xlane.xlu0 %9109
      %v9111 = vcvt.f32.s32 %v9110
      %v9112 = vcvt.f32.s32 %v9106
      %v9113 = vshll.u32 %v9112, 16
      %v9114 = vadd.s32 %v9113, %v9111
      %v9115 = vsel %vm7471, %v9013, 2147483647
      %v9116 = vand.u32 %v9115, 65535
      %v9117 = vshra.s32 %v9115, 16
      %v9118 = vcvt.s32.f32 %v9116
      %v9119 = vcvt.s32.f32 %v9117
      %9120 = vmin.xlane.f32.xlu0 %v9119
      %v9121 = vpop.xlane.xlu0 %9120
      %vm9122 = vcmp.eq.f32.partialorder %v9119, %v9121
      %v9123 = vsel %vm9122, %v9118, inf
      %9124 = vmin.xlane.f32.xlu0 %v9123
      %v9125 = vpop.xlane.xlu0 %9124
      %v9126 = vcvt.f32.s32 %v9125
      %v9127 = vcvt.f32.s32 %v9121
      %v9128 = vshll.u32 %v9127, 16
      %v9129 = vadd.s32 %v9128, %v9126
      %v9130 = vsel %vm7471, %v9014, 2147483647
      %v9131 = vand.u32 %v9130, 65535
      %v9132 = vshra.s32 %v9130, 16
      %v9133 = vcvt.s32.f32 %v9131
      %v9134 = vcvt.s32.f32 %v9132
      %9135 = vmin.xlane.f32.xlu0 %v9134
      %v9136 = vpop.xlane.xlu0 %9135
      %vm9137 = vcmp.eq.f32.partialorder %v9134, %v9136
      %v9138 = vsel %vm9137, %v9133, inf
      %9139 = vmin.xlane.f32.xlu0 %v9138
      %v9140 = vpop.xlane.xlu0 %9139
      %v9141 = vcvt.f32.s32 %v9140
      %v9142 = vcvt.f32.s32 %v9136
      %v9143 = vshll.u32 %v9142, 16
      %v9144 = vadd.s32 %v9143, %v9141
      %v9145 = vsel %vm7471, %v9015, 2147483647
      %v9146 = vand.u32 %v9145, 65535
      %v9147 = vshra.s32 %v9145, 16
      %v9148 = vcvt.s32.f32 %v9146
      %v9149 = vcvt.s32.f32 %v9147
      %9150 = vmin.xlane.f32.xlu0 %v9149
      %v9151 = vpop.xlane.xlu0 %9150
      %vm9152 = vcmp.eq.f32.partialorder %v9149, %v9151
      %v9153 = vsel %vm9152, %v9148, inf
      %9154 = vmin.xlane.f32.xlu0 %v9153
      %v9155 = vpop.xlane.xlu0 %9154
      %v9156 = vcvt.f32.s32 %v9155
      %v9157 = vcvt.f32.s32 %v9151
      %v9158 = vshll.u32 %v9157, 16
      %v9159 = vadd.s32 %v9158, %v9156
      %v9160 = vsel %vm7471, %v9016, 2147483647
      %v9161 = vand.u32 %v9160, 65535
      %v9162 = vshra.s32 %v9160, 16
      %v9163 = vcvt.s32.f32 %v9161
      %v9164 = vcvt.s32.f32 %v9162
      %9165 = vmin.xlane.f32.xlu0 %v9164
      %v9166 = vpop.xlane.xlu0 %9165
      %vm9167 = vcmp.eq.f32.partialorder %v9164, %v9166
      %v9168 = vsel %vm9167, %v9163, inf
      %9169 = vmin.xlane.f32.xlu0 %v9168
      %v9170 = vpop.xlane.xlu0 %9169
      %v9171 = vcvt.f32.s32 %v9170
      %v9172 = vcvt.f32.s32 %v9166
      %v9173 = vshll.u32 %v9172, 16
      %v9174 = vadd.s32 %v9173, %v9171
      %v9175 = vsel %vm7471, %v9017, 2147483647
      %v9176 = vand.u32 %v9175, 65535
      %v9177 = vshra.s32 %v9175, 16
      %v9178 = vcvt.s32.f32 %v9176
      %v9179 = vcvt.s32.f32 %v9177
      %9180 = vmin.xlane.f32.xlu0 %v9179
      %v9181 = vpop.xlane.xlu0 %9180
      %vm9182 = vcmp.eq.f32.partialorder %v9179, %v9181
      %v9183 = vsel %vm9182, %v9178, inf
      %9184 = vmin.xlane.f32.xlu0 %v9183
      %v9185 = vpop.xlane.xlu0 %9184
      %v9186 = vcvt.f32.s32 %v9185
      %v9187 = vcvt.f32.s32 %v9181
      %v9188 = vshll.u32 %v9187, 16
      %v9189 = vadd.s32 %v9188, %v9186
      %v9190 = vsel %vm7471, %v9018, 2147483647
      %v9191 = vand.u32 %v9190, 65535
      %v9192 = vshra.s32 %v9190, 16
      %v9193 = vcvt.s32.f32 %v9191
      %v9194 = vcvt.s32.f32 %v9192
      %9195 = vmin.xlane.f32.xlu0 %v9194
      %v9196 = vpop.xlane.xlu0 %9195
      %vm9197 = vcmp.eq.f32.partialorder %v9194, %v9196
      %v9198 = vsel %vm9197, %v9193, inf
      %9199 = vmin.xlane.f32.xlu0 %v9198
      %v9200 = vpop.xlane.xlu0 %9199
      %v9201 = vcvt.f32.s32 %v9200
      %v9202 = vcvt.f32.s32 %v9196
      %v9203 = vshll.u32 %v9202, 16
      %v9204 = vadd.s32 %v9203, %v9201
      %v9205 = vsel %vm7471, %v9019, 2147483647
      %v9206 = vand.u32 %v9205, 65535
      %v9207 = vshra.s32 %v9205, 16
      %v9208 = vcvt.s32.f32 %v9206
      %v9209 = vcvt.s32.f32 %v9207
      %9210 = vmin.xlane.f32.xlu0 %v9209
      %v9211 = vpop.xlane.xlu0 %9210
      %vm9212 = vcmp.eq.f32.partialorder %v9209, %v9211
      %v9213 = vsel %vm9212, %v9208, inf
      %9214 = vmin.xlane.f32.xlu0 %v9213
      %v9215 = vpop.xlane.xlu0 %9214
      %v9216 = vcvt.f32.s32 %v9215
      %v9217 = vcvt.f32.s32 %v9211
      %v9218 = vshll.u32 %v9217, 16
      %v9219 = vadd.s32 %v9218, %v9216
      %v9220 = vsel %vm7471, %v9020, 2147483647
      %v9221 = vand.u32 %v9220, 65535
      %v9222 = vshra.s32 %v9220, 16
      %v9223 = vcvt.s32.f32 %v9221
      %v9224 = vcvt.s32.f32 %v9222
      %9225 = vmin.xlane.f32.xlu0 %v9224
      %v9226 = vpop.xlane.xlu0 %9225
      %vm9227 = vcmp.eq.f32.partialorder %v9224, %v9226
      %v9228 = vsel %vm9227, %v9223, inf
      %9229 = vmin.xlane.f32.xlu0 %v9228
      %v9230 = vpop.xlane.xlu0 %9229
      %v9231 = vcvt.f32.s32 %v9230
      %v9232 = vcvt.f32.s32 %v9226
      %v9233 = vshll.u32 %v9232, 16
      %v9234 = vadd.s32 %v9233, %v9231
      %v9235 = vsel %vm7471, %v9021, 2147483647
      %v9236 = vand.u32 %v9235, 65535
      %v9237 = vshra.s32 %v9235, 16
      %v9238 = vcvt.s32.f32 %v9236
      %v9239 = vcvt.s32.f32 %v9237
      %9240 = vmin.xlane.f32.xlu0 %v9239
      %v9241 = vpop.xlane.xlu0 %9240
      %vm9242 = vcmp.eq.f32.partialorder %v9239, %v9241
      %v9243 = vsel %vm9242, %v9238, inf
      %9244 = vmin.xlane.f32.xlu0 %v9243
      %v9245 = vpop.xlane.xlu0 %9244
      %v9246 = vcvt.f32.s32 %v9245
      %v9247 = vcvt.f32.s32 %v9241
      %v9248 = vshll.u32 %v9247, 16
      %v9249 = vadd.s32 %v9248, %v9246
      %v9250 = vsel %vm7471, %v9022, 2147483647
      %v9251 = vand.u32 %v9250, 65535
      %v9252 = vshra.s32 %v9250, 16
      %v9253 = vcvt.s32.f32 %v9251
      %v9254 = vcvt.s32.f32 %v9252
      %9255 = vmin.xlane.f32.xlu0 %v9254
      %v9256 = vpop.xlane.xlu0 %9255
      %vm9257 = vcmp.eq.f32.partialorder %v9254, %v9256
      %v9258 = vsel %vm9257, %v9253, inf
      %9259 = vmin.xlane.f32.xlu0 %v9258
      %v9260 = vpop.xlane.xlu0 %9259
      %v9261 = vcvt.f32.s32 %v9260
      %v9262 = vcvt.f32.s32 %v9256
      %v9263 = vshll.u32 %v9262, 16
      %v9264 = vadd.s32 %v9263, %v9261
      %v9265 = vsel %vm7471, %v9023, 2147483647
      %v9266 = vand.u32 %v9265, 65535
      %v9267 = vshra.s32 %v9265, 16
      %v9268 = vcvt.s32.f32 %v9266
      %v9269 = vcvt.s32.f32 %v9267
      %9270 = vmin.xlane.f32.xlu0 %v9269
      %v9271 = vpop.xlane.xlu0 %9270
      %vm9272 = vcmp.eq.f32.partialorder %v9269, %v9271
      %v9273 = vsel %vm9272, %v9268, inf
      %9274 = vmin.xlane.f32.xlu0 %v9273
      %v9275 = vpop.xlane.xlu0 %9274
      %v9276 = vcvt.f32.s32 %v9275
      %v9277 = vcvt.f32.s32 %v9271
      %v9278 = vshll.u32 %v9277, 16
      %v9279 = vadd.s32 %v9278, %v9276
      %v9280 = vsel %vm7471, %v9024, 2147483647
      %v9281 = vand.u32 %v9280, 65535
      %v9282 = vshra.s32 %v9280, 16
      %v9283 = vcvt.s32.f32 %v9281
      %v9284 = vcvt.s32.f32 %v9282
      %9285 = vmin.xlane.f32.xlu0 %v9284
      %v9286 = vpop.xlane.xlu0 %9285
      %vm9287 = vcmp.eq.f32.partialorder %v9284, %v9286
      %v9288 = vsel %vm9287, %v9283, inf
      %9289 = vmin.xlane.f32.xlu0 %v9288
      %v9290 = vpop.xlane.xlu0 %9289
      %v9291 = vcvt.f32.s32 %v9290
      %v9292 = vcvt.f32.s32 %v9286
      %v9293 = vshll.u32 %v9292, 16
      %v9294 = vadd.s32 %v9293, %v9291
      %v9295 = vsel %vm7471, %v9025, 2147483647
      %v9296 = vand.u32 %v9295, 65535
      %v9297 = vshra.s32 %v9295, 16
      %v9298 = vcvt.s32.f32 %v9296
      %v9299 = vcvt.s32.f32 %v9297
      %9300 = vmin.xlane.f32.xlu0 %v9299
      %v9301 = vpop.xlane.xlu0 %9300
      %vm9302 = vcmp.eq.f32.partialorder %v9299, %v9301
      %v9303 = vsel %vm9302, %v9298, inf
      %9304 = vmin.xlane.f32.xlu0 %v9303
      %v9305 = vpop.xlane.xlu0 %9304
      %v9306 = vcvt.f32.s32 %v9305
      %v9307 = vcvt.f32.s32 %v9301
      %v9308 = vshll.u32 %v9307, 16
      %v9309 = vadd.s32 %v9308, %v9306
      %v9310 = vsel %vm7471, %v9026, 2147483647
      %v9311 = vand.u32 %v9310, 65535
      %v9312 = vshra.s32 %v9310, 16
      %v9313 = vcvt.s32.f32 %v9311
      %v9314 = vcvt.s32.f32 %v9312
      %9315 = vmin.xlane.f32.xlu0 %v9314
      %v9316 = vpop.xlane.xlu0 %9315
      %vm9317 = vcmp.eq.f32.partialorder %v9314, %v9316
      %v9318 = vsel %vm9317, %v9313, inf
      %9319 = vmin.xlane.f32.xlu0 %v9318
      %v9320 = vpop.xlane.xlu0 %9319
      %v9321 = vcvt.f32.s32 %v9320
      %v9322 = vcvt.f32.s32 %v9316
      %v9323 = vshll.u32 %v9322, 16
      %v9324 = vadd.s32 %v9323, %v9321
      %v9325 = vsel %vm7471, %v9027, 2147483647
      %v9326 = vand.u32 %v9325, 65535
      %v9327 = vshra.s32 %v9325, 16
      %v9328 = vcvt.s32.f32 %v9326
      %v9329 = vcvt.s32.f32 %v9327
      %9330 = vmin.xlane.f32.xlu0 %v9329
      %v9331 = vpop.xlane.xlu0 %9330
      %vm9332 = vcmp.eq.f32.partialorder %v9329, %v9331
      %v9333 = vsel %vm9332, %v9328, inf
      %9334 = vmin.xlane.f32.xlu0 %v9333
      %v9335 = vpop.xlane.xlu0 %9334
      %v9336 = vcvt.f32.s32 %v9335
      %v9337 = vcvt.f32.s32 %v9331
      %v9338 = vshll.u32 %v9337, 16
      %v9339 = vadd.s32 %v9338, %v9336
      %v9340 = vsel %vm7471, %v9028, 2147483647
      %v9341 = vand.u32 %v9340, 65535
      %v9342 = vshra.s32 %v9340, 16
      %v9343 = vcvt.s32.f32 %v9341
      %v9344 = vcvt.s32.f32 %v9342
      %9345 = vmin.xlane.f32.xlu0 %v9344
      %v9346 = vpop.xlane.xlu0 %9345
      %vm9347 = vcmp.eq.f32.partialorder %v9344, %v9346
      %v9348 = vsel %vm9347, %v9343, inf
      %9349 = vmin.xlane.f32.xlu0 %v9348
      %v9350 = vpop.xlane.xlu0 %9349
      %v9351 = vcvt.f32.s32 %v9350
      %v9352 = vcvt.f32.s32 %v9346
      %v9353 = vshll.u32 %v9352, 16
      %v9354 = vadd.s32 %v9353, %v9351
      %v9355 = vsel %vm7471, %v9029, 2147483647
      %v9356 = vand.u32 %v9355, 65535
      %v9357 = vshra.s32 %v9355, 16
      %v9358 = vcvt.s32.f32 %v9356
      %v9359 = vcvt.s32.f32 %v9357
      %9360 = vmin.xlane.f32.xlu0 %v9359
      %v9361 = vpop.xlane.xlu0 %9360
      %vm9362 = vcmp.eq.f32.partialorder %v9359, %v9361
      %v9363 = vsel %vm9362, %v9358, inf
      %9364 = vmin.xlane.f32.xlu0 %v9363
      %v9365 = vpop.xlane.xlu0 %9364
      %v9366 = vcvt.f32.s32 %v9365
      %v9367 = vcvt.f32.s32 %v9361
      %v9368 = vshll.u32 %v9367, 16
      %v9369 = vadd.s32 %v9368, %v9366
      %v9370 = vsel %vm7471, %v9030, 2147483647
      %v9371 = vand.u32 %v9370, 65535
      %v9372 = vshra.s32 %v9370, 16
      %v9373 = vcvt.s32.f32 %v9371
      %v9374 = vcvt.s32.f32 %v9372
      %9375 = vmin.xlane.f32.xlu0 %v9374
      %v9376 = vpop.xlane.xlu0 %9375
      %vm9377 = vcmp.eq.f32.partialorder %v9374, %v9376
      %v9378 = vsel %vm9377, %v9373, inf
      %9379 = vmin.xlane.f32.xlu0 %v9378
      %v9380 = vpop.xlane.xlu0 %9379
      %v9381 = vcvt.f32.s32 %v9380
      %v9382 = vcvt.f32.s32 %v9376
      %v9383 = vshll.u32 %v9382, 16
      %v9384 = vadd.s32 %v9383, %v9381
      %v9385 = vsel %vm7471, %v9031, 2147483647
      %v9386 = vand.u32 %v9385, 65535
      %v9387 = vshra.s32 %v9385, 16
      %v9388 = vcvt.s32.f32 %v9386
      %v9389 = vcvt.s32.f32 %v9387
      %9390 = vmin.xlane.f32.xlu0 %v9389
      %v9391 = vpop.xlane.xlu0 %9390
      %vm9392 = vcmp.eq.f32.partialorder %v9389, %v9391
      %v9393 = vsel %vm9392, %v9388, inf
      %9394 = vmin.xlane.f32.xlu0 %v9393
      %v9395 = vpop.xlane.xlu0 %9394
      %v9396 = vcvt.f32.s32 %v9395
      %v9397 = vcvt.f32.s32 %v9391
      %v9398 = vshll.u32 %v9397, 16
      %v9399 = vadd.s32 %v9398, %v9396
      %v9400 = vsel %vm7471, %v9032, 2147483647
      %v9401 = vand.u32 %v9400, 65535
      %v9402 = vshra.s32 %v9400, 16
      %v9403 = vcvt.s32.f32 %v9401
      %v9404 = vcvt.s32.f32 %v9402
      %9405 = vmin.xlane.f32.xlu0 %v9404
      %v9406 = vpop.xlane.xlu0 %9405
      %vm9407 = vcmp.eq.f32.partialorder %v9404, %v9406
      %v9408 = vsel %vm9407, %v9403, inf
      %9409 = vmin.xlane.f32.xlu0 %v9408
      %v9410 = vpop.xlane.xlu0 %9409
      %v9411 = vcvt.f32.s32 %v9410
      %v9412 = vcvt.f32.s32 %v9406
      %v9413 = vshll.u32 %v9412, 16
      %v9414 = vadd.s32 %v9413, %v9411
      %v9415 = vsel %vm7471, %v9033, 2147483647
      %v9416 = vand.u32 %v9415, 65535
      %v9417 = vshra.s32 %v9415, 16
      %v9418 = vcvt.s32.f32 %v9416
      %v9419 = vcvt.s32.f32 %v9417
      %9420 = vmin.xlane.f32.xlu0 %v9419
      %v9421 = vpop.xlane.xlu0 %9420
      %vm9422 = vcmp.eq.f32.partialorder %v9419, %v9421
      %v9423 = vsel %vm9422, %v9418, inf
      %9424 = vmin.xlane.f32.xlu0 %v9423
      %v9425 = vpop.xlane.xlu0 %9424
      %v9426 = vcvt.f32.s32 %v9425
      %v9427 = vcvt.f32.s32 %v9421
      %v9428 = vshll.u32 %v9427, 16
      %v9429 = vadd.s32 %v9428, %v9426
      %v9430 = vsel %vm7471, %v9034, 2147483647
      %v9431 = vand.u32 %v9430, 65535
      %v9432 = vshra.s32 %v9430, 16
      %v9433 = vcvt.s32.f32 %v9431
      %v9434 = vcvt.s32.f32 %v9432
      %9435 = vmin.xlane.f32.xlu0 %v9434
      %v9436 = vpop.xlane.xlu0 %9435
      %vm9437 = vcmp.eq.f32.partialorder %v9434, %v9436
      %v9438 = vsel %vm9437, %v9433, inf
      %9439 = vmin.xlane.f32.xlu0 %v9438
      %v9440 = vpop.xlane.xlu0 %9439
      %v9441 = vcvt.f32.s32 %v9440
      %v9442 = vcvt.f32.s32 %v9436
      %v9443 = vshll.u32 %v9442, 16
      %v9444 = vadd.s32 %v9443, %v9441
      %v9445 = vsel %vm7471, %v9035, 2147483647
      %v9446 = vand.u32 %v9445, 65535
      %v9447 = vshra.s32 %v9445, 16
      %v9448 = vcvt.s32.f32 %v9446
      %v9449 = vcvt.s32.f32 %v9447
      %9450 = vmin.xlane.f32.xlu0 %v9449
      %v9451 = vpop.xlane.xlu0 %9450
      %vm9452 = vcmp.eq.f32.partialorder %v9449, %v9451
      %v9453 = vsel %vm9452, %v9448, inf
      %9454 = vmin.xlane.f32.xlu0 %v9453
      %v9455 = vpop.xlane.xlu0 %9454
      %v9456 = vcvt.f32.s32 %v9455
      %v9457 = vcvt.f32.s32 %v9451
      %v9458 = vshll.u32 %v9457, 16
      %v9459 = vadd.s32 %v9458, %v9456
      %v9460 = vsel %vm7471, %v9036, 2147483647
      %v9461 = vand.u32 %v9460, 65535
      %v9462 = vshra.s32 %v9460, 16
      %v9463 = vcvt.s32.f32 %v9461
      %v9464 = vcvt.s32.f32 %v9462
      %9465 = vmin.xlane.f32.xlu0 %v9464
      %v9466 = vpop.xlane.xlu0 %9465
      %vm9467 = vcmp.eq.f32.partialorder %v9464, %v9466
      %v9468 = vsel %vm9467, %v9463, inf
      %9469 = vmin.xlane.f32.xlu0 %v9468
      %v9470 = vpop.xlane.xlu0 %9469
      %v9471 = vcvt.f32.s32 %v9470
      %v9472 = vcvt.f32.s32 %v9466
      %v9473 = vshll.u32 %v9472, 16
      %v9474 = vadd.s32 %v9473, %v9471
      %v9475 = vsel %vm7471, %v9037, 2147483647
      %v9476 = vand.u32 %v9475, 65535
      %v9477 = vshra.s32 %v9475, 16
      %v9478 = vcvt.s32.f32 %v9476
      %v9479 = vcvt.s32.f32 %v9477
      %9480 = vmin.xlane.f32.xlu0 %v9479
      %v9481 = vpop.xlane.xlu0 %9480
      %vm9482 = vcmp.eq.f32.partialorder %v9479, %v9481
      %v9483 = vsel %vm9482, %v9478, inf
      %9484 = vmin.xlane.f32.xlu0 %v9483
      %v9485 = vpop.xlane.xlu0 %9484
      %v9486 = vcvt.f32.s32 %v9485
      %v9487 = vcvt.f32.s32 %v9481
      %v9488 = vshll.u32 %v9487, 16
      %v9489 = vadd.s32 %v9488, %v9486
      %v9490 = vsel %vm7471, %v9038, 2147483647
      %v9491 = vand.u32 %v9490, 65535
      %v9492 = vshra.s32 %v9490, 16
      %v9493 = vcvt.s32.f32 %v9491
      %v9494 = vcvt.s32.f32 %v9492
      %9495 = vmin.xlane.f32.xlu0 %v9494
      %v9496 = vpop.xlane.xlu0 %9495
      %vm9497 = vcmp.eq.f32.partialorder %v9494, %v9496
      %v9498 = vsel %vm9497, %v9493, inf
      %9499 = vmin.xlane.f32.xlu0 %v9498
      %v9500 = vpop.xlane.xlu0 %9499
      %v9501 = vcvt.f32.s32 %v9500
      %v9502 = vcvt.f32.s32 %v9496
      %v9503 = vshll.u32 %v9502, 16
      %v9504 = vadd.s32 %v9503, %v9501
      %v9505 = vsel %vm7471, %v9039, 2147483647
      %v9506 = vand.u32 %v9505, 65535
      %v9507 = vshra.s32 %v9505, 16
      %v9508 = vcvt.s32.f32 %v9506
      %v9509 = vcvt.s32.f32 %v9507
      %9510 = vmin.xlane.f32.xlu0 %v9509
      %v9511 = vpop.xlane.xlu0 %9510
      %vm9512 = vcmp.eq.f32.partialorder %v9509, %v9511
      %v9513 = vsel %vm9512, %v9508, inf
      %9514 = vmin.xlane.f32.xlu0 %v9513
      %v9515 = vpop.xlane.xlu0 %9514
      %v9516 = vcvt.f32.s32 %v9515
      %v9517 = vcvt.f32.s32 %v9511
      %v9518 = vshll.u32 %v9517, 16
      %v9519 = vadd.s32 %v9518, %v9516
      %vm9520 = vcmp.eq.s32.totalorder %v7439, %v9054
      %vm9521 = vcmp.eq.s32.totalorder %v7440, %v9069
      %vm9522 = vcmp.eq.s32.totalorder %v7441, %v9084
      %vm9523 = vcmp.eq.s32.totalorder %v7442, %v9099
      %vm9524 = vcmp.eq.s32.totalorder %v7443, %v9114
      %vm9525 = vcmp.eq.s32.totalorder %v7444, %v9129
      %vm9526 = vcmp.eq.s32.totalorder %v7445, %v9144
      %vm9527 = vcmp.eq.s32.totalorder %v7446, %v9159
      %vm9528 = vcmp.eq.s32.totalorder %v7447, %v9174
      %vm9529 = vcmp.eq.s32.totalorder %v7448, %v9189
      %vm9530 = vcmp.eq.s32.totalorder %v7449, %v9204
      %vm9531 = vcmp.eq.s32.totalorder %v7450, %v9219
      %vm9532 = vcmp.eq.s32.totalorder %v7451, %v9234
      %vm9533 = vcmp.eq.s32.totalorder %v7452, %v9249
      %vm9534 = vcmp.eq.s32.totalorder %v7453, %v9264
      %vm9535 = vcmp.eq.s32.totalorder %v7454, %v9279
      %vm9536 = vcmp.eq.s32.totalorder %v7455, %v9294
      %vm9537 = vcmp.eq.s32.totalorder %v7456, %v9309
      %vm9538 = vcmp.eq.s32.totalorder %v7457, %v9324
      %vm9539 = vcmp.eq.s32.totalorder %v7458, %v9339
      %vm9540 = vcmp.eq.s32.totalorder %v7459, %v9354
      %vm9541 = vcmp.eq.s32.totalorder %v7460, %v9369
      %vm9542 = vcmp.eq.s32.totalorder %v7461, %v9384
      %vm9543 = vcmp.eq.s32.totalorder %v7462, %v9399
      %vm9544 = vcmp.eq.s32.totalorder %v7463, %v9414
      %vm9545 = vcmp.eq.s32.totalorder %v7464, %v9429
      %vm9546 = vcmp.eq.s32.totalorder %v7465, %v9444
      %vm9547 = vcmp.eq.s32.totalorder %v7466, %v9459
      %vm9548 = vcmp.eq.s32.totalorder %v7467, %v9474
      %vm9549 = vcmp.eq.s32.totalorder %v7468, %v9489
      %vm9550 = vcmp.eq.s32.totalorder %v7469, %v9504
      %vm9551 = vcmp.eq.s32.totalorder %v7470, %v9519
      %v9552 = vsel %vm9520, -inf, %v8848
      %v9553 = vsel %vm9521, -inf, %v8849
      %v9554 = vsel %vm9522, -inf, %v8850
      %v9555 = vsel %vm9523, -inf, %v8851
      %v9556 = vsel %vm9524, -inf, %v8852
      %v9557 = vsel %vm9525, -inf, %v8853
      %v9558 = vsel %vm9526, -inf, %v8854
      %v9559 = vsel %vm9527, -inf, %v8855
      %v9560 = vsel %vm9528, -inf, %v8856
      %v9561 = vsel %vm9529, -inf, %v8857
      %v9562 = vsel %vm9530, -inf, %v8858
      %v9563 = vsel %vm9531, -inf, %v8859
      %v9564 = vsel %vm9532, -inf, %v8860
      %v9565 = vsel %vm9533, -inf, %v8861
      %v9566 = vsel %vm9534, -inf, %v8862
      %v9567 = vsel %vm9535, -inf, %v8863
      %v9568 = vsel %vm9536, -inf, %v8864
      %v9569 = vsel %vm9537, -inf, %v8865
      %v9570 = vsel %vm9538, -inf, %v8866
      %v9571 = vsel %vm9539, -inf, %v8867
      %v9572 = vsel %vm9540, -inf, %v8868
      %v9573 = vsel %vm9541, -inf, %v8869
      %v9574 = vsel %vm9542, -inf, %v8870
      %v9575 = vsel %vm9543, -inf, %v8871
      %v9576 = vsel %vm9544, -inf, %v8872
      %v9577 = vsel %vm9545, -inf, %v8873
      %v9578 = vsel %vm9546, -inf, %v8874
      %v9579 = vsel %vm9547, -inf, %v8875
      %v9580 = vsel %vm9548, -inf, %v8876
      %v9581 = vsel %vm9549, -inf, %v8877
      %v9582 = vsel %vm9550, -inf, %v8878
      %v9583 = vsel %vm9551, -inf, %v8879
      %v9584 = vsel %vm7471, %v9552, -inf
      %9585 = vmax.xlane.f32.xlu0 %v9584
      %v9586 = vpop.xlane.xlu0 %9585
      %v9587 = vsel %vm7471, %v9553, -inf
      %9588 = vmax.xlane.f32.xlu0 %v9587
      %v9589 = vpop.xlane.xlu0 %9588
      %v9590 = vsel %vm7471, %v9554, -inf
      %9591 = vmax.xlane.f32.xlu0 %v9590
      %v9592 = vpop.xlane.xlu0 %9591
      %v9593 = vsel %vm7471, %v9555, -inf
      %9594 = vmax.xlane.f32.xlu0 %v9593
      %v9595 = vpop.xlane.xlu0 %9594
      %v9596 = vsel %vm7471, %v9556, -inf
      %9597 = vmax.xlane.f32.xlu0 %v9596
      %v9598 = vpop.xlane.xlu0 %9597
      %v9599 = vsel %vm7471, %v9557, -inf
      %9600 = vmax.xlane.f32.xlu0 %v9599
      %v9601 = vpop.xlane.xlu0 %9600
      %v9602 = vsel %vm7471, %v9558, -inf
      %9603 = vmax.xlane.f32.xlu0 %v9602
      %v9604 = vpop.xlane.xlu0 %9603
      %v9605 = vsel %vm7471, %v9559, -inf
      %9606 = vmax.xlane.f32.xlu0 %v9605
      %v9607 = vpop.xlane.xlu0 %9606
      %v9608 = vsel %vm7471, %v9560, -inf
      %9609 = vmax.xlane.f32.xlu0 %v9608
      %v9610 = vpop.xlane.xlu0 %9609
      %v9611 = vsel %vm7471, %v9561, -inf
      %9612 = vmax.xlane.f32.xlu0 %v9611
      %v9613 = vpop.xlane.xlu0 %9612
      %v9614 = vsel %vm7471, %v9562, -inf
      %9615 = vmax.xlane.f32.xlu0 %v9614
      %v9616 = vpop.xlane.xlu0 %9615
      %v9617 = vsel %vm7471, %v9563, -inf
      %9618 = vmax.xlane.f32.xlu0 %v9617
      %v9619 = vpop.xlane.xlu0 %9618
      %v9620 = vsel %vm7471, %v9564, -inf
      %9621 = vmax.xlane.f32.xlu0 %v9620
      %v9622 = vpop.xlane.xlu0 %9621
      %v9623 = vsel %vm7471, %v9565, -inf
      %9624 = vmax.xlane.f32.xlu0 %v9623
      %v9625 = vpop.xlane.xlu0 %9624
      %v9626 = vsel %vm7471, %v9566, -inf
      %9627 = vmax.xlane.f32.xlu0 %v9626
      %v9628 = vpop.xlane.xlu0 %9627
      %v9629 = vsel %vm7471, %v9567, -inf
      %9630 = vmax.xlane.f32.xlu0 %v9629
      %v9631 = vpop.xlane.xlu0 %9630
      %v9632 = vsel %vm7471, %v9568, -inf
      %9633 = vmax.xlane.f32.xlu0 %v9632
      %v9634 = vpop.xlane.xlu0 %9633
      %v9635 = vsel %vm7471, %v9569, -inf
      %9636 = vmax.xlane.f32.xlu0 %v9635
      %v9637 = vpop.xlane.xlu0 %9636
      %v9638 = vsel %vm7471, %v9570, -inf
      %9639 = vmax.xlane.f32.xlu0 %v9638
      %v9640 = vpop.xlane.xlu0 %9639
      %v9641 = vsel %vm7471, %v9571, -inf
      %9642 = vmax.xlane.f32.xlu0 %v9641
      %v9643 = vpop.xlane.xlu0 %9642
      %v9644 = vsel %vm7471, %v9572, -inf
      %9645 = vmax.xlane.f32.xlu0 %v9644
      %v9646 = vpop.xlane.xlu0 %9645
      %v9647 = vsel %vm7471, %v9573, -inf
      %9648 = vmax.xlane.f32.xlu0 %v9647
      %v9649 = vpop.xlane.xlu0 %9648
      %v9650 = vsel %vm7471, %v9574, -inf
      %9651 = vmax.xlane.f32.xlu0 %v9650
      %v9652 = vpop.xlane.xlu0 %9651
      %v9653 = vsel %vm7471, %v9575, -inf
      %9654 = vmax.xlane.f32.xlu0 %v9653
      %v9655 = vpop.xlane.xlu0 %9654
      %v9656 = vsel %vm7471, %v9576, -inf
      %9657 = vmax.xlane.f32.xlu0 %v9656
      %v9658 = vpop.xlane.xlu0 %9657
      %v9659 = vsel %vm7471, %v9577, -inf
      %9660 = vmax.xlane.f32.xlu0 %v9659
      %v9661 = vpop.xlane.xlu0 %9660
      %v9662 = vsel %vm7471, %v9578, -inf
      %9663 = vmax.xlane.f32.xlu0 %v9662
      %v9664 = vpop.xlane.xlu0 %9663
      %v9665 = vsel %vm7471, %v9579, -inf
      %9666 = vmax.xlane.f32.xlu0 %v9665
      %v9667 = vpop.xlane.xlu0 %9666
      %v9668 = vsel %vm7471, %v9580, -inf
      %9669 = vmax.xlane.f32.xlu0 %v9668
      %v9670 = vpop.xlane.xlu0 %9669
      %v9671 = vsel %vm7471, %v9581, -inf
      %9672 = vmax.xlane.f32.xlu0 %v9671
      %v9673 = vpop.xlane.xlu0 %9672
      %v9674 = vsel %vm7471, %v9582, -inf
      %9675 = vmax.xlane.f32.xlu0 %v9674
      %v9676 = vpop.xlane.xlu0 %9675
      %v9677 = vsel %vm7471, %v9583, -inf
      %9678 = vmax.xlane.f32.xlu0 %v9677
      %v9679 = vpop.xlane.xlu0 %9678
      %vm9680 = vcmp.ge.f32.partialorder %v9552, %v9586
      %vm9681 = vcmp.ge.f32.partialorder %v9553, %v9589
      %vm9682 = vcmp.ge.f32.partialorder %v9554, %v9592
      %vm9683 = vcmp.ge.f32.partialorder %v9555, %v9595
      %vm9684 = vcmp.ge.f32.partialorder %v9556, %v9598
      %vm9685 = vcmp.ge.f32.partialorder %v9557, %v9601
      %vm9686 = vcmp.ge.f32.partialorder %v9558, %v9604
      %vm9687 = vcmp.ge.f32.partialorder %v9559, %v9607
      %vm9688 = vcmp.ge.f32.partialorder %v9560, %v9610
      %vm9689 = vcmp.ge.f32.partialorder %v9561, %v9613
      %vm9690 = vcmp.ge.f32.partialorder %v9562, %v9616
      %vm9691 = vcmp.ge.f32.partialorder %v9563, %v9619
      %vm9692 = vcmp.ge.f32.partialorder %v9564, %v9622
      %vm9693 = vcmp.ge.f32.partialorder %v9565, %v9625
      %vm9694 = vcmp.ge.f32.partialorder %v9566, %v9628
      %vm9695 = vcmp.ge.f32.partialorder %v9567, %v9631
      %vm9696 = vcmp.ge.f32.partialorder %v9568, %v9634
      %vm9697 = vcmp.ge.f32.partialorder %v9569, %v9637
      %vm9698 = vcmp.ge.f32.partialorder %v9570, %v9640
      %vm9699 = vcmp.ge.f32.partialorder %v9571, %v9643
      %vm9700 = vcmp.ge.f32.partialorder %v9572, %v9646
      %vm9701 = vcmp.ge.f32.partialorder %v9573, %v9649
      %vm9702 = vcmp.ge.f32.partialorder %v9574, %v9652
      %vm9703 = vcmp.ge.f32.partialorder %v9575, %v9655
      %vm9704 = vcmp.ge.f32.partialorder %v9576, %v9658
      %vm9705 = vcmp.ge.f32.partialorder %v9577, %v9661
      %vm9706 = vcmp.ge.f32.partialorder %v9578, %v9664
      %vm9707 = vcmp.ge.f32.partialorder %v9579, %v9667
      %vm9708 = vcmp.ge.f32.partialorder %v9580, %v9670
      %vm9709 = vcmp.ge.f32.partialorder %v9581, %v9673
      %vm9710 = vcmp.ge.f32.partialorder %v9582, %v9676
      %vm9711 = vcmp.ge.f32.partialorder %v9583, %v9679
      %v9712 = vsel %vm9680, %v7439, 1073741824
      %v9713 = vsel %vm9681, %v7440, 1073741824
      %v9714 = vsel %vm9682, %v7441, 1073741824
      %v9715 = vsel %vm9683, %v7442, 1073741824
      %v9716 = vsel %vm9684, %v7443, 1073741824
      %v9717 = vsel %vm9685, %v7444, 1073741824
      %v9718 = vsel %vm9686, %v7445, 1073741824
      %v9719 = vsel %vm9687, %v7446, 1073741824
      %v9720 = vsel %vm9688, %v7447, 1073741824
      %v9721 = vsel %vm9689, %v7448, 1073741824
      %v9722 = vsel %vm9690, %v7449, 1073741824
      %v9723 = vsel %vm9691, %v7450, 1073741824
      %v9724 = vsel %vm9692, %v7451, 1073741824
      %v9725 = vsel %vm9693, %v7452, 1073741824
      %v9726 = vsel %vm9694, %v7453, 1073741824
      %v9727 = vsel %vm9695, %v7454, 1073741824
      %v9728 = vsel %vm9696, %v7455, 1073741824
      %v9729 = vsel %vm9697, %v7456, 1073741824
      %v9730 = vsel %vm9698, %v7457, 1073741824
      %v9731 = vsel %vm9699, %v7458, 1073741824
      %v9732 = vsel %vm9700, %v7459, 1073741824
      %v9733 = vsel %vm9701, %v7460, 1073741824
      %v9734 = vsel %vm9702, %v7461, 1073741824
      %v9735 = vsel %vm9703, %v7462, 1073741824
      %v9736 = vsel %vm9704, %v7463, 1073741824
      %v9737 = vsel %vm9705, %v7464, 1073741824
      %v9738 = vsel %vm9706, %v7465, 1073741824
      %v9739 = vsel %vm9707, %v7466, 1073741824
      %v9740 = vsel %vm9708, %v7467, 1073741824
      %v9741 = vsel %vm9709, %v7468, 1073741824
      %v9742 = vsel %vm9710, %v7469, 1073741824
      %v9743 = vsel %vm9711, %v7470, 1073741824
      %v9744 = vsel %vm7471, %v9712, 2147483647
      %v9745 = vand.u32 %v9744, 65535
      %v9746 = vshra.s32 %v9744, 16
      %v9747 = vcvt.s32.f32 %v9745
      %v9748 = vcvt.s32.f32 %v9746
      %9749 = vmin.xlane.f32.xlu0 %v9748
      %v9750 = vpop.xlane.xlu0 %9749
      %vm9751 = vcmp.eq.f32.partialorder %v9748, %v9750
      %v9752 = vsel %vm9751, %v9747, inf
      %9753 = vmin.xlane.f32.xlu0 %v9752
      %v9754 = vpop.xlane.xlu0 %9753
      %v9755 = vcvt.f32.s32 %v9754
      %v9756 = vcvt.f32.s32 %v9750
      %v9757 = vshll.u32 %v9756, 16
      %v9758 = vadd.s32 %v9757, %v9755
      %v9759 = vsel %vm7471, %v9713, 2147483647
      %v9760 = vand.u32 %v9759, 65535
      %v9761 = vshra.s32 %v9759, 16
      %v9762 = vcvt.s32.f32 %v9760
      %v9763 = vcvt.s32.f32 %v9761
      %9764 = vmin.xlane.f32.xlu0 %v9763
      %v9765 = vpop.xlane.xlu0 %9764
      %vm9766 = vcmp.eq.f32.partialorder %v9763, %v9765
      %v9767 = vsel %vm9766, %v9762, inf
      %9768 = vmin.xlane.f32.xlu0 %v9767
      %v9769 = vpop.xlane.xlu0 %9768
      %v9770 = vcvt.f32.s32 %v9769
      %v9771 = vcvt.f32.s32 %v9765
      %v9772 = vshll.u32 %v9771, 16
      %v9773 = vadd.s32 %v9772, %v9770
      %v9774 = vsel %vm7471, %v9714, 2147483647
      %v9775 = vand.u32 %v9774, 65535
      %v9776 = vshra.s32 %v9774, 16
      %v9777 = vcvt.s32.f32 %v9775
      %v9778 = vcvt.s32.f32 %v9776
      %9779 = vmin.xlane.f32.xlu0 %v9778
      %v9780 = vpop.xlane.xlu0 %9779
      %vm9781 = vcmp.eq.f32.partialorder %v9778, %v9780
      %v9782 = vsel %vm9781, %v9777, inf
      %9783 = vmin.xlane.f32.xlu0 %v9782
      %v9784 = vpop.xlane.xlu0 %9783
      %v9785 = vcvt.f32.s32 %v9784
      %v9786 = vcvt.f32.s32 %v9780
      %v9787 = vshll.u32 %v9786, 16
      %v9788 = vadd.s32 %v9787, %v9785
      %v9789 = vsel %vm7471, %v9715, 2147483647
      %v9790 = vand.u32 %v9789, 65535
      %v9791 = vshra.s32 %v9789, 16
      %v9792 = vcvt.s32.f32 %v9790
      %v9793 = vcvt.s32.f32 %v9791
      %9794 = vmin.xlane.f32.xlu0 %v9793
      %v9795 = vpop.xlane.xlu0 %9794
      %vm9796 = vcmp.eq.f32.partialorder %v9793, %v9795
      %v9797 = vsel %vm9796, %v9792, inf
      %9798 = vmin.xlane.f32.xlu0 %v9797
      %v9799 = vpop.xlane.xlu0 %9798
      %v9800 = vcvt.f32.s32 %v9799
      %v9801 = vcvt.f32.s32 %v9795
      %v9802 = vshll.u32 %v9801, 16
      %v9803 = vadd.s32 %v9802, %v9800
      %v9804 = vsel %vm7471, %v9716, 2147483647
      %v9805 = vand.u32 %v9804, 65535
      %v9806 = vshra.s32 %v9804, 16
      %v9807 = vcvt.s32.f32 %v9805
      %v9808 = vcvt.s32.f32 %v9806
      %9809 = vmin.xlane.f32.xlu0 %v9808
      %v9810 = vpop.xlane.xlu0 %9809
      %vm9811 = vcmp.eq.f32.partialorder %v9808, %v9810
      %v9812 = vsel %vm9811, %v9807, inf
      %9813 = vmin.xlane.f32.xlu0 %v9812
      %v9814 = vpop.xlane.xlu0 %9813
      %v9815 = vcvt.f32.s32 %v9814
      %v9816 = vcvt.f32.s32 %v9810
      %v9817 = vshll.u32 %v9816, 16
      %v9818 = vadd.s32 %v9817, %v9815
      %v9819 = vsel %vm7471, %v9717, 2147483647
      %v9820 = vand.u32 %v9819, 65535
      %v9821 = vshra.s32 %v9819, 16
      %v9822 = vcvt.s32.f32 %v9820
      %v9823 = vcvt.s32.f32 %v9821
      %9824 = vmin.xlane.f32.xlu0 %v9823
      %v9825 = vpop.xlane.xlu0 %9824
      %vm9826 = vcmp.eq.f32.partialorder %v9823, %v9825
      %v9827 = vsel %vm9826, %v9822, inf
      %9828 = vmin.xlane.f32.xlu0 %v9827
      %v9829 = vpop.xlane.xlu0 %9828
      %v9830 = vcvt.f32.s32 %v9829
      %v9831 = vcvt.f32.s32 %v9825
      %v9832 = vshll.u32 %v9831, 16
      %v9833 = vadd.s32 %v9832, %v9830
      %v9834 = vsel %vm7471, %v9718, 2147483647
      %v9835 = vand.u32 %v9834, 65535
      %v9836 = vshra.s32 %v9834, 16
      %v9837 = vcvt.s32.f32 %v9835
      %v9838 = vcvt.s32.f32 %v9836
      %9839 = vmin.xlane.f32.xlu0 %v9838
      %v9840 = vpop.xlane.xlu0 %9839
      %vm9841 = vcmp.eq.f32.partialorder %v9838, %v9840
      %v9842 = vsel %vm9841, %v9837, inf
      %9843 = vmin.xlane.f32.xlu0 %v9842
      %v9844 = vpop.xlane.xlu0 %9843
      %v9845 = vcvt.f32.s32 %v9844
      %v9846 = vcvt.f32.s32 %v9840
      %v9847 = vshll.u32 %v9846, 16
      %v9848 = vadd.s32 %v9847, %v9845
      %v9849 = vsel %vm7471, %v9719, 2147483647
      %v9850 = vand.u32 %v9849, 65535
      %v9851 = vshra.s32 %v9849, 16
      %v9852 = vcvt.s32.f32 %v9850
      %v9853 = vcvt.s32.f32 %v9851
      %9854 = vmin.xlane.f32.xlu0 %v9853
      %v9855 = vpop.xlane.xlu0 %9854
      %vm9856 = vcmp.eq.f32.partialorder %v9853, %v9855
      %v9857 = vsel %vm9856, %v9852, inf
      %9858 = vmin.xlane.f32.xlu0 %v9857
      %v9859 = vpop.xlane.xlu0 %9858
      %v9860 = vcvt.f32.s32 %v9859
      %v9861 = vcvt.f32.s32 %v9855
      %v9862 = vshll.u32 %v9861, 16
      %v9863 = vadd.s32 %v9862, %v9860
      %v9864 = vsel %vm7471, %v9720, 2147483647
      %v9865 = vand.u32 %v9864, 65535
      %v9866 = vshra.s32 %v9864, 16
      %v9867 = vcvt.s32.f32 %v9865
      %v9868 = vcvt.s32.f32 %v9866
      %9869 = vmin.xlane.f32.xlu0 %v9868
      %v9870 = vpop.xlane.xlu0 %9869
      %vm9871 = vcmp.eq.f32.partialorder %v9868, %v9870
      %v9872 = vsel %vm9871, %v9867, inf
      %9873 = vmin.xlane.f32.xlu0 %v9872
      %v9874 = vpop.xlane.xlu0 %9873
      %v9875 = vcvt.f32.s32 %v9874
      %v9876 = vcvt.f32.s32 %v9870
      %v9877 = vshll.u32 %v9876, 16
      %v9878 = vadd.s32 %v9877, %v9875
      %v9879 = vsel %vm7471, %v9721, 2147483647
      %v9880 = vand.u32 %v9879, 65535
      %v9881 = vshra.s32 %v9879, 16
      %v9882 = vcvt.s32.f32 %v9880
      %v9883 = vcvt.s32.f32 %v9881
      %9884 = vmin.xlane.f32.xlu0 %v9883
      %v9885 = vpop.xlane.xlu0 %9884
      %vm9886 = vcmp.eq.f32.partialorder %v9883, %v9885
      %v9887 = vsel %vm9886, %v9882, inf
      %9888 = vmin.xlane.f32.xlu0 %v9887
      %v9889 = vpop.xlane.xlu0 %9888
      %v9890 = vcvt.f32.s32 %v9889
      %v9891 = vcvt.f32.s32 %v9885
      %v9892 = vshll.u32 %v9891, 16
      %v9893 = vadd.s32 %v9892, %v9890
      %v9894 = vsel %vm7471, %v9722, 2147483647
      %v9895 = vand.u32 %v9894, 65535
      %v9896 = vshra.s32 %v9894, 16
      %v9897 = vcvt.s32.f32 %v9895
      %v9898 = vcvt.s32.f32 %v9896
      %9899 = vmin.xlane.f32.xlu0 %v9898
      %v9900 = vpop.xlane.xlu0 %9899
      %vm9901 = vcmp.eq.f32.partialorder %v9898, %v9900
      %v9902 = vsel %vm9901, %v9897, inf
      %9903 = vmin.xlane.f32.xlu0 %v9902
      %v9904 = vpop.xlane.xlu0 %9903
      %v9905 = vcvt.f32.s32 %v9904
      %v9906 = vcvt.f32.s32 %v9900
      %v9907 = vshll.u32 %v9906, 16
      %v9908 = vadd.s32 %v9907, %v9905
      %v9909 = vsel %vm7471, %v9723, 2147483647
      %v9910 = vand.u32 %v9909, 65535
      %v9911 = vshra.s32 %v9909, 16
      %v9912 = vcvt.s32.f32 %v9910
      %v9913 = vcvt.s32.f32 %v9911
      %9914 = vmin.xlane.f32.xlu0 %v9913
      %v9915 = vpop.xlane.xlu0 %9914
      %vm9916 = vcmp.eq.f32.partialorder %v9913, %v9915
      %v9917 = vsel %vm9916, %v9912, inf
      %9918 = vmin.xlane.f32.xlu0 %v9917
      %v9919 = vpop.xlane.xlu0 %9918
      %v9920 = vcvt.f32.s32 %v9919
      %v9921 = vcvt.f32.s32 %v9915
      %v9922 = vshll.u32 %v9921, 16
      %v9923 = vadd.s32 %v9922, %v9920
      %v9924 = vsel %vm7471, %v9724, 2147483647
      %v9925 = vand.u32 %v9924, 65535
      %v9926 = vshra.s32 %v9924, 16
      %v9927 = vcvt.s32.f32 %v9925
      %v9928 = vcvt.s32.f32 %v9926
      %9929 = vmin.xlane.f32.xlu0 %v9928
      %v9930 = vpop.xlane.xlu0 %9929
      %vm9931 = vcmp.eq.f32.partialorder %v9928, %v9930
      %v9932 = vsel %vm9931, %v9927, inf
      %9933 = vmin.xlane.f32.xlu0 %v9932
      %v9934 = vpop.xlane.xlu0 %9933
      %v9935 = vcvt.f32.s32 %v9934
      %v9936 = vcvt.f32.s32 %v9930
      %v9937 = vshll.u32 %v9936, 16
      %v9938 = vadd.s32 %v9937, %v9935
      %v9939 = vsel %vm7471, %v9725, 2147483647
      %v9940 = vand.u32 %v9939, 65535
      %v9941 = vshra.s32 %v9939, 16
      %v9942 = vcvt.s32.f32 %v9940
      %v9943 = vcvt.s32.f32 %v9941
      %9944 = vmin.xlane.f32.xlu0 %v9943
      %v9945 = vpop.xlane.xlu0 %9944
      %vm9946 = vcmp.eq.f32.partialorder %v9943, %v9945
      %v9947 = vsel %vm9946, %v9942, inf
      %9948 = vmin.xlane.f32.xlu0 %v9947
      %v9949 = vpop.xlane.xlu0 %9948
      %v9950 = vcvt.f32.s32 %v9949
      %v9951 = vcvt.f32.s32 %v9945
      %v9952 = vshll.u32 %v9951, 16
      %v9953 = vadd.s32 %v9952, %v9950
      %v9954 = vsel %vm7471, %v9726, 2147483647
      %v9955 = vand.u32 %v9954, 65535
      %v9956 = vshra.s32 %v9954, 16
      %v9957 = vcvt.s32.f32 %v9955
      %v9958 = vcvt.s32.f32 %v9956
      %9959 = vmin.xlane.f32.xlu0 %v9958
      %v9960 = vpop.xlane.xlu0 %9959
      %vm9961 = vcmp.eq.f32.partialorder %v9958, %v9960
      %v9962 = vsel %vm9961, %v9957, inf
      %9963 = vmin.xlane.f32.xlu0 %v9962
      %v9964 = vpop.xlane.xlu0 %9963
      %v9965 = vcvt.f32.s32 %v9964
      %v9966 = vcvt.f32.s32 %v9960
      %v9967 = vshll.u32 %v9966, 16
      %v9968 = vadd.s32 %v9967, %v9965
      %v9969 = vsel %vm7471, %v9727, 2147483647
      %v9970 = vand.u32 %v9969, 65535
      %v9971 = vshra.s32 %v9969, 16
      %v9972 = vcvt.s32.f32 %v9970
      %v9973 = vcvt.s32.f32 %v9971
      %9974 = vmin.xlane.f32.xlu0 %v9973
      %v9975 = vpop.xlane.xlu0 %9974
      %vm9976 = vcmp.eq.f32.partialorder %v9973, %v9975
      %v9977 = vsel %vm9976, %v9972, inf
      %9978 = vmin.xlane.f32.xlu0 %v9977
      %v9979 = vpop.xlane.xlu0 %9978
      %v9980 = vcvt.f32.s32 %v9979
      %v9981 = vcvt.f32.s32 %v9975
      %v9982 = vshll.u32 %v9981, 16
      %v9983 = vadd.s32 %v9982, %v9980
      %v9984 = vsel %vm7471, %v9728, 2147483647
      %v9985 = vand.u32 %v9984, 65535
      %v9986 = vshra.s32 %v9984, 16
      %v9987 = vcvt.s32.f32 %v9985
      %v9988 = vcvt.s32.f32 %v9986
      %9989 = vmin.xlane.f32.xlu0 %v9988
      %v9990 = vpop.xlane.xlu0 %9989
      %vm9991 = vcmp.eq.f32.partialorder %v9988, %v9990
      %v9992 = vsel %vm9991, %v9987, inf
      %9993 = vmin.xlane.f32.xlu0 %v9992
      %v9994 = vpop.xlane.xlu0 %9993
      %v9995 = vcvt.f32.s32 %v9994
      %v9996 = vcvt.f32.s32 %v9990
      %v9997 = vshll.u32 %v9996, 16
      %v9998 = vadd.s32 %v9997, %v9995
      %v9999 = vsel %vm7471, %v9729, 2147483647
      %v10000 = vand.u32 %v9999, 65535
      %v10001 = vshra.s32 %v9999, 16
      %v10002 = vcvt.s32.f32 %v10000
      %v10003 = vcvt.s32.f32 %v10001
      %10004 = vmin.xlane.f32.xlu0 %v10003
      %v10005 = vpop.xlane.xlu0 %10004
      %vm10006 = vcmp.eq.f32.partialorder %v10003, %v10005
      %v10007 = vsel %vm10006, %v10002, inf
      %10008 = vmin.xlane.f32.xlu0 %v10007
      %v10009 = vpop.xlane.xlu0 %10008
      %v10010 = vcvt.f32.s32 %v10009
      %v10011 = vcvt.f32.s32 %v10005
      %v10012 = vshll.u32 %v10011, 16
      %v10013 = vadd.s32 %v10012, %v10010
      %v10014 = vsel %vm7471, %v9730, 2147483647
      %v10015 = vand.u32 %v10014, 65535
      %v10016 = vshra.s32 %v10014, 16
      %v10017 = vcvt.s32.f32 %v10015
      %v10018 = vcvt.s32.f32 %v10016
      %10019 = vmin.xlane.f32.xlu0 %v10018
      %v10020 = vpop.xlane.xlu0 %10019
      %vm10021 = vcmp.eq.f32.partialorder %v10018, %v10020
      %v10022 = vsel %vm10021, %v10017, inf
      %10023 = vmin.xlane.f32.xlu0 %v10022
      %v10024 = vpop.xlane.xlu0 %10023
      %v10025 = vcvt.f32.s32 %v10024
      %v10026 = vcvt.f32.s32 %v10020
      %v10027 = vshll.u32 %v10026, 16
      %v10028 = vadd.s32 %v10027, %v10025
      %v10029 = vsel %vm7471, %v9731, 2147483647
      %v10030 = vand.u32 %v10029, 65535
      %v10031 = vshra.s32 %v10029, 16
      %v10032 = vcvt.s32.f32 %v10030
      %v10033 = vcvt.s32.f32 %v10031
      %10034 = vmin.xlane.f32.xlu0 %v10033
      %v10035 = vpop.xlane.xlu0 %10034
      %vm10036 = vcmp.eq.f32.partialorder %v10033, %v10035
      %v10037 = vsel %vm10036, %v10032, inf
      %10038 = vmin.xlane.f32.xlu0 %v10037
      %v10039 = vpop.xlane.xlu0 %10038
      %v10040 = vcvt.f32.s32 %v10039
      %v10041 = vcvt.f32.s32 %v10035
      %v10042 = vshll.u32 %v10041, 16
      %v10043 = vadd.s32 %v10042, %v10040
      %v10044 = vsel %vm7471, %v9732, 2147483647
      %v10045 = vand.u32 %v10044, 65535
      %v10046 = vshra.s32 %v10044, 16
      %v10047 = vcvt.s32.f32 %v10045
      %v10048 = vcvt.s32.f32 %v10046
      %10049 = vmin.xlane.f32.xlu0 %v10048
      %v10050 = vpop.xlane.xlu0 %10049
      %vm10051 = vcmp.eq.f32.partialorder %v10048, %v10050
      %v10052 = vsel %vm10051, %v10047, inf
      %10053 = vmin.xlane.f32.xlu0 %v10052
      %v10054 = vpop.xlane.xlu0 %10053
      %v10055 = vcvt.f32.s32 %v10054
      %v10056 = vcvt.f32.s32 %v10050
      %v10057 = vshll.u32 %v10056, 16
      %v10058 = vadd.s32 %v10057, %v10055
      %v10059 = vsel %vm7471, %v9733, 2147483647
      %v10060 = vand.u32 %v10059, 65535
      %v10061 = vshra.s32 %v10059, 16
      %v10062 = vcvt.s32.f32 %v10060
      %v10063 = vcvt.s32.f32 %v10061
      %10064 = vmin.xlane.f32.xlu0 %v10063
      %v10065 = vpop.xlane.xlu0 %10064
      %vm10066 = vcmp.eq.f32.partialorder %v10063, %v10065
      %v10067 = vsel %vm10066, %v10062, inf
      %10068 = vmin.xlane.f32.xlu0 %v10067
      %v10069 = vpop.xlane.xlu0 %10068
      %v10070 = vcvt.f32.s32 %v10069
      %v10071 = vcvt.f32.s32 %v10065
      %v10072 = vshll.u32 %v10071, 16
      %v10073 = vadd.s32 %v10072, %v10070
      %v10074 = vsel %vm7471, %v9734, 2147483647
      %v10075 = vand.u32 %v10074, 65535
      %v10076 = vshra.s32 %v10074, 16
      %v10077 = vcvt.s32.f32 %v10075
      %v10078 = vcvt.s32.f32 %v10076
      %10079 = vmin.xlane.f32.xlu0 %v10078
      %v10080 = vpop.xlane.xlu0 %10079
      %vm10081 = vcmp.eq.f32.partialorder %v10078, %v10080
      %v10082 = vsel %vm10081, %v10077, inf
      %10083 = vmin.xlane.f32.xlu0 %v10082
      %v10084 = vpop.xlane.xlu0 %10083
      %v10085 = vcvt.f32.s32 %v10084
      %v10086 = vcvt.f32.s32 %v10080
      %v10087 = vshll.u32 %v10086, 16
      %v10088 = vadd.s32 %v10087, %v10085
      %v10089 = vsel %vm7471, %v9735, 2147483647
      %v10090 = vand.u32 %v10089, 65535
      %v10091 = vshra.s32 %v10089, 16
      %v10092 = vcvt.s32.f32 %v10090
      %v10093 = vcvt.s32.f32 %v10091
      %10094 = vmin.xlane.f32.xlu0 %v10093
      %v10095 = vpop.xlane.xlu0 %10094
      %vm10096 = vcmp.eq.f32.partialorder %v10093, %v10095
      %v10097 = vsel %vm10096, %v10092, inf
      %10098 = vmin.xlane.f32.xlu0 %v10097
      %v10099 = vpop.xlane.xlu0 %10098
      %v10100 = vcvt.f32.s32 %v10099
      %v10101 = vcvt.f32.s32 %v10095
      %v10102 = vshll.u32 %v10101, 16
      %v10103 = vadd.s32 %v10102, %v10100
      %v10104 = vsel %vm7471, %v9736, 2147483647
      %v10105 = vand.u32 %v10104, 65535
      %v10106 = vshra.s32 %v10104, 16
      %v10107 = vcvt.s32.f32 %v10105
      %v10108 = vcvt.s32.f32 %v10106
      %10109 = vmin.xlane.f32.xlu0 %v10108
      %v10110 = vpop.xlane.xlu0 %10109
      %vm10111 = vcmp.eq.f32.partialorder %v10108, %v10110
      %v10112 = vsel %vm10111, %v10107, inf
      %10113 = vmin.xlane.f32.xlu0 %v10112
      %v10114 = vpop.xlane.xlu0 %10113
      %v10115 = vcvt.f32.s32 %v10114
      %v10116 = vcvt.f32.s32 %v10110
      %v10117 = vshll.u32 %v10116, 16
      %v10118 = vadd.s32 %v10117, %v10115
      %v10119 = vsel %vm7471, %v9737, 2147483647
      %v10120 = vand.u32 %v10119, 65535
      %v10121 = vshra.s32 %v10119, 16
      %v10122 = vcvt.s32.f32 %v10120
      %v10123 = vcvt.s32.f32 %v10121
      %10124 = vmin.xlane.f32.xlu0 %v10123
      %v10125 = vpop.xlane.xlu0 %10124
      %vm10126 = vcmp.eq.f32.partialorder %v10123, %v10125
      %v10127 = vsel %vm10126, %v10122, inf
      %10128 = vmin.xlane.f32.xlu0 %v10127
      %v10129 = vpop.xlane.xlu0 %10128
      %v10130 = vcvt.f32.s32 %v10129
      %v10131 = vcvt.f32.s32 %v10125
      %v10132 = vshll.u32 %v10131, 16
      %v10133 = vadd.s32 %v10132, %v10130
      %v10134 = vsel %vm7471, %v9738, 2147483647
      %v10135 = vand.u32 %v10134, 65535
      %v10136 = vshra.s32 %v10134, 16
      %v10137 = vcvt.s32.f32 %v10135
      %v10138 = vcvt.s32.f32 %v10136
      %10139 = vmin.xlane.f32.xlu0 %v10138
      %v10140 = vpop.xlane.xlu0 %10139
      %vm10141 = vcmp.eq.f32.partialorder %v10138, %v10140
      %v10142 = vsel %vm10141, %v10137, inf
      %10143 = vmin.xlane.f32.xlu0 %v10142
      %v10144 = vpop.xlane.xlu0 %10143
      %v10145 = vcvt.f32.s32 %v10144
      %v10146 = vcvt.f32.s32 %v10140
      %v10147 = vshll.u32 %v10146, 16
      %v10148 = vadd.s32 %v10147, %v10145
      %v10149 = vsel %vm7471, %v9739, 2147483647
      %v10150 = vand.u32 %v10149, 65535
      %v10151 = vshra.s32 %v10149, 16
      %v10152 = vcvt.s32.f32 %v10150
      %v10153 = vcvt.s32.f32 %v10151
      %10154 = vmin.xlane.f32.xlu0 %v10153
      %v10155 = vpop.xlane.xlu0 %10154
      %vm10156 = vcmp.eq.f32.partialorder %v10153, %v10155
      %v10157 = vsel %vm10156, %v10152, inf
      %10158 = vmin.xlane.f32.xlu0 %v10157
      %v10159 = vpop.xlane.xlu0 %10158
      %v10160 = vcvt.f32.s32 %v10159
      %v10161 = vcvt.f32.s32 %v10155
      %v10162 = vshll.u32 %v10161, 16
      %v10163 = vadd.s32 %v10162, %v10160
      %v10164 = vsel %vm7471, %v9740, 2147483647
      %v10165 = vand.u32 %v10164, 65535
      %v10166 = vshra.s32 %v10164, 16
      %v10167 = vcvt.s32.f32 %v10165
      %v10168 = vcvt.s32.f32 %v10166
      %10169 = vmin.xlane.f32.xlu0 %v10168
      %v10170 = vpop.xlane.xlu0 %10169
      %vm10171 = vcmp.eq.f32.partialorder %v10168, %v10170
      %v10172 = vsel %vm10171, %v10167, inf
      %10173 = vmin.xlane.f32.xlu0 %v10172
      %v10174 = vpop.xlane.xlu0 %10173
      %v10175 = vcvt.f32.s32 %v10174
      %v10176 = vcvt.f32.s32 %v10170
      %v10177 = vshll.u32 %v10176, 16
      %v10178 = vadd.s32 %v10177, %v10175
      %v10179 = vsel %vm7471, %v9741, 2147483647
      %v10180 = vand.u32 %v10179, 65535
      %v10181 = vshra.s32 %v10179, 16
      %v10182 = vcvt.s32.f32 %v10180
      %v10183 = vcvt.s32.f32 %v10181
      %10184 = vmin.xlane.f32.xlu0 %v10183
      %v10185 = vpop.xlane.xlu0 %10184
      %vm10186 = vcmp.eq.f32.partialorder %v10183, %v10185
      %v10187 = vsel %vm10186, %v10182, inf
      %10188 = vmin.xlane.f32.xlu0 %v10187
      %v10189 = vpop.xlane.xlu0 %10188
      %v10190 = vcvt.f32.s32 %v10189
      %v10191 = vcvt.f32.s32 %v10185
      %v10192 = vshll.u32 %v10191, 16
      %v10193 = vadd.s32 %v10192, %v10190
      %v10194 = vsel %vm7471, %v9742, 2147483647
      %v10195 = vand.u32 %v10194, 65535
      %v10196 = vshra.s32 %v10194, 16
      %v10197 = vcvt.s32.f32 %v10195
      %v10198 = vcvt.s32.f32 %v10196
      %10199 = vmin.xlane.f32.xlu0 %v10198
      %v10200 = vpop.xlane.xlu0 %10199
      %vm10201 = vcmp.eq.f32.partialorder %v10198, %v10200
      %v10202 = vsel %vm10201, %v10197, inf
      %10203 = vmin.xlane.f32.xlu0 %v10202
      %v10204 = vpop.xlane.xlu0 %10203
      %v10205 = vcvt.f32.s32 %v10204
      %v10206 = vcvt.f32.s32 %v10200
      %v10207 = vshll.u32 %v10206, 16
      %v10208 = vadd.s32 %v10207, %v10205
      %v10209 = vsel %vm7471, %v9743, 2147483647
      %v10210 = vand.u32 %v10209, 65535
      %v10211 = vshra.s32 %v10209, 16
      %v10212 = vcvt.s32.f32 %v10210
      %v10213 = vcvt.s32.f32 %v10211
      %10214 = vmin.xlane.f32.xlu0 %v10213
      %v10215 = vpop.xlane.xlu0 %10214
      %vm10216 = vcmp.eq.f32.partialorder %v10213, %v10215
      %v10217 = vsel %vm10216, %v10212, inf
      %10218 = vmin.xlane.f32.xlu0 %v10217
      %v10219 = vpop.xlane.xlu0 %10218
      %v10220 = vcvt.f32.s32 %v10219
      %v10221 = vcvt.f32.s32 %v10215
      %v10222 = vshll.u32 %v10221, 16
      %v10223 = vadd.s32 %v10222, %v10220
      %v10224 = vsel %vm6955, %v7474, %v8178
      %v10225 = vsel %vm6955, %v7477, %v8181
      %v10226 = vsel %vm6955, %v7480, %v8184
      %v10227 = vsel %vm6955, %v7483, %v8187
      %v10228 = vsel %vm6955, %v7486, %v8190
      %v10229 = vsel %vm6955, %v7489, %v8193
      %v10230 = vsel %vm6955, %v7492, %v8196
      %v10231 = vsel %vm6955, %v7495, %v8199
      %v10232 = vsel %vm6955, %v7498, %v8202
      %v10233 = vsel %vm6955, %v7501, %v8205
      %v10234 = vsel %vm6955, %v7504, %v8208
      %v10235 = vsel %vm6955, %v7507, %v8211
      %v10236 = vsel %vm6955, %v7510, %v8214
      %v10237 = vsel %vm6955, %v7513, %v8217
      %v10238 = vsel %vm6955, %v7516, %v8220
      %v10239 = vsel %vm6955, %v7519, %v8223
      %v10240 = vsel %vm6955, %v7522, %v8226
      %v10241 = vsel %vm6955, %v7525, %v8229
      %v10242 = vsel %vm6955, %v7528, %v8232
      %v10243 = vsel %vm6955, %v7531, %v8235
      %v10244 = vsel %vm6955, %v7534, %v8238
      %v10245 = vsel %vm6955, %v7537, %v8241
      %v10246 = vsel %vm6955, %v7540, %v8244
      %v10247 = vsel %vm6955, %v7543, %v8247
      %v10248 = vsel %vm6955, %v7546, %v8250
      %v10249 = vsel %vm6955, %v7549, %v8253
      %v10250 = vsel %vm6955, %v7552, %v8256
      %v10251 = vsel %vm6955, %v7555, %v8259
      %v10252 = vsel %vm6955, %v7558, %v8262
      %v10253 = vsel %vm6955, %v7561, %v8265
      %v10254 = vsel %vm6955, %v7564, %v8268
      %v10255 = vsel %vm6955, %v7567, %v8271
      %v10256 = vsel %vm6988, %v10224, %v8882
      %v10257 = vsel %vm6988, %v10225, %v8885
      %v10258 = vsel %vm6988, %v10226, %v8888
      %v10259 = vsel %vm6988, %v10227, %v8891
      %v10260 = vsel %vm6988, %v10228, %v8894
      %v10261 = vsel %vm6988, %v10229, %v8897
      %v10262 = vsel %vm6988, %v10230, %v8900
      %v10263 = vsel %vm6988, %v10231, %v8903
      %v10264 = vsel %vm6988, %v10232, %v8906
      %v10265 = vsel %vm6988, %v10233, %v8909
      %v10266 = vsel %vm6988, %v10234, %v8912
      %v10267 = vsel %vm6988, %v10235, %v8915
      %v10268 = vsel %vm6988, %v10236, %v8918
      %v10269 = vsel %vm6988, %v10237, %v8921
      %v10270 = vsel %vm6988, %v10238, %v8924
      %v10271 = vsel %vm6988, %v10239, %v8927
      %v10272 = vsel %vm6988, %v10240, %v8930
      %v10273 = vsel %vm6988, %v10241, %v8933
      %v10274 = vsel %vm6988, %v10242, %v8936
      %v10275 = vsel %vm6988, %v10243, %v8939
      %v10276 = vsel %vm6988, %v10244, %v8942
      %v10277 = vsel %vm6988, %v10245, %v8945
      %v10278 = vsel %vm6988, %v10246, %v8948
      %v10279 = vsel %vm6988, %v10247, %v8951
      %v10280 = vsel %vm6988, %v10248, %v8954
      %v10281 = vsel %vm6988, %v10249, %v8957
      %v10282 = vsel %vm6988, %v10250, %v8960
      %v10283 = vsel %vm6988, %v10251, %v8963
      %v10284 = vsel %vm6988, %v10252, %v8966
      %v10285 = vsel %vm6988, %v10253, %v8969
      %v10286 = vsel %vm6988, %v10254, %v8972
      %v10287 = vsel %vm6988, %v10255, %v8975
      %v10288 = vsel %vm7021, %v10256, %v9586
      %v10289 = vsel %vm7021, %v10257, %v9589
      %v10290 = vsel %vm7021, %v10258, %v9592
      %v10291 = vsel %vm7021, %v10259, %v9595
      %v10292 = vsel %vm7021, %v10260, %v9598
      %v10293 = vsel %vm7021, %v10261, %v9601
      %v10294 = vsel %vm7021, %v10262, %v9604
      %v10295 = vsel %vm7021, %v10263, %v9607
      %v10296 = vsel %vm7021, %v10264, %v9610
      %v10297 = vsel %vm7021, %v10265, %v9613
      %v10298 = vsel %vm7021, %v10266, %v9616
      %v10299 = vsel %vm7021, %v10267, %v9619
      %v10300 = vsel %vm7021, %v10268, %v9622
      %v10301 = vsel %vm7021, %v10269, %v9625
      %v10302 = vsel %vm7021, %v10270, %v9628
      %v10303 = vsel %vm7021, %v10271, %v9631
      %v10304 = vsel %vm7021, %v10272, %v9634
      %v10305 = vsel %vm7021, %v10273, %v9637
      %v10306 = vsel %vm7021, %v10274, %v9640
      %v10307 = vsel %vm7021, %v10275, %v9643
      %v10308 = vsel %vm7021, %v10276, %v9646
      %v10309 = vsel %vm7021, %v10277, %v9649
      %v10310 = vsel %vm7021, %v10278, %v9652
      %v10311 = vsel %vm7021, %v10279, %v9655
      %v10312 = vsel %vm7021, %v10280, %v9658
      %v10313 = vsel %vm7021, %v10281, %v9661
      %v10314 = vsel %vm7021, %v10282, %v9664
      %v10315 = vsel %vm7021, %v10283, %v9667
      %v10316 = vsel %vm7021, %v10284, %v9670
      %v10317 = vsel %vm7021, %v10285, %v9673
      %v10318 = vsel %vm7021, %v10286, %v9676
      %v10319 = vsel %vm7021, %v10287, %v9679
      %10320 = vst.msk [vmem:[#allocation2] sm:$0xff] %vm7310, %v10288
      %10321 = vst.msk [vmem:[#allocation2 + $0x8] sm:$0xff] %vm7310, %v10289
      %10322 = vst.msk [vmem:[#allocation2 + $0x10] sm:$0xff] %vm7310, %v10290
      %10323 = vst.msk [vmem:[#allocation2 + $0x18] sm:$0xff] %vm7310, %v10291
      %10324 = vst.msk [vmem:[#allocation2 + $0x20] sm:$0xff] %vm7310, %v10292
      %10325 = vst.msk [vmem:[#allocation2 + $0x28] sm:$0xff] %vm7310, %v10293
      %10326 = vst.msk [vmem:[#allocation2 + $0x30] sm:$0xff] %vm7310, %v10294
      %10327 = vst.msk [vmem:[#allocation2 + $0x38] sm:$0xff] %vm7310, %v10295
      %10328 = vst.msk [vmem:[#allocation2 + $0x40] sm:$0xff] %vm7310, %v10296
      %10329 = vst.msk [vmem:[#allocation2 + $0x48] sm:$0xff] %vm7310, %v10297
      %10330 = vst.msk [vmem:[#allocation2 + $0x50] sm:$0xff] %vm7310, %v10298
      %10331 = vst.msk [vmem:[#allocation2 + $0x58] sm:$0xff] %vm7310, %v10299
      %10332 = vst.msk [vmem:[#allocation2 + $0x60] sm:$0xff] %vm7310, %v10300
      %10333 = vst.msk [vmem:[#allocation2 + $0x68] sm:$0xff] %vm7310, %v10301
      %10334 = vst.msk [vmem:[#allocation2 + $0x70] sm:$0xff] %vm7310, %v10302
      %10335 = vst.msk [vmem:[#allocation2 + $0x78] sm:$0xff] %vm7310, %v10303
      %10336 = vst.msk [vmem:[#allocation2 + $0x80] sm:$0xff] %vm7310, %v10304
      %10337 = vst.msk [vmem:[#allocation2 + $0x88] sm:$0xff] %vm7310, %v10305
      %10338 = vst.msk [vmem:[#allocation2 + $0x90] sm:$0xff] %vm7310, %v10306
      %10339 = vst.msk [vmem:[#allocation2 + $0x98] sm:$0xff] %vm7310, %v10307
      %10340 = vst.msk [vmem:[#allocation2 + $0xa0] sm:$0xff] %vm7310, %v10308
      %10341 = vst.msk [vmem:[#allocation2 + $0xa8] sm:$0xff] %vm7310, %v10309
      %10342 = vst.msk [vmem:[#allocation2 + $0xb0] sm:$0xff] %vm7310, %v10310
      %10343 = vst.msk [vmem:[#allocation2 + $0xb8] sm:$0xff] %vm7310, %v10311
      %10344 = vst.msk [vmem:[#allocation2 + $0xc0] sm:$0xff] %vm7310, %v10312
      %10345 = vst.msk [vmem:[#allocation2 + $0xc8] sm:$0xff] %vm7310, %v10313
      %10346 = vst.msk [vmem:[#allocation2 + $0xd0] sm:$0xff] %vm7310, %v10314
      %10347 = vst.msk [vmem:[#allocation2 + $0xd8] sm:$0xff] %vm7310, %v10315
      %10348 = vst.msk [vmem:[#allocation2 + $0xe0] sm:$0xff] %vm7310, %v10316
      %10349 = vst.msk [vmem:[#allocation2 + $0xe8] sm:$0xff] %vm7310, %v10317
      %10350 = vst.msk [vmem:[#allocation2 + $0xf0] sm:$0xff] %vm7310, %v10318
      %10351 = vst.msk [vmem:[#allocation2 + $0xf8] sm:$0xff] %vm7310, %v10319
      %v10352 = vsel %vm6955, %v7646, %v8350
      %v10353 = vsel %vm6955, %v7661, %v8365
      %v10354 = vsel %vm6955, %v7676, %v8380
      %v10355 = vsel %vm6955, %v7691, %v8395
      %v10356 = vsel %vm6955, %v7706, %v8410
      %v10357 = vsel %vm6955, %v7721, %v8425
      %v10358 = vsel %vm6955, %v7736, %v8440
      %v10359 = vsel %vm6955, %v7751, %v8455
      %v10360 = vsel %vm6955, %v7766, %v8470
      %v10361 = vsel %vm6955, %v7781, %v8485
      %v10362 = vsel %vm6955, %v7796, %v8500
      %v10363 = vsel %vm6955, %v7811, %v8515
      %v10364 = vsel %vm6955, %v7826, %v8530
      %v10365 = vsel %vm6955, %v7841, %v8545
      %v10366 = vsel %vm6955, %v7856, %v8560
      %v10367 = vsel %vm6955, %v7871, %v8575
      %v10368 = vsel %vm6955, %v7886, %v8590
      %v10369 = vsel %vm6955, %v7901, %v8605
      %v10370 = vsel %vm6955, %v7916, %v8620
      %v10371 = vsel %vm6955, %v7931, %v8635
      %v10372 = vsel %vm6955, %v7946, %v8650
      %v10373 = vsel %vm6955, %v7961, %v8665
      %v10374 = vsel %vm6955, %v7976, %v8680
      %v10375 = vsel %vm6955, %v7991, %v8695
      %v10376 = vsel %vm6955, %v8006, %v8710
      %v10377 = vsel %vm6955, %v8021, %v8725
      %v10378 = vsel %vm6955, %v8036, %v8740
      %v10379 = vsel %vm6955, %v8051, %v8755
      %v10380 = vsel %vm6955, %v8066, %v8770
      %v10381 = vsel %vm6955, %v8081, %v8785
      %v10382 = vsel %vm6955, %v8096, %v8800
      %v10383 = vsel %vm6955, %v8111, %v8815
      %v10384 = vsel %vm6988, %v10352, %v9054
      %v10385 = vsel %vm6988, %v10353, %v9069
      %v10386 = vsel %vm6988, %v10354, %v9084
      %v10387 = vsel %vm6988, %v10355, %v9099
      %v10388 = vsel %vm6988, %v10356, %v9114
      %v10389 = vsel %vm6988, %v10357, %v9129
      %v10390 = vsel %vm6988, %v10358, %v9144
      %v10391 = vsel %vm6988, %v10359, %v9159
      %v10392 = vsel %vm6988, %v10360, %v9174
      %v10393 = vsel %vm6988, %v10361, %v9189
      %v10394 = vsel %vm6988, %v10362, %v9204
      %v10395 = vsel %vm6988, %v10363, %v9219
      %v10396 = vsel %vm6988, %v10364, %v9234
      %v10397 = vsel %vm6988, %v10365, %v9249
      %v10398 = vsel %vm6988, %v10366, %v9264
      %v10399 = vsel %vm6988, %v10367, %v9279
      %v10400 = vsel %vm6988, %v10368, %v9294
      %v10401 = vsel %vm6988, %v10369, %v9309
      %v10402 = vsel %vm6988, %v10370, %v9324
      %v10403 = vsel %vm6988, %v10371, %v9339
      %v10404 = vsel %vm6988, %v10372, %v9354
      %v10405 = vsel %vm6988, %v10373, %v9369
      %v10406 = vsel %vm6988, %v10374, %v9384
      %v10407 = vsel %vm6988, %v10375, %v9399
      %v10408 = vsel %vm6988, %v10376, %v9414
      %v10409 = vsel %vm6988, %v10377, %v9429
      %v10410 = vsel %vm6988, %v10378, %v9444
      %v10411 = vsel %vm6988, %v10379, %v9459
      %v10412 = vsel %vm6988, %v10380, %v9474
      %v10413 = vsel %vm6988, %v10381, %v9489
      %v10414 = vsel %vm6988, %v10382, %v9504
      %v10415 = vsel %vm6988, %v10383, %v9519
      %v10416 = vsel %vm7021, %v10384, %v9758
      %v10417 = vsel %vm7021, %v10385, %v9773
      %v10418 = vsel %vm7021, %v10386, %v9788
      %v10419 = vsel %vm7021, %v10387, %v9803
      %v10420 = vsel %vm7021, %v10388, %v9818
      %v10421 = vsel %vm7021, %v10389, %v9833
      %v10422 = vsel %vm7021, %v10390, %v9848
      %v10423 = vsel %vm7021, %v10391, %v9863
      %v10424 = vsel %vm7021, %v10392, %v9878
      %v10425 = vsel %vm7021, %v10393, %v9893
      %v10426 = vsel %vm7021, %v10394, %v9908
      %v10427 = vsel %vm7021, %v10395, %v9923
      %v10428 = vsel %vm7021, %v10396, %v9938
      %v10429 = vsel %vm7021, %v10397, %v9953
      %v10430 = vsel %vm7021, %v10398, %v9968
      %v10431 = vsel %vm7021, %v10399, %v9983
      %v10432 = vsel %vm7021, %v10400, %v9998
      %v10433 = vsel %vm7021, %v10401, %v10013
      %v10434 = vsel %vm7021, %v10402, %v10028
      %v10435 = vsel %vm7021, %v10403, %v10043
      %v10436 = vsel %vm7021, %v10404, %v10058
      %v10437 = vsel %vm7021, %v10405, %v10073
      %v10438 = vsel %vm7021, %v10406, %v10088
      %v10439 = vsel %vm7021, %v10407, %v10103
      %v10440 = vsel %vm7021, %v10408, %v10118
      %v10441 = vsel %vm7021, %v10409, %v10133
      %v10442 = vsel %vm7021, %v10410, %v10148
      %v10443 = vsel %vm7021, %v10411, %v10163
      %v10444 = vsel %vm7021, %v10412, %v10178
      %v10445 = vsel %vm7021, %v10413, %v10193
      %v10446 = vsel %vm7021, %v10414, %v10208
      %v10447 = vsel %vm7021, %v10415, %v10223
      %10448 = vst.msk [vmem:[#allocation3] sm:$0xff] %vm7310, %v10416
      %10449 = vst.msk [vmem:[#allocation3 + $0x8] sm:$0xff] %vm7310, %v10417
      %10450 = vst.msk [vmem:[#allocation3 + $0x10] sm:$0xff] %vm7310, %v10418
      %10451 = vst.msk [vmem:[#allocation3 + $0x18] sm:$0xff] %vm7310, %v10419
      %10452 = vst.msk [vmem:[#allocation3 + $0x20] sm:$0xff] %vm7310, %v10420
      %10453 = vst.msk [vmem:[#allocation3 + $0x28] sm:$0xff] %vm7310, %v10421
      %10454 = vst.msk [vmem:[#allocation3 + $0x30] sm:$0xff] %vm7310, %v10422
      %10455 = vst.msk [vmem:[#allocation3 + $0x38] sm:$0xff] %vm7310, %v10423
      %10456 = vst.msk [vmem:[#allocation3 + $0x40] sm:$0xff] %vm7310, %v10424
      %10457 = vst.msk [vmem:[#allocation3 + $0x48] sm:$0xff] %vm7310, %v10425
      %10458 = vst.msk [vmem:[#allocation3 + $0x50] sm:$0xff] %vm7310, %v10426
      %10459 = vst.msk [vmem:[#allocation3 + $0x58] sm:$0xff] %vm7310, %v10427
      %10460 = vst.msk [vmem:[#allocation3 + $0x60] sm:$0xff] %vm7310, %v10428
      %10461 = vst.msk [vmem:[#allocation3 + $0x68] sm:$0xff] %vm7310, %v10429
      %10462 = vst.msk [vmem:[#allocation3 + $0x70] sm:$0xff] %vm7310, %v10430
      %10463 = vst.msk [vmem:[#allocation3 + $0x78] sm:$0xff] %vm7310, %v10431
      %10464 = vst.msk [vmem:[#allocation3 + $0x80] sm:$0xff] %vm7310, %v10432
      %10465 = vst.msk [vmem:[#allocation3 + $0x88] sm:$0xff] %vm7310, %v10433
      %10466 = vst.msk [vmem:[#allocation3 + $0x90] sm:$0xff] %vm7310, %v10434
      %10467 = vst.msk [vmem:[#allocation3 + $0x98] sm:$0xff] %vm7310, %v10435
      %10468 = vst.msk [vmem:[#allocation3 + $0xa0] sm:$0xff] %vm7310, %v10436
      %10469 = vst.msk [vmem:[#allocation3 + $0xa8] sm:$0xff] %vm7310, %v10437
      %10470 = vst.msk [vmem:[#allocation3 + $0xb0] sm:$0xff] %vm7310, %v10438
      %10471 = vst.msk [vmem:[#allocation3 + $0xb8] sm:$0xff] %vm7310, %v10439
      %10472 = vst.msk [vmem:[#allocation3 + $0xc0] sm:$0xff] %vm7310, %v10440
      %10473 = vst.msk [vmem:[#allocation3 + $0xc8] sm:$0xff] %vm7310, %v10441
      %10474 = vst.msk [vmem:[#allocation3 + $0xd0] sm:$0xff] %vm7310, %v10442
      %10475 = vst.msk [vmem:[#allocation3 + $0xd8] sm:$0xff] %vm7310, %v10443
      %10476 = vst.msk [vmem:[#allocation3 + $0xe0] sm:$0xff] %vm7310, %v10444
      %10477 = vst.msk [vmem:[#allocation3 + $0xe8] sm:$0xff] %vm7310, %v10445
      %10478 = vst.msk [vmem:[#allocation3 + $0xf0] sm:$0xff] %vm7310, %v10446
      %10479 = vst.msk [vmem:[#allocation3 + $0xf8] sm:$0xff] %vm7310, %v10447
      // Predicated region
      $region41: #{tpu_custom_call.1} parent=27 // pred_check
        %p10480 = pneg %p160
      $region42: #{tpu_custom_call.1} parent=27 // pred_check_branch
        %10482 = sbr.rel (%p10480) target = $region44
      $region43: #{tpu_custom_call.1} parent=27 // pred_region
        %v10483 = vld [vmem:[#allocation3] sm:$0xff]
        %v10484 = vld [vmem:[#allocation3 + $0x8] sm:$0xff]
        %v10485 = vld [vmem:[#allocation3 + $0x10] sm:$0xff]
        %v10486 = vld [vmem:[#allocation3 + $0x18] sm:$0xff]
        %v10487 = vld [vmem:[#allocation3 + $0x20] sm:$0xff]
        %v10488 = vld [vmem:[#allocation3 + $0x28] sm:$0xff]
        %v10489 = vld [vmem:[#allocation3 + $0x30] sm:$0xff]
        %v10490 = vld [vmem:[#allocation3 + $0x38] sm:$0xff]
        %v10491 = vld [vmem:[#allocation3 + $0x40] sm:$0xff]
        %v10492 = vld [vmem:[#allocation3 + $0x48] sm:$0xff]
        %v10493 = vld [vmem:[#allocation3 + $0x50] sm:$0xff]
        %v10494 = vld [vmem:[#allocation3 + $0x58] sm:$0xff]
        %v10495 = vld [vmem:[#allocation3 + $0x60] sm:$0xff]
        %v10496 = vld [vmem:[#allocation3 + $0x68] sm:$0xff]
        %v10497 = vld [vmem:[#allocation3 + $0x70] sm:$0xff]
        %v10498 = vld [vmem:[#allocation3 + $0x78] sm:$0xff]
        %v10499 = vld [vmem:[#allocation3 + $0x80] sm:$0xff]
        %v10500 = vld [vmem:[#allocation3 + $0x88] sm:$0xff]
        %v10501 = vld [vmem:[#allocation3 + $0x90] sm:$0xff]
        %v10502 = vld [vmem:[#allocation3 + $0x98] sm:$0xff]
        %v10503 = vld [vmem:[#allocation3 + $0xa0] sm:$0xff]
        %v10504 = vld [vmem:[#allocation3 + $0xa8] sm:$0xff]
        %v10505 = vld [vmem:[#allocation3 + $0xb0] sm:$0xff]
        %v10506 = vld [vmem:[#allocation3 + $0xb8] sm:$0xff]
        %v10507 = vld [vmem:[#allocation3 + $0xc0] sm:$0xff]
        %v10508 = vld [vmem:[#allocation3 + $0xc8] sm:$0xff]
        %v10509 = vld [vmem:[#allocation3 + $0xd0] sm:$0xff]
        %v10510 = vld [vmem:[#allocation3 + $0xd8] sm:$0xff]
        %v10511 = vld [vmem:[#allocation3 + $0xe0] sm:$0xff]
        %v10512 = vld [vmem:[#allocation3 + $0xe8] sm:$0xff]
        %v10513 = vld [vmem:[#allocation3 + $0xf0] sm:$0xff]
        %v10514 = vld [vmem:[#allocation3 + $0xf8] sm:$0xff]
        %10515 = vst.msk [vmem:[%s157] sm:$0xff] %vm7310, %v10483
        %10516 = vst.msk [vmem:[%s157 + $0x8] sm:$0xff] %vm7310, %v10484
        %10517 = vst.msk [vmem:[%s157 + $0x10] sm:$0xff] %vm7310, %v10485
        %10518 = vst.msk [vmem:[%s157 + $0x18] sm:$0xff] %vm7310, %v10486
        %10519 = vst.msk [vmem:[%s157 + $0x20] sm:$0xff] %vm7310, %v10487
        %10520 = vst.msk [vmem:[%s157 + $0x28] sm:$0xff] %vm7310, %v10488
        %10521 = vst.msk [vmem:[%s157 + $0x30] sm:$0xff] %vm7310, %v10489
        %10522 = vst.msk [vmem:[%s157 + $0x38] sm:$0xff] %vm7310, %v10490
        %10523 = vst.msk [vmem:[%s157 + $0x40] sm:$0xff] %vm7310, %v10491
        %10524 = vst.msk [vmem:[%s157 + $0x48] sm:$0xff] %vm7310, %v10492
        %10525 = vst.msk [vmem:[%s157 + $0x50] sm:$0xff] %vm7310, %v10493
        %10526 = vst.msk [vmem:[%s157 + $0x58] sm:$0xff] %vm7310, %v10494
        %10527 = vst.msk [vmem:[%s157 + $0x60] sm:$0xff] %vm7310, %v10495
        %10528 = vst.msk [vmem:[%s157 + $0x68] sm:$0xff] %vm7310, %v10496
        %10529 = vst.msk [vmem:[%s157 + $0x70] sm:$0xff] %vm7310, %v10497
        %10530 = vst.msk [vmem:[%s157 + $0x78] sm:$0xff] %vm7310, %v10498
        %10531 = vst.msk [vmem:[%s157 + $0x80] sm:$0xff] %vm7310, %v10499
        %10532 = vst.msk [vmem:[%s157 + $0x88] sm:$0xff] %vm7310, %v10500
        %10533 = vst.msk [vmem:[%s157 + $0x90] sm:$0xff] %vm7310, %v10501
        %10534 = vst.msk [vmem:[%s157 + $0x98] sm:$0xff] %vm7310, %v10502
        %10535 = vst.msk [vmem:[%s157 + $0xa0] sm:$0xff] %vm7310, %v10503
        %10536 = vst.msk [vmem:[%s157 + $0xa8] sm:$0xff] %vm7310, %v10504
        %10537 = vst.msk [vmem:[%s157 + $0xb0] sm:$0xff] %vm7310, %v10505
        %10538 = vst.msk [vmem:[%s157 + $0xb8] sm:$0xff] %vm7310, %v10506
        %10539 = vst.msk [vmem:[%s157 + $0xc0] sm:$0xff] %vm7310, %v10507
        %10540 = vst.msk [vmem:[%s157 + $0xc8] sm:$0xff] %vm7310, %v10508
        %10541 = vst.msk [vmem:[%s157 + $0xd0] sm:$0xff] %vm7310, %v10509
        %10542 = vst.msk [vmem:[%s157 + $0xd8] sm:$0xff] %vm7310, %v10510
        %10543 = vst.msk [vmem:[%s157 + $0xe0] sm:$0xff] %vm7310, %v10511
        %10544 = vst.msk [vmem:[%s157 + $0xe8] sm:$0xff] %vm7310, %v10512
        %10545 = vst.msk [vmem:[%s157 + $0xf0] sm:$0xff] %vm7310, %v10513
        %10546 = vst.msk [vmem:[%s157 + $0xf8] sm:$0xff] %vm7310, %v10514
      $region44: #{tpu_custom_call.1} parent=27 // pred_fallthru
        _
      %s10547 = smul.u32 32, %s17
      %p10548 = scmp.lt.s32.totalorder %s10547, 63
      %s10549 = scalar_select %p10548, %s10547, 63
      %s10550 = smul.addr %s10549, 8
      %s10551 = scalar_lea.vmem %s2, %s10550
      // Predicated region
      $region45: #{tpu_custom_call.1} parent=27 // pred_check
        %p10552 = pneg %p90
      $region46: #{tpu_custom_call.1} parent=27 // pred_check_branch
        %10554 = sbr.rel (%p10552) target = $region48
      $region47: #{tpu_custom_call.1} parent=27 // pred_region
        %s10555 = smul.u32 32, %s17
      $region48: #{tpu_custom_call.1} parent=27 // pred_fallthru
        _
    $region28: #{tpu_custom_call.1} parent=5 // pred_fallthru
      _
    %p10556 = scmp.le.s32.totalorder 2, %s8
    // Predicated region
    $region49: #{tpu_custom_call.1} parent=5 // pred_check
      %p10557 = pneg %p10556
    $region50: #{tpu_custom_call.1} parent=5 // pred_check_branch
      %10559 = sbr.rel (%p10557) target = $region52
    $region51: #{tpu_custom_call.1} parent=5 // pred_region
      %s10560 = ssub.s32 %s8, 2
      // Predicated region
      $region53: #{tpu_custom_call.1} parent=51 // pred_check
        %p10561 = pneg %p96
      $region54: #{tpu_custom_call.1} parent=51 // pred_check_branch
        %10563 = sbr.rel (%p10561) target = $region56
      $region55: #{tpu_custom_call.1} parent=51 // pred_region
        %s10564 = smul.u32 32, %s19
        %p10565 = scmp.lt.s32.totalorder %s10564, 63
        %s10566 = scalar_select %p10565, %s10564, 63
        %s10567 = smul.addr %s10566, 8
        %s10568 = scalar_lea.vmem %s2, %s10567
      $region56: #{tpu_custom_call.1} parent=51 // pred_fallthru
        _
    $region52: #{tpu_custom_call.1} parent=5 // pred_fallthru
      _
  $region6: #{tpu_custom_call.1} parent=0 // loop_footer
    %s12 = sadd.s32 1, %s8
  $region7: #{tpu_custom_call.1} parent=0 // loop_footer_branch
    %7 = sbr.rel target = $region3
  $region8: #{tpu_custom_call.1} parent=0 // loop_exit
    _

</llo_original>
